<compile_context>
chip_gen: v5e
topology: v5e:2x2
jax: 0.10.0
libtpu: 0.0.40
codegen_flags: <defaults>
</compile_context>

<pallas_src>
import jax
import jax.numpy as jnp
import numpy as np
from jax.experimental import pallas as pl
from jax.experimental.pallas import tpu as pltpu

# ----------------------------- model config ---------------------------------
BATCH = 2
PAST_SEQ_LEN = 8
INPUT_FEATURE_NUM = 4
OUTPUT_FEATURE_NUM = 2
FUTURE_SEQ_LEN = 4
HIDDEN = 128         # lstm_hidden_dim (module default; keeps gates vreg-aligned)
NUM_LAYERS = 2       # lstm_layer_num (hard-wired: layer0 + layer1 below)

F32 = jnp.float32
BF16 = jnp.bfloat16


# ------------------------------- kernel -------------------------------------
def _lstm_gates(gates, c, hdim):
    """Gate columns are pre-permuted to [i | f | o | g] in the wrapper, so the
    three sigmoid gates form one contiguous (B, 3H) lane slab and tanh one
    (B, H) slab.  All elementwise math stays f32."""
    sig = jax.nn.sigmoid(gates[:, :3 * hdim])
    g_g = jnp.tanh(gates[:, 3 * hdim:])
    i_g = sig[:, :hdim]
    f_g = sig[:, hdim:2 * hdim]
    o_g = sig[:, 2 * hdim:3 * hdim]
    c_new = f_g * c + i_g * g_g
    h_new = o_g * jnp.tanh(c_new)
    return h_new, c_new


def _seq2seq_kernel(
    xe_ref,        # (T*B, F_in)  bf16  time-major flattened past sequence
    e_wih0_ref,    # (F_in, 4H)   bf16
    e_b0_ref,      # (1, 4H)      f32
    e_wwave_ref,   # (2H, 8H)     bf16  [[Whh0, Wih1], [0, Whh1]]
    e_b1_ref,      # (1, 4H)      f32
    d0_proj_ref,   # (B, 4H)      f32   dec0 @ d_wih0 + d_b0
    d_b0f_ref,     # (1, 4H)      f32   d_b0 + fc_b @ d_wih0
    d_b1_ref,      # (1, 4H)      f32
    fc_w_ref,      # (H, H)       bf16  fc.weight^T zero-padded to 128 lanes
    fc_b_ref,      # (1, H)       f32   zero-padded
    d_w0_hbm,      # (2H, 4H)     bf16  [d_whh0 ; fc_w @ d_wih0]   (ANY/HBM)
    d_w1_hbm,      # (2H, 4H)     bf16  [d_wih1 ; d_whh1]          (ANY/HBM)
    out_ref,       # (FUT*B, H)   f32   lane-dense output slab
    d_w0_vmem,     # scratch (2H, 4H) bf16
    d_w1_vmem,     # scratch (2H, 4H) bf16
    dma_sem,       # DMA semaphores (2,)
):
    hdim = out_ref.shape[1]
    batch = d0_proj_ref.shape[0]
    past_seq_len = xe_ref.shape[0] // batch
    future_seq_len = out_ref.shape[0] // batch

    # Kick off the decoder-weight DMAs immediately so they stream in behind
    # the encoder recurrence (largest benefit on v5e, lowest HBM bandwidth).
    cp_w0 = pltpu.make_async_copy(d_w0_hbm, d_w0_vmem, dma_sem.at[0])
    cp_w1 = pltpu.make_async_copy(d_w1_hbm, d_w1_vmem, dma_sem.at[1])
    cp_w0.start()
    cp_w1.start()

    e_wwave = e_wwave_ref[...]
    fc_w = fc_w_ref[...]

    # Hoisted bias broadcasts (JAX does not CSE broadcast_in_dim).
    e_b1 = jnp.broadcast_to(e_b1_ref[...], (batch, 4 * hdim))
    d_b0f = jnp.broadcast_to(d_b0f_ref[...], (batch, 4 * hdim))
    d_b1 = jnp.broadcast_to(d_b1_ref[...], (batch, 4 * hdim))
    fc_b = jnp.broadcast_to(fc_b_ref[...], (future_seq_len * batch, hdim))

    # Encoder layer-0 input projection for the whole past sequence, hoisted
    # off the serial recurrence (one bf16 MXU matmul, f32 accumulate).
    x_proj = (
        jnp.dot(xe_ref[...], e_wih0_ref[...], preferred_element_type=F32)
        + e_b0_ref[...]
    )                                                           # (T*B, 4H) f32

    zeros = jnp.zeros((batch, hdim), F32)
    c0 = zeros
    c1 = zeros
    h1 = zeros

    # ---- encoder: wavefront-fused 2-layer LSTM, fully unrolled --------------
    # One matmul per timestep: [h0(t), h1(t-1)] @ [[Whh0, Wih1], [0, Whh1]]
    # produces layer-1 gates for step t and the layer-0 recurrent term for
    # step t+1.  (dropout(p=0.25) between layers is identity at inference.)
    # Step 0 peeled: h0(-1) = h1(-1) = 0.
    g0 = x_proj[0:batch, :]
    h0, c0 = _lstm_gates(g0, c0, hdim)
    m = jnp.dot(h0.astype(BF16), e_wwave[:hdim, :],
                preferred_element_type=F32)          # h1(-1)=0 -> top half only
    r0_next = m[:, :4 * hdim]
    h1, c1 = _lstm_gates(m[:, 4 * hdim:] + e_b1, c1, hdim)

    for t in range(1, past_seq_len):
        g0 = x_proj[t * batch:(t + 1) * batch, :] + r0_next
        h0, c0 = _lstm_gates(g0, c0, hdim)
        m = jnp.dot(jnp.concatenate([h0, h1], axis=-1).astype(BF16), e_wwave,
                    preferred_element_type=F32)
        r0_next = m[:, :4 * hdim]
        h1, c1 = _lstm_gates(m[:, 4 * hdim:] + e_b1, c1, hdim)

    # Decoder weights must be resident before the decoder recurrence starts.
    cp_w0.wait()
    cp_w1.wait()
    d_w0 = d_w0_vmem[...]
    d_w1 = d_w1_vmem[...]

    # ---- decoder: autoregressive, fc head folded out of the recurrence ------
    # Feedback uses h1 directly through W_fb = fc_w @ d_wih0 (rows H:2H of
    # d_w0); the actual fc outputs are computed once after the loop.
    g0_extra = d0_proj_ref[...]            # step 0: dec0 @ d_wih0 + d_b0
    fb = jnp.zeros((batch, hdim), BF16)    # step 0: dec0 term already in g0_extra
    h1_steps = []
    for _ in range(future_seq_len):
        g0 = jnp.dot(jnp.concatenate([h0.astype(BF16), fb], axis=-1), d_w0,
                     preferred_element_type=F32) + g0_extra
        h0, c0 = _lstm_gates(g0, c0, hdim)
        g1 = jnp.dot(jnp.concatenate([h0, h1], axis=-1).astype(BF16), d_w1,
                     preferred_element_type=F32) + d_b1
        h1, c1 = _lstm_gates(g1, c1, hdim)
        h1_steps.append(h1)
        fb = h1.astype(BF16)               # no teacher forcing at inference
        g0_extra = d_b0f

    # Single stacked fc matmul, off the recurrence; one lane-dense (8,128) store.
    h1_stack = jnp.concatenate(h1_steps, axis=0)     # (FUT*B, H)
    out_ref[...] = (
        jnp.dot(h1_stack.astype(BF16), fc_w, preferred_element_type=F32) + fc_b
    )


# ------------------------------- wrapper -------------------------------------
def _permute_gate_cols(w, hdim=HIDDEN):
    """PyTorch gate order [i, f, g, o] -> [i, f, o, g] (sigmoid gates contiguous)."""
    return jnp.concatenate(
        [w[..., :2 * hdim], w[..., 3 * hdim:4 * hdim], w[..., 2 * hdim:3 * hdim]],
        axis=-1)


def lstm_seq2seq_forward(input_seq, params):
    """input_seq: (B, T, F_in) float32 -> (B, FUTURE_SEQ_LEN, F_out) float32."""
    b_sz, t_len, f_in = input_seq.shape
    hdim = HIDDEN

    # Time-major flatten so each timestep is a contiguous static row slice of
    # the precomputed layer-0 projection inside the kernel.
    xe = jnp.transpose(input_seq, (1, 0, 2)).reshape(t_len * b_sz, f_in).astype(BF16)
    dec0 = input_seq[:, -1, :OUTPUT_FEATURE_NUM].astype(F32)       # (B, F_out)

    # --- gate-permuted weights (columns [i,f,g,o] -> [i,f,o,g]) ---
    e_wih0 = _permute_gate_cols(params["e_wih0"])
    e_whh0 = _permute_gate_cols(params["e_whh0"])
    e_b0 = _permute_gate_cols(params["e_b0"])
    e_wih1 = _permute_gate_cols(params["e_wih1"])
    e_whh1 = _permute_gate_cols(params["e_whh1"])
    e_b1 = _permute_gate_cols(params["e_b1"])
    d_wih0 = _permute_gate_cols(params["d_wih0"])
    d_whh0 = _permute_gate_cols(params["d_whh0"])
    d_b0 = _permute_gate_cols(params["d_b0"])
    d_wih1 = _permute_gate_cols(params["d_wih1"])
    d_whh1 = _permute_gate_cols(params["d_whh1"])
    d_b1 = _permute_gate_cols(params["d_b1"])

    # Encoder wavefront weight: [h0(t), h1(t-1)] @ [[Whh0, Wih1], [0, Whh1]].
    e_wwave = jnp.concatenate(
        [jnp.concatenate([e_whh0, e_wih1], axis=1),
         jnp.concatenate([jnp.zeros((hdim, 4 * hdim), F32), e_whh1], axis=1)],
        axis=0)                                                    # (2H, 8H)

    # Decoder layer 0 with the fc head folded into the feedback:
    #   dec_in(s>=1) = h1(s-1) @ fc_w + fc_b
    #   dec_in @ Wih0 = h1 @ (fc_w @ Wih0) + fc_b @ Wih0
    w_fb = jnp.dot(params["fc_w"], d_wih0)                         # (H, 4H)
    d_w0 = jnp.concatenate([d_whh0, w_fb], axis=0)                 # (2H, 4H)
    d_b0f = d_b0 + jnp.dot(params["fc_b"], d_wih0)                 # (1, 4H)
    d_w1 = jnp.concatenate([d_wih1, d_whh1], axis=0)               # (2H, 4H)

    # Decoder step-0 input projection (raw last-input features).
    d0_proj = jnp.dot(dec0, d_wih0) + d_b0                         # (B, 4H)

    # fc padded to 128 output lanes so the final store is lane-dense.
    fc_w_pad = jnp.zeros((hdim, hdim), F32).at[:, :OUTPUT_FEATURE_NUM].set(
        params["fc_w"])
    fc_b_pad = jnp.zeros((1, hdim), F32).at[:, :OUTPUT_FEATURE_NUM].set(
        params["fc_b"])

    args = (
        xe,
        e_wih0.astype(BF16), e_b0,
        e_wwave.astype(BF16), e_b1,
        d0_proj, d_b0f, d_b1,
        fc_w_pad.astype(BF16), fc_b_pad,
        d_w0.astype(BF16), d_w1.astype(BF16),
    )

    vmem = pl.BlockSpec(memory_space=pltpu.MemorySpace.VMEM)
    any_spec = pl.BlockSpec(memory_space=pl.ANY)

    # Single program, everything resident in VMEM (~1.1 MiB).  Decoder-side
    # weights stay in HBM (ANY) and are DMA'd behind the encoder recurrence.
    out_wide = pl.pallas_call(
        _seq2seq_kernel,
        out_shape=jax.ShapeDtypeStruct((FUTURE_SEQ_LEN * b_sz, hdim), F32),
        in_specs=[vmem] * 10 + [any_spec, any_spec],
        out_specs=vmem,
        scratch_shapes=[
            pltpu.VMEM((2 * hdim, 4 * hdim), BF16),
            pltpu.VMEM((2 * hdim, 4 * hdim), BF16),
            pltpu.SemaphoreType.DMA((2,)),
        ],
        cost_estimate=pl.CostEstimate(
            flops=13_000_000, transcendentals=31_000, bytes_accessed=1_300_000),
    )(*args)

    out = out_wide.reshape(FUTURE_SEQ_LEN, b_sz, hdim)
    out = jnp.transpose(out, (1, 0, 2))[:, :, :OUTPUT_FEATURE_NUM]
    return out


# --------------------------- parameter init ----------------------------------
def init_params(key):
    """Deterministic init mimicking PyTorch's U(-1/sqrt(H), 1/sqrt(H)).

    Weights stored pre-transposed ((in, 4H) / (H, 4H) / (H, F_out)); the two
    LSTM biases (b_ih + b_hh) are pre-summed into a single (1, 4H) row.
    Gate column order here is PyTorch's [i, f, g, o]; the wrapper permutes."""
    bound = 1.0 / np.sqrt(HIDDEN)

    def u(k, shape):
        return jax.random.uniform(k, shape, F32, -bound, bound)

    keys = jax.random.split(key, 20)
    p = {}
    p["e_wih0"] = u(keys[0], (INPUT_FEATURE_NUM, 4 * HIDDEN))
    p["e_whh0"] = u(keys[1], (HIDDEN, 4 * HIDDEN))
    p["e_b0"] = u(keys[2], (1, 4 * HIDDEN)) + u(keys[3], (1, 4 * HIDDEN))
    p["e_wih1"] = u(keys[4], (HIDDEN, 4 * HIDDEN))
    p["e_whh1"] = u(keys[5], (HIDDEN, 4 * HIDDEN))
    p["e_b1"] = u(keys[6], (1, 4 * HIDDEN)) + u(keys[7], (1, 4 * HIDDEN))
    p["d_wih0"] = u(keys[8], (OUTPUT_FEATURE_NUM, 4 * HIDDEN))
    p["d_whh0"] = u(keys[9], (HIDDEN, 4 * HIDDEN))
    p["d_b0"] = u(keys[10], (1, 4 * HIDDEN)) + u(keys[11], (1, 4 * HIDDEN))
    p["d_wih1"] = u(keys[12], (HIDDEN, 4 * HIDDEN))
    p["d_whh1"] = u(keys[13], (HIDDEN, 4 * HIDDEN))
    p["d_b1"] = u(keys[14], (1, 4 * HIDDEN)) + u(keys[15], (1, 4 * HIDDEN))
    p["fc_w"] = u(keys[16], (HIDDEN, OUTPUT_FEATURE_NUM))
    p["fc_b"] = u(keys[17], (1, OUTPUT_FEATURE_NUM))
    return p


# ------------------------- pure-JAX f32 reference -----------------------------
def _lstm_cell_ref(x, h, c, wih_t, whh_t, b):
    hdim = whh_t.shape[0]
    gates = (
        jnp.dot(x, wih_t, preferred_element_type=F32)
        + jnp.dot(h, whh_t, preferred_element_type=F32)
        + b
    )
    i_g = jax.nn.sigmoid(gates[:, 0 * hdim:1 * hdim])
    f_g = jax.nn.sigmoid(gates[:, 1 * hdim:2 * hdim])
    g_g = jnp.tanh(gates[:, 2 * hdim:3 * hdim])
    o_g = jax.nn.sigmoid(gates[:, 3 * hdim:4 * hdim])
    c_new = f_g * c + i_g * g_g
    h_new = o_g * jnp.tanh(c_new)
    return h_new, c_new


def reference_forward(x, p):
    b_sz, t_len, _ = x.shape
    zeros = jnp.zeros((b_sz, HIDDEN), F32)
    h0 = c0 = h1 = c1 = zeros
    for t in range(t_len):
        xt = x[:, t, :]
        h0, c0 = _lstm_cell_ref(xt, h0, c0, p["e_wih0"], p["e_whh0"], p["e_b0"])
        h1, c1 = _lstm_cell_ref(h0, h1, c1, p["e_wih1"], p["e_whh1"], p["e_b1"])
    dec_in = x[:, -1, :OUTPUT_FEATURE_NUM]
    outs = []
    for _ in range(FUTURE_SEQ_LEN):
        h0, c0 = _lstm_cell_ref(dec_in, h0, c0, p["d_wih0"], p["d_whh0"], p["d_b0"])
        h1, c1 = _lstm_cell_ref(h0, h1, c1, p["d_wih1"], p["d_whh1"], p["d_b1"])
        step = jnp.dot(h1, p["fc_w"], preferred_element_type=F32) + p["fc_b"]
        outs.append(step[:, None, :])
        dec_in = step
    return jnp.concatenate(outs, axis=1)


# --------------------------------- main ---------------------------------------
if __name__ == "__main__":
    key = jax.random.PRNGKey(0)
    k_x, k_p = jax.random.split(key)
    input_seq = jax.random.normal(
        k_x, (BATCH, PAST_SEQ_LEN, INPUT_FEATURE_NUM), F32
    )
    params = init_params(k_p)

    out = lstm_seq2seq_forward(input_seq, params)
    out = jax.block_until_ready(out)

    ref = reference_forward(input_seq, params)
    assert out.shape == (BATCH, FUTURE_SEQ_LEN, OUTPUT_FEATURE_NUM)
    # Kernel uses bf16 matmul operands (f32 accumulate) per the perf review;
    # tolerance vs. the f32 reference is relaxed accordingly.
    np.testing.assert_allclose(
        np.asarray(out), np.asarray(ref), atol=2e-2, rtol=2e-2
    )

    print("KERNEL_OK")
</pallas_src>

<mosaic_0001>
module attributes {stable_mosaic.version = 11 : i64} {
  func.func @_seq2seq_kernel(%arg0: memref<16x4xbf16, #tpu.memory_space<vmem>>, %arg1: memref<4x512xbf16, #tpu.memory_space<vmem>>, %arg2: memref<1x512xf32, #tpu.memory_space<vmem>>, %arg3: memref<256x1024xbf16, #tpu.memory_space<vmem>>, %arg4: memref<1x512xf32, #tpu.memory_space<vmem>>, %arg5: memref<2x512xf32, #tpu.memory_space<vmem>>, %arg6: memref<1x512xf32, #tpu.memory_space<vmem>>, %arg7: memref<1x512xf32, #tpu.memory_space<vmem>>, %arg8: memref<128x128xbf16, #tpu.memory_space<vmem>>, %arg9: memref<1x128xf32, #tpu.memory_space<vmem>>, %arg10: memref<256x512xbf16, #tpu.memory_space<any>>, %arg11: memref<256x512xbf16, #tpu.memory_space<any>>, %arg12: memref<8x128xf32, #tpu.memory_space<vmem>>, %arg13: memref<256x512xbf16, #tpu.memory_space<vmem>>, %arg14: memref<256x512xbf16, #tpu.memory_space<vmem>>, %arg15: memref<2x!tpu.dma_semaphore, #tpu.memory_space<semaphore_mem>>) attributes {dimension_semantics = [], scalar_prefetch = 0 : i64, scratch_operands = 3 : i64, tpu.core_type = #tpu.core_type<tc>} {
    %c0_i32 = arith.constant 0 : i32
    %0 = tpu.memref_slice %arg15[%c0_i32] : memref<2x!tpu.dma_semaphore, #tpu.memory_space<semaphore_mem>> -> memref<1x!tpu.dma_semaphore, #tpu.memory_space<semaphore_mem>>
    %1 = tpu.memref_squeeze %0 : memref<1x!tpu.dma_semaphore, #tpu.memory_space<semaphore_mem>> -> memref<!tpu.dma_semaphore, #tpu.memory_space<semaphore_mem>>
    tpu.enqueue_dma source(%arg10 : memref<256x512xbf16, #tpu.memory_space<any>>) target(%arg13 : memref<256x512xbf16, #tpu.memory_space<vmem>>) target_semaphore(%1 : memref<!tpu.dma_semaphore, #tpu.memory_space<semaphore_mem>>)
    %c1_i32 = arith.constant 1 : i32
    %2 = tpu.memref_slice %arg15[%c1_i32] : memref<2x!tpu.dma_semaphore, #tpu.memory_space<semaphore_mem>> -> memref<1x!tpu.dma_semaphore, #tpu.memory_space<semaphore_mem>>
    %3 = tpu.memref_squeeze %2 : memref<1x!tpu.dma_semaphore, #tpu.memory_space<semaphore_mem>> -> memref<!tpu.dma_semaphore, #tpu.memory_space<semaphore_mem>>
    tpu.enqueue_dma source(%arg11 : memref<256x512xbf16, #tpu.memory_space<any>>) target(%arg14 : memref<256x512xbf16, #tpu.memory_space<vmem>>) target_semaphore(%3 : memref<!tpu.dma_semaphore, #tpu.memory_space<semaphore_mem>>)
    %c0 = arith.constant 0 : index
    %c0_0 = arith.constant 0 : index
    %4 = vector.load %arg3[%c0, %c0_0] : memref<256x1024xbf16, #tpu.memory_space<vmem>>, vector<256x1024xbf16>
    %c0_1 = arith.constant 0 : index
    %c0_2 = arith.constant 0 : index
    %5 = vector.load %arg8[%c0_1, %c0_2] : memref<128x128xbf16, #tpu.memory_space<vmem>>, vector<128x128xbf16>
    %c0_3 = arith.constant 0 : index
    %c0_4 = arith.constant 0 : index
    %6 = vector.load %arg4[%c0_3, %c0_4] : memref<1x512xf32, #tpu.memory_space<vmem>>, vector<1x512xf32>
    %7 = vector.shape_cast %6 : vector<1x512xf32> to vector<1x512xf32>
    %8 = vector.broadcast %7 : vector<1x512xf32> to vector<2x512xf32>
    %c0_5 = arith.constant 0 : index
    %c0_6 = arith.constant 0 : index
    %9 = vector.load %arg6[%c0_5, %c0_6] : memref<1x512xf32, #tpu.memory_space<vmem>>, vector<1x512xf32>
    %10 = vector.shape_cast %9 : vector<1x512xf32> to vector<1x512xf32>
    %11 = vector.broadcast %10 : vector<1x512xf32> to vector<2x512xf32>
    %c0_7 = arith.constant 0 : index
    %c0_8 = arith.constant 0 : index
    %12 = vector.load %arg7[%c0_7, %c0_8] : memref<1x512xf32, #tpu.memory_space<vmem>>, vector<1x512xf32>
    %13 = vector.shape_cast %12 : vector<1x512xf32> to vector<1x512xf32>
    %14 = vector.broadcast %13 : vector<1x512xf32> to vector<2x512xf32>
    %c0_9 = arith.constant 0 : index
    %c0_10 = arith.constant 0 : index
    %15 = vector.load %arg9[%c0_9, %c0_10] : memref<1x128xf32, #tpu.memory_space<vmem>>, vector<1x128xf32>
    %16 = vector.shape_cast %15 : vector<1x128xf32> to vector<1x128xf32>
    %17 = vector.broadcast %16 : vector<1x128xf32> to vector<8x128xf32>
    %c0_11 = arith.constant 0 : index
    %c0_12 = arith.constant 0 : index
    %18 = vector.load %arg0[%c0_11, %c0_12] : memref<16x4xbf16, #tpu.memory_space<vmem>>, vector<16x4xbf16>
    %c0_13 = arith.constant 0 : index
    %c0_14 = arith.constant 0 : index
    %19 = vector.load %arg1[%c0_13, %c0_14] : memref<4x512xbf16, #tpu.memory_space<vmem>>, vector<4x512xbf16>
    %cst = arith.constant dense<0.000000e+00> : vector<16x512xf32>
    %20 = tpu.matmul %18, %19, %cst {dimension_numbers = #tpu.dot_dimension_numbers<[1], [0], [0], [1], [0, 0, 1, 1], [], []>} : vector<16x4xbf16>, vector<4x512xbf16>, vector<16x512xf32> -> vector<16x512xf32>
    %c0_15 = arith.constant 0 : index
    %c0_16 = arith.constant 0 : index
    %21 = vector.load %arg2[%c0_15, %c0_16] : memref<1x512xf32, #tpu.memory_space<vmem>>, vector<1x512xf32>
    %22 = vector.broadcast %21 : vector<1x512xf32> to vector<16x512xf32>
    %23 = arith.addf %20, %22 : vector<16x512xf32>
    %cst_17 = arith.constant 0.000000e+00 : f32
    %24 = vector.broadcast %cst_17 : f32 to vector<2x128xf32>
    %25 = vector.extract_strided_slice %23 {offsets = [0, 0], sizes = [2, 512], strides = [1, 1]} : vector<16x512xf32> to vector<2x512xf32>
    %26 = vector.extract_strided_slice %25 {offsets = [0, 0], sizes = [2, 384], strides = [1, 1]} : vector<2x512xf32> to vector<2x384xf32>
    %27 = arith.negf %26 : vector<2x384xf32>
    %28 = math.exp %27 : vector<2x384xf32>
    %cst_18 = arith.constant 1.000000e+00 : f32
    %29 = vector.broadcast %cst_18 : f32 to vector<2x384xf32>
    %30 = arith.addf %29, %28 : vector<2x384xf32>
    %31 = arith.divf %29, %30 : vector<2x384xf32>
    %32 = vector.extract_strided_slice %25 {offsets = [0, 384], sizes = [2, 128], strides = [1, 1]} : vector<2x512xf32> to vector<2x128xf32>
    %33 = math.tanh %32 : vector<2x128xf32>
    %34 = vector.extract_strided_slice %31 {offsets = [0, 0], sizes = [2, 128], strides = [1, 1]} : vector<2x384xf32> to vector<2x128xf32>
    %35 = vector.extract_strided_slice %31 {offsets = [0, 128], sizes = [2, 128], strides = [1, 1]} : vector<2x384xf32> to vector<2x128xf32>
    %36 = vector.extract_strided_slice %31 {offsets = [0, 256], sizes = [2, 128], strides = [1, 1]} : vector<2x384xf32> to vector<2x128xf32>
    %37 = arith.mulf %35, %24 : vector<2x128xf32>
    %38 = arith.mulf %34, %33 : vector<2x128xf32>
    %39 = arith.addf %37, %38 : vector<2x128xf32>
    %40 = math.tanh %39 : vector<2x128xf32>
    %41 = arith.mulf %36, %40 : vector<2x128xf32>
    %42 = arith.truncf %41 : vector<2x128xf32> to vector<2x128xbf16>
    %43 = vector.extract_strided_slice %4 {offsets = [0, 0], sizes = [128, 1024], strides = [1, 1]} : vector<256x1024xbf16> to vector<128x1024xbf16>
    %cst_19 = arith.constant dense<0.000000e+00> : vector<2x1024xf32>
    %44 = tpu.matmul %42, %43, %cst_19 {dimension_numbers = #tpu.dot_dimension_numbers<[1], [0], [0], [1], [0, 0, 1, 1], [], []>} : vector<2x128xbf16>, vector<128x1024xbf16>, vector<2x1024xf32> -> vector<2x1024xf32>
    %45 = vector.extract_strided_slice %44 {offsets = [0, 0], sizes = [2, 512], strides = [1, 1]} : vector<2x1024xf32> to vector<2x512xf32>
    %46 = vector.extract_strided_slice %44 {offsets = [0, 512], sizes = [2, 512], strides = [1, 1]} : vector<2x1024xf32> to vector<2x512xf32>
    %47 = arith.addf %46, %8 : vector<2x512xf32>
    %48 = vector.extract_strided_slice %47 {offsets = [0, 0], sizes = [2, 384], strides = [1, 1]} : vector<2x512xf32> to vector<2x384xf32>
    %49 = arith.negf %48 : vector<2x384xf32>
    %50 = math.exp %49 : vector<2x384xf32>
    %cst_20 = arith.constant 1.000000e+00 : f32
    %51 = vector.broadcast %cst_20 : f32 to vector<2x384xf32>
    %52 = arith.addf %51, %50 : vector<2x384xf32>
    %53 = arith.divf %51, %52 : vector<2x384xf32>
    %54 = vector.extract_strided_slice %47 {offsets = [0, 384], sizes = [2, 128], strides = [1, 1]} : vector<2x512xf32> to vector<2x128xf32>
    %55 = math.tanh %54 : vector<2x128xf32>
    %56 = vector.extract_strided_slice %53 {offsets = [0, 0], sizes = [2, 128], strides = [1, 1]} : vector<2x384xf32> to vector<2x128xf32>
    %57 = vector.extract_strided_slice %53 {offsets = [0, 128], sizes = [2, 128], strides = [1, 1]} : vector<2x384xf32> to vector<2x128xf32>
    %58 = vector.extract_strided_slice %53 {offsets = [0, 256], sizes = [2, 128], strides = [1, 1]} : vector<2x384xf32> to vector<2x128xf32>
    %59 = arith.mulf %57, %24 : vector<2x128xf32>
    %60 = arith.mulf %56, %55 : vector<2x128xf32>
    %61 = arith.addf %59, %60 : vector<2x128xf32>
    %62 = math.tanh %61 : vector<2x128xf32>
    %63 = arith.mulf %58, %62 : vector<2x128xf32>
    %64 = vector.extract_strided_slice %23 {offsets = [2, 0], sizes = [2, 512], strides = [1, 1]} : vector<16x512xf32> to vector<2x512xf32>
    %65 = arith.addf %64, %45 : vector<2x512xf32>
    %66 = vector.extract_strided_slice %65 {offsets = [0, 0], sizes = [2, 384], strides = [1, 1]} : vector<2x512xf32> to vector<2x384xf32>
    %67 = arith.negf %66 : vector<2x384xf32>
    %68 = math.exp %67 : vector<2x384xf32>
    %cst_21 = arith.constant 1.000000e+00 : f32
    %69 = vector.broadcast %cst_21 : f32 to vector<2x384xf32>
    %70 = arith.addf %69, %68 : vector<2x384xf32>
    %71 = arith.divf %69, %70 : vector<2x384xf32>
    %72 = vector.extract_strided_slice %65 {offsets = [0, 384], sizes = [2, 128], strides = [1, 1]} : vector<2x512xf32> to vector<2x128xf32>
    %73 = math.tanh %72 : vector<2x128xf32>
    %74 = vector.extract_strided_slice %71 {offsets = [0, 0], sizes = [2, 128], strides = [1, 1]} : vector<2x384xf32> to vector<2x128xf32>
    %75 = vector.extract_strided_slice %71 {offsets = [0, 128], sizes = [2, 128], strides = [1, 1]} : vector<2x384xf32> to vector<2x128xf32>
    %76 = vector.extract_strided_slice %71 {offsets = [0, 256], sizes = [2, 128], strides = [1, 1]} : vector<2x384xf32> to vector<2x128xf32>
    %77 = arith.mulf %75, %39 : vector<2x128xf32>
    %78 = arith.mulf %74, %73 : vector<2x128xf32>
    %79 = arith.addf %77, %78 : vector<2x128xf32>
    %80 = math.tanh %79 : vector<2x128xf32>
    %81 = arith.mulf %76, %80 : vector<2x128xf32>
    %82 = tpu.concatenate %81, %63 in 1 : vector<2x128xf32>, vector<2x128xf32> -> vector<2x256xf32>
    %83 = arith.truncf %82 : vector<2x256xf32> to vector<2x256xbf16>
    %cst_22 = arith.constant dense<0.000000e+00> : vector<2x1024xf32>
    %84 = tpu.matmul %83, %4, %cst_22 {dimension_numbers = #tpu.dot_dimension_numbers<[1], [0], [0], [1], [0, 0, 1, 1], [], []>} : vector<2x256xbf16>, vector<256x1024xbf16>, vector<2x1024xf32> -> vector<2x1024xf32>
    %85 = vector.extract_strided_slice %84 {offsets = [0, 0], sizes = [2, 512], strides = [1, 1]} : vector<2x1024xf32> to vector<2x512xf32>
    %86 = vector.extract_strided_slice %84 {offsets = [0, 512], sizes = [2, 512], strides = [1, 1]} : vector<2x1024xf32> to vector<2x512xf32>
    %87 = arith.addf %86, %8 : vector<2x512xf32>
    %88 = vector.extract_strided_slice %87 {offsets = [0, 0], sizes = [2, 384], strides = [1, 1]} : vector<2x512xf32> to vector<2x384xf32>
    %89 = arith.negf %88 : vector<2x384xf32>
    %90 = math.exp %89 : vector<2x384xf32>
    %cst_23 = arith.constant 1.000000e+00 : f32
    %91 = vector.broadcast %cst_23 : f32 to vector<2x384xf32>
    %92 = arith.addf %91, %90 : vector<2x384xf32>
    %93 = arith.divf %91, %92 : vector<2x384xf32>
    %94 = vector.extract_strided_slice %87 {offsets = [0, 384], sizes = [2, 128], strides = [1, 1]} : vector<2x512xf32> to vector<2x128xf32>
    %95 = math.tanh %94 : vector<2x128xf32>
    %96 = vector.extract_strided_slice %93 {offsets = [0, 0], sizes = [2, 128], strides = [1, 1]} : vector<2x384xf32> to vector<2x128xf32>
    %97 = vector.extract_strided_slice %93 {offsets = [0, 128], sizes = [2, 128], strides = [1, 1]} : vector<2x384xf32> to vector<2x128xf32>
    %98 = vector.extract_strided_slice %93 {offsets = [0, 256], sizes = [2, 128], strides = [1, 1]} : vector<2x384xf32> to vector<2x128xf32>
    %99 = arith.mulf %97, %61 : vector<2x128xf32>
    %100 = arith.mulf %96, %95 : vector<2x128xf32>
    %101 = arith.addf %99, %100 : vector<2x128xf32>
    %102 = math.tanh %101 : vector<2x128xf32>
    %103 = arith.mulf %98, %102 : vector<2x128xf32>
    %104 = vector.extract_strided_slice %23 {offsets = [4, 0], sizes = [2, 512], strides = [1, 1]} : vector<16x512xf32> to vector<2x512xf32>
    %105 = arith.addf %104, %85 : vector<2x512xf32>
    %106 = vector.extract_strided_slice %105 {offsets = [0, 0], sizes = [2, 384], strides = [1, 1]} : vector<2x512xf32> to vector<2x384xf32>
    %107 = arith.negf %106 : vector<2x384xf32>
    %108 = math.exp %107 : vector<2x384xf32>
    %cst_24 = arith.constant 1.000000e+00 : f32
    %109 = vector.broadcast %cst_24 : f32 to vector<2x384xf32>
    %110 = arith.addf %109, %108 : vector<2x384xf32>
    %111 = arith.divf %109, %110 : vector<2x384xf32>
    %112 = vector.extract_strided_slice %105 {offsets = [0, 384], sizes = [2, 128], strides = [1, 1]} : vector<2x512xf32> to vector<2x128xf32>
    %113 = math.tanh %112 : vector<2x128xf32>
    %114 = vector.extract_strided_slice %111 {offsets = [0, 0], sizes = [2, 128], strides = [1, 1]} : vector<2x384xf32> to vector<2x128xf32>
    %115 = vector.extract_strided_slice %111 {offsets = [0, 128], sizes = [2, 128], strides = [1, 1]} : vector<2x384xf32> to vector<2x128xf32>
    %116 = vector.extract_strided_slice %111 {offsets = [0, 256], sizes = [2, 128], strides = [1, 1]} : vector<2x384xf32> to vector<2x128xf32>
    %117 = arith.mulf %115, %79 : vector<2x128xf32>
    %118 = arith.mulf %114, %113 : vector<2x128xf32>
    %119 = arith.addf %117, %118 : vector<2x128xf32>
    %120 = math.tanh %119 : vector<2x128xf32>
    %121 = arith.mulf %116, %120 : vector<2x128xf32>
    %122 = tpu.concatenate %121, %103 in 1 : vector<2x128xf32>, vector<2x128xf32> -> vector<2x256xf32>
    %123 = arith.truncf %122 : vector<2x256xf32> to vector<2x256xbf16>
    %cst_25 = arith.constant dense<0.000000e+00> : vector<2x1024xf32>
    %124 = tpu.matmul %123, %4, %cst_25 {dimension_numbers = #tpu.dot_dimension_numbers<[1], [0], [0], [1], [0, 0, 1, 1], [], []>} : vector<2x256xbf16>, vector<256x1024xbf16>, vector<2x1024xf32> -> vector<2x1024xf32>
    %125 = vector.extract_strided_slice %124 {offsets = [0, 0], sizes = [2, 512], strides = [1, 1]} : vector<2x1024xf32> to vector<2x512xf32>
    %126 = vector.extract_strided_slice %124 {offsets = [0, 512], sizes = [2, 512], strides = [1, 1]} : vector<2x1024xf32> to vector<2x512xf32>
    %127 = arith.addf %126, %8 : vector<2x512xf32>
    %128 = vector.extract_strided_slice %127 {offsets = [0, 0], sizes = [2, 384], strides = [1, 1]} : vector<2x512xf32> to vector<2x384xf32>
    %129 = arith.negf %128 : vector<2x384xf32>
    %130 = math.exp %129 : vector<2x384xf32>
    %cst_26 = arith.constant 1.000000e+00 : f32
    %131 = vector.broadcast %cst_26 : f32 to vector<2x384xf32>
    %132 = arith.addf %131, %130 : vector<2x384xf32>
    %133 = arith.divf %131, %132 : vector<2x384xf32>
    %134 = vector.extract_strided_slice %127 {offsets = [0, 384], sizes = [2, 128], strides = [1, 1]} : vector<2x512xf32> to vector<2x128xf32>
    %135 = math.tanh %134 : vector<2x128xf32>
    %136 = vector.extract_strided_slice %133 {offsets = [0, 0], sizes = [2, 128], strides = [1, 1]} : vector<2x384xf32> to vector<2x128xf32>
    %137 = vector.extract_strided_slice %133 {offsets = [0, 128], sizes = [2, 128], strides = [1, 1]} : vector<2x384xf32> to vector<2x128xf32>
    %138 = vector.extract_strided_slice %133 {offsets = [0, 256], sizes = [2, 128], strides = [1, 1]} : vector<2x384xf32> to vector<2x128xf32>
    %139 = arith.mulf %137, %101 : vector<2x128xf32>
    %140 = arith.mulf %136, %135 : vector<2x128xf32>
    %141 = arith.addf %139, %140 : vector<2x128xf32>
    %142 = math.tanh %141 : vector<2x128xf32>
    %143 = arith.mulf %138, %142 : vector<2x128xf32>
    %144 = vector.extract_strided_slice %23 {offsets = [6, 0], sizes = [2, 512], strides = [1, 1]} : vector<16x512xf32> to vector<2x512xf32>
    %145 = arith.addf %144, %125 : vector<2x512xf32>
    %146 = vector.extract_strided_slice %145 {offsets = [0, 0], sizes = [2, 384], strides = [1, 1]} : vector<2x512xf32> to vector<2x384xf32>
    %147 = arith.negf %146 : vector<2x384xf32>
    %148 = math.exp %147 : vector<2x384xf32>
    %cst_27 = arith.constant 1.000000e+00 : f32
    %149 = vector.broadcast %cst_27 : f32 to vector<2x384xf32>
    %150 = arith.addf %149, %148 : vector<2x384xf32>
    %151 = arith.divf %149, %150 : vector<2x384xf32>
    %152 = vector.extract_strided_slice %145 {offsets = [0, 384], sizes = [2, 128], strides = [1, 1]} : vector<2x512xf32> to vector<2x128xf32>
    %153 = math.tanh %152 : vector<2x128xf32>
    %154 = vector.extract_strided_slice %151 {offsets = [0, 0], sizes = [2, 128], strides = [1, 1]} : vector<2x384xf32> to vector<2x128xf32>
    %155 = vector.extract_strided_slice %151 {offsets = [0, 128], sizes = [2, 128], strides = [1, 1]} : vector<2x384xf32> to vector<2x128xf32>
    %156 = vector.extract_strided_slice %151 {offsets = [0, 256], sizes = [2, 128], strides = [1, 1]} : vector<2x384xf32> to vector<2x128xf32>
    %157 = arith.mulf %155, %119 : vector<2x128xf32>
    %158 = arith.mulf %154, %153 : vector<2x128xf32>
    %159 = arith.addf %157, %158 : vector<2x128xf32>
    %160 = math.tanh %159 : vector<2x128xf32>
    %161 = arith.mulf %156, %160 : vector<2x128xf32>
    %162 = tpu.concatenate %161, %143 in 1 : vector<2x128xf32>, vector<2x128xf32> -> vector<2x256xf32>
    %163 = arith.truncf %162 : vector<2x256xf32> to vector<2x256xbf16>
    %cst_28 = arith.constant dense<0.000000e+00> : vector<2x1024xf32>
    %164 = tpu.matmul %163, %4, %cst_28 {dimension_numbers = #tpu.dot_dimension_numbers<[1], [0], [0], [1], [0, 0, 1, 1], [], []>} : vector<2x256xbf16>, vector<256x1024xbf16>, vector<2x1024xf32> -> vector<2x1024xf32>
    %165 = vector.extract_strided_slice %164 {offsets = [0, 0], sizes = [2, 512], strides = [1, 1]} : vector<2x1024xf32> to vector<2x512xf32>
    %166 = vector.extract_strided_slice %164 {offsets = [0, 512], sizes = [2, 512], strides = [1, 1]} : vector<2x1024xf32> to vector<2x512xf32>
    %167 = arith.addf %166, %8 : vector<2x512xf32>
    %168 = vector.extract_strided_slice %167 {offsets = [0, 0], sizes = [2, 384], strides = [1, 1]} : vector<2x512xf32> to vector<2x384xf32>
    %169 = arith.negf %168 : vector<2x384xf32>
    %170 = math.exp %169 : vector<2x384xf32>
    %cst_29 = arith.constant 1.000000e+00 : f32
    %171 = vector.broadcast %cst_29 : f32 to vector<2x384xf32>
    %172 = arith.addf %171, %170 : vector<2x384xf32>
    %173 = arith.divf %171, %172 : vector<2x384xf32>
    %174 = vector.extract_strided_slice %167 {offsets = [0, 384], sizes = [2, 128], strides = [1, 1]} : vector<2x512xf32> to vector<2x128xf32>
    %175 = math.tanh %174 : vector<2x128xf32>
    %176 = vector.extract_strided_slice %173 {offsets = [0, 0], sizes = [2, 128], strides = [1, 1]} : vector<2x384xf32> to vector<2x128xf32>
    %177 = vector.extract_strided_slice %173 {offsets = [0, 128], sizes = [2, 128], strides = [1, 1]} : vector<2x384xf32> to vector<2x128xf32>
    %178 = vector.extract_strided_slice %173 {offsets = [0, 256], sizes = [2, 128], strides = [1, 1]} : vector<2x384xf32> to vector<2x128xf32>
    %179 = arith.mulf %177, %141 : vector<2x128xf32>
    %180 = arith.mulf %176, %175 : vector<2x128xf32>
    %181 = arith.addf %179, %180 : vector<2x128xf32>
    %182 = math.tanh %181 : vector<2x128xf32>
    %183 = arith.mulf %178, %182 : vector<2x128xf32>
    %184 = vector.extract_strided_slice %23 {offsets = [8, 0], sizes = [2, 512], strides = [1, 1]} : vector<16x512xf32> to vector<2x512xf32>
    %185 = arith.addf %184, %165 : vector<2x512xf32>
    %186 = vector.extract_strided_slice %185 {offsets = [0, 0], sizes = [2, 384], strides = [1, 1]} : vector<2x512xf32> to vector<2x384xf32>
    %187 = arith.negf %186 : vector<2x384xf32>
    %188 = math.exp %187 : vector<2x384xf32>
    %cst_30 = arith.constant 1.000000e+00 : f32
    %189 = vector.broadcast %cst_30 : f32 to vector<2x384xf32>
    %190 = arith.addf %189, %188 : vector<2x384xf32>
    %191 = arith.divf %189, %190 : vector<2x384xf32>
    %192 = vector.extract_strided_slice %185 {offsets = [0, 384], sizes = [2, 128], strides = [1, 1]} : vector<2x512xf32> to vector<2x128xf32>
    %193 = math.tanh %192 : vector<2x128xf32>
    %194 = vector.extract_strided_slice %191 {offsets = [0, 0], sizes = [2, 128], strides = [1, 1]} : vector<2x384xf32> to vector<2x128xf32>
    %195 = vector.extract_strided_slice %191 {offsets = [0, 128], sizes = [2, 128], strides = [1, 1]} : vector<2x384xf32> to vector<2x128xf32>
    %196 = vector.extract_strided_slice %191 {offsets = [0, 256], sizes = [2, 128], strides = [1, 1]} : vector<2x384xf32> to vector<2x128xf32>
    %197 = arith.mulf %195, %159 : vector<2x128xf32>
    %198 = arith.mulf %194, %193 : vector<2x128xf32>
    %199 = arith.addf %197, %198 : vector<2x128xf32>
    %200 = math.tanh %199 : vector<2x128xf32>
    %201 = arith.mulf %196, %200 : vector<2x128xf32>
    %202 = tpu.concatenate %201, %183 in 1 : vector<2x128xf32>, vector<2x128xf32> -> vector<2x256xf32>
    %203 = arith.truncf %202 : vector<2x256xf32> to vector<2x256xbf16>
    %cst_31 = arith.constant dense<0.000000e+00> : vector<2x1024xf32>
    %204 = tpu.matmul %203, %4, %cst_31 {dimension_numbers = #tpu.dot_dimension_numbers<[1], [0], [0], [1], [0, 0, 1, 1], [], []>} : vector<2x256xbf16>, vector<256x1024xbf16>, vector<2x1024xf32> -> vector<2x1024xf32>
    %205 = vector.extract_strided_slice %204 {offsets = [0, 0], sizes = [2, 512], strides = [1, 1]} : vector<2x1024xf32> to vector<2x512xf32>
    %206 = vector.extract_strided_slice %204 {offsets = [0, 512], sizes = [2, 512], strides = [1, 1]} : vector<2x1024xf32> to vector<2x512xf32>
    %207 = arith.addf %206, %8 : vector<2x512xf32>
    %208 = vector.extract_strided_slice %207 {offsets = [0, 0], sizes = [2, 384], strides = [1, 1]} : vector<2x512xf32> to vector<2x384xf32>
    %209 = arith.negf %208 : vector<2x384xf32>
    %210 = math.exp %209 : vector<2x384xf32>
    %cst_32 = arith.constant 1.000000e+00 : f32
    %211 = vector.broadcast %cst_32 : f32 to vector<2x384xf32>
    %212 = arith.addf %211, %210 : vector<2x384xf32>
    %213 = arith.divf %211, %212 : vector<2x384xf32>
    %214 = vector.extract_strided_slice %207 {offsets = [0, 384], sizes = [2, 128], strides = [1, 1]} : vector<2x512xf32> to vector<2x128xf32>
    %215 = math.tanh %214 : vector<2x128xf32>
    %216 = vector.extract_strided_slice %213 {offsets = [0, 0], sizes = [2, 128], strides = [1, 1]} : vector<2x384xf32> to vector<2x128xf32>
    %217 = vector.extract_strided_slice %213 {offsets = [0, 128], sizes = [2, 128], strides = [1, 1]} : vector<2x384xf32> to vector<2x128xf32>
    %218 = vector.extract_strided_slice %213 {offsets = [0, 256], sizes = [2, 128], strides = [1, 1]} : vector<2x384xf32> to vector<2x128xf32>
    %219 = arith.mulf %217, %181 : vector<2x128xf32>
    %220 = arith.mulf %216, %215 : vector<2x128xf32>
    %221 = arith.addf %219, %220 : vector<2x128xf32>
    %222 = math.tanh %221 : vector<2x128xf32>
    %223 = arith.mulf %218, %222 : vector<2x128xf32>
    %224 = vector.extract_strided_slice %23 {offsets = [10, 0], sizes = [2, 512], strides = [1, 1]} : vector<16x512xf32> to vector<2x512xf32>
    %225 = arith.addf %224, %205 : vector<2x512xf32>
    %226 = vector.extract_strided_slice %225 {offsets = [0, 0], sizes = [2, 384], strides = [1, 1]} : vector<2x512xf32> to vector<2x384xf32>
    %227 = arith.negf %226 : vector<2x384xf32>
    %228 = math.exp %227 : vector<2x384xf32>
    %cst_33 = arith.constant 1.000000e+00 : f32
    %229 = vector.broadcast %cst_33 : f32 to vector<2x384xf32>
    %230 = arith.addf %229, %228 : vector<2x384xf32>
    %231 = arith.divf %229, %230 : vector<2x384xf32>
    %232 = vector.extract_strided_slice %225 {offsets = [0, 384], sizes = [2, 128], strides = [1, 1]} : vector<2x512xf32> to vector<2x128xf32>
    %233 = math.tanh %232 : vector<2x128xf32>
    %234 = vector.extract_strided_slice %231 {offsets = [0, 0], sizes = [2, 128], strides = [1, 1]} : vector<2x384xf32> to vector<2x128xf32>
    %235 = vector.extract_strided_slice %231 {offsets = [0, 128], sizes = [2, 128], strides = [1, 1]} : vector<2x384xf32> to vector<2x128xf32>
    %236 = vector.extract_strided_slice %231 {offsets = [0, 256], sizes = [2, 128], strides = [1, 1]} : vector<2x384xf32> to vector<2x128xf32>
    %237 = arith.mulf %235, %199 : vector<2x128xf32>
    %238 = arith.mulf %234, %233 : vector<2x128xf32>
    %239 = arith.addf %237, %238 : vector<2x128xf32>
    %240 = math.tanh %239 : vector<2x128xf32>
    %241 = arith.mulf %236, %240 : vector<2x128xf32>
    %242 = tpu.concatenate %241, %223 in 1 : vector<2x128xf32>, vector<2x128xf32> -> vector<2x256xf32>
    %243 = arith.truncf %242 : vector<2x256xf32> to vector<2x256xbf16>
    %cst_34 = arith.constant dense<0.000000e+00> : vector<2x1024xf32>
    %244 = tpu.matmul %243, %4, %cst_34 {dimension_numbers = #tpu.dot_dimension_numbers<[1], [0], [0], [1], [0, 0, 1, 1], [], []>} : vector<2x256xbf16>, vector<256x1024xbf16>, vector<2x1024xf32> -> vector<2x1024xf32>
    %245 = vector.extract_strided_slice %244 {offsets = [0, 0], sizes = [2, 512], strides = [1, 1]} : vector<2x1024xf32> to vector<2x512xf32>
    %246 = vector.extract_strided_slice %244 {offsets = [0, 512], sizes = [2, 512], strides = [1, 1]} : vector<2x1024xf32> to vector<2x512xf32>
    %247 = arith.addf %246, %8 : vector<2x512xf32>
    %248 = vector.extract_strided_slice %247 {offsets = [0, 0], sizes = [2, 384], strides = [1, 1]} : vector<2x512xf32> to vector<2x384xf32>
    %249 = arith.negf %248 : vector<2x384xf32>
    %250 = math.exp %249 : vector<2x384xf32>
    %cst_35 = arith.constant 1.000000e+00 : f32
    %251 = vector.broadcast %cst_35 : f32 to vector<2x384xf32>
    %252 = arith.addf %251, %250 : vector<2x384xf32>
    %253 = arith.divf %251, %252 : vector<2x384xf32>
    %254 = vector.extract_strided_slice %247 {offsets = [0, 384], sizes = [2, 128], strides = [1, 1]} : vector<2x512xf32> to vector<2x128xf32>
    %255 = math.tanh %254 : vector<2x128xf32>
    %256 = vector.extract_strided_slice %253 {offsets = [0, 0], sizes = [2, 128], strides = [1, 1]} : vector<2x384xf32> to vector<2x128xf32>
    %257 = vector.extract_strided_slice %253 {offsets = [0, 128], sizes = [2, 128], strides = [1, 1]} : vector<2x384xf32> to vector<2x128xf32>
    %258 = vector.extract_strided_slice %253 {offsets = [0, 256], sizes = [2, 128], strides = [1, 1]} : vector<2x384xf32> to vector<2x128xf32>
    %259 = arith.mulf %257, %221 : vector<2x128xf32>
    %260 = arith.mulf %256, %255 : vector<2x128xf32>
    %261 = arith.addf %259, %260 : vector<2x128xf32>
    %262 = math.tanh %261 : vector<2x128xf32>
    %263 = arith.mulf %258, %262 : vector<2x128xf32>
    %264 = vector.extract_strided_slice %23 {offsets = [12, 0], sizes = [2, 512], strides = [1, 1]} : vector<16x512xf32> to vector<2x512xf32>
    %265 = arith.addf %264, %245 : vector<2x512xf32>
    %266 = vector.extract_strided_slice %265 {offsets = [0, 0], sizes = [2, 384], strides = [1, 1]} : vector<2x512xf32> to vector<2x384xf32>
    %267 = arith.negf %266 : vector<2x384xf32>
    %268 = math.exp %267 : vector<2x384xf32>
    %cst_36 = arith.constant 1.000000e+00 : f32
    %269 = vector.broadcast %cst_36 : f32 to vector<2x384xf32>
    %270 = arith.addf %269, %268 : vector<2x384xf32>
    %271 = arith.divf %269, %270 : vector<2x384xf32>
    %272 = vector.extract_strided_slice %265 {offsets = [0, 384], sizes = [2, 128], strides = [1, 1]} : vector<2x512xf32> to vector<2x128xf32>
    %273 = math.tanh %272 : vector<2x128xf32>
    %274 = vector.extract_strided_slice %271 {offsets = [0, 0], sizes = [2, 128], strides = [1, 1]} : vector<2x384xf32> to vector<2x128xf32>
    %275 = vector.extract_strided_slice %271 {offsets = [0, 128], sizes = [2, 128], strides = [1, 1]} : vector<2x384xf32> to vector<2x128xf32>
    %276 = vector.extract_strided_slice %271 {offsets = [0, 256], sizes = [2, 128], strides = [1, 1]} : vector<2x384xf32> to vector<2x128xf32>
    %277 = arith.mulf %275, %239 : vector<2x128xf32>
    %278 = arith.mulf %274, %273 : vector<2x128xf32>
    %279 = arith.addf %277, %278 : vector<2x128xf32>
    %280 = math.tanh %279 : vector<2x128xf32>
    %281 = arith.mulf %276, %280 : vector<2x128xf32>
    %282 = tpu.concatenate %281, %263 in 1 : vector<2x128xf32>, vector<2x128xf32> -> vector<2x256xf32>
    %283 = arith.truncf %282 : vector<2x256xf32> to vector<2x256xbf16>
    %cst_37 = arith.constant dense<0.000000e+00> : vector<2x1024xf32>
    %284 = tpu.matmul %283, %4, %cst_37 {dimension_numbers = #tpu.dot_dimension_numbers<[1], [0], [0], [1], [0, 0, 1, 1], [], []>} : vector<2x256xbf16>, vector<256x1024xbf16>, vector<2x1024xf32> -> vector<2x1024xf32>
    %285 = vector.extract_strided_slice %284 {offsets = [0, 0], sizes = [2, 512], strides = [1, 1]} : vector<2x1024xf32> to vector<2x512xf32>
    %286 = vector.extract_strided_slice %284 {offsets = [0, 512], sizes = [2, 512], strides = [1, 1]} : vector<2x1024xf32> to vector<2x512xf32>
    %287 = arith.addf %286, %8 : vector<2x512xf32>
    %288 = vector.extract_strided_slice %287 {offsets = [0, 0], sizes = [2, 384], strides = [1, 1]} : vector<2x512xf32> to vector<2x384xf32>
    %289 = arith.negf %288 : vector<2x384xf32>
    %290 = math.exp %289 : vector<2x384xf32>
    %cst_38 = arith.constant 1.000000e+00 : f32
    %291 = vector.broadcast %cst_38 : f32 to vector<2x384xf32>
    %292 = arith.addf %291, %290 : vector<2x384xf32>
    %293 = arith.divf %291, %292 : vector<2x384xf32>
    %294 = vector.extract_strided_slice %287 {offsets = [0, 384], sizes = [2, 128], strides = [1, 1]} : vector<2x512xf32> to vector<2x128xf32>
    %295 = math.tanh %294 : vector<2x128xf32>
    %296 = vector.extract_strided_slice %293 {offsets = [0, 0], sizes = [2, 128], strides = [1, 1]} : vector<2x384xf32> to vector<2x128xf32>
    %297 = vector.extract_strided_slice %293 {offsets = [0, 128], sizes = [2, 128], strides = [1, 1]} : vector<2x384xf32> to vector<2x128xf32>
    %298 = vector.extract_strided_slice %293 {offsets = [0, 256], sizes = [2, 128], strides = [1, 1]} : vector<2x384xf32> to vector<2x128xf32>
    %299 = arith.mulf %297, %261 : vector<2x128xf32>
    %300 = arith.mulf %296, %295 : vector<2x128xf32>
    %301 = arith.addf %299, %300 : vector<2x128xf32>
    %302 = math.tanh %301 : vector<2x128xf32>
    %303 = arith.mulf %298, %302 : vector<2x128xf32>
    %304 = vector.extract_strided_slice %23 {offsets = [14, 0], sizes = [2, 512], strides = [1, 1]} : vector<16x512xf32> to vector<2x512xf32>
    %305 = arith.addf %304, %285 : vector<2x512xf32>
    %306 = vector.extract_strided_slice %305 {offsets = [0, 0], sizes = [2, 384], strides = [1, 1]} : vector<2x512xf32> to vector<2x384xf32>
    %307 = arith.negf %306 : vector<2x384xf32>
    %308 = math.exp %307 : vector<2x384xf32>
    %cst_39 = arith.constant 1.000000e+00 : f32
    %309 = vector.broadcast %cst_39 : f32 to vector<2x384xf32>
    %310 = arith.addf %309, %308 : vector<2x384xf32>
    %311 = arith.divf %309, %310 : vector<2x384xf32>
    %312 = vector.extract_strided_slice %305 {offsets = [0, 384], sizes = [2, 128], strides = [1, 1]} : vector<2x512xf32> to vector<2x128xf32>
    %313 = math.tanh %312 : vector<2x128xf32>
    %314 = vector.extract_strided_slice %311 {offsets = [0, 0], sizes = [2, 128], strides = [1, 1]} : vector<2x384xf32> to vector<2x128xf32>
    %315 = vector.extract_strided_slice %311 {offsets = [0, 128], sizes = [2, 128], strides = [1, 1]} : vector<2x384xf32> to vector<2x128xf32>
    %316 = vector.extract_strided_slice %311 {offsets = [0, 256], sizes = [2, 128], strides = [1, 1]} : vector<2x384xf32> to vector<2x128xf32>
    %317 = arith.mulf %315, %279 : vector<2x128xf32>
    %318 = arith.mulf %314, %313 : vector<2x128xf32>
    %319 = arith.addf %317, %318 : vector<2x128xf32>
    %320 = math.tanh %319 : vector<2x128xf32>
    %321 = arith.mulf %316, %320 : vector<2x128xf32>
    %322 = tpu.concatenate %321, %303 in 1 : vector<2x128xf32>, vector<2x128xf32> -> vector<2x256xf32>
    %323 = arith.truncf %322 : vector<2x256xf32> to vector<2x256xbf16>
    %cst_40 = arith.constant dense<0.000000e+00> : vector<2x1024xf32>
    %324 = tpu.matmul %323, %4, %cst_40 {dimension_numbers = #tpu.dot_dimension_numbers<[1], [0], [0], [1], [0, 0, 1, 1], [], []>} : vector<2x256xbf16>, vector<256x1024xbf16>, vector<2x1024xf32> -> vector<2x1024xf32>
    %325 = vector.extract_strided_slice %324 {offsets = [0, 512], sizes = [2, 512], strides = [1, 1]} : vector<2x1024xf32> to vector<2x512xf32>
    %326 = arith.addf %325, %8 : vector<2x512xf32>
    %327 = vector.extract_strided_slice %326 {offsets = [0, 0], sizes = [2, 384], strides = [1, 1]} : vector<2x512xf32> to vector<2x384xf32>
    %328 = arith.negf %327 : vector<2x384xf32>
    %329 = math.exp %328 : vector<2x384xf32>
    %cst_41 = arith.constant 1.000000e+00 : f32
    %330 = vector.broadcast %cst_41 : f32 to vector<2x384xf32>
    %331 = arith.addf %330, %329 : vector<2x384xf32>
    %332 = arith.divf %330, %331 : vector<2x384xf32>
    %333 = vector.extract_strided_slice %326 {offsets = [0, 384], sizes = [2, 128], strides = [1, 1]} : vector<2x512xf32> to vector<2x128xf32>
    %334 = math.tanh %333 : vector<2x128xf32>
    %335 = vector.extract_strided_slice %332 {offsets = [0, 0], sizes = [2, 128], strides = [1, 1]} : vector<2x384xf32> to vector<2x128xf32>
    %336 = vector.extract_strided_slice %332 {offsets = [0, 128], sizes = [2, 128], strides = [1, 1]} : vector<2x384xf32> to vector<2x128xf32>
    %337 = vector.extract_strided_slice %332 {offsets = [0, 256], sizes = [2, 128], strides = [1, 1]} : vector<2x384xf32> to vector<2x128xf32>
    %338 = arith.mulf %336, %301 : vector<2x128xf32>
    %339 = arith.mulf %335, %334 : vector<2x128xf32>
    %340 = arith.addf %338, %339 : vector<2x128xf32>
    %341 = math.tanh %340 : vector<2x128xf32>
    %342 = arith.mulf %337, %341 : vector<2x128xf32>
    %c0_i32_42 = arith.constant 0 : i32
    %343 = tpu.memref_slice %arg15[%c0_i32_42] : memref<2x!tpu.dma_semaphore, #tpu.memory_space<semaphore_mem>> -> memref<1x!tpu.dma_semaphore, #tpu.memory_space<semaphore_mem>>
    %344 = tpu.memref_squeeze %343 : memref<1x!tpu.dma_semaphore, #tpu.memory_space<semaphore_mem>> -> memref<!tpu.dma_semaphore, #tpu.memory_space<semaphore_mem>>
    tpu.wait_dma2 semaphore(%344 : memref<!tpu.dma_semaphore, #tpu.memory_space<semaphore_mem>>) src(%arg10 : memref<256x512xbf16, #tpu.memory_space<any>>) dst(%arg13 : memref<256x512xbf16, #tpu.memory_space<vmem>>)
    %c1_i32_43 = arith.constant 1 : i32
    %345 = tpu.memref_slice %arg15[%c1_i32_43] : memref<2x!tpu.dma_semaphore, #tpu.memory_space<semaphore_mem>> -> memref<1x!tpu.dma_semaphore, #tpu.memory_space<semaphore_mem>>
    %346 = tpu.memref_squeeze %345 : memref<1x!tpu.dma_semaphore, #tpu.memory_space<semaphore_mem>> -> memref<!tpu.dma_semaphore, #tpu.memory_space<semaphore_mem>>
    tpu.wait_dma2 semaphore(%346 : memref<!tpu.dma_semaphore, #tpu.memory_space<semaphore_mem>>) src(%arg11 : memref<256x512xbf16, #tpu.memory_space<any>>) dst(%arg14 : memref<256x512xbf16, #tpu.memory_space<vmem>>)
    %c0_44 = arith.constant 0 : index
    %c0_45 = arith.constant 0 : index
    %347 = vector.load %arg13[%c0_44, %c0_45] : memref<256x512xbf16, #tpu.memory_space<vmem>>, vector<256x512xbf16>
    %c0_46 = arith.constant 0 : index
    %c0_47 = arith.constant 0 : index
    %348 = vector.load %arg14[%c0_46, %c0_47] : memref<256x512xbf16, #tpu.memory_space<vmem>>, vector<256x512xbf16>
    %c0_48 = arith.constant 0 : index
    %c0_49 = arith.constant 0 : index
    %349 = vector.load %arg5[%c0_48, %c0_49] : memref<2x512xf32, #tpu.memory_space<vmem>>, vector<2x512xf32>
    %cst_50 = arith.constant 0.000000e+00 : bf16
    %350 = vector.broadcast %cst_50 : bf16 to vector<2x128xbf16>
    %351 = arith.truncf %321 : vector<2x128xf32> to vector<2x128xbf16>
    %352 = tpu.concatenate %351, %350 in 1 : vector<2x128xbf16>, vector<2x128xbf16> -> vector<2x256xbf16>
    %cst_51 = arith.constant dense<0.000000e+00> : vector<2x512xf32>
    %353 = tpu.matmul %352, %347, %cst_51 {dimension_numbers = #tpu.dot_dimension_numbers<[1], [0], [0], [1], [0, 0, 1, 1], [], []>} : vector<2x256xbf16>, vector<256x512xbf16>, vector<2x512xf32> -> vector<2x512xf32>
    %354 = arith.addf %353, %349 : vector<2x512xf32>
    %355 = vector.extract_strided_slice %354 {offsets = [0, 0], sizes = [2, 384], strides = [1, 1]} : vector<2x512xf32> to vector<2x384xf32>
    %356 = arith.negf %355 : vector<2x384xf32>
    %357 = math.exp %356 : vector<2x384xf32>
    %cst_52 = arith.constant 1.000000e+00 : f32
    %358 = vector.broadcast %cst_52 : f32 to vector<2x384xf32>
    %359 = arith.addf %358, %357 : vector<2x384xf32>
    %360 = arith.divf %358, %359 : vector<2x384xf32>
    %361 = vector.extract_strided_slice %354 {offsets = [0, 384], sizes = [2, 128], strides = [1, 1]} : vector<2x512xf32> to vector<2x128xf32>
    %362 = math.tanh %361 : vector<2x128xf32>
    %363 = vector.extract_strided_slice %360 {offsets = [0, 0], sizes = [2, 128], strides = [1, 1]} : vector<2x384xf32> to vector<2x128xf32>
    %364 = vector.extract_strided_slice %360 {offsets = [0, 128], sizes = [2, 128], strides = [1, 1]} : vector<2x384xf32> to vector<2x128xf32>
    %365 = vector.extract_strided_slice %360 {offsets = [0, 256], sizes = [2, 128], strides = [1, 1]} : vector<2x384xf32> to vector<2x128xf32>
    %366 = arith.mulf %364, %319 : vector<2x128xf32>
    %367 = arith.mulf %363, %362 : vector<2x128xf32>
    %368 = arith.addf %366, %367 : vector<2x128xf32>
    %369 = math.tanh %368 : vector<2x128xf32>
    %370 = arith.mulf %365, %369 : vector<2x128xf32>
    %371 = tpu.concatenate %370, %342 in 1 : vector<2x128xf32>, vector<2x128xf32> -> vector<2x256xf32>
    %372 = arith.truncf %371 : vector<2x256xf32> to vector<2x256xbf16>
    %cst_53 = arith.constant dense<0.000000e+00> : vector<2x512xf32>
    %373 = tpu.matmul %372, %348, %cst_53 {dimension_numbers = #tpu.dot_dimension_numbers<[1], [0], [0], [1], [0, 0, 1, 1], [], []>} : vector<2x256xbf16>, vector<256x512xbf16>, vector<2x512xf32> -> vector<2x512xf32>
    %374 = arith.addf %373, %14 : vector<2x512xf32>
    %375 = vector.extract_strided_slice %374 {offsets = [0, 0], sizes = [2, 384], strides = [1, 1]} : vector<2x512xf32> to vector<2x384xf32>
    %376 = arith.negf %375 : vector<2x384xf32>
    %377 = math.exp %376 : vector<2x384xf32>
    %cst_54 = arith.constant 1.000000e+00 : f32
    %378 = vector.broadcast %cst_54 : f32 to vector<2x384xf32>
    %379 = arith.addf %378, %377 : vector<2x384xf32>
    %380 = arith.divf %378, %379 : vector<2x384xf32>
    %381 = vector.extract_strided_slice %374 {offsets = [0, 384], sizes = [2, 128], strides = [1, 1]} : vector<2x512xf32> to vector<2x128xf32>
    %382 = math.tanh %381 : vector<2x128xf32>
    %383 = vector.extract_strided_slice %380 {offsets = [0, 0], sizes = [2, 128], strides = [1, 1]} : vector<2x384xf32> to vector<2x128xf32>
    %384 = vector.extract_strided_slice %380 {offsets = [0, 128], sizes = [2, 128], strides = [1, 1]} : vector<2x384xf32> to vector<2x128xf32>
    %385 = vector.extract_strided_slice %380 {offsets = [0, 256], sizes = [2, 128], strides = [1, 1]} : vector<2x384xf32> to vector<2x128xf32>
    %386 = arith.mulf %384, %340 : vector<2x128xf32>
    %387 = arith.mulf %383, %382 : vector<2x128xf32>
    %388 = arith.addf %386, %387 : vector<2x128xf32>
    %389 = math.tanh %388 : vector<2x128xf32>
    %390 = arith.mulf %385, %389 : vector<2x128xf32>
    %391 = arith.truncf %390 : vector<2x128xf32> to vector<2x128xbf16>
    %392 = arith.truncf %370 : vector<2x128xf32> to vector<2x128xbf16>
    %393 = tpu.concatenate %392, %391 in 1 : vector<2x128xbf16>, vector<2x128xbf16> -> vector<2x256xbf16>
    %cst_55 = arith.constant dense<0.000000e+00> : vector<2x512xf32>
    %394 = tpu.matmul %393, %347, %cst_55 {dimension_numbers = #tpu.dot_dimension_numbers<[1], [0], [0], [1], [0, 0, 1, 1], [], []>} : vector<2x256xbf16>, vector<256x512xbf16>, vector<2x512xf32> -> vector<2x512xf32>
    %395 = arith.addf %394, %11 : vector<2x512xf32>
    %396 = vector.extract_strided_slice %395 {offsets = [0, 0], sizes = [2, 384], strides = [1, 1]} : vector<2x512xf32> to vector<2x384xf32>
    %397 = arith.negf %396 : vector<2x384xf32>
    %398 = math.exp %397 : vector<2x384xf32>
    %cst_56 = arith.constant 1.000000e+00 : f32
    %399 = vector.broadcast %cst_56 : f32 to vector<2x384xf32>
    %400 = arith.addf %399, %398 : vector<2x384xf32>
    %401 = arith.divf %399, %400 : vector<2x384xf32>
    %402 = vector.extract_strided_slice %395 {offsets = [0, 384], sizes = [2, 128], strides = [1, 1]} : vector<2x512xf32> to vector<2x128xf32>
    %403 = math.tanh %402 : vector<2x128xf32>
    %404 = vector.extract_strided_slice %401 {offsets = [0, 0], sizes = [2, 128], strides = [1, 1]} : vector<2x384xf32> to vector<2x128xf32>
    %405 = vector.extract_strided_slice %401 {offsets = [0, 128], sizes = [2, 128], strides = [1, 1]} : vector<2x384xf32> to vector<2x128xf32>
    %406 = vector.extract_strided_slice %401 {offsets = [0, 256], sizes = [2, 128], strides = [1, 1]} : vector<2x384xf32> to vector<2x128xf32>
    %407 = arith.mulf %405, %368 : vector<2x128xf32>
    %408 = arith.mulf %404, %403 : vector<2x128xf32>
    %409 = arith.addf %407, %408 : vector<2x128xf32>
    %410 = math.tanh %409 : vector<2x128xf32>
    %411 = arith.mulf %406, %410 : vector<2x128xf32>
    %412 = tpu.concatenate %411, %390 in 1 : vector<2x128xf32>, vector<2x128xf32> -> vector<2x256xf32>
    %413 = arith.truncf %412 : vector<2x256xf32> to vector<2x256xbf16>
    %cst_57 = arith.constant dense<0.000000e+00> : vector<2x512xf32>
    %414 = tpu.matmul %413, %348, %cst_57 {dimension_numbers = #tpu.dot_dimension_numbers<[1], [0], [0], [1], [0, 0, 1, 1], [], []>} : vector<2x256xbf16>, vector<256x512xbf16>, vector<2x512xf32> -> vector<2x512xf32>
    %415 = arith.addf %414, %14 : vector<2x512xf32>
    %416 = vector.extract_strided_slice %415 {offsets = [0, 0], sizes = [2, 384], strides = [1, 1]} : vector<2x512xf32> to vector<2x384xf32>
    %417 = arith.negf %416 : vector<2x384xf32>
    %418 = math.exp %417 : vector<2x384xf32>
    %cst_58 = arith.constant 1.000000e+00 : f32
    %419 = vector.broadcast %cst_58 : f32 to vector<2x384xf32>
    %420 = arith.addf %419, %418 : vector<2x384xf32>
    %421 = arith.divf %419, %420 : vector<2x384xf32>
    %422 = vector.extract_strided_slice %415 {offsets = [0, 384], sizes = [2, 128], strides = [1, 1]} : vector<2x512xf32> to vector<2x128xf32>
    %423 = math.tanh %422 : vector<2x128xf32>
    %424 = vector.extract_strided_slice %421 {offsets = [0, 0], sizes = [2, 128], strides = [1, 1]} : vector<2x384xf32> to vector<2x128xf32>
    %425 = vector.extract_strided_slice %421 {offsets = [0, 128], sizes = [2, 128], strides = [1, 1]} : vector<2x384xf32> to vector<2x128xf32>
    %426 = vector.extract_strided_slice %421 {offsets = [0, 256], sizes = [2, 128], strides = [1, 1]} : vector<2x384xf32> to vector<2x128xf32>
    %427 = arith.mulf %425, %388 : vector<2x128xf32>
    %428 = arith.mulf %424, %423 : vector<2x128xf32>
    %429 = arith.addf %427, %428 : vector<2x128xf32>
    %430 = math.tanh %429 : vector<2x128xf32>
    %431 = arith.mulf %426, %430 : vector<2x128xf32>
    %432 = arith.truncf %431 : vector<2x128xf32> to vector<2x128xbf16>
    %433 = arith.truncf %411 : vector<2x128xf32> to vector<2x128xbf16>
    %434 = tpu.concatenate %433, %432 in 1 : vector<2x128xbf16>, vector<2x128xbf16> -> vector<2x256xbf16>
    %cst_59 = arith.constant dense<0.000000e+00> : vector<2x512xf32>
    %435 = tpu.matmul %434, %347, %cst_59 {dimension_numbers = #tpu.dot_dimension_numbers<[1], [0], [0], [1], [0, 0, 1, 1], [], []>} : vector<2x256xbf16>, vector<256x512xbf16>, vector<2x512xf32> -> vector<2x512xf32>
    %436 = arith.addf %435, %11 : vector<2x512xf32>
    %437 = vector.extract_strided_slice %436 {offsets = [0, 0], sizes = [2, 384], strides = [1, 1]} : vector<2x512xf32> to vector<2x384xf32>
    %438 = arith.negf %437 : vector<2x384xf32>
    %439 = math.exp %438 : vector<2x384xf32>
    %cst_60 = arith.constant 1.000000e+00 : f32
    %440 = vector.broadcast %cst_60 : f32 to vector<2x384xf32>
    %441 = arith.addf %440, %439 : vector<2x384xf32>
    %442 = arith.divf %440, %441 : vector<2x384xf32>
    %443 = vector.extract_strided_slice %436 {offsets = [0, 384], sizes = [2, 128], strides = [1, 1]} : vector<2x512xf32> to vector<2x128xf32>
    %444 = math.tanh %443 : vector<2x128xf32>
    %445 = vector.extract_strided_slice %442 {offsets = [0, 0], sizes = [2, 128], strides = [1, 1]} : vector<2x384xf32> to vector<2x128xf32>
    %446 = vector.extract_strided_slice %442 {offsets = [0, 128], sizes = [2, 128], strides = [1, 1]} : vector<2x384xf32> to vector<2x128xf32>
    %447 = vector.extract_strided_slice %442 {offsets = [0, 256], sizes = [2, 128], strides = [1, 1]} : vector<2x384xf32> to vector<2x128xf32>
    %448 = arith.mulf %446, %409 : vector<2x128xf32>
    %449 = arith.mulf %445, %444 : vector<2x128xf32>
    %450 = arith.addf %448, %449 : vector<2x128xf32>
    %451 = math.tanh %450 : vector<2x128xf32>
    %452 = arith.mulf %447, %451 : vector<2x128xf32>
    %453 = tpu.concatenate %452, %431 in 1 : vector<2x128xf32>, vector<2x128xf32> -> vector<2x256xf32>
    %454 = arith.truncf %453 : vector<2x256xf32> to vector<2x256xbf16>
    %cst_61 = arith.constant dense<0.000000e+00> : vector<2x512xf32>
    %455 = tpu.matmul %454, %348, %cst_61 {dimension_numbers = #tpu.dot_dimension_numbers<[1], [0], [0], [1], [0, 0, 1, 1], [], []>} : vector<2x256xbf16>, vector<256x512xbf16>, vector<2x512xf32> -> vector<2x512xf32>
    %456 = arith.addf %455, %14 : vector<2x512xf32>
    %457 = vector.extract_strided_slice %456 {offsets = [0, 0], sizes = [2, 384], strides = [1, 1]} : vector<2x512xf32> to vector<2x384xf32>
    %458 = arith.negf %457 : vector<2x384xf32>
    %459 = math.exp %458 : vector<2x384xf32>
    %cst_62 = arith.constant 1.000000e+00 : f32
    %460 = vector.broadcast %cst_62 : f32 to vector<2x384xf32>
    %461 = arith.addf %460, %459 : vector<2x384xf32>
    %462 = arith.divf %460, %461 : vector<2x384xf32>
    %463 = vector.extract_strided_slice %456 {offsets = [0, 384], sizes = [2, 128], strides = [1, 1]} : vector<2x512xf32> to vector<2x128xf32>
    %464 = math.tanh %463 : vector<2x128xf32>
    %465 = vector.extract_strided_slice %462 {offsets = [0, 0], sizes = [2, 128], strides = [1, 1]} : vector<2x384xf32> to vector<2x128xf32>
    %466 = vector.extract_strided_slice %462 {offsets = [0, 128], sizes = [2, 128], strides = [1, 1]} : vector<2x384xf32> to vector<2x128xf32>
    %467 = vector.extract_strided_slice %462 {offsets = [0, 256], sizes = [2, 128], strides = [1, 1]} : vector<2x384xf32> to vector<2x128xf32>
    %468 = arith.mulf %466, %429 : vector<2x128xf32>
    %469 = arith.mulf %465, %464 : vector<2x128xf32>
    %470 = arith.addf %468, %469 : vector<2x128xf32>
    %471 = math.tanh %470 : vector<2x128xf32>
    %472 = arith.mulf %467, %471 : vector<2x128xf32>
    %473 = arith.truncf %472 : vector<2x128xf32> to vector<2x128xbf16>
    %474 = arith.truncf %452 : vector<2x128xf32> to vector<2x128xbf16>
    %475 = tpu.concatenate %474, %473 in 1 : vector<2x128xbf16>, vector<2x128xbf16> -> vector<2x256xbf16>
    %cst_63 = arith.constant dense<0.000000e+00> : vector<2x512xf32>
    %476 = tpu.matmul %475, %347, %cst_63 {dimension_numbers = #tpu.dot_dimension_numbers<[1], [0], [0], [1], [0, 0, 1, 1], [], []>} : vector<2x256xbf16>, vector<256x512xbf16>, vector<2x512xf32> -> vector<2x512xf32>
    %477 = arith.addf %476, %11 : vector<2x512xf32>
    %478 = vector.extract_strided_slice %477 {offsets = [0, 0], sizes = [2, 384], strides = [1, 1]} : vector<2x512xf32> to vector<2x384xf32>
    %479 = arith.negf %478 : vector<2x384xf32>
    %480 = math.exp %479 : vector<2x384xf32>
    %cst_64 = arith.constant 1.000000e+00 : f32
    %481 = vector.broadcast %cst_64 : f32 to vector<2x384xf32>
    %482 = arith.addf %481, %480 : vector<2x384xf32>
    %483 = arith.divf %481, %482 : vector<2x384xf32>
    %484 = vector.extract_strided_slice %477 {offsets = [0, 384], sizes = [2, 128], strides = [1, 1]} : vector<2x512xf32> to vector<2x128xf32>
    %485 = math.tanh %484 : vector<2x128xf32>
    %486 = vector.extract_strided_slice %483 {offsets = [0, 0], sizes = [2, 128], strides = [1, 1]} : vector<2x384xf32> to vector<2x128xf32>
    %487 = vector.extract_strided_slice %483 {offsets = [0, 128], sizes = [2, 128], strides = [1, 1]} : vector<2x384xf32> to vector<2x128xf32>
    %488 = vector.extract_strided_slice %483 {offsets = [0, 256], sizes = [2, 128], strides = [1, 1]} : vector<2x384xf32> to vector<2x128xf32>
    %489 = arith.mulf %487, %450 : vector<2x128xf32>
    %490 = arith.mulf %486, %485 : vector<2x128xf32>
    %491 = arith.addf %489, %490 : vector<2x128xf32>
    %492 = math.tanh %491 : vector<2x128xf32>
    %493 = arith.mulf %488, %492 : vector<2x128xf32>
    %494 = tpu.concatenate %493, %472 in 1 : vector<2x128xf32>, vector<2x128xf32> -> vector<2x256xf32>
    %495 = arith.truncf %494 : vector<2x256xf32> to vector<2x256xbf16>
    %cst_65 = arith.constant dense<0.000000e+00> : vector<2x512xf32>
    %496 = tpu.matmul %495, %348, %cst_65 {dimension_numbers = #tpu.dot_dimension_numbers<[1], [0], [0], [1], [0, 0, 1, 1], [], []>} : vector<2x256xbf16>, vector<256x512xbf16>, vector<2x512xf32> -> vector<2x512xf32>
    %497 = arith.addf %496, %14 : vector<2x512xf32>
    %498 = vector.extract_strided_slice %497 {offsets = [0, 0], sizes = [2, 384], strides = [1, 1]} : vector<2x512xf32> to vector<2x384xf32>
    %499 = arith.negf %498 : vector<2x384xf32>
    %500 = math.exp %499 : vector<2x384xf32>
    %cst_66 = arith.constant 1.000000e+00 : f32
    %501 = vector.broadcast %cst_66 : f32 to vector<2x384xf32>
    %502 = arith.addf %501, %500 : vector<2x384xf32>
    %503 = arith.divf %501, %502 : vector<2x384xf32>
    %504 = vector.extract_strided_slice %497 {offsets = [0, 384], sizes = [2, 128], strides = [1, 1]} : vector<2x512xf32> to vector<2x128xf32>
    %505 = math.tanh %504 : vector<2x128xf32>
    %506 = vector.extract_strided_slice %503 {offsets = [0, 0], sizes = [2, 128], strides = [1, 1]} : vector<2x384xf32> to vector<2x128xf32>
    %507 = vector.extract_strided_slice %503 {offsets = [0, 128], sizes = [2, 128], strides = [1, 1]} : vector<2x384xf32> to vector<2x128xf32>
    %508 = vector.extract_strided_slice %503 {offsets = [0, 256], sizes = [2, 128], strides = [1, 1]} : vector<2x384xf32> to vector<2x128xf32>
    %509 = arith.mulf %507, %470 : vector<2x128xf32>
    %510 = arith.mulf %506, %505 : vector<2x128xf32>
    %511 = arith.addf %509, %510 : vector<2x128xf32>
    %512 = math.tanh %511 : vector<2x128xf32>
    %513 = arith.mulf %508, %512 : vector<2x128xf32>
    %514 = tpu.concatenate %390, %431, %472, %513 in 0 : vector<2x128xf32>, vector<2x128xf32>, vector<2x128xf32>, vector<2x128xf32> -> vector<8x128xf32>
    %515 = arith.truncf %514 : vector<8x128xf32> to vector<8x128xbf16>
    %cst_67 = arith.constant dense<0.000000e+00> : vector<8x128xf32>
    %516 = tpu.matmul %515, %5, %cst_67 {dimension_numbers = #tpu.dot_dimension_numbers<[1], [0], [0], [1], [0, 0, 1, 1], [], []>} : vector<8x128xbf16>, vector<128x128xbf16>, vector<8x128xf32> -> vector<8x128xf32>
    %517 = arith.addf %516, %17 : vector<8x128xf32>
    %c0_68 = arith.constant 0 : index
    %c0_69 = arith.constant 0 : index
    %518 = vector.load %arg12[%c0_68, %c0_69] : memref<8x128xf32, #tpu.memory_space<vmem>>, vector<8x128xf32>
    tpu.vector_store %arg12[%c0_68, %c0_69], %517 {strides = array<i32>} : memref<8x128xf32, #tpu.memory_space<vmem>>, vector<8x128xf32>,
    return
  }
}

</mosaic_0001>

<llo_original>
// kernel: tpu_custom_call.1
$region0: #{tpu_custom_call.1}
  #allocation0 [shape = 'u32[]', space=smem, size = 0x4, offset = 0x4, fixed_abs, tag = 'smem constant byte address 0x4 - core index']
  #allocation1 [shape = 'u32[72,128]{1,0:T(1,128)}', space=vmem, size = 0x9000, scoped, tag = 'internal scratch']
  #allocation2 [shape = 'bf16[256,512]{1,0:T(8,128)(2,1)}', space=vmem, size = 0x40000, scoped, tag = 'scratch operand']
  #allocation3 [shape = 'bf16[256,512]{1,0:T(8,128)(2,1)}', space=vmem, size = 0x40000, scoped, tag = 'scratch operand']
  #allocation4 [shape = 's32[2]{0}', space=sflag, size = 0x8, scoped, tag = 'scratch operand']
  #allocation15 [shape = 's32[]', space=sflag, size = 0x4, offset = 0, fixed_abs, tag = 'sflag constant byte address 0x0 - dummy sync flag']
  #allocation16 [shape = 's32[]', space=sflag, size = 0x4, offset = 0, fixed_abs, tag = 'sflag constant byte address 0x0 - dummy sync flag']
  #allocation17 [shape = 'u32[]', space=smem, size = 0x4, offset = 0x44, fixed_abs, tag = 'smem constant byte address 0x44 - assertion arg 0']
  #allocation18 [shape = 'u32[]', space=smem, size = 0x4, offset = 0x48, fixed_abs, tag = 'smem constant byte address 0x48 - assertion arg 1']
  #allocation19 [shape = 's32[]', space=sflag, size = 0x4, offset = 0, fixed_abs, tag = 'sflag constant byte address 0x0 - dummy sync flag']
  #allocation20 [shape = 's32[]', space=sflag, size = 0x4, offset = 0, fixed_abs, tag = 'sflag constant byte address 0x0 - dummy sync flag']
  %s0 = inlined_call_operand.vmem [shape: bf16[16,4], index: 0, kind: input, shape index: {}]
  %s1 = inlined_call_operand.vmem [shape: bf16[4,512], index: 1, kind: input, shape index: {}]
  %s2 = inlined_call_operand.hbm [shape: f32[1,512], index: 2, kind: input, shape index: {}]
  %s3 = inlined_call_operand.hbm [shape: bf16[256,1024], index: 3, kind: input, shape index: {}]
  %s4 = inlined_call_operand.vmem [shape: f32[1,512], index: 4, kind: input, shape index: {}]
  %s5 = inlined_call_operand.hbm [shape: f32[2,512], index: 5, kind: input, shape index: {}]
  %s6 = inlined_call_operand.hbm [shape: f32[1,512], index: 6, kind: input, shape index: {}]
  %s7 = inlined_call_operand.vmem [shape: f32[1,512], index: 7, kind: input, shape index: {}]
  %s8 = inlined_call_operand.hbm [shape: bf16[128,128], index: 8, kind: input, shape index: {}]
  %s9 = inlined_call_operand.vmem [shape: f32[1,128], index: 9, kind: input, shape index: {}]
  %s10 = inlined_call_operand.hbm [shape: bf16[256,512], index: 10, kind: input, shape index: {}]
  %s11 = inlined_call_operand.hbm [shape: bf16[256,512], index: 11, kind: input, shape index: {}]
  %s12 = inlined_call_operand.hbm [shape: f32[8,128], index: 12, kind: output, shape index: {}]
  %s13 = sld [smem:[#allocation0]]
  $region78: #{tpu_custom_call.1} parent=0
    _
  %s15 = ssub.s32 1, %s13
  %s16 = scalar_select 0, %s15, %s13
  $region1: #{tpu_custom_call.1} parent=0
    #allocation5 [shape = 'u8[2048]{0}', space=vmem, size = 0x800, scoped, tag = 'input window, operand 2, single buffered']
    #allocation6 [shape = 's32[1]{0}', space=sflag, size = 0x4, scoped, tag = 'scoped memory for tpu_custom_call.1']
    #allocation7 [shape = 's32[1]{0}', space=sflag, size = 0x4, scoped, tag = 'scoped memory for tpu_custom_call.1']
    #allocation8 [shape = 'u8[524288]{0}', space=vmem, size = 0x80000, scoped, tag = 'input window, operand 3, single buffered']
    #allocation9 [shape = 's32[1]{0}', space=sflag, size = 0x4, scoped, tag = 'scoped memory for tpu_custom_call.1']
    #allocation10 [shape = 'u8[4096]{0}', space=vmem, size = 0x1000, scoped, tag = 'input window, operand 5, single buffered']
    #allocation11 [shape = 'u8[2048]{0}', space=vmem, size = 0x800, scoped, tag = 'input window, operand 6, single buffered']
    #allocation12 [shape = 's32[1]{0}', space=sflag, size = 0x4, scoped, tag = 'scoped memory for tpu_custom_call.1']
    #allocation13 [shape = 'u8[32768]{0}', space=vmem, size = 0x8000, scoped, tag = 'input window, operand 8, single buffered']
    #allocation14 [shape = 'u8[4096]{0}', space=vmem, size = 0x1000, scoped, tag = 'output window, operand 0, single buffered']
    %17 = vsyncpa [#allocation6], 0
    %18 = vsyncpa [#allocation9], 0
    %19 = vsyncpa [#allocation12], 0
    %20 = vsyncpa [#allocation7], 0
    // Predicated region
    $region2: #{tpu_custom_call.1} parent=1 // pred_check
      _
    $region3: #{tpu_custom_call.1} parent=1 // pred_check_branch
      %22 = sbr.rel (0) target = $region5
    $region4: #{tpu_custom_call.1} parent=1 // pred_region
      _
    $region5: #{tpu_custom_call.1} parent=1 // pred_fallthru
      _
    // Predicated region
    $region6: #{tpu_custom_call.1} parent=1 // pred_check
      _
    $region7: #{tpu_custom_call.1} parent=1 // pred_check_branch
      %24 = sbr.rel (0) target = $region9
    $region8: #{tpu_custom_call.1} parent=1 // pred_region
      _
    $region9: #{tpu_custom_call.1} parent=1 // pred_fallthru
      _
    // Predicated region
    $region10: #{tpu_custom_call.1} parent=1 // pred_check
      _
    $region11: #{tpu_custom_call.1} parent=1 // pred_check_branch
      %26 = sbr.rel (0) target = $region13
    $region12: #{tpu_custom_call.1} parent=1 // pred_region
      %28 = vsyncadd [#allocation6], 0
      %s30 = sshll.u32 %s2, 4
      %s31 = int_to_ptr.hbm [resolvable:$true] %s30
      %s32 = sshll.u32 [#allocation5], 4
      %s33 = int_to_ptr.vmem [resolvable:$true] %s32
      %35 = dma.hbm_to_vmem [thread:$0]  %s31, 64, %s33, [#allocation6]
    $region13: #{tpu_custom_call.1} parent=1 // pred_fallthru
      _
    // Predicated region
    $region14: #{tpu_custom_call.1} parent=1 // pred_check
      _
    $region15: #{tpu_custom_call.1} parent=1 // pred_check_branch
      %37 = sbr.rel (0) target = $region17
    $region16: #{tpu_custom_call.1} parent=1 // pred_region
      %39 = vsyncadd [#allocation9], 0
      %s40 = sshll.u32 %s3, 4
      %s41 = int_to_ptr.hbm [resolvable:$true] %s40
      %s42 = sshll.u32 [#allocation8], 4
      %s43 = int_to_ptr.vmem [resolvable:$true] %s42
      %48 = dma.hbm_to_vmem [thread:$0]  %s41, 16384, %s43, [#allocation9], 512, 512, 32
    $region17: #{tpu_custom_call.1} parent=1 // pred_fallthru
      _
    // Predicated region
    $region18: #{tpu_custom_call.1} parent=1 // pred_check
      _
    $region19: #{tpu_custom_call.1} parent=1 // pred_check_branch
      %50 = sbr.rel (0) target = $region21
    $region20: #{tpu_custom_call.1} parent=1 // pred_region
      _
    $region21: #{tpu_custom_call.1} parent=1 // pred_fallthru
      _
    // Predicated region
    $region22: #{tpu_custom_call.1} parent=1 // pred_check
      _
    $region23: #{tpu_custom_call.1} parent=1 // pred_check_branch
      %52 = sbr.rel (0) target = $region25
    $region24: #{tpu_custom_call.1} parent=1 // pred_region
      %54 = vsyncadd [#allocation9], 0
      %s56 = sshll.u32 %s5, 4
      %s57 = int_to_ptr.hbm [resolvable:$true] %s56
      %s58 = sshll.u32 [#allocation10], 4
      %s59 = int_to_ptr.vmem [resolvable:$true] %s58
      %61 = dma.hbm_to_vmem [thread:$0]  %s57, 128, %s59, [#allocation9]
    $region25: #{tpu_custom_call.1} parent=1 // pred_fallthru
      _
    // Predicated region
    $region26: #{tpu_custom_call.1} parent=1 // pred_check
      _
    $region27: #{tpu_custom_call.1} parent=1 // pred_check_branch
      %63 = sbr.rel (0) target = $region29
    $region28: #{tpu_custom_call.1} parent=1 // pred_region
      %65 = vsyncadd [#allocation12], 0
      %s67 = sshll.u32 %s6, 4
      %s68 = int_to_ptr.hbm [resolvable:$true] %s67
      %s69 = sshll.u32 [#allocation11], 4
      %s70 = int_to_ptr.vmem [resolvable:$true] %s69
      %72 = dma.hbm_to_vmem [thread:$0]  %s68, 64, %s70, [#allocation12]
    $region29: #{tpu_custom_call.1} parent=1 // pred_fallthru
      _
    // Predicated region
    $region30: #{tpu_custom_call.1} parent=1 // pred_check
      _
    $region31: #{tpu_custom_call.1} parent=1 // pred_check_branch
      %74 = sbr.rel (0) target = $region33
    $region32: #{tpu_custom_call.1} parent=1 // pred_region
      _
    $region33: #{tpu_custom_call.1} parent=1 // pred_fallthru
      _
    // Predicated region
    $region34: #{tpu_custom_call.1} parent=1 // pred_check
      _
    $region35: #{tpu_custom_call.1} parent=1 // pred_check_branch
      %76 = sbr.rel (0) target = $region37
    $region36: #{tpu_custom_call.1} parent=1 // pred_region
      %78 = vsyncadd [#allocation12], 0
      %s79 = sshll.u32 %s8, 4
      %s80 = int_to_ptr.hbm [resolvable:$true] %s79
      %s81 = sshll.u32 [#allocation13], 4
      %s82 = int_to_ptr.vmem [resolvable:$true] %s81
      %87 = dma.hbm_to_vmem [thread:$0]  %s80, 1024, %s82, [#allocation12], 64, 64, 4
    $region37: #{tpu_custom_call.1} parent=1 // pred_fallthru
      _
    // Predicated region
    $region38: #{tpu_custom_call.1} parent=1 // pred_check
      _
    $region39: #{tpu_custom_call.1} parent=1 // pred_check_branch
      %89 = sbr.rel (0) target = $region41
    $region40: #{tpu_custom_call.1} parent=1 // pred_region
      _
    $region41: #{tpu_custom_call.1} parent=1 // pred_fallthru
      _
    // Predicated region
    $region42: #{tpu_custom_call.1} parent=1 // pred_check
      _
    $region43: #{tpu_custom_call.1} parent=1 // pred_check_branch
      %91 = sbr.rel (0) target = $region45
    $region44: #{tpu_custom_call.1} parent=1 // pred_region
      %93 = dma.done [#allocation6], 64
    $region45: #{tpu_custom_call.1} parent=1 // pred_fallthru
      _
    // Predicated region
    $region46: #{tpu_custom_call.1} parent=1 // pred_check
      _
    $region47: #{tpu_custom_call.1} parent=1 // pred_check_branch
      %95 = sbr.rel (0) target = $region49
    $region48: #{tpu_custom_call.1} parent=1 // pred_region
      %97 = dma.done [#allocation9], 16384
    $region49: #{tpu_custom_call.1} parent=1 // pred_fallthru
      _
    // Predicated region
    $region50: #{tpu_custom_call.1} parent=1 // pred_check
      _
    $region51: #{tpu_custom_call.1} parent=1 // pred_check_branch
      %99 = sbr.rel (0) target = $region53
    $region52: #{tpu_custom_call.1} parent=1 // pred_region
      %101 = dma.done [#allocation9], 128
    $region53: #{tpu_custom_call.1} parent=1 // pred_fallthru
      _
    // Predicated region
    $region54: #{tpu_custom_call.1} parent=1 // pred_check
      _
    $region55: #{tpu_custom_call.1} parent=1 // pred_check_branch
      %103 = sbr.rel (0) target = $region57
    $region56: #{tpu_custom_call.1} parent=1 // pred_region
      %105 = dma.done [#allocation12], 64
    $region57: #{tpu_custom_call.1} parent=1 // pred_fallthru
      _
    // Predicated region
    $region58: #{tpu_custom_call.1} parent=1 // pred_check
      _
    $region59: #{tpu_custom_call.1} parent=1 // pred_check_branch
      %107 = sbr.rel (0) target = $region61
    $region60: #{tpu_custom_call.1} parent=1 // pred_region
      %109 = dma.done [#allocation12], 1024
    $region61: #{tpu_custom_call.1} parent=1 // pred_fallthru
      _
    // Predicated region
    $region62: #{tpu_custom_call.1} parent=1 // pred_check
      _
    $region63: #{tpu_custom_call.1} parent=1 // pred_check_branch
      %112 = sbr.rel target = $region65
    $region64: #{tpu_custom_call.1} parent=1 // pred_region
      %113 = sst [smem:[#allocation17]] [#allocation16]
      %114 = sst [smem:[#allocation18]] [#allocation15]
    $region65: #{tpu_custom_call.1} parent=1 // pred_fallthru
      _
    %116 = shalt.err (0)
    %s118 = sshll.u32 %s10, 4
    %s119 = int_to_ptr.hbm [resolvable:$true] %s118
    %s120 = sshll.u32 [#allocation2], 4
    %s121 = int_to_ptr.vmem [resolvable:$true] %s120
    %123 = dma.hbm_to_vmem [thread:$0]  %s119, 8192, %s121, [#allocation4]
    %s124 = scalar_lea.sflag [#allocation4], 1
    // Predicated region
    $region66: #{tpu_custom_call.1} parent=1 // pred_check
      _
    $region67: #{tpu_custom_call.1} parent=1 // pred_check_branch
      %126 = sbr.rel target = $region69
    $region68: #{tpu_custom_call.1} parent=1 // pred_region
      %127 = sst [smem:[#allocation17]] [#allocation20]
      %128 = sst [smem:[#allocation18]] [#allocation19]
    $region69: #{tpu_custom_call.1} parent=1 // pred_fallthru
      _
    %130 = shalt.err (0)
    %s132 = sshll.u32 %s11, 4
    %s133 = int_to_ptr.hbm [resolvable:$true] %s132
    %s134 = sshll.u32 [#allocation3], 4
    %s135 = int_to_ptr.vmem [resolvable:$true] %s134
    %137 = dma.hbm_to_vmem [thread:$0]  %s133, 8192, %s135, %s124
    %v138 = vld [vmem:[#allocation8] sm:$0xff]
    %v139 = vld [vmem:[#allocation8 + $0x8] sm:$0xff]
    %v140 = vld [vmem:[#allocation8 + $0x10] sm:$0xff]
    %v141 = vld [vmem:[#allocation8 + $0x18] sm:$0xff]
    %v142 = vld [vmem:[#allocation8 + $0x20] sm:$0xff]
    %v143 = vld [vmem:[#allocation8 + $0x28] sm:$0xff]
    %v144 = vld [vmem:[#allocation8 + $0x30] sm:$0xff]
    %v145 = vld [vmem:[#allocation8 + $0x38] sm:$0xff]
    %v146 = vld [vmem:[#allocation8 + $0x40] sm:$0xff]
    %v147 = vld [vmem:[#allocation8 + $0x48] sm:$0xff]
    %v148 = vld [vmem:[#allocation8 + $0x50] sm:$0xff]
    %v149 = vld [vmem:[#allocation8 + $0x58] sm:$0xff]
    %v150 = vld [vmem:[#allocation8 + $0x60] sm:$0xff]
    %v151 = vld [vmem:[#allocation8 + $0x68] sm:$0xff]
    %v152 = vld [vmem:[#allocation8 + $0x70] sm:$0xff]
    %v153 = vld [vmem:[#allocation8 + $0x78] sm:$0xff]
    %v154 = vld [vmem:[#allocation8 + $0x80] sm:$0xff]
    %v155 = vld [vmem:[#allocation8 + $0x88] sm:$0xff]
    %v156 = vld [vmem:[#allocation8 + $0x90] sm:$0xff]
    %v157 = vld [vmem:[#allocation8 + $0x98] sm:$0xff]
    %v158 = vld [vmem:[#allocation8 + $0xa0] sm:$0xff]
    %v159 = vld [vmem:[#allocation8 + $0xa8] sm:$0xff]
    %v160 = vld [vmem:[#allocation8 + $0xb0] sm:$0xff]
    %v161 = vld [vmem:[#allocation8 + $0xb8] sm:$0xff]
    %v162 = vld [vmem:[#allocation8 + $0xc0] sm:$0xff]
    %v163 = vld [vmem:[#allocation8 + $0xc8] sm:$0xff]
    %v164 = vld [vmem:[#allocation8 + $0xd0] sm:$0xff]
    %v165 = vld [vmem:[#allocation8 + $0xd8] sm:$0xff]
    %v166 = vld [vmem:[#allocation8 + $0xe0] sm:$0xff]
    %v167 = vld [vmem:[#allocation8 + $0xe8] sm:$0xff]
    %v168 = vld [vmem:[#allocation8 + $0xf0] sm:$0xff]
    %v169 = vld [vmem:[#allocation8 + $0xf8] sm:$0xff]
    %v170 = vld [vmem:[#allocation8 + $0x100] sm:$0xff]
    %v171 = vld [vmem:[#allocation8 + $0x108] sm:$0xff]
    %v172 = vld [vmem:[#allocation8 + $0x110] sm:$0xff]
    %v173 = vld [vmem:[#allocation8 + $0x118] sm:$0xff]
    %v174 = vld [vmem:[#allocation8 + $0x120] sm:$0xff]
    %v175 = vld [vmem:[#allocation8 + $0x128] sm:$0xff]
    %v176 = vld [vmem:[#allocation8 + $0x130] sm:$0xff]
    %v177 = vld [vmem:[#allocation8 + $0x138] sm:$0xff]
    %v178 = vld [vmem:[#allocation8 + $0x140] sm:$0xff]
    %v179 = vld [vmem:[#allocation8 + $0x148] sm:$0xff]
    %v180 = vld [vmem:[#allocation8 + $0x150] sm:$0xff]
    %v181 = vld [vmem:[#allocation8 + $0x158] sm:$0xff]
    %v182 = vld [vmem:[#allocation8 + $0x160] sm:$0xff]
    %v183 = vld [vmem:[#allocation8 + $0x168] sm:$0xff]
    %v184 = vld [vmem:[#allocation8 + $0x170] sm:$0xff]
    %v185 = vld [vmem:[#allocation8 + $0x178] sm:$0xff]
    %v186 = vld [vmem:[#allocation8 + $0x180] sm:$0xff]
    %v187 = vld [vmem:[#allocation8 + $0x188] sm:$0xff]
    %v188 = vld [vmem:[#allocation8 + $0x190] sm:$0xff]
    %v189 = vld [vmem:[#allocation8 + $0x198] sm:$0xff]
    %v190 = vld [vmem:[#allocation8 + $0x1a0] sm:$0xff]
    %v191 = vld [vmem:[#allocation8 + $0x1a8] sm:$0xff]
    %v192 = vld [vmem:[#allocation8 + $0x1b0] sm:$0xff]
    %v193 = vld [vmem:[#allocation8 + $0x1b8] sm:$0xff]
    %v194 = vld [vmem:[#allocation8 + $0x1c0] sm:$0xff]
    %v195 = vld [vmem:[#allocation8 + $0x1c8] sm:$0xff]
    %v196 = vld [vmem:[#allocation8 + $0x1d0] sm:$0xff]
    %v197 = vld [vmem:[#allocation8 + $0x1d8] sm:$0xff]
    %v198 = vld [vmem:[#allocation8 + $0x1e0] sm:$0xff]
    %v199 = vld [vmem:[#allocation8 + $0x1e8] sm:$0xff]
    %v200 = vld [vmem:[#allocation8 + $0x1f0] sm:$0xff]
    %v201 = vld [vmem:[#allocation8 + $0x1f8] sm:$0xff]
    %v202 = vld [vmem:[#allocation8 + $0x200] sm:$0xff]
    %v203 = vld [vmem:[#allocation8 + $0x208] sm:$0xff]
    %v204 = vld [vmem:[#allocation8 + $0x210] sm:$0xff]
    %v205 = vld [vmem:[#allocation8 + $0x218] sm:$0xff]
    %v206 = vld [vmem:[#allocation8 + $0x220] sm:$0xff]
    %v207 = vld [vmem:[#allocation8 + $0x228] sm:$0xff]
    %v208 = vld [vmem:[#allocation8 + $0x230] sm:$0xff]
    %v209 = vld [vmem:[#allocation8 + $0x238] sm:$0xff]
    %v210 = vld [vmem:[#allocation8 + $0x240] sm:$0xff]
    %v211 = vld [vmem:[#allocation8 + $0x248] sm:$0xff]
    %v212 = vld [vmem:[#allocation8 + $0x250] sm:$0xff]
    %v213 = vld [vmem:[#allocation8 + $0x258] sm:$0xff]
    %v214 = vld [vmem:[#allocation8 + $0x260] sm:$0xff]
    %v215 = vld [vmem:[#allocation8 + $0x268] sm:$0xff]
    %v216 = vld [vmem:[#allocation8 + $0x270] sm:$0xff]
    %v217 = vld [vmem:[#allocation8 + $0x278] sm:$0xff]
    %v218 = vld [vmem:[#allocation8 + $0x280] sm:$0xff]
    %v219 = vld [vmem:[#allocation8 + $0x288] sm:$0xff]
    %v220 = vld [vmem:[#allocation8 + $0x290] sm:$0xff]
    %v221 = vld [vmem:[#allocation8 + $0x298] sm:$0xff]
    %v222 = vld [vmem:[#allocation8 + $0x2a0] sm:$0xff]
    %v223 = vld [vmem:[#allocation8 + $0x2a8] sm:$0xff]
    %v224 = vld [vmem:[#allocation8 + $0x2b0] sm:$0xff]
    %v225 = vld [vmem:[#allocation8 + $0x2b8] sm:$0xff]
    %v226 = vld [vmem:[#allocation8 + $0x2c0] sm:$0xff]
    %v227 = vld [vmem:[#allocation8 + $0x2c8] sm:$0xff]
    %v228 = vld [vmem:[#allocation8 + $0x2d0] sm:$0xff]
    %v229 = vld [vmem:[#allocation8 + $0x2d8] sm:$0xff]
    %v230 = vld [vmem:[#allocation8 + $0x2e0] sm:$0xff]
    %v231 = vld [vmem:[#allocation8 + $0x2e8] sm:$0xff]
    %v232 = vld [vmem:[#allocation8 + $0x2f0] sm:$0xff]
    %v233 = vld [vmem:[#allocation8 + $0x2f8] sm:$0xff]
    %v234 = vld [vmem:[#allocation8 + $0x300] sm:$0xff]
    %v235 = vld [vmem:[#allocation8 + $0x308] sm:$0xff]
    %v236 = vld [vmem:[#allocation8 + $0x310] sm:$0xff]
    %v237 = vld [vmem:[#allocation8 + $0x318] sm:$0xff]
    %v238 = vld [vmem:[#allocation8 + $0x320] sm:$0xff]
    %v239 = vld [vmem:[#allocation8 + $0x328] sm:$0xff]
    %v240 = vld [vmem:[#allocation8 + $0x330] sm:$0xff]
    %v241 = vld [vmem:[#allocation8 + $0x338] sm:$0xff]
    %v242 = vld [vmem:[#allocation8 + $0x340] sm:$0xff]
    %v243 = vld [vmem:[#allocation8 + $0x348] sm:$0xff]
    %v244 = vld [vmem:[#allocation8 + $0x350] sm:$0xff]
    %v245 = vld [vmem:[#allocation8 + $0x358] sm:$0xff]
    %v246 = vld [vmem:[#allocation8 + $0x360] sm:$0xff]
    %v247 = vld [vmem:[#allocation8 + $0x368] sm:$0xff]
    %v248 = vld [vmem:[#allocation8 + $0x370] sm:$0xff]
    %v249 = vld [vmem:[#allocation8 + $0x378] sm:$0xff]
    %v250 = vld [vmem:[#allocation8 + $0x380] sm:$0xff]
    %v251 = vld [vmem:[#allocation8 + $0x388] sm:$0xff]
    %v252 = vld [vmem:[#allocation8 + $0x390] sm:$0xff]
    %v253 = vld [vmem:[#allocation8 + $0x398] sm:$0xff]
    %v254 = vld [vmem:[#allocation8 + $0x3a0] sm:$0xff]
    %v255 = vld [vmem:[#allocation8 + $0x3a8] sm:$0xff]
    %v256 = vld [vmem:[#allocation8 + $0x3b0] sm:$0xff]
    %v257 = vld [vmem:[#allocation8 + $0x3b8] sm:$0xff]
    %v258 = vld [vmem:[#allocation8 + $0x3c0] sm:$0xff]
    %v259 = vld [vmem:[#allocation8 + $0x3c8] sm:$0xff]
    %v260 = vld [vmem:[#allocation8 + $0x3d0] sm:$0xff]
    %v261 = vld [vmem:[#allocation8 + $0x3d8] sm:$0xff]
    %v262 = vld [vmem:[#allocation8 + $0x3e0] sm:$0xff]
    %v263 = vld [vmem:[#allocation8 + $0x3e8] sm:$0xff]
    %v264 = vld [vmem:[#allocation8 + $0x3f0] sm:$0xff]
    %v265 = vld [vmem:[#allocation8 + $0x3f8] sm:$0xff]
    %v266 = vld [vmem:[#allocation13] sm:$0xf]
    %v267 = vld [vmem:[#allocation13 + $0x4] sm:$0xf]
    %v268 = vld [vmem:[#allocation13 + $0x8] sm:$0xf]
    %v269 = vld [vmem:[#allocation13 + $0xc] sm:$0xf]
    %v270 = vld [vmem:[#allocation13 + $0x10] sm:$0xf]
    %v271 = vld [vmem:[#allocation13 + $0x14] sm:$0xf]
    %v272 = vld [vmem:[#allocation13 + $0x18] sm:$0xf]
    %v273 = vld [vmem:[#allocation13 + $0x1c] sm:$0xf]
    %v274 = vld [vmem:[#allocation13 + $0x20] sm:$0xf]
    %v275 = vld [vmem:[#allocation13 + $0x24] sm:$0xf]
    %v276 = vld [vmem:[#allocation13 + $0x28] sm:$0xf]
    %v277 = vld [vmem:[#allocation13 + $0x2c] sm:$0xf]
    %v278 = vld [vmem:[#allocation13 + $0x30] sm:$0xf]
    %v279 = vld [vmem:[#allocation13 + $0x34] sm:$0xf]
    %v280 = vld [vmem:[#allocation13 + $0x38] sm:$0xf]
    %v281 = vld [vmem:[#allocation13 + $0x3c] sm:$0xf]
    %v282 = vld [vmem:[%s4] sm:$0xf]
    %v284 = vperm.slane %v282, 0
    %v285 = vperm.slane %v282, 1
    %v286 = vperm.slane %v282, 2
    %v287 = vperm.slane %v282, 3
    %v292 = vld [vmem:[#allocation11] sm:$0xf]
    %v294 = vperm.slane %v292, 0
    %v295 = vperm.slane %v292, 1
    %v296 = vperm.slane %v292, 2
    %v297 = vperm.slane %v292, 3
    %v302 = vld [vmem:[%s7] sm:$0xf]
    %v304 = vperm.slane %v302, 0
    %v305 = vperm.slane %v302, 1
    %v306 = vperm.slane %v302, 2
    %v307 = vperm.slane %v302, 3
    %v312 = vld [vmem:[%s9] sm:$0x1]
    %v314 = vperm.slane %v312, 0
    %v316 = vld [vmem:[%s0] sm:$0xf]
    %v317 = vld [vmem:[%s0 + $0x4] sm:$0xf]
    %v318 = vld [vmem:[%s1] sm:$0xff]
    %v319 = vld [vmem:[#allocation5] sm:$0xf]
    %v321 = vperm.slane %v319, 0
    %v322 = vperm.slane %v319, 1
    %v323 = vperm.slane %v319, 2
    %v324 = vperm.slane %v319, 3
    %v331 = vunpack.c.l.b16 %v316
    %v332 = vunpack.c.l.b16 %v317
    %v333 = vpack.c.b16 %v332, %v331
    %335 = vst [vmem:[#allocation1] ss:$4 sm:$0xff] %v318
    %v336 = vld.sshfl [vmem:[#allocation1] sm:$0xff pattern:$0x73625140]
    %v337 = vld.sshfl [vmem:[#allocation1 + $0x8] sm:$0xff pattern:$0x73625140]
    %v338 = vld.sshfl [vmem:[#allocation1 + $0x10] sm:$0xff pattern:$0x73625140]
    %v339 = vld.sshfl [vmem:[#allocation1 + $0x18] sm:$0xff pattern:$0x73625140]
    %vm340 = vcmask 31744
    %v342 = vsel %vm340, %v333, 0
    %vm344 = vcmask 1041408
    %v345 = vsel %vm344, %v336, 0
    %v347 = vsel %vm344, %v337, 0
    %v349 = vsel %vm344, %v338, 0
    %v351 = vsel %vm344, %v339, 0
    %353 = vmatpush.bf16.msra.mxu0 0
    %354 = vmatpush.bf16.msra.mxu0 0
    %355 = vmatpush.bf16.msra.mxu0 0
    %356 = vmatpush.bf16.msra.mxu0 0
    %357 = vmatpush.bf16.msra.mxu0 0
    %358 = vmatpush.bf16.msra.mxu0 0
    %359 = vmatpush.bf16.msra.mxu0 0
    %360 = vmatpush.bf16.msra.mxu0 %v345
    %361 = vmatmul.bf16.gmra.mxu0 %v342
    %v362 = vpop.f32.mrf.mxu0
    %v363 = vadd.f32 %v321, %v362
    %v364 = vpop.f32.mrf.mxu0
    %v365 = vadd.f32 %v321, %v364
    %366 = vdwg.mxu0
    %367 = vmatpush.bf16.msra.mxu0 0
    %368 = vmatpush.bf16.msra.mxu0 0
    %369 = vmatpush.bf16.msra.mxu0 0
    %370 = vmatpush.bf16.msra.mxu0 0
    %371 = vmatpush.bf16.msra.mxu0 0
    %372 = vmatpush.bf16.msra.mxu0 0
    %373 = vmatpush.bf16.msra.mxu0 0
    %374 = vmatpush.bf16.msra.mxu0 %v347
    %375 = vmatmul.bf16.gmra.mxu0 %v342
    %v376 = vpop.f32.mrf.mxu0
    %v377 = vadd.f32 %v322, %v376
    %v378 = vpop.f32.mrf.mxu0
    %v379 = vadd.f32 %v322, %v378
    %380 = vdwg.mxu0
    %381 = vmatpush.bf16.msra.mxu0 0
    %382 = vmatpush.bf16.msra.mxu0 0
    %383 = vmatpush.bf16.msra.mxu0 0
    %384 = vmatpush.bf16.msra.mxu0 0
    %385 = vmatpush.bf16.msra.mxu0 0
    %386 = vmatpush.bf16.msra.mxu0 0
    %387 = vmatpush.bf16.msra.mxu0 0
    %388 = vmatpush.bf16.msra.mxu0 %v349
    %389 = vmatmul.bf16.gmra.mxu0 %v342
    %v390 = vpop.f32.mrf.mxu0
    %v391 = vadd.f32 %v323, %v390
    %v392 = vpop.f32.mrf.mxu0
    %v393 = vadd.f32 %v323, %v392
    %394 = vdwg.mxu0
    %395 = vmatpush.bf16.msra.mxu0 0
    %396 = vmatpush.bf16.msra.mxu0 0
    %397 = vmatpush.bf16.msra.mxu0 0
    %398 = vmatpush.bf16.msra.mxu0 0
    %399 = vmatpush.bf16.msra.mxu0 0
    %400 = vmatpush.bf16.msra.mxu0 0
    %401 = vmatpush.bf16.msra.mxu0 0
    %402 = vmatpush.bf16.msra.mxu0 %v351
    %403 = vmatmul.bf16.gmra.mxu0 %v342
    %v404 = vpop.f32.mrf.mxu0
    %v405 = vadd.f32 %v324, %v404
    %v406 = vpop.f32.mrf.mxu0
    %v407 = vadd.f32 %v324, %v406
    %408 = vdwg.mxu0
    %v409 = vxor.u32 %v363, 2147483648
    %v410 = vxor.u32 %v377, 2147483648
    %v411 = vxor.u32 %v391, 2147483648
    %v412 = vmul.f32 %v409, 1.442695
    %v413 = vpow.pop %v412
    %v414 = vmul.f32 %v410, 1.442695
    %v415 = vpow.pop %v414
    %v416 = vmul.f32 %v411, 1.442695
    %v417 = vpow.pop %v416
    %v418 = vadd.f32 %v413, 1.0
    %v419 = vadd.f32 %v415, 1.0
    %v420 = vadd.f32 %v417, 1.0
    %v421 = vrcp.pop %v418
    %v422 = vmul.f32 %v418, %v421
    %v423 = vsub.f32 1.0, %v422
    %v424 = vmul.f32 %v421, %v423
    %v425 = vadd.f32 %v421, %v424
    %vm426 = vweird.f32 %v418
    %vm427 = vweird.f32 %v421
    %vm428 = vmor %vm426, %vm427
    %v429 = vsel %vm428, %v421, %v425
    %v430 = vand.u32 2147483647, %v418
    %vm431 = vcmp.eq.f32.partialorder %v430, 8.507059e+37
    %v432 = vand.u32 %v418, 2147483648
    %v433 = vor.u32 1.1754944e-38, %v432
    %v434 = vsel %vm431, %v433, %v429
    %v435 = vmul.f32 1.0, %v434
    %v436 = vrcp.pop %v419
    %v437 = vmul.f32 %v419, %v436
    %v438 = vsub.f32 1.0, %v437
    %v439 = vmul.f32 %v436, %v438
    %v440 = vadd.f32 %v436, %v439
    %vm441 = vweird.f32 %v419
    %vm442 = vweird.f32 %v436
    %vm443 = vmor %vm441, %vm442
    %v444 = vsel %vm443, %v436, %v440
    %v445 = vand.u32 2147483647, %v419
    %vm446 = vcmp.eq.f32.partialorder %v445, 8.507059e+37
    %v447 = vand.u32 %v419, 2147483648
    %v448 = vor.u32 1.1754944e-38, %v447
    %v449 = vsel %vm446, %v448, %v444
    %v450 = vmul.f32 1.0, %v449
    %v451 = vrcp.pop %v420
    %v452 = vmul.f32 %v420, %v451
    %v453 = vsub.f32 1.0, %v452
    %v454 = vmul.f32 %v451, %v453
    %v455 = vadd.f32 %v451, %v454
    %vm456 = vweird.f32 %v420
    %vm457 = vweird.f32 %v451
    %vm458 = vmor %vm456, %vm457
    %v459 = vsel %vm458, %v451, %v455
    %v460 = vand.u32 2147483647, %v420
    %vm461 = vcmp.eq.f32.partialorder %v460, 8.507059e+37
    %v462 = vand.u32 %v420, 2147483648
    %v463 = vor.u32 1.1754944e-38, %v462
    %v464 = vsel %vm461, %v463, %v459
    %v465 = vmul.f32 1.0, %v464
    %v466 = vtanh.pop %v405
    %v467 = vmul.f32 %v450, 0.0
    %v468 = vmul.f32 %v435, %v466
    %v469 = vadd.f32 %v467, %v468
    %v470 = vtanh.pop %v469
    %v471 = vmul.f32 %v465, %v470
    %v472 = vpack.c.bf16 %v471, %v471
    %v537 = vunpack.c.l.b16 %v138
    %v538 = vunpack.c.h.b16 %v138
    %v539 = vunpack.c.l.b16 %v139
    %v540 = vunpack.c.h.b16 %v139
    %v541 = vunpack.c.l.b16 %v140
    %v542 = vunpack.c.h.b16 %v140
    %v543 = vunpack.c.l.b16 %v141
    %v544 = vunpack.c.h.b16 %v141
    %v545 = vunpack.c.l.b16 %v142
    %v546 = vunpack.c.h.b16 %v142
    %v547 = vunpack.c.l.b16 %v143
    %v548 = vunpack.c.h.b16 %v143
    %v549 = vunpack.c.l.b16 %v144
    %v550 = vunpack.c.h.b16 %v144
    %v551 = vunpack.c.l.b16 %v145
    %v552 = vunpack.c.h.b16 %v145
    %v553 = vunpack.c.l.b16 %v146
    %v554 = vunpack.c.h.b16 %v146
    %v555 = vunpack.c.l.b16 %v147
    %v556 = vunpack.c.h.b16 %v147
    %v557 = vunpack.c.l.b16 %v148
    %v558 = vunpack.c.h.b16 %v148
    %v559 = vunpack.c.l.b16 %v149
    %v560 = vunpack.c.h.b16 %v149
    %v561 = vunpack.c.l.b16 %v150
    %v562 = vunpack.c.h.b16 %v150
    %v563 = vunpack.c.l.b16 %v151
    %v564 = vunpack.c.h.b16 %v151
    %v565 = vunpack.c.l.b16 %v152
    %v566 = vunpack.c.h.b16 %v152
    %v567 = vunpack.c.l.b16 %v153
    %v568 = vunpack.c.h.b16 %v153
    %v569 = vunpack.c.l.b16 %v154
    %v570 = vunpack.c.h.b16 %v154
    %v571 = vunpack.c.l.b16 %v155
    %v572 = vunpack.c.h.b16 %v155
    %v573 = vunpack.c.l.b16 %v156
    %v574 = vunpack.c.h.b16 %v156
    %v575 = vunpack.c.l.b16 %v157
    %v576 = vunpack.c.h.b16 %v157
    %v577 = vunpack.c.l.b16 %v158
    %v578 = vunpack.c.h.b16 %v158
    %v579 = vunpack.c.l.b16 %v159
    %v580 = vunpack.c.h.b16 %v159
    %v581 = vunpack.c.l.b16 %v160
    %v582 = vunpack.c.h.b16 %v160
    %v583 = vunpack.c.l.b16 %v161
    %v584 = vunpack.c.h.b16 %v161
    %v585 = vunpack.c.l.b16 %v162
    %v586 = vunpack.c.h.b16 %v162
    %v587 = vunpack.c.l.b16 %v163
    %v588 = vunpack.c.h.b16 %v163
    %v589 = vunpack.c.l.b16 %v164
    %v590 = vunpack.c.h.b16 %v164
    %v591 = vunpack.c.l.b16 %v165
    %v592 = vunpack.c.h.b16 %v165
    %v593 = vunpack.c.l.b16 %v166
    %v594 = vunpack.c.h.b16 %v166
    %v595 = vunpack.c.l.b16 %v167
    %v596 = vunpack.c.h.b16 %v167
    %v597 = vunpack.c.l.b16 %v168
    %v598 = vunpack.c.h.b16 %v168
    %v599 = vunpack.c.l.b16 %v169
    %v600 = vunpack.c.h.b16 %v169
    %v601 = vunpack.c.l.b16 %v170
    %v602 = vunpack.c.h.b16 %v170
    %v603 = vunpack.c.l.b16 %v171
    %v604 = vunpack.c.h.b16 %v171
    %v605 = vunpack.c.l.b16 %v172
    %v606 = vunpack.c.h.b16 %v172
    %v607 = vunpack.c.l.b16 %v173
    %v608 = vunpack.c.h.b16 %v173
    %v609 = vunpack.c.l.b16 %v174
    %v610 = vunpack.c.h.b16 %v174
    %v611 = vunpack.c.l.b16 %v175
    %v612 = vunpack.c.h.b16 %v175
    %v613 = vunpack.c.l.b16 %v176
    %v614 = vunpack.c.h.b16 %v176
    %v615 = vunpack.c.l.b16 %v177
    %v616 = vunpack.c.h.b16 %v177
    %v617 = vunpack.c.l.b16 %v178
    %v618 = vunpack.c.h.b16 %v178
    %v619 = vunpack.c.l.b16 %v179
    %v620 = vunpack.c.h.b16 %v179
    %v621 = vunpack.c.l.b16 %v180
    %v622 = vunpack.c.h.b16 %v180
    %v623 = vunpack.c.l.b16 %v181
    %v624 = vunpack.c.h.b16 %v181
    %v625 = vunpack.c.l.b16 %v182
    %v626 = vunpack.c.h.b16 %v182
    %v627 = vunpack.c.l.b16 %v183
    %v628 = vunpack.c.h.b16 %v183
    %v629 = vunpack.c.l.b16 %v184
    %v630 = vunpack.c.h.b16 %v184
    %v631 = vunpack.c.l.b16 %v185
    %v632 = vunpack.c.h.b16 %v185
    %v633 = vunpack.c.l.b16 %v186
    %v634 = vunpack.c.h.b16 %v186
    %v635 = vunpack.c.l.b16 %v187
    %v636 = vunpack.c.h.b16 %v187
    %v637 = vunpack.c.l.b16 %v188
    %v638 = vunpack.c.h.b16 %v188
    %v639 = vunpack.c.l.b16 %v189
    %v640 = vunpack.c.h.b16 %v189
    %v641 = vunpack.c.l.b16 %v190
    %v642 = vunpack.c.h.b16 %v190
    %v643 = vunpack.c.l.b16 %v191
    %v644 = vunpack.c.h.b16 %v191
    %v645 = vunpack.c.l.b16 %v192
    %v646 = vunpack.c.h.b16 %v192
    %v647 = vunpack.c.l.b16 %v193
    %v648 = vunpack.c.h.b16 %v193
    %v649 = vunpack.c.l.b16 %v194
    %v650 = vunpack.c.h.b16 %v194
    %v651 = vunpack.c.l.b16 %v195
    %v652 = vunpack.c.h.b16 %v195
    %v653 = vunpack.c.l.b16 %v196
    %v654 = vunpack.c.h.b16 %v196
    %v655 = vunpack.c.l.b16 %v197
    %v656 = vunpack.c.h.b16 %v197
    %v657 = vunpack.c.l.b16 %v198
    %v658 = vunpack.c.h.b16 %v198
    %v659 = vunpack.c.l.b16 %v199
    %v660 = vunpack.c.h.b16 %v199
    %v661 = vunpack.c.l.b16 %v200
    %v662 = vunpack.c.h.b16 %v200
    %v663 = vunpack.c.l.b16 %v201
    %v664 = vunpack.c.h.b16 %v201
    %v665 = vpack.c.b16 %v545, %v537
    %v666 = vpack.c.b16 %v546, %v538
    %v667 = vpack.c.b16 %v547, %v539
    %v668 = vpack.c.b16 %v548, %v540
    %v669 = vpack.c.b16 %v549, %v541
    %v670 = vpack.c.b16 %v550, %v542
    %v671 = vpack.c.b16 %v551, %v543
    %v672 = vpack.c.b16 %v552, %v544
    %v673 = vpack.c.b16 %v561, %v553
    %v674 = vpack.c.b16 %v562, %v554
    %v675 = vpack.c.b16 %v563, %v555
    %v676 = vpack.c.b16 %v564, %v556
    %v677 = vpack.c.b16 %v565, %v557
    %v678 = vpack.c.b16 %v566, %v558
    %v679 = vpack.c.b16 %v567, %v559
    %v680 = vpack.c.b16 %v568, %v560
    %v681 = vpack.c.b16 %v577, %v569
    %v682 = vpack.c.b16 %v578, %v570
    %v683 = vpack.c.b16 %v579, %v571
    %v684 = vpack.c.b16 %v580, %v572
    %v685 = vpack.c.b16 %v581, %v573
    %v686 = vpack.c.b16 %v582, %v574
    %v687 = vpack.c.b16 %v583, %v575
    %v688 = vpack.c.b16 %v584, %v576
    %v689 = vpack.c.b16 %v593, %v585
    %v690 = vpack.c.b16 %v594, %v586
    %v691 = vpack.c.b16 %v595, %v587
    %v692 = vpack.c.b16 %v596, %v588
    %v693 = vpack.c.b16 %v597, %v589
    %v694 = vpack.c.b16 %v598, %v590
    %v695 = vpack.c.b16 %v599, %v591
    %v696 = vpack.c.b16 %v600, %v592
    %v697 = vpack.c.b16 %v609, %v601
    %v698 = vpack.c.b16 %v610, %v602
    %v699 = vpack.c.b16 %v611, %v603
    %v700 = vpack.c.b16 %v612, %v604
    %v701 = vpack.c.b16 %v613, %v605
    %v702 = vpack.c.b16 %v614, %v606
    %v703 = vpack.c.b16 %v615, %v607
    %v704 = vpack.c.b16 %v616, %v608
    %v705 = vpack.c.b16 %v625, %v617
    %v706 = vpack.c.b16 %v626, %v618
    %v707 = vpack.c.b16 %v627, %v619
    %v708 = vpack.c.b16 %v628, %v620
    %v709 = vpack.c.b16 %v629, %v621
    %v710 = vpack.c.b16 %v630, %v622
    %v711 = vpack.c.b16 %v631, %v623
    %v712 = vpack.c.b16 %v632, %v624
    %v713 = vpack.c.b16 %v641, %v633
    %v714 = vpack.c.b16 %v642, %v634
    %v715 = vpack.c.b16 %v643, %v635
    %v716 = vpack.c.b16 %v644, %v636
    %v717 = vpack.c.b16 %v645, %v637
    %v718 = vpack.c.b16 %v646, %v638
    %v719 = vpack.c.b16 %v647, %v639
    %v720 = vpack.c.b16 %v648, %v640
    %v721 = vpack.c.b16 %v657, %v649
    %v722 = vpack.c.b16 %v658, %v650
    %v723 = vpack.c.b16 %v659, %v651
    %v724 = vpack.c.b16 %v660, %v652
    %v725 = vpack.c.b16 %v661, %v653
    %v726 = vpack.c.b16 %v662, %v654
    %v727 = vpack.c.b16 %v663, %v655
    %v728 = vpack.c.b16 %v664, %v656
    %793 = vmatpush.bf16.msra.mxu0 %v721
    %794 = vmatpush.bf16.msra.mxu0 %v713
    %795 = vmatpush.bf16.msra.mxu0 %v705
    %796 = vmatpush.bf16.msra.mxu0 %v697
    %797 = vmatpush.bf16.msra.mxu0 %v689
    %798 = vmatpush.bf16.msra.mxu0 %v681
    %799 = vmatpush.bf16.msra.mxu0 %v673
    %800 = vmatpush.bf16.msra.mxu0 %v665
    %801 = vmatmul.bf16.gmra.mxu0 %v472
    %v802 = vpop.f32.mrf.mxu0
    %v803 = vadd.f32 0.0, %v802
    %v804 = vpop.f32.mrf.mxu0
    %805 = vdwg.mxu0
    %806 = vmatpush.bf16.msra.mxu0 %v722
    %807 = vmatpush.bf16.msra.mxu0 %v714
    %808 = vmatpush.bf16.msra.mxu0 %v706
    %809 = vmatpush.bf16.msra.mxu0 %v698
    %810 = vmatpush.bf16.msra.mxu0 %v690
    %811 = vmatpush.bf16.msra.mxu0 %v682
    %812 = vmatpush.bf16.msra.mxu0 %v674
    %813 = vmatpush.bf16.msra.mxu0 %v666
    %814 = vmatmul.bf16.gmra.mxu0 %v472
    %v815 = vpop.f32.mrf.mxu0
    %v816 = vadd.f32 0.0, %v815
    %v817 = vpop.f32.mrf.mxu0
    %818 = vdwg.mxu0
    %819 = vmatpush.bf16.msra.mxu0 %v723
    %820 = vmatpush.bf16.msra.mxu0 %v715
    %821 = vmatpush.bf16.msra.mxu0 %v707
    %822 = vmatpush.bf16.msra.mxu0 %v699
    %823 = vmatpush.bf16.msra.mxu0 %v691
    %824 = vmatpush.bf16.msra.mxu0 %v683
    %825 = vmatpush.bf16.msra.mxu0 %v675
    %826 = vmatpush.bf16.msra.mxu0 %v667
    %827 = vmatmul.bf16.gmra.mxu0 %v472
    %v828 = vpop.f32.mrf.mxu0
    %v829 = vadd.f32 0.0, %v828
    %v830 = vpop.f32.mrf.mxu0
    %831 = vdwg.mxu0
    %832 = vmatpush.bf16.msra.mxu0 %v724
    %833 = vmatpush.bf16.msra.mxu0 %v716
    %834 = vmatpush.bf16.msra.mxu0 %v708
    %835 = vmatpush.bf16.msra.mxu0 %v700
    %836 = vmatpush.bf16.msra.mxu0 %v692
    %837 = vmatpush.bf16.msra.mxu0 %v684
    %838 = vmatpush.bf16.msra.mxu0 %v676
    %839 = vmatpush.bf16.msra.mxu0 %v668
    %840 = vmatmul.bf16.gmra.mxu0 %v472
    %v841 = vpop.f32.mrf.mxu0
    %v842 = vadd.f32 0.0, %v841
    %v843 = vpop.f32.mrf.mxu0
    %844 = vdwg.mxu0
    %845 = vmatpush.bf16.msra.mxu0 %v725
    %846 = vmatpush.bf16.msra.mxu0 %v717
    %847 = vmatpush.bf16.msra.mxu0 %v709
    %848 = vmatpush.bf16.msra.mxu0 %v701
    %849 = vmatpush.bf16.msra.mxu0 %v693
    %850 = vmatpush.bf16.msra.mxu0 %v685
    %851 = vmatpush.bf16.msra.mxu0 %v677
    %852 = vmatpush.bf16.msra.mxu0 %v669
    %853 = vmatmul.bf16.gmra.mxu0 %v472
    %v854 = vpop.f32.mrf.mxu0
    %v855 = vadd.f32 0.0, %v854
    %v856 = vpop.f32.mrf.mxu0
    %857 = vdwg.mxu0
    %858 = vmatpush.bf16.msra.mxu0 %v726
    %859 = vmatpush.bf16.msra.mxu0 %v718
    %860 = vmatpush.bf16.msra.mxu0 %v710
    %861 = vmatpush.bf16.msra.mxu0 %v702
    %862 = vmatpush.bf16.msra.mxu0 %v694
    %863 = vmatpush.bf16.msra.mxu0 %v686
    %864 = vmatpush.bf16.msra.mxu0 %v678
    %865 = vmatpush.bf16.msra.mxu0 %v670
    %866 = vmatmul.bf16.gmra.mxu0 %v472
    %v867 = vpop.f32.mrf.mxu0
    %v868 = vadd.f32 0.0, %v867
    %v869 = vpop.f32.mrf.mxu0
    %870 = vdwg.mxu0
    %871 = vmatpush.bf16.msra.mxu0 %v727
    %872 = vmatpush.bf16.msra.mxu0 %v719
    %873 = vmatpush.bf16.msra.mxu0 %v711
    %874 = vmatpush.bf16.msra.mxu0 %v703
    %875 = vmatpush.bf16.msra.mxu0 %v695
    %876 = vmatpush.bf16.msra.mxu0 %v687
    %877 = vmatpush.bf16.msra.mxu0 %v679
    %878 = vmatpush.bf16.msra.mxu0 %v671
    %879 = vmatmul.bf16.gmra.mxu0 %v472
    %v880 = vpop.f32.mrf.mxu0
    %v881 = vadd.f32 0.0, %v880
    %v882 = vpop.f32.mrf.mxu0
    %883 = vdwg.mxu0
    %884 = vmatpush.bf16.msra.mxu0 %v728
    %885 = vmatpush.bf16.msra.mxu0 %v720
    %886 = vmatpush.bf16.msra.mxu0 %v712
    %887 = vmatpush.bf16.msra.mxu0 %v704
    %888 = vmatpush.bf16.msra.mxu0 %v696
    %889 = vmatpush.bf16.msra.mxu0 %v688
    %890 = vmatpush.bf16.msra.mxu0 %v680
    %891 = vmatpush.bf16.msra.mxu0 %v672
    %892 = vmatmul.bf16.gmra.mxu0 %v472
    %v893 = vpop.f32.mrf.mxu0
    %v894 = vadd.f32 0.0, %v893
    %v895 = vpop.f32.mrf.mxu0
    %896 = vdwg.mxu0
    %v897 = vadd.f32 %v855, %v284
    %v898 = vadd.f32 %v868, %v285
    %v899 = vadd.f32 %v881, %v286
    %v900 = vadd.f32 %v894, %v287
    %v901 = vxor.u32 %v897, 2147483648
    %v902 = vxor.u32 %v898, 2147483648
    %v903 = vxor.u32 %v899, 2147483648
    %v904 = vmul.f32 %v901, 1.442695
    %v905 = vpow.pop %v904
    %v906 = vmul.f32 %v902, 1.442695
    %v907 = vpow.pop %v906
    %v908 = vmul.f32 %v903, 1.442695
    %v909 = vpow.pop %v908
    %v910 = vadd.f32 %v905, 1.0
    %v911 = vadd.f32 %v907, 1.0
    %v912 = vadd.f32 %v909, 1.0
    %v913 = vrcp.pop %v910
    %v914 = vmul.f32 %v910, %v913
    %v915 = vsub.f32 1.0, %v914
    %v916 = vmul.f32 %v913, %v915
    %v917 = vadd.f32 %v913, %v916
    %vm918 = vweird.f32 %v910
    %vm919 = vweird.f32 %v913
    %vm920 = vmor %vm918, %vm919
    %v921 = vsel %vm920, %v913, %v917
    %v922 = vand.u32 2147483647, %v910
    %vm923 = vcmp.eq.f32.partialorder %v922, 8.507059e+37
    %v924 = vand.u32 %v910, 2147483648
    %v925 = vor.u32 1.1754944e-38, %v924
    %v926 = vsel %vm923, %v925, %v921
    %v927 = vmul.f32 1.0, %v926
    %v928 = vrcp.pop %v911
    %v929 = vmul.f32 %v911, %v928
    %v930 = vsub.f32 1.0, %v929
    %v931 = vmul.f32 %v928, %v930
    %v932 = vadd.f32 %v928, %v931
    %vm933 = vweird.f32 %v911
    %vm934 = vweird.f32 %v928
    %vm935 = vmor %vm933, %vm934
    %v936 = vsel %vm935, %v928, %v932
    %v937 = vand.u32 2147483647, %v911
    %vm938 = vcmp.eq.f32.partialorder %v937, 8.507059e+37
    %v939 = vand.u32 %v911, 2147483648
    %v940 = vor.u32 1.1754944e-38, %v939
    %v941 = vsel %vm938, %v940, %v936
    %v942 = vmul.f32 1.0, %v941
    %v943 = vrcp.pop %v912
    %v944 = vmul.f32 %v912, %v943
    %v945 = vsub.f32 1.0, %v944
    %v946 = vmul.f32 %v943, %v945
    %v947 = vadd.f32 %v943, %v946
    %vm948 = vweird.f32 %v912
    %vm949 = vweird.f32 %v943
    %vm950 = vmor %vm948, %vm949
    %v951 = vsel %vm950, %v943, %v947
    %v952 = vand.u32 2147483647, %v912
    %vm953 = vcmp.eq.f32.partialorder %v952, 8.507059e+37
    %v954 = vand.u32 %v912, 2147483648
    %v955 = vor.u32 1.1754944e-38, %v954
    %v956 = vsel %vm953, %v955, %v951
    %v957 = vmul.f32 1.0, %v956
    %v958 = vtanh.pop %v900
    %v959 = vmul.f32 %v942, 0.0
    %v960 = vmul.f32 %v927, %v958
    %v961 = vadd.f32 %v959, %v960
    %v962 = vtanh.pop %v961
    %v963 = vmul.f32 %v957, %v962
    %v968 = vrot.slane %v803, 6
    %v969 = vrot.slane %v816, 6
    %v970 = vrot.slane %v829, 6
    %v971 = vrot.slane %v842, 6
    %v976 = vadd.f32 %v363, %v968
    %v977 = vadd.f32 %v377, %v969
    %v978 = vadd.f32 %v391, %v970
    %v979 = vadd.f32 %v405, %v971
    %v980 = vxor.u32 %v976, 2147483648
    %v981 = vxor.u32 %v977, 2147483648
    %v982 = vxor.u32 %v978, 2147483648
    %v983 = vmul.f32 %v980, 1.442695
    %v984 = vpow.pop %v983
    %v985 = vmul.f32 %v981, 1.442695
    %v986 = vpow.pop %v985
    %v987 = vmul.f32 %v982, 1.442695
    %v988 = vpow.pop %v987
    %v989 = vadd.f32 %v984, 1.0
    %v990 = vadd.f32 %v986, 1.0
    %v991 = vadd.f32 %v988, 1.0
    %v992 = vrcp.pop %v989
    %v993 = vmul.f32 %v989, %v992
    %v994 = vsub.f32 1.0, %v993
    %v995 = vmul.f32 %v992, %v994
    %v996 = vadd.f32 %v992, %v995
    %vm997 = vweird.f32 %v989
    %vm998 = vweird.f32 %v992
    %vm999 = vmor %vm997, %vm998
    %v1000 = vsel %vm999, %v992, %v996
    %v1001 = vand.u32 2147483647, %v989
    %vm1002 = vcmp.eq.f32.partialorder %v1001, 8.507059e+37
    %v1003 = vand.u32 %v989, 2147483648
    %v1004 = vor.u32 1.1754944e-38, %v1003
    %v1005 = vsel %vm1002, %v1004, %v1000
    %v1006 = vmul.f32 1.0, %v1005
    %v1007 = vrcp.pop %v990
    %v1008 = vmul.f32 %v990, %v1007
    %v1009 = vsub.f32 1.0, %v1008
    %v1010 = vmul.f32 %v1007, %v1009
    %v1011 = vadd.f32 %v1007, %v1010
    %vm1012 = vweird.f32 %v990
    %vm1013 = vweird.f32 %v1007
    %vm1014 = vmor %vm1012, %vm1013
    %v1015 = vsel %vm1014, %v1007, %v1011
    %v1016 = vand.u32 2147483647, %v990
    %vm1017 = vcmp.eq.f32.partialorder %v1016, 8.507059e+37
    %v1018 = vand.u32 %v990, 2147483648
    %v1019 = vor.u32 1.1754944e-38, %v1018
    %v1020 = vsel %vm1017, %v1019, %v1015
    %v1021 = vmul.f32 1.0, %v1020
    %v1022 = vrcp.pop %v991
    %v1023 = vmul.f32 %v991, %v1022
    %v1024 = vsub.f32 1.0, %v1023
    %v1025 = vmul.f32 %v1022, %v1024
    %v1026 = vadd.f32 %v1022, %v1025
    %vm1027 = vweird.f32 %v991
    %vm1028 = vweird.f32 %v1022
    %vm1029 = vmor %vm1027, %vm1028
    %v1030 = vsel %vm1029, %v1022, %v1026
    %v1031 = vand.u32 2147483647, %v991
    %vm1032 = vcmp.eq.f32.partialorder %v1031, 8.507059e+37
    %v1033 = vand.u32 %v991, 2147483648
    %v1034 = vor.u32 1.1754944e-38, %v1033
    %v1035 = vsel %vm1032, %v1034, %v1030
    %v1036 = vmul.f32 1.0, %v1035
    %v1037 = vtanh.pop %v979
    %v1039 = vrot.slane %v469, 6
    %v1041 = vmul.f32 %v1021, %v1039
    %v1042 = vmul.f32 %v1006, %v1037
    %v1043 = vadd.f32 %v1041, %v1042
    %v1044 = vtanh.pop %v1043
    %v1045 = vmul.f32 %v1036, %v1044
    %v1047 = vrot.slane %v963, 6
    %v1049 = vpack.c.bf16 %v1045, %v1045
    %v1050 = vpack.c.bf16 %v1047, %v1047
    %v1053 = vrot.slane %v1049, 1
    %v1054 = vrot.slane %v1050, 1
    %v1121 = vunpack.c.l.b16 %v202
    %v1122 = vunpack.c.h.b16 %v202
    %v1123 = vunpack.c.l.b16 %v203
    %v1124 = vunpack.c.h.b16 %v203
    %v1125 = vunpack.c.l.b16 %v204
    %v1126 = vunpack.c.h.b16 %v204
    %v1127 = vunpack.c.l.b16 %v205
    %v1128 = vunpack.c.h.b16 %v205
    %v1129 = vunpack.c.l.b16 %v206
    %v1130 = vunpack.c.h.b16 %v206
    %v1131 = vunpack.c.l.b16 %v207
    %v1132 = vunpack.c.h.b16 %v207
    %v1133 = vunpack.c.l.b16 %v208
    %v1134 = vunpack.c.h.b16 %v208
    %v1135 = vunpack.c.l.b16 %v209
    %v1136 = vunpack.c.h.b16 %v209
    %v1137 = vunpack.c.l.b16 %v210
    %v1138 = vunpack.c.h.b16 %v210
    %v1139 = vunpack.c.l.b16 %v211
    %v1140 = vunpack.c.h.b16 %v211
    %v1141 = vunpack.c.l.b16 %v212
    %v1142 = vunpack.c.h.b16 %v212
    %v1143 = vunpack.c.l.b16 %v213
    %v1144 = vunpack.c.h.b16 %v213
    %v1145 = vunpack.c.l.b16 %v214
    %v1146 = vunpack.c.h.b16 %v214
    %v1147 = vunpack.c.l.b16 %v215
    %v1148 = vunpack.c.h.b16 %v215
    %v1149 = vunpack.c.l.b16 %v216
    %v1150 = vunpack.c.h.b16 %v216
    %v1151 = vunpack.c.l.b16 %v217
    %v1152 = vunpack.c.h.b16 %v217
    %v1153 = vunpack.c.l.b16 %v218
    %v1154 = vunpack.c.h.b16 %v218
    %v1155 = vunpack.c.l.b16 %v219
    %v1156 = vunpack.c.h.b16 %v219
    %v1157 = vunpack.c.l.b16 %v220
    %v1158 = vunpack.c.h.b16 %v220
    %v1159 = vunpack.c.l.b16 %v221
    %v1160 = vunpack.c.h.b16 %v221
    %v1161 = vunpack.c.l.b16 %v222
    %v1162 = vunpack.c.h.b16 %v222
    %v1163 = vunpack.c.l.b16 %v223
    %v1164 = vunpack.c.h.b16 %v223
    %v1165 = vunpack.c.l.b16 %v224
    %v1166 = vunpack.c.h.b16 %v224
    %v1167 = vunpack.c.l.b16 %v225
    %v1168 = vunpack.c.h.b16 %v225
    %v1169 = vunpack.c.l.b16 %v226
    %v1170 = vunpack.c.h.b16 %v226
    %v1171 = vunpack.c.l.b16 %v227
    %v1172 = vunpack.c.h.b16 %v227
    %v1173 = vunpack.c.l.b16 %v228
    %v1174 = vunpack.c.h.b16 %v228
    %v1175 = vunpack.c.l.b16 %v229
    %v1176 = vunpack.c.h.b16 %v229
    %v1177 = vunpack.c.l.b16 %v230
    %v1178 = vunpack.c.h.b16 %v230
    %v1179 = vunpack.c.l.b16 %v231
    %v1180 = vunpack.c.h.b16 %v231
    %v1181 = vunpack.c.l.b16 %v232
    %v1182 = vunpack.c.h.b16 %v232
    %v1183 = vunpack.c.l.b16 %v233
    %v1184 = vunpack.c.h.b16 %v233
    %v1185 = vunpack.c.l.b16 %v234
    %v1186 = vunpack.c.h.b16 %v234
    %v1187 = vunpack.c.l.b16 %v235
    %v1188 = vunpack.c.h.b16 %v235
    %v1189 = vunpack.c.l.b16 %v236
    %v1190 = vunpack.c.h.b16 %v236
    %v1191 = vunpack.c.l.b16 %v237
    %v1192 = vunpack.c.h.b16 %v237
    %v1193 = vunpack.c.l.b16 %v238
    %v1194 = vunpack.c.h.b16 %v238
    %v1195 = vunpack.c.l.b16 %v239
    %v1196 = vunpack.c.h.b16 %v239
    %v1197 = vunpack.c.l.b16 %v240
    %v1198 = vunpack.c.h.b16 %v240
    %v1199 = vunpack.c.l.b16 %v241
    %v1200 = vunpack.c.h.b16 %v241
    %v1201 = vunpack.c.l.b16 %v242
    %v1202 = vunpack.c.h.b16 %v242
    %v1203 = vunpack.c.l.b16 %v243
    %v1204 = vunpack.c.h.b16 %v243
    %v1205 = vunpack.c.l.b16 %v244
    %v1206 = vunpack.c.h.b16 %v244
    %v1207 = vunpack.c.l.b16 %v245
    %v1208 = vunpack.c.h.b16 %v245
    %v1209 = vunpack.c.l.b16 %v246
    %v1210 = vunpack.c.h.b16 %v246
    %v1211 = vunpack.c.l.b16 %v247
    %v1212 = vunpack.c.h.b16 %v247
    %v1213 = vunpack.c.l.b16 %v248
    %v1214 = vunpack.c.h.b16 %v248
    %v1215 = vunpack.c.l.b16 %v249
    %v1216 = vunpack.c.h.b16 %v249
    %v1217 = vunpack.c.l.b16 %v250
    %v1218 = vunpack.c.h.b16 %v250
    %v1219 = vunpack.c.l.b16 %v251
    %v1220 = vunpack.c.h.b16 %v251
    %v1221 = vunpack.c.l.b16 %v252
    %v1222 = vunpack.c.h.b16 %v252
    %v1223 = vunpack.c.l.b16 %v253
    %v1224 = vunpack.c.h.b16 %v253
    %v1225 = vunpack.c.l.b16 %v254
    %v1226 = vunpack.c.h.b16 %v254
    %v1227 = vunpack.c.l.b16 %v255
    %v1228 = vunpack.c.h.b16 %v255
    %v1229 = vunpack.c.l.b16 %v256
    %v1230 = vunpack.c.h.b16 %v256
    %v1231 = vunpack.c.l.b16 %v257
    %v1232 = vunpack.c.h.b16 %v257
    %v1233 = vunpack.c.l.b16 %v258
    %v1234 = vunpack.c.h.b16 %v258
    %v1235 = vunpack.c.l.b16 %v259
    %v1236 = vunpack.c.h.b16 %v259
    %v1237 = vunpack.c.l.b16 %v260
    %v1238 = vunpack.c.h.b16 %v260
    %v1239 = vunpack.c.l.b16 %v261
    %v1240 = vunpack.c.h.b16 %v261
    %v1241 = vunpack.c.l.b16 %v262
    %v1242 = vunpack.c.h.b16 %v262
    %v1243 = vunpack.c.l.b16 %v263
    %v1244 = vunpack.c.h.b16 %v263
    %v1245 = vunpack.c.l.b16 %v264
    %v1246 = vunpack.c.h.b16 %v264
    %v1247 = vunpack.c.l.b16 %v265
    %v1248 = vunpack.c.h.b16 %v265
    %v1249 = vpack.c.b16 %v1129, %v1121
    %v1250 = vpack.c.b16 %v1130, %v1122
    %v1251 = vpack.c.b16 %v1131, %v1123
    %v1252 = vpack.c.b16 %v1132, %v1124
    %v1253 = vpack.c.b16 %v1133, %v1125
    %v1254 = vpack.c.b16 %v1134, %v1126
    %v1255 = vpack.c.b16 %v1135, %v1127
    %v1256 = vpack.c.b16 %v1136, %v1128
    %v1257 = vpack.c.b16 %v1145, %v1137
    %v1258 = vpack.c.b16 %v1146, %v1138
    %v1259 = vpack.c.b16 %v1147, %v1139
    %v1260 = vpack.c.b16 %v1148, %v1140
    %v1261 = vpack.c.b16 %v1149, %v1141
    %v1262 = vpack.c.b16 %v1150, %v1142
    %v1263 = vpack.c.b16 %v1151, %v1143
    %v1264 = vpack.c.b16 %v1152, %v1144
    %v1265 = vpack.c.b16 %v1161, %v1153
    %v1266 = vpack.c.b16 %v1162, %v1154
    %v1267 = vpack.c.b16 %v1163, %v1155
    %v1268 = vpack.c.b16 %v1164, %v1156
    %v1269 = vpack.c.b16 %v1165, %v1157
    %v1270 = vpack.c.b16 %v1166, %v1158
    %v1271 = vpack.c.b16 %v1167, %v1159
    %v1272 = vpack.c.b16 %v1168, %v1160
    %v1273 = vpack.c.b16 %v1177, %v1169
    %v1274 = vpack.c.b16 %v1178, %v1170
    %v1275 = vpack.c.b16 %v1179, %v1171
    %v1276 = vpack.c.b16 %v1180, %v1172
    %v1277 = vpack.c.b16 %v1181, %v1173
    %v1278 = vpack.c.b16 %v1182, %v1174
    %v1279 = vpack.c.b16 %v1183, %v1175
    %v1280 = vpack.c.b16 %v1184, %v1176
    %v1281 = vpack.c.b16 %v1193, %v1185
    %v1282 = vpack.c.b16 %v1194, %v1186
    %v1283 = vpack.c.b16 %v1195, %v1187
    %v1284 = vpack.c.b16 %v1196, %v1188
    %v1285 = vpack.c.b16 %v1197, %v1189
    %v1286 = vpack.c.b16 %v1198, %v1190
    %v1287 = vpack.c.b16 %v1199, %v1191
    %v1288 = vpack.c.b16 %v1200, %v1192
    %v1289 = vpack.c.b16 %v1209, %v1201
    %v1290 = vpack.c.b16 %v1210, %v1202
    %v1291 = vpack.c.b16 %v1211, %v1203
    %v1292 = vpack.c.b16 %v1212, %v1204
    %v1293 = vpack.c.b16 %v1213, %v1205
    %v1294 = vpack.c.b16 %v1214, %v1206
    %v1295 = vpack.c.b16 %v1215, %v1207
    %v1296 = vpack.c.b16 %v1216, %v1208
    %v1297 = vpack.c.b16 %v1225, %v1217
    %v1298 = vpack.c.b16 %v1226, %v1218
    %v1299 = vpack.c.b16 %v1227, %v1219
    %v1300 = vpack.c.b16 %v1228, %v1220
    %v1301 = vpack.c.b16 %v1229, %v1221
    %v1302 = vpack.c.b16 %v1230, %v1222
    %v1303 = vpack.c.b16 %v1231, %v1223
    %v1304 = vpack.c.b16 %v1232, %v1224
    %v1305 = vpack.c.b16 %v1241, %v1233
    %v1306 = vpack.c.b16 %v1242, %v1234
    %v1307 = vpack.c.b16 %v1243, %v1235
    %v1308 = vpack.c.b16 %v1244, %v1236
    %v1309 = vpack.c.b16 %v1245, %v1237
    %v1310 = vpack.c.b16 %v1246, %v1238
    %v1311 = vpack.c.b16 %v1247, %v1239
    %v1312 = vpack.c.b16 %v1248, %v1240
    %1377 = vmatpush.bf16.msra.mxu0 %v721
    %1378 = vmatpush.bf16.msra.mxu0 %v713
    %1379 = vmatpush.bf16.msra.mxu0 %v705
    %1380 = vmatpush.bf16.msra.mxu0 %v697
    %1381 = vmatpush.bf16.msra.mxu0 %v689
    %1382 = vmatpush.bf16.msra.mxu0 %v681
    %1383 = vmatpush.bf16.msra.mxu0 %v673
    %1384 = vmatpush.bf16.msra.mxu0 %v665
    %1385 = vmatmul.bf16.gmra.mxu0 %v1053
    %v1386 = vpop.f32.mrf.mxu0
    %v1387 = vadd.f32 0.0, %v1386
    %v1388 = vpop.f32.mrf.mxu0
    %1389 = vdwg.mxu0
    %1390 = vmatpush.bf16.msra.mxu0 %v1305
    %1391 = vmatpush.bf16.msra.mxu0 %v1297
    %1392 = vmatpush.bf16.msra.mxu0 %v1289
    %1393 = vmatpush.bf16.msra.mxu0 %v1281
    %1394 = vmatpush.bf16.msra.mxu0 %v1273
    %1395 = vmatpush.bf16.msra.mxu0 %v1265
    %1396 = vmatpush.bf16.msra.mxu0 %v1257
    %1397 = vmatpush.bf16.msra.mxu0 %v1249
    %1398 = vmatmul.bf16.gmra.mxu0 %v1054
    %v1399 = vpop.f32.mrf.mxu0
    %v1400 = vadd.f32 %v1387, %v1399
    %v1401 = vpop.f32.mrf.mxu0
    %1402 = vdwg.mxu0
    %1403 = vmatpush.bf16.msra.mxu0 %v722
    %1404 = vmatpush.bf16.msra.mxu0 %v714
    %1405 = vmatpush.bf16.msra.mxu0 %v706
    %1406 = vmatpush.bf16.msra.mxu0 %v698
    %1407 = vmatpush.bf16.msra.mxu0 %v690
    %1408 = vmatpush.bf16.msra.mxu0 %v682
    %1409 = vmatpush.bf16.msra.mxu0 %v674
    %1410 = vmatpush.bf16.msra.mxu0 %v666
    %1411 = vmatmul.bf16.gmra.mxu0 %v1053
    %v1412 = vpop.f32.mrf.mxu0
    %v1413 = vadd.f32 0.0, %v1412
    %v1414 = vpop.f32.mrf.mxu0
    %1415 = vdwg.mxu0
    %1416 = vmatpush.bf16.msra.mxu0 %v1306
    %1417 = vmatpush.bf16.msra.mxu0 %v1298
    %1418 = vmatpush.bf16.msra.mxu0 %v1290
    %1419 = vmatpush.bf16.msra.mxu0 %v1282
    %1420 = vmatpush.bf16.msra.mxu0 %v1274
    %1421 = vmatpush.bf16.msra.mxu0 %v1266
    %1422 = vmatpush.bf16.msra.mxu0 %v1258
    %1423 = vmatpush.bf16.msra.mxu0 %v1250
    %1424 = vmatmul.bf16.gmra.mxu0 %v1054
    %v1425 = vpop.f32.mrf.mxu0
    %v1426 = vadd.f32 %v1413, %v1425
    %v1427 = vpop.f32.mrf.mxu0
    %1428 = vdwg.mxu0
    %1429 = vmatpush.bf16.msra.mxu0 %v723
    %1430 = vmatpush.bf16.msra.mxu0 %v715
    %1431 = vmatpush.bf16.msra.mxu0 %v707
    %1432 = vmatpush.bf16.msra.mxu0 %v699
    %1433 = vmatpush.bf16.msra.mxu0 %v691
    %1434 = vmatpush.bf16.msra.mxu0 %v683
    %1435 = vmatpush.bf16.msra.mxu0 %v675
    %1436 = vmatpush.bf16.msra.mxu0 %v667
    %1437 = vmatmul.bf16.gmra.mxu0 %v1053
    %v1438 = vpop.f32.mrf.mxu0
    %v1439 = vadd.f32 0.0, %v1438
    %v1440 = vpop.f32.mrf.mxu0
    %1441 = vdwg.mxu0
    %1442 = vmatpush.bf16.msra.mxu0 %v1307
    %1443 = vmatpush.bf16.msra.mxu0 %v1299
    %1444 = vmatpush.bf16.msra.mxu0 %v1291
    %1445 = vmatpush.bf16.msra.mxu0 %v1283
    %1446 = vmatpush.bf16.msra.mxu0 %v1275
    %1447 = vmatpush.bf16.msra.mxu0 %v1267
    %1448 = vmatpush.bf16.msra.mxu0 %v1259
    %1449 = vmatpush.bf16.msra.mxu0 %v1251
    %1450 = vmatmul.bf16.gmra.mxu0 %v1054
    %v1451 = vpop.f32.mrf.mxu0
    %v1452 = vadd.f32 %v1439, %v1451
    %v1453 = vpop.f32.mrf.mxu0
    %1454 = vdwg.mxu0
    %1455 = vmatpush.bf16.msra.mxu0 %v724
    %1456 = vmatpush.bf16.msra.mxu0 %v716
    %1457 = vmatpush.bf16.msra.mxu0 %v708
    %1458 = vmatpush.bf16.msra.mxu0 %v700
    %1459 = vmatpush.bf16.msra.mxu0 %v692
    %1460 = vmatpush.bf16.msra.mxu0 %v684
    %1461 = vmatpush.bf16.msra.mxu0 %v676
    %1462 = vmatpush.bf16.msra.mxu0 %v668
    %1463 = vmatmul.bf16.gmra.mxu0 %v1053
    %v1464 = vpop.f32.mrf.mxu0
    %v1465 = vadd.f32 0.0, %v1464
    %v1466 = vpop.f32.mrf.mxu0
    %1467 = vdwg.mxu0
    %1468 = vmatpush.bf16.msra.mxu0 %v1308
    %1469 = vmatpush.bf16.msra.mxu0 %v1300
    %1470 = vmatpush.bf16.msra.mxu0 %v1292
    %1471 = vmatpush.bf16.msra.mxu0 %v1284
    %1472 = vmatpush.bf16.msra.mxu0 %v1276
    %1473 = vmatpush.bf16.msra.mxu0 %v1268
    %1474 = vmatpush.bf16.msra.mxu0 %v1260
    %1475 = vmatpush.bf16.msra.mxu0 %v1252
    %1476 = vmatmul.bf16.gmra.mxu0 %v1054
    %v1477 = vpop.f32.mrf.mxu0
    %v1478 = vadd.f32 %v1465, %v1477
    %v1479 = vpop.f32.mrf.mxu0
    %1480 = vdwg.mxu0
    %1481 = vmatpush.bf16.msra.mxu0 %v725
    %1482 = vmatpush.bf16.msra.mxu0 %v717
    %1483 = vmatpush.bf16.msra.mxu0 %v709
    %1484 = vmatpush.bf16.msra.mxu0 %v701
    %1485 = vmatpush.bf16.msra.mxu0 %v693
    %1486 = vmatpush.bf16.msra.mxu0 %v685
    %1487 = vmatpush.bf16.msra.mxu0 %v677
    %1488 = vmatpush.bf16.msra.mxu0 %v669
    %1489 = vmatmul.bf16.gmra.mxu0 %v1053
    %v1490 = vpop.f32.mrf.mxu0
    %v1491 = vadd.f32 0.0, %v1490
    %v1492 = vpop.f32.mrf.mxu0
    %1493 = vdwg.mxu0
    %1494 = vmatpush.bf16.msra.mxu0 %v1309
    %1495 = vmatpush.bf16.msra.mxu0 %v1301
    %1496 = vmatpush.bf16.msra.mxu0 %v1293
    %1497 = vmatpush.bf16.msra.mxu0 %v1285
    %1498 = vmatpush.bf16.msra.mxu0 %v1277
    %1499 = vmatpush.bf16.msra.mxu0 %v1269
    %1500 = vmatpush.bf16.msra.mxu0 %v1261
    %1501 = vmatpush.bf16.msra.mxu0 %v1253
    %1502 = vmatmul.bf16.gmra.mxu0 %v1054
    %v1503 = vpop.f32.mrf.mxu0
    %v1504 = vadd.f32 %v1491, %v1503
    %v1505 = vpop.f32.mrf.mxu0
    %1506 = vdwg.mxu0
    %1507 = vmatpush.bf16.msra.mxu0 %v726
    %1508 = vmatpush.bf16.msra.mxu0 %v718
    %1509 = vmatpush.bf16.msra.mxu0 %v710
    %1510 = vmatpush.bf16.msra.mxu0 %v702
    %1511 = vmatpush.bf16.msra.mxu0 %v694
    %1512 = vmatpush.bf16.msra.mxu0 %v686
    %1513 = vmatpush.bf16.msra.mxu0 %v678
    %1514 = vmatpush.bf16.msra.mxu0 %v670
    %1515 = vmatmul.bf16.gmra.mxu0 %v1053
    %v1516 = vpop.f32.mrf.mxu0
    %v1517 = vadd.f32 0.0, %v1516
    %v1518 = vpop.f32.mrf.mxu0
    %1519 = vdwg.mxu0
    %1520 = vmatpush.bf16.msra.mxu0 %v1310
    %1521 = vmatpush.bf16.msra.mxu0 %v1302
    %1522 = vmatpush.bf16.msra.mxu0 %v1294
    %1523 = vmatpush.bf16.msra.mxu0 %v1286
    %1524 = vmatpush.bf16.msra.mxu0 %v1278
    %1525 = vmatpush.bf16.msra.mxu0 %v1270
    %1526 = vmatpush.bf16.msra.mxu0 %v1262
    %1527 = vmatpush.bf16.msra.mxu0 %v1254
    %1528 = vmatmul.bf16.gmra.mxu0 %v1054
    %v1529 = vpop.f32.mrf.mxu0
    %v1530 = vadd.f32 %v1517, %v1529
    %v1531 = vpop.f32.mrf.mxu0
    %1532 = vdwg.mxu0
    %1533 = vmatpush.bf16.msra.mxu0 %v727
    %1534 = vmatpush.bf16.msra.mxu0 %v719
    %1535 = vmatpush.bf16.msra.mxu0 %v711
    %1536 = vmatpush.bf16.msra.mxu0 %v703
    %1537 = vmatpush.bf16.msra.mxu0 %v695
    %1538 = vmatpush.bf16.msra.mxu0 %v687
    %1539 = vmatpush.bf16.msra.mxu0 %v679
    %1540 = vmatpush.bf16.msra.mxu0 %v671
    %1541 = vmatmul.bf16.gmra.mxu0 %v1053
    %v1542 = vpop.f32.mrf.mxu0
    %v1543 = vadd.f32 0.0, %v1542
    %v1544 = vpop.f32.mrf.mxu0
    %1545 = vdwg.mxu0
    %1546 = vmatpush.bf16.msra.mxu0 %v1311
    %1547 = vmatpush.bf16.msra.mxu0 %v1303
    %1548 = vmatpush.bf16.msra.mxu0 %v1295
    %1549 = vmatpush.bf16.msra.mxu0 %v1287
    %1550 = vmatpush.bf16.msra.mxu0 %v1279
    %1551 = vmatpush.bf16.msra.mxu0 %v1271
    %1552 = vmatpush.bf16.msra.mxu0 %v1263
    %1553 = vmatpush.bf16.msra.mxu0 %v1255
    %1554 = vmatmul.bf16.gmra.mxu0 %v1054
    %v1555 = vpop.f32.mrf.mxu0
    %v1556 = vadd.f32 %v1543, %v1555
    %v1557 = vpop.f32.mrf.mxu0
    %1558 = vdwg.mxu0
    %1559 = vmatpush.bf16.msra.mxu0 %v728
    %1560 = vmatpush.bf16.msra.mxu0 %v720
    %1561 = vmatpush.bf16.msra.mxu0 %v712
    %1562 = vmatpush.bf16.msra.mxu0 %v704
    %1563 = vmatpush.bf16.msra.mxu0 %v696
    %1564 = vmatpush.bf16.msra.mxu0 %v688
    %1565 = vmatpush.bf16.msra.mxu0 %v680
    %1566 = vmatpush.bf16.msra.mxu0 %v672
    %1567 = vmatmul.bf16.gmra.mxu0 %v1053
    %v1568 = vpop.f32.mrf.mxu0
    %v1569 = vadd.f32 0.0, %v1568
    %v1570 = vpop.f32.mrf.mxu0
    %1571 = vdwg.mxu0
    %1572 = vmatpush.bf16.msra.mxu0 %v1312
    %1573 = vmatpush.bf16.msra.mxu0 %v1304
    %1574 = vmatpush.bf16.msra.mxu0 %v1296
    %1575 = vmatpush.bf16.msra.mxu0 %v1288
    %1576 = vmatpush.bf16.msra.mxu0 %v1280
    %1577 = vmatpush.bf16.msra.mxu0 %v1272
    %1578 = vmatpush.bf16.msra.mxu0 %v1264
    %1579 = vmatpush.bf16.msra.mxu0 %v1256
    %1580 = vmatmul.bf16.gmra.mxu0 %v1054
    %v1581 = vpop.f32.mrf.mxu0
    %v1582 = vadd.f32 %v1569, %v1581
    %v1583 = vpop.f32.mrf.mxu0
    %1584 = vdwg.mxu0
    %v1585 = vadd.f32 %v1504, %v284
    %v1586 = vadd.f32 %v1530, %v285
    %v1587 = vadd.f32 %v1556, %v286
    %v1588 = vadd.f32 %v1582, %v287
    %v1589 = vxor.u32 %v1585, 2147483648
    %v1590 = vxor.u32 %v1586, 2147483648
    %v1591 = vxor.u32 %v1587, 2147483648
    %v1592 = vmul.f32 %v1589, 1.442695
    %v1593 = vpow.pop %v1592
    %v1594 = vmul.f32 %v1590, 1.442695
    %v1595 = vpow.pop %v1594
    %v1596 = vmul.f32 %v1591, 1.442695
    %v1597 = vpow.pop %v1596
    %v1598 = vadd.f32 %v1593, 1.0
    %v1599 = vadd.f32 %v1595, 1.0
    %v1600 = vadd.f32 %v1597, 1.0
    %v1601 = vrcp.pop %v1598
    %v1602 = vmul.f32 %v1598, %v1601
    %v1603 = vsub.f32 1.0, %v1602
    %v1604 = vmul.f32 %v1601, %v1603
    %v1605 = vadd.f32 %v1601, %v1604
    %vm1606 = vweird.f32 %v1598
    %vm1607 = vweird.f32 %v1601
    %vm1608 = vmor %vm1606, %vm1607
    %v1609 = vsel %vm1608, %v1601, %v1605
    %v1610 = vand.u32 2147483647, %v1598
    %vm1611 = vcmp.eq.f32.partialorder %v1610, 8.507059e+37
    %v1612 = vand.u32 %v1598, 2147483648
    %v1613 = vor.u32 1.1754944e-38, %v1612
    %v1614 = vsel %vm1611, %v1613, %v1609
    %v1615 = vmul.f32 1.0, %v1614
    %v1616 = vrcp.pop %v1599
    %v1617 = vmul.f32 %v1599, %v1616
    %v1618 = vsub.f32 1.0, %v1617
    %v1619 = vmul.f32 %v1616, %v1618
    %v1620 = vadd.f32 %v1616, %v1619
    %vm1621 = vweird.f32 %v1599
    %vm1622 = vweird.f32 %v1616
    %vm1623 = vmor %vm1621, %vm1622
    %v1624 = vsel %vm1623, %v1616, %v1620
    %v1625 = vand.u32 2147483647, %v1599
    %vm1626 = vcmp.eq.f32.partialorder %v1625, 8.507059e+37
    %v1627 = vand.u32 %v1599, 2147483648
    %v1628 = vor.u32 1.1754944e-38, %v1627
    %v1629 = vsel %vm1626, %v1628, %v1624
    %v1630 = vmul.f32 1.0, %v1629
    %v1631 = vrcp.pop %v1600
    %v1632 = vmul.f32 %v1600, %v1631
    %v1633 = vsub.f32 1.0, %v1632
    %v1634 = vmul.f32 %v1631, %v1633
    %v1635 = vadd.f32 %v1631, %v1634
    %vm1636 = vweird.f32 %v1600
    %vm1637 = vweird.f32 %v1631
    %vm1638 = vmor %vm1636, %vm1637
    %v1639 = vsel %vm1638, %v1631, %v1635
    %v1640 = vand.u32 2147483647, %v1600
    %vm1641 = vcmp.eq.f32.partialorder %v1640, 8.507059e+37
    %v1642 = vand.u32 %v1600, 2147483648
    %v1643 = vor.u32 1.1754944e-38, %v1642
    %v1644 = vsel %vm1641, %v1643, %v1639
    %v1645 = vmul.f32 1.0, %v1644
    %v1646 = vtanh.pop %v1588
    %v1647 = vmul.f32 %v1630, %v961
    %v1648 = vmul.f32 %v1615, %v1646
    %v1649 = vadd.f32 %v1647, %v1648
    %v1650 = vtanh.pop %v1649
    %v1651 = vmul.f32 %v1645, %v1650
    %v1656 = vrot.slane %v1400, 4
    %v1657 = vrot.slane %v1426, 4
    %v1658 = vrot.slane %v1452, 4
    %v1659 = vrot.slane %v1478, 4
    %v1664 = vadd.f32 %v363, %v1656
    %v1665 = vadd.f32 %v377, %v1657
    %v1666 = vadd.f32 %v391, %v1658
    %v1667 = vadd.f32 %v405, %v1659
    %v1668 = vxor.u32 %v1664, 2147483648
    %v1669 = vxor.u32 %v1665, 2147483648
    %v1670 = vxor.u32 %v1666, 2147483648
    %v1671 = vmul.f32 %v1668, 1.442695
    %v1672 = vpow.pop %v1671
    %v1673 = vmul.f32 %v1669, 1.442695
    %v1674 = vpow.pop %v1673
    %v1675 = vmul.f32 %v1670, 1.442695
    %v1676 = vpow.pop %v1675
    %v1677 = vadd.f32 %v1672, 1.0
    %v1678 = vadd.f32 %v1674, 1.0
    %v1679 = vadd.f32 %v1676, 1.0
    %v1680 = vrcp.pop %v1677
    %v1681 = vmul.f32 %v1677, %v1680
    %v1682 = vsub.f32 1.0, %v1681
    %v1683 = vmul.f32 %v1680, %v1682
    %v1684 = vadd.f32 %v1680, %v1683
    %vm1685 = vweird.f32 %v1677
    %vm1686 = vweird.f32 %v1680
    %vm1687 = vmor %vm1685, %vm1686
    %v1688 = vsel %vm1687, %v1680, %v1684
    %v1689 = vand.u32 2147483647, %v1677
    %vm1690 = vcmp.eq.f32.partialorder %v1689, 8.507059e+37
    %v1691 = vand.u32 %v1677, 2147483648
    %v1692 = vor.u32 1.1754944e-38, %v1691
    %v1693 = vsel %vm1690, %v1692, %v1688
    %v1694 = vmul.f32 1.0, %v1693
    %v1695 = vrcp.pop %v1678
    %v1696 = vmul.f32 %v1678, %v1695
    %v1697 = vsub.f32 1.0, %v1696
    %v1698 = vmul.f32 %v1695, %v1697
    %v1699 = vadd.f32 %v1695, %v1698
    %vm1700 = vweird.f32 %v1678
    %vm1701 = vweird.f32 %v1695
    %vm1702 = vmor %vm1700, %vm1701
    %v1703 = vsel %vm1702, %v1695, %v1699
    %v1704 = vand.u32 2147483647, %v1678
    %vm1705 = vcmp.eq.f32.partialorder %v1704, 8.507059e+37
    %v1706 = vand.u32 %v1678, 2147483648
    %v1707 = vor.u32 1.1754944e-38, %v1706
    %v1708 = vsel %vm1705, %v1707, %v1703
    %v1709 = vmul.f32 1.0, %v1708
    %v1710 = vrcp.pop %v1679
    %v1711 = vmul.f32 %v1679, %v1710
    %v1712 = vsub.f32 1.0, %v1711
    %v1713 = vmul.f32 %v1710, %v1712
    %v1714 = vadd.f32 %v1710, %v1713
    %vm1715 = vweird.f32 %v1679
    %vm1716 = vweird.f32 %v1710
    %vm1717 = vmor %vm1715, %vm1716
    %v1718 = vsel %vm1717, %v1710, %v1714
    %v1719 = vand.u32 2147483647, %v1679
    %vm1720 = vcmp.eq.f32.partialorder %v1719, 8.507059e+37
    %v1721 = vand.u32 %v1679, 2147483648
    %v1722 = vor.u32 1.1754944e-38, %v1721
    %v1723 = vsel %vm1720, %v1722, %v1718
    %v1724 = vmul.f32 1.0, %v1723
    %v1725 = vtanh.pop %v1667
    %v1727 = vrot.slane %v1043, 6
    %v1729 = vmul.f32 %v1709, %v1727
    %v1730 = vmul.f32 %v1694, %v1725
    %v1731 = vadd.f32 %v1729, %v1730
    %v1732 = vtanh.pop %v1731
    %v1733 = vmul.f32 %v1724, %v1732
    %v1735 = vrot.slane %v1651, 4
    %v1737 = vpack.c.bf16 %v1733, %v1733
    %v1738 = vpack.c.bf16 %v1735, %v1735
    %v1741 = vrot.slane %v1737, 2
    %v1742 = vrot.slane %v1738, 2
    %1745 = vmatpush.bf16.msra.mxu0 %v721
    %1746 = vmatpush.bf16.msra.mxu0 %v713
    %1747 = vmatpush.bf16.msra.mxu0 %v705
    %1748 = vmatpush.bf16.msra.mxu0 %v697
    %1749 = vmatpush.bf16.msra.mxu0 %v689
    %1750 = vmatpush.bf16.msra.mxu0 %v681
    %1751 = vmatpush.bf16.msra.mxu0 %v673
    %1752 = vmatpush.bf16.msra.mxu0 %v665
    %1753 = vmatmul.bf16.gmra.mxu0 %v1741
    %v1754 = vpop.f32.mrf.mxu0
    %v1755 = vadd.f32 0.0, %v1754
    %v1756 = vpop.f32.mrf.mxu0
    %1757 = vdwg.mxu0
    %1758 = vmatpush.bf16.msra.mxu0 %v1305
    %1759 = vmatpush.bf16.msra.mxu0 %v1297
    %1760 = vmatpush.bf16.msra.mxu0 %v1289
    %1761 = vmatpush.bf16.msra.mxu0 %v1281
    %1762 = vmatpush.bf16.msra.mxu0 %v1273
    %1763 = vmatpush.bf16.msra.mxu0 %v1265
    %1764 = vmatpush.bf16.msra.mxu0 %v1257
    %1765 = vmatpush.bf16.msra.mxu0 %v1249
    %1766 = vmatmul.bf16.gmra.mxu0 %v1742
    %v1767 = vpop.f32.mrf.mxu0
    %v1768 = vadd.f32 %v1755, %v1767
    %v1769 = vpop.f32.mrf.mxu0
    %1770 = vdwg.mxu0
    %1771 = vmatpush.bf16.msra.mxu0 %v722
    %1772 = vmatpush.bf16.msra.mxu0 %v714
    %1773 = vmatpush.bf16.msra.mxu0 %v706
    %1774 = vmatpush.bf16.msra.mxu0 %v698
    %1775 = vmatpush.bf16.msra.mxu0 %v690
    %1776 = vmatpush.bf16.msra.mxu0 %v682
    %1777 = vmatpush.bf16.msra.mxu0 %v674
    %1778 = vmatpush.bf16.msra.mxu0 %v666
    %1779 = vmatmul.bf16.gmra.mxu0 %v1741
    %v1780 = vpop.f32.mrf.mxu0
    %v1781 = vadd.f32 0.0, %v1780
    %v1782 = vpop.f32.mrf.mxu0
    %1783 = vdwg.mxu0
    %1784 = vmatpush.bf16.msra.mxu0 %v1306
    %1785 = vmatpush.bf16.msra.mxu0 %v1298
    %1786 = vmatpush.bf16.msra.mxu0 %v1290
    %1787 = vmatpush.bf16.msra.mxu0 %v1282
    %1788 = vmatpush.bf16.msra.mxu0 %v1274
    %1789 = vmatpush.bf16.msra.mxu0 %v1266
    %1790 = vmatpush.bf16.msra.mxu0 %v1258
    %1791 = vmatpush.bf16.msra.mxu0 %v1250
    %1792 = vmatmul.bf16.gmra.mxu0 %v1742
    %v1793 = vpop.f32.mrf.mxu0
    %v1794 = vadd.f32 %v1781, %v1793
    %v1795 = vpop.f32.mrf.mxu0
    %1796 = vdwg.mxu0
    %1797 = vmatpush.bf16.msra.mxu0 %v723
    %1798 = vmatpush.bf16.msra.mxu0 %v715
    %1799 = vmatpush.bf16.msra.mxu0 %v707
    %1800 = vmatpush.bf16.msra.mxu0 %v699
    %1801 = vmatpush.bf16.msra.mxu0 %v691
    %1802 = vmatpush.bf16.msra.mxu0 %v683
    %1803 = vmatpush.bf16.msra.mxu0 %v675
    %1804 = vmatpush.bf16.msra.mxu0 %v667
    %1805 = vmatmul.bf16.gmra.mxu0 %v1741
    %v1806 = vpop.f32.mrf.mxu0
    %v1807 = vadd.f32 0.0, %v1806
    %v1808 = vpop.f32.mrf.mxu0
    %1809 = vdwg.mxu0
    %1810 = vmatpush.bf16.msra.mxu0 %v1307
    %1811 = vmatpush.bf16.msra.mxu0 %v1299
    %1812 = vmatpush.bf16.msra.mxu0 %v1291
    %1813 = vmatpush.bf16.msra.mxu0 %v1283
    %1814 = vmatpush.bf16.msra.mxu0 %v1275
    %1815 = vmatpush.bf16.msra.mxu0 %v1267
    %1816 = vmatpush.bf16.msra.mxu0 %v1259
    %1817 = vmatpush.bf16.msra.mxu0 %v1251
    %1818 = vmatmul.bf16.gmra.mxu0 %v1742
    %v1819 = vpop.f32.mrf.mxu0
    %v1820 = vadd.f32 %v1807, %v1819
    %v1821 = vpop.f32.mrf.mxu0
    %1822 = vdwg.mxu0
    %1823 = vmatpush.bf16.msra.mxu0 %v724
    %1824 = vmatpush.bf16.msra.mxu0 %v716
    %1825 = vmatpush.bf16.msra.mxu0 %v708
    %1826 = vmatpush.bf16.msra.mxu0 %v700
    %1827 = vmatpush.bf16.msra.mxu0 %v692
    %1828 = vmatpush.bf16.msra.mxu0 %v684
    %1829 = vmatpush.bf16.msra.mxu0 %v676
    %1830 = vmatpush.bf16.msra.mxu0 %v668
    %1831 = vmatmul.bf16.gmra.mxu0 %v1741
    %v1832 = vpop.f32.mrf.mxu0
    %v1833 = vadd.f32 0.0, %v1832
    %v1834 = vpop.f32.mrf.mxu0
    %1835 = vdwg.mxu0
    %1836 = vmatpush.bf16.msra.mxu0 %v1308
    %1837 = vmatpush.bf16.msra.mxu0 %v1300
    %1838 = vmatpush.bf16.msra.mxu0 %v1292
    %1839 = vmatpush.bf16.msra.mxu0 %v1284
    %1840 = vmatpush.bf16.msra.mxu0 %v1276
    %1841 = vmatpush.bf16.msra.mxu0 %v1268
    %1842 = vmatpush.bf16.msra.mxu0 %v1260
    %1843 = vmatpush.bf16.msra.mxu0 %v1252
    %1844 = vmatmul.bf16.gmra.mxu0 %v1742
    %v1845 = vpop.f32.mrf.mxu0
    %v1846 = vadd.f32 %v1833, %v1845
    %v1847 = vpop.f32.mrf.mxu0
    %1848 = vdwg.mxu0
    %1849 = vmatpush.bf16.msra.mxu0 %v725
    %1850 = vmatpush.bf16.msra.mxu0 %v717
    %1851 = vmatpush.bf16.msra.mxu0 %v709
    %1852 = vmatpush.bf16.msra.mxu0 %v701
    %1853 = vmatpush.bf16.msra.mxu0 %v693
    %1854 = vmatpush.bf16.msra.mxu0 %v685
    %1855 = vmatpush.bf16.msra.mxu0 %v677
    %1856 = vmatpush.bf16.msra.mxu0 %v669
    %1857 = vmatmul.bf16.gmra.mxu0 %v1741
    %v1858 = vpop.f32.mrf.mxu0
    %v1859 = vadd.f32 0.0, %v1858
    %v1860 = vpop.f32.mrf.mxu0
    %1861 = vdwg.mxu0
    %1862 = vmatpush.bf16.msra.mxu0 %v1309
    %1863 = vmatpush.bf16.msra.mxu0 %v1301
    %1864 = vmatpush.bf16.msra.mxu0 %v1293
    %1865 = vmatpush.bf16.msra.mxu0 %v1285
    %1866 = vmatpush.bf16.msra.mxu0 %v1277
    %1867 = vmatpush.bf16.msra.mxu0 %v1269
    %1868 = vmatpush.bf16.msra.mxu0 %v1261
    %1869 = vmatpush.bf16.msra.mxu0 %v1253
    %1870 = vmatmul.bf16.gmra.mxu0 %v1742
    %v1871 = vpop.f32.mrf.mxu0
    %v1872 = vadd.f32 %v1859, %v1871
    %v1873 = vpop.f32.mrf.mxu0
    %1874 = vdwg.mxu0
    %1875 = vmatpush.bf16.msra.mxu0 %v726
    %1876 = vmatpush.bf16.msra.mxu0 %v718
    %1877 = vmatpush.bf16.msra.mxu0 %v710
    %1878 = vmatpush.bf16.msra.mxu0 %v702
    %1879 = vmatpush.bf16.msra.mxu0 %v694
    %1880 = vmatpush.bf16.msra.mxu0 %v686
    %1881 = vmatpush.bf16.msra.mxu0 %v678
    %1882 = vmatpush.bf16.msra.mxu0 %v670
    %1883 = vmatmul.bf16.gmra.mxu0 %v1741
    %v1884 = vpop.f32.mrf.mxu0
    %v1885 = vadd.f32 0.0, %v1884
    %v1886 = vpop.f32.mrf.mxu0
    %1887 = vdwg.mxu0
    %1888 = vmatpush.bf16.msra.mxu0 %v1310
    %1889 = vmatpush.bf16.msra.mxu0 %v1302
    %1890 = vmatpush.bf16.msra.mxu0 %v1294
    %1891 = vmatpush.bf16.msra.mxu0 %v1286
    %1892 = vmatpush.bf16.msra.mxu0 %v1278
    %1893 = vmatpush.bf16.msra.mxu0 %v1270
    %1894 = vmatpush.bf16.msra.mxu0 %v1262
    %1895 = vmatpush.bf16.msra.mxu0 %v1254
    %1896 = vmatmul.bf16.gmra.mxu0 %v1742
    %v1897 = vpop.f32.mrf.mxu0
    %v1898 = vadd.f32 %v1885, %v1897
    %v1899 = vpop.f32.mrf.mxu0
    %1900 = vdwg.mxu0
    %1901 = vmatpush.bf16.msra.mxu0 %v727
    %1902 = vmatpush.bf16.msra.mxu0 %v719
    %1903 = vmatpush.bf16.msra.mxu0 %v711
    %1904 = vmatpush.bf16.msra.mxu0 %v703
    %1905 = vmatpush.bf16.msra.mxu0 %v695
    %1906 = vmatpush.bf16.msra.mxu0 %v687
    %1907 = vmatpush.bf16.msra.mxu0 %v679
    %1908 = vmatpush.bf16.msra.mxu0 %v671
    %1909 = vmatmul.bf16.gmra.mxu0 %v1741
    %v1910 = vpop.f32.mrf.mxu0
    %v1911 = vadd.f32 0.0, %v1910
    %v1912 = vpop.f32.mrf.mxu0
    %1913 = vdwg.mxu0
    %1914 = vmatpush.bf16.msra.mxu0 %v1311
    %1915 = vmatpush.bf16.msra.mxu0 %v1303
    %1916 = vmatpush.bf16.msra.mxu0 %v1295
    %1917 = vmatpush.bf16.msra.mxu0 %v1287
    %1918 = vmatpush.bf16.msra.mxu0 %v1279
    %1919 = vmatpush.bf16.msra.mxu0 %v1271
    %1920 = vmatpush.bf16.msra.mxu0 %v1263
    %1921 = vmatpush.bf16.msra.mxu0 %v1255
    %1922 = vmatmul.bf16.gmra.mxu0 %v1742
    %v1923 = vpop.f32.mrf.mxu0
    %v1924 = vadd.f32 %v1911, %v1923
    %v1925 = vpop.f32.mrf.mxu0
    %1926 = vdwg.mxu0
    %1927 = vmatpush.bf16.msra.mxu0 %v728
    %1928 = vmatpush.bf16.msra.mxu0 %v720
    %1929 = vmatpush.bf16.msra.mxu0 %v712
    %1930 = vmatpush.bf16.msra.mxu0 %v704
    %1931 = vmatpush.bf16.msra.mxu0 %v696
    %1932 = vmatpush.bf16.msra.mxu0 %v688
    %1933 = vmatpush.bf16.msra.mxu0 %v680
    %1934 = vmatpush.bf16.msra.mxu0 %v672
    %1935 = vmatmul.bf16.gmra.mxu0 %v1741
    %v1936 = vpop.f32.mrf.mxu0
    %v1937 = vadd.f32 0.0, %v1936
    %v1938 = vpop.f32.mrf.mxu0
    %1939 = vdwg.mxu0
    %1940 = vmatpush.bf16.msra.mxu0 %v1312
    %1941 = vmatpush.bf16.msra.mxu0 %v1304
    %1942 = vmatpush.bf16.msra.mxu0 %v1296
    %1943 = vmatpush.bf16.msra.mxu0 %v1288
    %1944 = vmatpush.bf16.msra.mxu0 %v1280
    %1945 = vmatpush.bf16.msra.mxu0 %v1272
    %1946 = vmatpush.bf16.msra.mxu0 %v1264
    %1947 = vmatpush.bf16.msra.mxu0 %v1256
    %1948 = vmatmul.bf16.gmra.mxu0 %v1742
    %v1949 = vpop.f32.mrf.mxu0
    %v1950 = vadd.f32 %v1937, %v1949
    %v1951 = vpop.f32.mrf.mxu0
    %1952 = vdwg.mxu0
    %v1953 = vadd.f32 %v1872, %v284
    %v1954 = vadd.f32 %v1898, %v285
    %v1955 = vadd.f32 %v1924, %v286
    %v1956 = vadd.f32 %v1950, %v287
    %v1957 = vxor.u32 %v1953, 2147483648
    %v1958 = vxor.u32 %v1954, 2147483648
    %v1959 = vxor.u32 %v1955, 2147483648
    %v1960 = vmul.f32 %v1957, 1.442695
    %v1961 = vpow.pop %v1960
    %v1962 = vmul.f32 %v1958, 1.442695
    %v1963 = vpow.pop %v1962
    %v1964 = vmul.f32 %v1959, 1.442695
    %v1965 = vpow.pop %v1964
    %v1966 = vadd.f32 %v1961, 1.0
    %v1967 = vadd.f32 %v1963, 1.0
    %v1968 = vadd.f32 %v1965, 1.0
    %v1969 = vrcp.pop %v1966
    %v1970 = vmul.f32 %v1966, %v1969
    %v1971 = vsub.f32 1.0, %v1970
    %v1972 = vmul.f32 %v1969, %v1971
    %v1973 = vadd.f32 %v1969, %v1972
    %vm1974 = vweird.f32 %v1966
    %vm1975 = vweird.f32 %v1969
    %vm1976 = vmor %vm1974, %vm1975
    %v1977 = vsel %vm1976, %v1969, %v1973
    %v1978 = vand.u32 2147483647, %v1966
    %vm1979 = vcmp.eq.f32.partialorder %v1978, 8.507059e+37
    %v1980 = vand.u32 %v1966, 2147483648
    %v1981 = vor.u32 1.1754944e-38, %v1980
    %v1982 = vsel %vm1979, %v1981, %v1977
    %v1983 = vmul.f32 1.0, %v1982
    %v1984 = vrcp.pop %v1967
    %v1985 = vmul.f32 %v1967, %v1984
    %v1986 = vsub.f32 1.0, %v1985
    %v1987 = vmul.f32 %v1984, %v1986
    %v1988 = vadd.f32 %v1984, %v1987
    %vm1989 = vweird.f32 %v1967
    %vm1990 = vweird.f32 %v1984
    %vm1991 = vmor %vm1989, %vm1990
    %v1992 = vsel %vm1991, %v1984, %v1988
    %v1993 = vand.u32 2147483647, %v1967
    %vm1994 = vcmp.eq.f32.partialorder %v1993, 8.507059e+37
    %v1995 = vand.u32 %v1967, 2147483648
    %v1996 = vor.u32 1.1754944e-38, %v1995
    %v1997 = vsel %vm1994, %v1996, %v1992
    %v1998 = vmul.f32 1.0, %v1997
    %v1999 = vrcp.pop %v1968
    %v2000 = vmul.f32 %v1968, %v1999
    %v2001 = vsub.f32 1.0, %v2000
    %v2002 = vmul.f32 %v1999, %v2001
    %v2003 = vadd.f32 %v1999, %v2002
    %vm2004 = vweird.f32 %v1968
    %vm2005 = vweird.f32 %v1999
    %vm2006 = vmor %vm2004, %vm2005
    %v2007 = vsel %vm2006, %v1999, %v2003
    %v2008 = vand.u32 2147483647, %v1968
    %vm2009 = vcmp.eq.f32.partialorder %v2008, 8.507059e+37
    %v2010 = vand.u32 %v1968, 2147483648
    %v2011 = vor.u32 1.1754944e-38, %v2010
    %v2012 = vsel %vm2009, %v2011, %v2007
    %v2013 = vmul.f32 1.0, %v2012
    %v2014 = vtanh.pop %v1956
    %v2015 = vmul.f32 %v1998, %v1649
    %v2016 = vmul.f32 %v1983, %v2014
    %v2017 = vadd.f32 %v2015, %v2016
    %v2018 = vtanh.pop %v2017
    %v2019 = vmul.f32 %v2013, %v2018
    %v2024 = vrot.slane %v1768, 2
    %v2025 = vrot.slane %v1794, 2
    %v2026 = vrot.slane %v1820, 2
    %v2027 = vrot.slane %v1846, 2
    %v2032 = vadd.f32 %v363, %v2024
    %v2033 = vadd.f32 %v377, %v2025
    %v2034 = vadd.f32 %v391, %v2026
    %v2035 = vadd.f32 %v405, %v2027
    %v2036 = vxor.u32 %v2032, 2147483648
    %v2037 = vxor.u32 %v2033, 2147483648
    %v2038 = vxor.u32 %v2034, 2147483648
    %v2039 = vmul.f32 %v2036, 1.442695
    %v2040 = vpow.pop %v2039
    %v2041 = vmul.f32 %v2037, 1.442695
    %v2042 = vpow.pop %v2041
    %v2043 = vmul.f32 %v2038, 1.442695
    %v2044 = vpow.pop %v2043
    %v2045 = vadd.f32 %v2040, 1.0
    %v2046 = vadd.f32 %v2042, 1.0
    %v2047 = vadd.f32 %v2044, 1.0
    %v2048 = vrcp.pop %v2045
    %v2049 = vmul.f32 %v2045, %v2048
    %v2050 = vsub.f32 1.0, %v2049
    %v2051 = vmul.f32 %v2048, %v2050
    %v2052 = vadd.f32 %v2048, %v2051
    %vm2053 = vweird.f32 %v2045
    %vm2054 = vweird.f32 %v2048
    %vm2055 = vmor %vm2053, %vm2054
    %v2056 = vsel %vm2055, %v2048, %v2052
    %v2057 = vand.u32 2147483647, %v2045
    %vm2058 = vcmp.eq.f32.partialorder %v2057, 8.507059e+37
    %v2059 = vand.u32 %v2045, 2147483648
    %v2060 = vor.u32 1.1754944e-38, %v2059
    %v2061 = vsel %vm2058, %v2060, %v2056
    %v2062 = vmul.f32 1.0, %v2061
    %v2063 = vrcp.pop %v2046
    %v2064 = vmul.f32 %v2046, %v2063
    %v2065 = vsub.f32 1.0, %v2064
    %v2066 = vmul.f32 %v2063, %v2065
    %v2067 = vadd.f32 %v2063, %v2066
    %vm2068 = vweird.f32 %v2046
    %vm2069 = vweird.f32 %v2063
    %vm2070 = vmor %vm2068, %vm2069
    %v2071 = vsel %vm2070, %v2063, %v2067
    %v2072 = vand.u32 2147483647, %v2046
    %vm2073 = vcmp.eq.f32.partialorder %v2072, 8.507059e+37
    %v2074 = vand.u32 %v2046, 2147483648
    %v2075 = vor.u32 1.1754944e-38, %v2074
    %v2076 = vsel %vm2073, %v2075, %v2071
    %v2077 = vmul.f32 1.0, %v2076
    %v2078 = vrcp.pop %v2047
    %v2079 = vmul.f32 %v2047, %v2078
    %v2080 = vsub.f32 1.0, %v2079
    %v2081 = vmul.f32 %v2078, %v2080
    %v2082 = vadd.f32 %v2078, %v2081
    %vm2083 = vweird.f32 %v2047
    %vm2084 = vweird.f32 %v2078
    %vm2085 = vmor %vm2083, %vm2084
    %v2086 = vsel %vm2085, %v2078, %v2082
    %v2087 = vand.u32 2147483647, %v2047
    %vm2088 = vcmp.eq.f32.partialorder %v2087, 8.507059e+37
    %v2089 = vand.u32 %v2047, 2147483648
    %v2090 = vor.u32 1.1754944e-38, %v2089
    %v2091 = vsel %vm2088, %v2090, %v2086
    %v2092 = vmul.f32 1.0, %v2091
    %v2093 = vtanh.pop %v2035
    %v2095 = vrot.slane %v1731, 6
    %v2097 = vmul.f32 %v2077, %v2095
    %v2098 = vmul.f32 %v2062, %v2093
    %v2099 = vadd.f32 %v2097, %v2098
    %v2100 = vtanh.pop %v2099
    %v2101 = vmul.f32 %v2092, %v2100
    %v2103 = vrot.slane %v2019, 2
    %v2105 = vpack.c.bf16 %v2101, %v2101
    %v2106 = vpack.c.bf16 %v2103, %v2103
    %v2109 = vrot.slane %v2105, 3
    %v2110 = vrot.slane %v2106, 3
    %2113 = vmatpush.bf16.msra.mxu0 %v721
    %2114 = vmatpush.bf16.msra.mxu0 %v713
    %2115 = vmatpush.bf16.msra.mxu0 %v705
    %2116 = vmatpush.bf16.msra.mxu0 %v697
    %2117 = vmatpush.bf16.msra.mxu0 %v689
    %2118 = vmatpush.bf16.msra.mxu0 %v681
    %2119 = vmatpush.bf16.msra.mxu0 %v673
    %2120 = vmatpush.bf16.msra.mxu0 %v665
    %2121 = vmatmul.bf16.gmra.mxu0 %v2109
    %v2122 = vpop.f32.mrf.mxu0
    %v2123 = vadd.f32 0.0, %v2122
    %v2124 = vpop.f32.mrf.mxu0
    %2125 = vdwg.mxu0
    %2126 = vmatpush.bf16.msra.mxu0 %v1305
    %2127 = vmatpush.bf16.msra.mxu0 %v1297
    %2128 = vmatpush.bf16.msra.mxu0 %v1289
    %2129 = vmatpush.bf16.msra.mxu0 %v1281
    %2130 = vmatpush.bf16.msra.mxu0 %v1273
    %2131 = vmatpush.bf16.msra.mxu0 %v1265
    %2132 = vmatpush.bf16.msra.mxu0 %v1257
    %2133 = vmatpush.bf16.msra.mxu0 %v1249
    %2134 = vmatmul.bf16.gmra.mxu0 %v2110
    %v2135 = vpop.f32.mrf.mxu0
    %v2136 = vadd.f32 %v2123, %v2135
    %v2137 = vpop.f32.mrf.mxu0
    %2138 = vdwg.mxu0
    %2139 = vmatpush.bf16.msra.mxu0 %v722
    %2140 = vmatpush.bf16.msra.mxu0 %v714
    %2141 = vmatpush.bf16.msra.mxu0 %v706
    %2142 = vmatpush.bf16.msra.mxu0 %v698
    %2143 = vmatpush.bf16.msra.mxu0 %v690
    %2144 = vmatpush.bf16.msra.mxu0 %v682
    %2145 = vmatpush.bf16.msra.mxu0 %v674
    %2146 = vmatpush.bf16.msra.mxu0 %v666
    %2147 = vmatmul.bf16.gmra.mxu0 %v2109
    %v2148 = vpop.f32.mrf.mxu0
    %v2149 = vadd.f32 0.0, %v2148
    %v2150 = vpop.f32.mrf.mxu0
    %2151 = vdwg.mxu0
    %2152 = vmatpush.bf16.msra.mxu0 %v1306
    %2153 = vmatpush.bf16.msra.mxu0 %v1298
    %2154 = vmatpush.bf16.msra.mxu0 %v1290
    %2155 = vmatpush.bf16.msra.mxu0 %v1282
    %2156 = vmatpush.bf16.msra.mxu0 %v1274
    %2157 = vmatpush.bf16.msra.mxu0 %v1266
    %2158 = vmatpush.bf16.msra.mxu0 %v1258
    %2159 = vmatpush.bf16.msra.mxu0 %v1250
    %2160 = vmatmul.bf16.gmra.mxu0 %v2110
    %v2161 = vpop.f32.mrf.mxu0
    %v2162 = vadd.f32 %v2149, %v2161
    %v2163 = vpop.f32.mrf.mxu0
    %2164 = vdwg.mxu0
    %2165 = vmatpush.bf16.msra.mxu0 %v723
    %2166 = vmatpush.bf16.msra.mxu0 %v715
    %2167 = vmatpush.bf16.msra.mxu0 %v707
    %2168 = vmatpush.bf16.msra.mxu0 %v699
    %2169 = vmatpush.bf16.msra.mxu0 %v691
    %2170 = vmatpush.bf16.msra.mxu0 %v683
    %2171 = vmatpush.bf16.msra.mxu0 %v675
    %2172 = vmatpush.bf16.msra.mxu0 %v667
    %2173 = vmatmul.bf16.gmra.mxu0 %v2109
    %v2174 = vpop.f32.mrf.mxu0
    %v2175 = vadd.f32 0.0, %v2174
    %v2176 = vpop.f32.mrf.mxu0
    %2177 = vdwg.mxu0
    %2178 = vmatpush.bf16.msra.mxu0 %v1307
    %2179 = vmatpush.bf16.msra.mxu0 %v1299
    %2180 = vmatpush.bf16.msra.mxu0 %v1291
    %2181 = vmatpush.bf16.msra.mxu0 %v1283
    %2182 = vmatpush.bf16.msra.mxu0 %v1275
    %2183 = vmatpush.bf16.msra.mxu0 %v1267
    %2184 = vmatpush.bf16.msra.mxu0 %v1259
    %2185 = vmatpush.bf16.msra.mxu0 %v1251
    %2186 = vmatmul.bf16.gmra.mxu0 %v2110
    %v2187 = vpop.f32.mrf.mxu0
    %v2188 = vadd.f32 %v2175, %v2187
    %v2189 = vpop.f32.mrf.mxu0
    %2190 = vdwg.mxu0
    %2191 = vmatpush.bf16.msra.mxu0 %v724
    %2192 = vmatpush.bf16.msra.mxu0 %v716
    %2193 = vmatpush.bf16.msra.mxu0 %v708
    %2194 = vmatpush.bf16.msra.mxu0 %v700
    %2195 = vmatpush.bf16.msra.mxu0 %v692
    %2196 = vmatpush.bf16.msra.mxu0 %v684
    %2197 = vmatpush.bf16.msra.mxu0 %v676
    %2198 = vmatpush.bf16.msra.mxu0 %v668
    %2199 = vmatmul.bf16.gmra.mxu0 %v2109
    %v2200 = vpop.f32.mrf.mxu0
    %v2201 = vadd.f32 0.0, %v2200
    %v2202 = vpop.f32.mrf.mxu0
    %2203 = vdwg.mxu0
    %2204 = vmatpush.bf16.msra.mxu0 %v1308
    %2205 = vmatpush.bf16.msra.mxu0 %v1300
    %2206 = vmatpush.bf16.msra.mxu0 %v1292
    %2207 = vmatpush.bf16.msra.mxu0 %v1284
    %2208 = vmatpush.bf16.msra.mxu0 %v1276
    %2209 = vmatpush.bf16.msra.mxu0 %v1268
    %2210 = vmatpush.bf16.msra.mxu0 %v1260
    %2211 = vmatpush.bf16.msra.mxu0 %v1252
    %2212 = vmatmul.bf16.gmra.mxu0 %v2110
    %v2213 = vpop.f32.mrf.mxu0
    %v2214 = vadd.f32 %v2201, %v2213
    %v2215 = vpop.f32.mrf.mxu0
    %2216 = vdwg.mxu0
    %2217 = vmatpush.bf16.msra.mxu0 %v725
    %2218 = vmatpush.bf16.msra.mxu0 %v717
    %2219 = vmatpush.bf16.msra.mxu0 %v709
    %2220 = vmatpush.bf16.msra.mxu0 %v701
    %2221 = vmatpush.bf16.msra.mxu0 %v693
    %2222 = vmatpush.bf16.msra.mxu0 %v685
    %2223 = vmatpush.bf16.msra.mxu0 %v677
    %2224 = vmatpush.bf16.msra.mxu0 %v669
    %2225 = vmatmul.bf16.gmra.mxu0 %v2109
    %v2226 = vpop.f32.mrf.mxu0
    %v2227 = vadd.f32 0.0, %v2226
    %v2228 = vpop.f32.mrf.mxu0
    %2229 = vdwg.mxu0
    %2230 = vmatpush.bf16.msra.mxu0 %v1309
    %2231 = vmatpush.bf16.msra.mxu0 %v1301
    %2232 = vmatpush.bf16.msra.mxu0 %v1293
    %2233 = vmatpush.bf16.msra.mxu0 %v1285
    %2234 = vmatpush.bf16.msra.mxu0 %v1277
    %2235 = vmatpush.bf16.msra.mxu0 %v1269
    %2236 = vmatpush.bf16.msra.mxu0 %v1261
    %2237 = vmatpush.bf16.msra.mxu0 %v1253
    %2238 = vmatmul.bf16.gmra.mxu0 %v2110
    %v2239 = vpop.f32.mrf.mxu0
    %v2240 = vadd.f32 %v2227, %v2239
    %v2241 = vpop.f32.mrf.mxu0
    %2242 = vdwg.mxu0
    %2243 = vmatpush.bf16.msra.mxu0 %v726
    %2244 = vmatpush.bf16.msra.mxu0 %v718
    %2245 = vmatpush.bf16.msra.mxu0 %v710
    %2246 = vmatpush.bf16.msra.mxu0 %v702
    %2247 = vmatpush.bf16.msra.mxu0 %v694
    %2248 = vmatpush.bf16.msra.mxu0 %v686
    %2249 = vmatpush.bf16.msra.mxu0 %v678
    %2250 = vmatpush.bf16.msra.mxu0 %v670
    %2251 = vmatmul.bf16.gmra.mxu0 %v2109
    %v2252 = vpop.f32.mrf.mxu0
    %v2253 = vadd.f32 0.0, %v2252
    %v2254 = vpop.f32.mrf.mxu0
    %2255 = vdwg.mxu0
    %2256 = vmatpush.bf16.msra.mxu0 %v1310
    %2257 = vmatpush.bf16.msra.mxu0 %v1302
    %2258 = vmatpush.bf16.msra.mxu0 %v1294
    %2259 = vmatpush.bf16.msra.mxu0 %v1286
    %2260 = vmatpush.bf16.msra.mxu0 %v1278
    %2261 = vmatpush.bf16.msra.mxu0 %v1270
    %2262 = vmatpush.bf16.msra.mxu0 %v1262
    %2263 = vmatpush.bf16.msra.mxu0 %v1254
    %2264 = vmatmul.bf16.gmra.mxu0 %v2110
    %v2265 = vpop.f32.mrf.mxu0
    %v2266 = vadd.f32 %v2253, %v2265
    %v2267 = vpop.f32.mrf.mxu0
    %2268 = vdwg.mxu0
    %2269 = vmatpush.bf16.msra.mxu0 %v727
    %2270 = vmatpush.bf16.msra.mxu0 %v719
    %2271 = vmatpush.bf16.msra.mxu0 %v711
    %2272 = vmatpush.bf16.msra.mxu0 %v703
    %2273 = vmatpush.bf16.msra.mxu0 %v695
    %2274 = vmatpush.bf16.msra.mxu0 %v687
    %2275 = vmatpush.bf16.msra.mxu0 %v679
    %2276 = vmatpush.bf16.msra.mxu0 %v671
    %2277 = vmatmul.bf16.gmra.mxu0 %v2109
    %v2278 = vpop.f32.mrf.mxu0
    %v2279 = vadd.f32 0.0, %v2278
    %v2280 = vpop.f32.mrf.mxu0
    %2281 = vdwg.mxu0
    %2282 = vmatpush.bf16.msra.mxu0 %v1311
    %2283 = vmatpush.bf16.msra.mxu0 %v1303
    %2284 = vmatpush.bf16.msra.mxu0 %v1295
    %2285 = vmatpush.bf16.msra.mxu0 %v1287
    %2286 = vmatpush.bf16.msra.mxu0 %v1279
    %2287 = vmatpush.bf16.msra.mxu0 %v1271
    %2288 = vmatpush.bf16.msra.mxu0 %v1263
    %2289 = vmatpush.bf16.msra.mxu0 %v1255
    %2290 = vmatmul.bf16.gmra.mxu0 %v2110
    %v2291 = vpop.f32.mrf.mxu0
    %v2292 = vadd.f32 %v2279, %v2291
    %v2293 = vpop.f32.mrf.mxu0
    %2294 = vdwg.mxu0
    %2295 = vmatpush.bf16.msra.mxu0 %v728
    %2296 = vmatpush.bf16.msra.mxu0 %v720
    %2297 = vmatpush.bf16.msra.mxu0 %v712
    %2298 = vmatpush.bf16.msra.mxu0 %v704
    %2299 = vmatpush.bf16.msra.mxu0 %v696
    %2300 = vmatpush.bf16.msra.mxu0 %v688
    %2301 = vmatpush.bf16.msra.mxu0 %v680
    %2302 = vmatpush.bf16.msra.mxu0 %v672
    %2303 = vmatmul.bf16.gmra.mxu0 %v2109
    %v2304 = vpop.f32.mrf.mxu0
    %v2305 = vadd.f32 0.0, %v2304
    %v2306 = vpop.f32.mrf.mxu0
    %2307 = vdwg.mxu0
    %2308 = vmatpush.bf16.msra.mxu0 %v1312
    %2309 = vmatpush.bf16.msra.mxu0 %v1304
    %2310 = vmatpush.bf16.msra.mxu0 %v1296
    %2311 = vmatpush.bf16.msra.mxu0 %v1288
    %2312 = vmatpush.bf16.msra.mxu0 %v1280
    %2313 = vmatpush.bf16.msra.mxu0 %v1272
    %2314 = vmatpush.bf16.msra.mxu0 %v1264
    %2315 = vmatpush.bf16.msra.mxu0 %v1256
    %2316 = vmatmul.bf16.gmra.mxu0 %v2110
    %v2317 = vpop.f32.mrf.mxu0
    %v2318 = vadd.f32 %v2305, %v2317
    %v2319 = vpop.f32.mrf.mxu0
    %2320 = vdwg.mxu0
    %v2321 = vadd.f32 %v2240, %v284
    %v2322 = vadd.f32 %v2266, %v285
    %v2323 = vadd.f32 %v2292, %v286
    %v2324 = vadd.f32 %v2318, %v287
    %v2325 = vxor.u32 %v2321, 2147483648
    %v2326 = vxor.u32 %v2322, 2147483648
    %v2327 = vxor.u32 %v2323, 2147483648
    %v2328 = vmul.f32 %v2325, 1.442695
    %v2329 = vpow.pop %v2328
    %v2330 = vmul.f32 %v2326, 1.442695
    %v2331 = vpow.pop %v2330
    %v2332 = vmul.f32 %v2327, 1.442695
    %v2333 = vpow.pop %v2332
    %v2334 = vadd.f32 %v2329, 1.0
    %v2335 = vadd.f32 %v2331, 1.0
    %v2336 = vadd.f32 %v2333, 1.0
    %v2337 = vrcp.pop %v2334
    %v2338 = vmul.f32 %v2334, %v2337
    %v2339 = vsub.f32 1.0, %v2338
    %v2340 = vmul.f32 %v2337, %v2339
    %v2341 = vadd.f32 %v2337, %v2340
    %vm2342 = vweird.f32 %v2334
    %vm2343 = vweird.f32 %v2337
    %vm2344 = vmor %vm2342, %vm2343
    %v2345 = vsel %vm2344, %v2337, %v2341
    %v2346 = vand.u32 2147483647, %v2334
    %vm2347 = vcmp.eq.f32.partialorder %v2346, 8.507059e+37
    %v2348 = vand.u32 %v2334, 2147483648
    %v2349 = vor.u32 1.1754944e-38, %v2348
    %v2350 = vsel %vm2347, %v2349, %v2345
    %v2351 = vmul.f32 1.0, %v2350
    %v2352 = vrcp.pop %v2335
    %v2353 = vmul.f32 %v2335, %v2352
    %v2354 = vsub.f32 1.0, %v2353
    %v2355 = vmul.f32 %v2352, %v2354
    %v2356 = vadd.f32 %v2352, %v2355
    %vm2357 = vweird.f32 %v2335
    %vm2358 = vweird.f32 %v2352
    %vm2359 = vmor %vm2357, %vm2358
    %v2360 = vsel %vm2359, %v2352, %v2356
    %v2361 = vand.u32 2147483647, %v2335
    %vm2362 = vcmp.eq.f32.partialorder %v2361, 8.507059e+37
    %v2363 = vand.u32 %v2335, 2147483648
    %v2364 = vor.u32 1.1754944e-38, %v2363
    %v2365 = vsel %vm2362, %v2364, %v2360
    %v2366 = vmul.f32 1.0, %v2365
    %v2367 = vrcp.pop %v2336
    %v2368 = vmul.f32 %v2336, %v2367
    %v2369 = vsub.f32 1.0, %v2368
    %v2370 = vmul.f32 %v2367, %v2369
    %v2371 = vadd.f32 %v2367, %v2370
    %vm2372 = vweird.f32 %v2336
    %vm2373 = vweird.f32 %v2367
    %vm2374 = vmor %vm2372, %vm2373
    %v2375 = vsel %vm2374, %v2367, %v2371
    %v2376 = vand.u32 2147483647, %v2336
    %vm2377 = vcmp.eq.f32.partialorder %v2376, 8.507059e+37
    %v2378 = vand.u32 %v2336, 2147483648
    %v2379 = vor.u32 1.1754944e-38, %v2378
    %v2380 = vsel %vm2377, %v2379, %v2375
    %v2381 = vmul.f32 1.0, %v2380
    %v2382 = vtanh.pop %v2324
    %v2383 = vmul.f32 %v2366, %v2017
    %v2384 = vmul.f32 %v2351, %v2382
    %v2385 = vadd.f32 %v2383, %v2384
    %v2386 = vtanh.pop %v2385
    %v2387 = vmul.f32 %v2381, %v2386
    %v2388 = vadd.f32 %v365, %v2136
    %v2389 = vadd.f32 %v379, %v2162
    %v2390 = vadd.f32 %v393, %v2188
    %v2391 = vadd.f32 %v407, %v2214
    %v2392 = vxor.u32 %v2388, 2147483648
    %v2393 = vxor.u32 %v2389, 2147483648
    %v2394 = vxor.u32 %v2390, 2147483648
    %v2395 = vmul.f32 %v2392, 1.442695
    %v2396 = vpow.pop %v2395
    %v2397 = vmul.f32 %v2393, 1.442695
    %v2398 = vpow.pop %v2397
    %v2399 = vmul.f32 %v2394, 1.442695
    %v2400 = vpow.pop %v2399
    %v2401 = vadd.f32 %v2396, 1.0
    %v2402 = vadd.f32 %v2398, 1.0
    %v2403 = vadd.f32 %v2400, 1.0
    %v2404 = vrcp.pop %v2401
    %v2405 = vmul.f32 %v2401, %v2404
    %v2406 = vsub.f32 1.0, %v2405
    %v2407 = vmul.f32 %v2404, %v2406
    %v2408 = vadd.f32 %v2404, %v2407
    %vm2409 = vweird.f32 %v2401
    %vm2410 = vweird.f32 %v2404
    %vm2411 = vmor %vm2409, %vm2410
    %v2412 = vsel %vm2411, %v2404, %v2408
    %v2413 = vand.u32 2147483647, %v2401
    %vm2414 = vcmp.eq.f32.partialorder %v2413, 8.507059e+37
    %v2415 = vand.u32 %v2401, 2147483648
    %v2416 = vor.u32 1.1754944e-38, %v2415
    %v2417 = vsel %vm2414, %v2416, %v2412
    %v2418 = vmul.f32 1.0, %v2417
    %v2419 = vrcp.pop %v2402
    %v2420 = vmul.f32 %v2402, %v2419
    %v2421 = vsub.f32 1.0, %v2420
    %v2422 = vmul.f32 %v2419, %v2421
    %v2423 = vadd.f32 %v2419, %v2422
    %vm2424 = vweird.f32 %v2402
    %vm2425 = vweird.f32 %v2419
    %vm2426 = vmor %vm2424, %vm2425
    %v2427 = vsel %vm2426, %v2419, %v2423
    %v2428 = vand.u32 2147483647, %v2402
    %vm2429 = vcmp.eq.f32.partialorder %v2428, 8.507059e+37
    %v2430 = vand.u32 %v2402, 2147483648
    %v2431 = vor.u32 1.1754944e-38, %v2430
    %v2432 = vsel %vm2429, %v2431, %v2427
    %v2433 = vmul.f32 1.0, %v2432
    %v2434 = vrcp.pop %v2403
    %v2435 = vmul.f32 %v2403, %v2434
    %v2436 = vsub.f32 1.0, %v2435
    %v2437 = vmul.f32 %v2434, %v2436
    %v2438 = vadd.f32 %v2434, %v2437
    %vm2439 = vweird.f32 %v2403
    %vm2440 = vweird.f32 %v2434
    %vm2441 = vmor %vm2439, %vm2440
    %v2442 = vsel %vm2441, %v2434, %v2438
    %v2443 = vand.u32 2147483647, %v2403
    %vm2444 = vcmp.eq.f32.partialorder %v2443, 8.507059e+37
    %v2445 = vand.u32 %v2403, 2147483648
    %v2446 = vor.u32 1.1754944e-38, %v2445
    %v2447 = vsel %vm2444, %v2446, %v2442
    %v2448 = vmul.f32 1.0, %v2447
    %v2449 = vtanh.pop %v2391
    %v2451 = vrot.slane %v2099, 6
    %v2453 = vmul.f32 %v2433, %v2451
    %v2454 = vmul.f32 %v2418, %v2449
    %v2455 = vadd.f32 %v2453, %v2454
    %v2456 = vtanh.pop %v2455
    %v2457 = vmul.f32 %v2448, %v2456
    %v2458 = vpack.c.bf16 %v2457, %v2457
    %v2459 = vpack.c.bf16 %v2387, %v2387
    %2460 = vmatpush.bf16.msra.mxu0 %v721
    %2461 = vmatpush.bf16.msra.mxu0 %v713
    %2462 = vmatpush.bf16.msra.mxu0 %v705
    %2463 = vmatpush.bf16.msra.mxu0 %v697
    %2464 = vmatpush.bf16.msra.mxu0 %v689
    %2465 = vmatpush.bf16.msra.mxu0 %v681
    %2466 = vmatpush.bf16.msra.mxu0 %v673
    %2467 = vmatpush.bf16.msra.mxu0 %v665
    %2468 = vmatmul.bf16.gmra.mxu0 %v2458
    %v2469 = vpop.f32.mrf.mxu0
    %v2470 = vadd.f32 0.0, %v2469
    %v2471 = vpop.f32.mrf.mxu0
    %2472 = vdwg.mxu0
    %2473 = vmatpush.bf16.msra.mxu0 %v1305
    %2474 = vmatpush.bf16.msra.mxu0 %v1297
    %2475 = vmatpush.bf16.msra.mxu0 %v1289
    %2476 = vmatpush.bf16.msra.mxu0 %v1281
    %2477 = vmatpush.bf16.msra.mxu0 %v1273
    %2478 = vmatpush.bf16.msra.mxu0 %v1265
    %2479 = vmatpush.bf16.msra.mxu0 %v1257
    %2480 = vmatpush.bf16.msra.mxu0 %v1249
    %2481 = vmatmul.bf16.gmra.mxu0 %v2459
    %v2482 = vpop.f32.mrf.mxu0
    %v2483 = vadd.f32 %v2470, %v2482
    %v2484 = vpop.f32.mrf.mxu0
    %2485 = vdwg.mxu0
    %2486 = vmatpush.bf16.msra.mxu0 %v722
    %2487 = vmatpush.bf16.msra.mxu0 %v714
    %2488 = vmatpush.bf16.msra.mxu0 %v706
    %2489 = vmatpush.bf16.msra.mxu0 %v698
    %2490 = vmatpush.bf16.msra.mxu0 %v690
    %2491 = vmatpush.bf16.msra.mxu0 %v682
    %2492 = vmatpush.bf16.msra.mxu0 %v674
    %2493 = vmatpush.bf16.msra.mxu0 %v666
    %2494 = vmatmul.bf16.gmra.mxu0 %v2458
    %v2495 = vpop.f32.mrf.mxu0
    %v2496 = vadd.f32 0.0, %v2495
    %v2497 = vpop.f32.mrf.mxu0
    %2498 = vdwg.mxu0
    %2499 = vmatpush.bf16.msra.mxu0 %v1306
    %2500 = vmatpush.bf16.msra.mxu0 %v1298
    %2501 = vmatpush.bf16.msra.mxu0 %v1290
    %2502 = vmatpush.bf16.msra.mxu0 %v1282
    %2503 = vmatpush.bf16.msra.mxu0 %v1274
    %2504 = vmatpush.bf16.msra.mxu0 %v1266
    %2505 = vmatpush.bf16.msra.mxu0 %v1258
    %2506 = vmatpush.bf16.msra.mxu0 %v1250
    %2507 = vmatmul.bf16.gmra.mxu0 %v2459
    %v2508 = vpop.f32.mrf.mxu0
    %v2509 = vadd.f32 %v2496, %v2508
    %v2510 = vpop.f32.mrf.mxu0
    %2511 = vdwg.mxu0
    %2512 = vmatpush.bf16.msra.mxu0 %v723
    %2513 = vmatpush.bf16.msra.mxu0 %v715
    %2514 = vmatpush.bf16.msra.mxu0 %v707
    %2515 = vmatpush.bf16.msra.mxu0 %v699
    %2516 = vmatpush.bf16.msra.mxu0 %v691
    %2517 = vmatpush.bf16.msra.mxu0 %v683
    %2518 = vmatpush.bf16.msra.mxu0 %v675
    %2519 = vmatpush.bf16.msra.mxu0 %v667
    %2520 = vmatmul.bf16.gmra.mxu0 %v2458
    %v2521 = vpop.f32.mrf.mxu0
    %v2522 = vadd.f32 0.0, %v2521
    %v2523 = vpop.f32.mrf.mxu0
    %2524 = vdwg.mxu0
    %2525 = vmatpush.bf16.msra.mxu0 %v1307
    %2526 = vmatpush.bf16.msra.mxu0 %v1299
    %2527 = vmatpush.bf16.msra.mxu0 %v1291
    %2528 = vmatpush.bf16.msra.mxu0 %v1283
    %2529 = vmatpush.bf16.msra.mxu0 %v1275
    %2530 = vmatpush.bf16.msra.mxu0 %v1267
    %2531 = vmatpush.bf16.msra.mxu0 %v1259
    %2532 = vmatpush.bf16.msra.mxu0 %v1251
    %2533 = vmatmul.bf16.gmra.mxu0 %v2459
    %v2534 = vpop.f32.mrf.mxu0
    %v2535 = vadd.f32 %v2522, %v2534
    %v2536 = vpop.f32.mrf.mxu0
    %2537 = vdwg.mxu0
    %2538 = vmatpush.bf16.msra.mxu0 %v724
    %2539 = vmatpush.bf16.msra.mxu0 %v716
    %2540 = vmatpush.bf16.msra.mxu0 %v708
    %2541 = vmatpush.bf16.msra.mxu0 %v700
    %2542 = vmatpush.bf16.msra.mxu0 %v692
    %2543 = vmatpush.bf16.msra.mxu0 %v684
    %2544 = vmatpush.bf16.msra.mxu0 %v676
    %2545 = vmatpush.bf16.msra.mxu0 %v668
    %2546 = vmatmul.bf16.gmra.mxu0 %v2458
    %v2547 = vpop.f32.mrf.mxu0
    %v2548 = vadd.f32 0.0, %v2547
    %v2549 = vpop.f32.mrf.mxu0
    %2550 = vdwg.mxu0
    %2551 = vmatpush.bf16.msra.mxu0 %v1308
    %2552 = vmatpush.bf16.msra.mxu0 %v1300
    %2553 = vmatpush.bf16.msra.mxu0 %v1292
    %2554 = vmatpush.bf16.msra.mxu0 %v1284
    %2555 = vmatpush.bf16.msra.mxu0 %v1276
    %2556 = vmatpush.bf16.msra.mxu0 %v1268
    %2557 = vmatpush.bf16.msra.mxu0 %v1260
    %2558 = vmatpush.bf16.msra.mxu0 %v1252
    %2559 = vmatmul.bf16.gmra.mxu0 %v2459
    %v2560 = vpop.f32.mrf.mxu0
    %v2561 = vadd.f32 %v2548, %v2560
    %v2562 = vpop.f32.mrf.mxu0
    %2563 = vdwg.mxu0
    %2564 = vmatpush.bf16.msra.mxu0 %v725
    %2565 = vmatpush.bf16.msra.mxu0 %v717
    %2566 = vmatpush.bf16.msra.mxu0 %v709
    %2567 = vmatpush.bf16.msra.mxu0 %v701
    %2568 = vmatpush.bf16.msra.mxu0 %v693
    %2569 = vmatpush.bf16.msra.mxu0 %v685
    %2570 = vmatpush.bf16.msra.mxu0 %v677
    %2571 = vmatpush.bf16.msra.mxu0 %v669
    %2572 = vmatmul.bf16.gmra.mxu0 %v2458
    %v2573 = vpop.f32.mrf.mxu0
    %v2574 = vadd.f32 0.0, %v2573
    %v2575 = vpop.f32.mrf.mxu0
    %2576 = vdwg.mxu0
    %2577 = vmatpush.bf16.msra.mxu0 %v1309
    %2578 = vmatpush.bf16.msra.mxu0 %v1301
    %2579 = vmatpush.bf16.msra.mxu0 %v1293
    %2580 = vmatpush.bf16.msra.mxu0 %v1285
    %2581 = vmatpush.bf16.msra.mxu0 %v1277
    %2582 = vmatpush.bf16.msra.mxu0 %v1269
    %2583 = vmatpush.bf16.msra.mxu0 %v1261
    %2584 = vmatpush.bf16.msra.mxu0 %v1253
    %2585 = vmatmul.bf16.gmra.mxu0 %v2459
    %v2586 = vpop.f32.mrf.mxu0
    %v2587 = vadd.f32 %v2574, %v2586
    %v2588 = vpop.f32.mrf.mxu0
    %2589 = vdwg.mxu0
    %2590 = vmatpush.bf16.msra.mxu0 %v726
    %2591 = vmatpush.bf16.msra.mxu0 %v718
    %2592 = vmatpush.bf16.msra.mxu0 %v710
    %2593 = vmatpush.bf16.msra.mxu0 %v702
    %2594 = vmatpush.bf16.msra.mxu0 %v694
    %2595 = vmatpush.bf16.msra.mxu0 %v686
    %2596 = vmatpush.bf16.msra.mxu0 %v678
    %2597 = vmatpush.bf16.msra.mxu0 %v670
    %2598 = vmatmul.bf16.gmra.mxu0 %v2458
    %v2599 = vpop.f32.mrf.mxu0
    %v2600 = vadd.f32 0.0, %v2599
    %v2601 = vpop.f32.mrf.mxu0
    %2602 = vdwg.mxu0
    %2603 = vmatpush.bf16.msra.mxu0 %v1310
    %2604 = vmatpush.bf16.msra.mxu0 %v1302
    %2605 = vmatpush.bf16.msra.mxu0 %v1294
    %2606 = vmatpush.bf16.msra.mxu0 %v1286
    %2607 = vmatpush.bf16.msra.mxu0 %v1278
    %2608 = vmatpush.bf16.msra.mxu0 %v1270
    %2609 = vmatpush.bf16.msra.mxu0 %v1262
    %2610 = vmatpush.bf16.msra.mxu0 %v1254
    %2611 = vmatmul.bf16.gmra.mxu0 %v2459
    %v2612 = vpop.f32.mrf.mxu0
    %v2613 = vadd.f32 %v2600, %v2612
    %v2614 = vpop.f32.mrf.mxu0
    %2615 = vdwg.mxu0
    %2616 = vmatpush.bf16.msra.mxu0 %v727
    %2617 = vmatpush.bf16.msra.mxu0 %v719
    %2618 = vmatpush.bf16.msra.mxu0 %v711
    %2619 = vmatpush.bf16.msra.mxu0 %v703
    %2620 = vmatpush.bf16.msra.mxu0 %v695
    %2621 = vmatpush.bf16.msra.mxu0 %v687
    %2622 = vmatpush.bf16.msra.mxu0 %v679
    %2623 = vmatpush.bf16.msra.mxu0 %v671
    %2624 = vmatmul.bf16.gmra.mxu0 %v2458
    %v2625 = vpop.f32.mrf.mxu0
    %v2626 = vadd.f32 0.0, %v2625
    %v2627 = vpop.f32.mrf.mxu0
    %2628 = vdwg.mxu0
    %2629 = vmatpush.bf16.msra.mxu0 %v1311
    %2630 = vmatpush.bf16.msra.mxu0 %v1303
    %2631 = vmatpush.bf16.msra.mxu0 %v1295
    %2632 = vmatpush.bf16.msra.mxu0 %v1287
    %2633 = vmatpush.bf16.msra.mxu0 %v1279
    %2634 = vmatpush.bf16.msra.mxu0 %v1271
    %2635 = vmatpush.bf16.msra.mxu0 %v1263
    %2636 = vmatpush.bf16.msra.mxu0 %v1255
    %2637 = vmatmul.bf16.gmra.mxu0 %v2459
    %v2638 = vpop.f32.mrf.mxu0
    %v2639 = vadd.f32 %v2626, %v2638
    %v2640 = vpop.f32.mrf.mxu0
    %2641 = vdwg.mxu0
    %2642 = vmatpush.bf16.msra.mxu0 %v728
    %2643 = vmatpush.bf16.msra.mxu0 %v720
    %2644 = vmatpush.bf16.msra.mxu0 %v712
    %2645 = vmatpush.bf16.msra.mxu0 %v704
    %2646 = vmatpush.bf16.msra.mxu0 %v696
    %2647 = vmatpush.bf16.msra.mxu0 %v688
    %2648 = vmatpush.bf16.msra.mxu0 %v680
    %2649 = vmatpush.bf16.msra.mxu0 %v672
    %2650 = vmatmul.bf16.gmra.mxu0 %v2458
    %v2651 = vpop.f32.mrf.mxu0
    %v2652 = vadd.f32 0.0, %v2651
    %v2653 = vpop.f32.mrf.mxu0
    %2654 = vdwg.mxu0
    %2655 = vmatpush.bf16.msra.mxu0 %v1312
    %2656 = vmatpush.bf16.msra.mxu0 %v1304
    %2657 = vmatpush.bf16.msra.mxu0 %v1296
    %2658 = vmatpush.bf16.msra.mxu0 %v1288
    %2659 = vmatpush.bf16.msra.mxu0 %v1280
    %2660 = vmatpush.bf16.msra.mxu0 %v1272
    %2661 = vmatpush.bf16.msra.mxu0 %v1264
    %2662 = vmatpush.bf16.msra.mxu0 %v1256
    %2663 = vmatmul.bf16.gmra.mxu0 %v2459
    %v2664 = vpop.f32.mrf.mxu0
    %v2665 = vadd.f32 %v2652, %v2664
    %v2666 = vpop.f32.mrf.mxu0
    %2667 = vdwg.mxu0
    %v2668 = vadd.f32 %v2587, %v284
    %v2669 = vadd.f32 %v2613, %v285
    %v2670 = vadd.f32 %v2639, %v286
    %v2671 = vadd.f32 %v2665, %v287
    %v2672 = vxor.u32 %v2668, 2147483648
    %v2673 = vxor.u32 %v2669, 2147483648
    %v2674 = vxor.u32 %v2670, 2147483648
    %v2675 = vmul.f32 %v2672, 1.442695
    %v2676 = vpow.pop %v2675
    %v2677 = vmul.f32 %v2673, 1.442695
    %v2678 = vpow.pop %v2677
    %v2679 = vmul.f32 %v2674, 1.442695
    %v2680 = vpow.pop %v2679
    %v2681 = vadd.f32 %v2676, 1.0
    %v2682 = vadd.f32 %v2678, 1.0
    %v2683 = vadd.f32 %v2680, 1.0
    %v2684 = vrcp.pop %v2681
    %v2685 = vmul.f32 %v2681, %v2684
    %v2686 = vsub.f32 1.0, %v2685
    %v2687 = vmul.f32 %v2684, %v2686
    %v2688 = vadd.f32 %v2684, %v2687
    %vm2689 = vweird.f32 %v2681
    %vm2690 = vweird.f32 %v2684
    %vm2691 = vmor %vm2689, %vm2690
    %v2692 = vsel %vm2691, %v2684, %v2688
    %v2693 = vand.u32 2147483647, %v2681
    %vm2694 = vcmp.eq.f32.partialorder %v2693, 8.507059e+37
    %v2695 = vand.u32 %v2681, 2147483648
    %v2696 = vor.u32 1.1754944e-38, %v2695
    %v2697 = vsel %vm2694, %v2696, %v2692
    %v2698 = vmul.f32 1.0, %v2697
    %v2699 = vrcp.pop %v2682
    %v2700 = vmul.f32 %v2682, %v2699
    %v2701 = vsub.f32 1.0, %v2700
    %v2702 = vmul.f32 %v2699, %v2701
    %v2703 = vadd.f32 %v2699, %v2702
    %vm2704 = vweird.f32 %v2682
    %vm2705 = vweird.f32 %v2699
    %vm2706 = vmor %vm2704, %vm2705
    %v2707 = vsel %vm2706, %v2699, %v2703
    %v2708 = vand.u32 2147483647, %v2682
    %vm2709 = vcmp.eq.f32.partialorder %v2708, 8.507059e+37
    %v2710 = vand.u32 %v2682, 2147483648
    %v2711 = vor.u32 1.1754944e-38, %v2710
    %v2712 = vsel %vm2709, %v2711, %v2707
    %v2713 = vmul.f32 1.0, %v2712
    %v2714 = vrcp.pop %v2683
    %v2715 = vmul.f32 %v2683, %v2714
    %v2716 = vsub.f32 1.0, %v2715
    %v2717 = vmul.f32 %v2714, %v2716
    %v2718 = vadd.f32 %v2714, %v2717
    %vm2719 = vweird.f32 %v2683
    %vm2720 = vweird.f32 %v2714
    %vm2721 = vmor %vm2719, %vm2720
    %v2722 = vsel %vm2721, %v2714, %v2718
    %v2723 = vand.u32 2147483647, %v2683
    %vm2724 = vcmp.eq.f32.partialorder %v2723, 8.507059e+37
    %v2725 = vand.u32 %v2683, 2147483648
    %v2726 = vor.u32 1.1754944e-38, %v2725
    %v2727 = vsel %vm2724, %v2726, %v2722
    %v2728 = vmul.f32 1.0, %v2727
    %v2729 = vtanh.pop %v2671
    %v2730 = vmul.f32 %v2713, %v2385
    %v2731 = vmul.f32 %v2698, %v2729
    %v2732 = vadd.f32 %v2730, %v2731
    %v2733 = vtanh.pop %v2732
    %v2734 = vmul.f32 %v2728, %v2733
    %v2739 = vrot.slane %v2483, 6
    %v2740 = vrot.slane %v2509, 6
    %v2741 = vrot.slane %v2535, 6
    %v2742 = vrot.slane %v2561, 6
    %v2747 = vadd.f32 %v365, %v2739
    %v2748 = vadd.f32 %v379, %v2740
    %v2749 = vadd.f32 %v393, %v2741
    %v2750 = vadd.f32 %v407, %v2742
    %v2751 = vxor.u32 %v2747, 2147483648
    %v2752 = vxor.u32 %v2748, 2147483648
    %v2753 = vxor.u32 %v2749, 2147483648
    %v2754 = vmul.f32 %v2751, 1.442695
    %v2755 = vpow.pop %v2754
    %v2756 = vmul.f32 %v2752, 1.442695
    %v2757 = vpow.pop %v2756
    %v2758 = vmul.f32 %v2753, 1.442695
    %v2759 = vpow.pop %v2758
    %v2760 = vadd.f32 %v2755, 1.0
    %v2761 = vadd.f32 %v2757, 1.0
    %v2762 = vadd.f32 %v2759, 1.0
    %v2763 = vrcp.pop %v2760
    %v2764 = vmul.f32 %v2760, %v2763
    %v2765 = vsub.f32 1.0, %v2764
    %v2766 = vmul.f32 %v2763, %v2765
    %v2767 = vadd.f32 %v2763, %v2766
    %vm2768 = vweird.f32 %v2760
    %vm2769 = vweird.f32 %v2763
    %vm2770 = vmor %vm2768, %vm2769
    %v2771 = vsel %vm2770, %v2763, %v2767
    %v2772 = vand.u32 2147483647, %v2760
    %vm2773 = vcmp.eq.f32.partialorder %v2772, 8.507059e+37
    %v2774 = vand.u32 %v2760, 2147483648
    %v2775 = vor.u32 1.1754944e-38, %v2774
    %v2776 = vsel %vm2773, %v2775, %v2771
    %v2777 = vmul.f32 1.0, %v2776
    %v2778 = vrcp.pop %v2761
    %v2779 = vmul.f32 %v2761, %v2778
    %v2780 = vsub.f32 1.0, %v2779
    %v2781 = vmul.f32 %v2778, %v2780
    %v2782 = vadd.f32 %v2778, %v2781
    %vm2783 = vweird.f32 %v2761
    %vm2784 = vweird.f32 %v2778
    %vm2785 = vmor %vm2783, %vm2784
    %v2786 = vsel %vm2785, %v2778, %v2782
    %v2787 = vand.u32 2147483647, %v2761
    %vm2788 = vcmp.eq.f32.partialorder %v2787, 8.507059e+37
    %v2789 = vand.u32 %v2761, 2147483648
    %v2790 = vor.u32 1.1754944e-38, %v2789
    %v2791 = vsel %vm2788, %v2790, %v2786
    %v2792 = vmul.f32 1.0, %v2791
    %v2793 = vrcp.pop %v2762
    %v2794 = vmul.f32 %v2762, %v2793
    %v2795 = vsub.f32 1.0, %v2794
    %v2796 = vmul.f32 %v2793, %v2795
    %v2797 = vadd.f32 %v2793, %v2796
    %vm2798 = vweird.f32 %v2762
    %vm2799 = vweird.f32 %v2793
    %vm2800 = vmor %vm2798, %vm2799
    %v2801 = vsel %vm2800, %v2793, %v2797
    %v2802 = vand.u32 2147483647, %v2762
    %vm2803 = vcmp.eq.f32.partialorder %v2802, 8.507059e+37
    %v2804 = vand.u32 %v2762, 2147483648
    %v2805 = vor.u32 1.1754944e-38, %v2804
    %v2806 = vsel %vm2803, %v2805, %v2801
    %v2807 = vmul.f32 1.0, %v2806
    %v2808 = vtanh.pop %v2750
    %v2810 = vrot.slane %v2455, 6
    %v2812 = vmul.f32 %v2792, %v2810
    %v2813 = vmul.f32 %v2777, %v2808
    %v2814 = vadd.f32 %v2812, %v2813
    %v2815 = vtanh.pop %v2814
    %v2816 = vmul.f32 %v2807, %v2815
    %v2818 = vrot.slane %v2734, 6
    %v2820 = vpack.c.bf16 %v2816, %v2816
    %v2821 = vpack.c.bf16 %v2818, %v2818
    %v2824 = vrot.slane %v2820, 1
    %v2825 = vrot.slane %v2821, 1
    %2828 = vmatpush.bf16.msra.mxu0 %v721
    %2829 = vmatpush.bf16.msra.mxu0 %v713
    %2830 = vmatpush.bf16.msra.mxu0 %v705
    %2831 = vmatpush.bf16.msra.mxu0 %v697
    %2832 = vmatpush.bf16.msra.mxu0 %v689
    %2833 = vmatpush.bf16.msra.mxu0 %v681
    %2834 = vmatpush.bf16.msra.mxu0 %v673
    %2835 = vmatpush.bf16.msra.mxu0 %v665
    %2836 = vmatmul.bf16.gmra.mxu0 %v2824
    %v2837 = vpop.f32.mrf.mxu0
    %v2838 = vadd.f32 0.0, %v2837
    %v2839 = vpop.f32.mrf.mxu0
    %2840 = vdwg.mxu0
    %2841 = vmatpush.bf16.msra.mxu0 %v1305
    %2842 = vmatpush.bf16.msra.mxu0 %v1297
    %2843 = vmatpush.bf16.msra.mxu0 %v1289
    %2844 = vmatpush.bf16.msra.mxu0 %v1281
    %2845 = vmatpush.bf16.msra.mxu0 %v1273
    %2846 = vmatpush.bf16.msra.mxu0 %v1265
    %2847 = vmatpush.bf16.msra.mxu0 %v1257
    %2848 = vmatpush.bf16.msra.mxu0 %v1249
    %2849 = vmatmul.bf16.gmra.mxu0 %v2825
    %v2850 = vpop.f32.mrf.mxu0
    %v2851 = vadd.f32 %v2838, %v2850
    %v2852 = vpop.f32.mrf.mxu0
    %2853 = vdwg.mxu0
    %2854 = vmatpush.bf16.msra.mxu0 %v722
    %2855 = vmatpush.bf16.msra.mxu0 %v714
    %2856 = vmatpush.bf16.msra.mxu0 %v706
    %2857 = vmatpush.bf16.msra.mxu0 %v698
    %2858 = vmatpush.bf16.msra.mxu0 %v690
    %2859 = vmatpush.bf16.msra.mxu0 %v682
    %2860 = vmatpush.bf16.msra.mxu0 %v674
    %2861 = vmatpush.bf16.msra.mxu0 %v666
    %2862 = vmatmul.bf16.gmra.mxu0 %v2824
    %v2863 = vpop.f32.mrf.mxu0
    %v2864 = vadd.f32 0.0, %v2863
    %v2865 = vpop.f32.mrf.mxu0
    %2866 = vdwg.mxu0
    %2867 = vmatpush.bf16.msra.mxu0 %v1306
    %2868 = vmatpush.bf16.msra.mxu0 %v1298
    %2869 = vmatpush.bf16.msra.mxu0 %v1290
    %2870 = vmatpush.bf16.msra.mxu0 %v1282
    %2871 = vmatpush.bf16.msra.mxu0 %v1274
    %2872 = vmatpush.bf16.msra.mxu0 %v1266
    %2873 = vmatpush.bf16.msra.mxu0 %v1258
    %2874 = vmatpush.bf16.msra.mxu0 %v1250
    %2875 = vmatmul.bf16.gmra.mxu0 %v2825
    %v2876 = vpop.f32.mrf.mxu0
    %v2877 = vadd.f32 %v2864, %v2876
    %v2878 = vpop.f32.mrf.mxu0
    %2879 = vdwg.mxu0
    %2880 = vmatpush.bf16.msra.mxu0 %v723
    %2881 = vmatpush.bf16.msra.mxu0 %v715
    %2882 = vmatpush.bf16.msra.mxu0 %v707
    %2883 = vmatpush.bf16.msra.mxu0 %v699
    %2884 = vmatpush.bf16.msra.mxu0 %v691
    %2885 = vmatpush.bf16.msra.mxu0 %v683
    %2886 = vmatpush.bf16.msra.mxu0 %v675
    %2887 = vmatpush.bf16.msra.mxu0 %v667
    %2888 = vmatmul.bf16.gmra.mxu0 %v2824
    %v2889 = vpop.f32.mrf.mxu0
    %v2890 = vadd.f32 0.0, %v2889
    %v2891 = vpop.f32.mrf.mxu0
    %2892 = vdwg.mxu0
    %2893 = vmatpush.bf16.msra.mxu0 %v1307
    %2894 = vmatpush.bf16.msra.mxu0 %v1299
    %2895 = vmatpush.bf16.msra.mxu0 %v1291
    %2896 = vmatpush.bf16.msra.mxu0 %v1283
    %2897 = vmatpush.bf16.msra.mxu0 %v1275
    %2898 = vmatpush.bf16.msra.mxu0 %v1267
    %2899 = vmatpush.bf16.msra.mxu0 %v1259
    %2900 = vmatpush.bf16.msra.mxu0 %v1251
    %2901 = vmatmul.bf16.gmra.mxu0 %v2825
    %v2902 = vpop.f32.mrf.mxu0
    %v2903 = vadd.f32 %v2890, %v2902
    %v2904 = vpop.f32.mrf.mxu0
    %2905 = vdwg.mxu0
    %2906 = vmatpush.bf16.msra.mxu0 %v724
    %2907 = vmatpush.bf16.msra.mxu0 %v716
    %2908 = vmatpush.bf16.msra.mxu0 %v708
    %2909 = vmatpush.bf16.msra.mxu0 %v700
    %2910 = vmatpush.bf16.msra.mxu0 %v692
    %2911 = vmatpush.bf16.msra.mxu0 %v684
    %2912 = vmatpush.bf16.msra.mxu0 %v676
    %2913 = vmatpush.bf16.msra.mxu0 %v668
    %2914 = vmatmul.bf16.gmra.mxu0 %v2824
    %v2915 = vpop.f32.mrf.mxu0
    %v2916 = vadd.f32 0.0, %v2915
    %v2917 = vpop.f32.mrf.mxu0
    %2918 = vdwg.mxu0
    %2919 = vmatpush.bf16.msra.mxu0 %v1308
    %2920 = vmatpush.bf16.msra.mxu0 %v1300
    %2921 = vmatpush.bf16.msra.mxu0 %v1292
    %2922 = vmatpush.bf16.msra.mxu0 %v1284
    %2923 = vmatpush.bf16.msra.mxu0 %v1276
    %2924 = vmatpush.bf16.msra.mxu0 %v1268
    %2925 = vmatpush.bf16.msra.mxu0 %v1260
    %2926 = vmatpush.bf16.msra.mxu0 %v1252
    %2927 = vmatmul.bf16.gmra.mxu0 %v2825
    %v2928 = vpop.f32.mrf.mxu0
    %v2929 = vadd.f32 %v2916, %v2928
    %v2930 = vpop.f32.mrf.mxu0
    %2931 = vdwg.mxu0
    %2932 = vmatpush.bf16.msra.mxu0 %v725
    %2933 = vmatpush.bf16.msra.mxu0 %v717
    %2934 = vmatpush.bf16.msra.mxu0 %v709
    %2935 = vmatpush.bf16.msra.mxu0 %v701
    %2936 = vmatpush.bf16.msra.mxu0 %v693
    %2937 = vmatpush.bf16.msra.mxu0 %v685
    %2938 = vmatpush.bf16.msra.mxu0 %v677
    %2939 = vmatpush.bf16.msra.mxu0 %v669
    %2940 = vmatmul.bf16.gmra.mxu0 %v2824
    %v2941 = vpop.f32.mrf.mxu0
    %v2942 = vadd.f32 0.0, %v2941
    %v2943 = vpop.f32.mrf.mxu0
    %2944 = vdwg.mxu0
    %2945 = vmatpush.bf16.msra.mxu0 %v1309
    %2946 = vmatpush.bf16.msra.mxu0 %v1301
    %2947 = vmatpush.bf16.msra.mxu0 %v1293
    %2948 = vmatpush.bf16.msra.mxu0 %v1285
    %2949 = vmatpush.bf16.msra.mxu0 %v1277
    %2950 = vmatpush.bf16.msra.mxu0 %v1269
    %2951 = vmatpush.bf16.msra.mxu0 %v1261
    %2952 = vmatpush.bf16.msra.mxu0 %v1253
    %2953 = vmatmul.bf16.gmra.mxu0 %v2825
    %v2954 = vpop.f32.mrf.mxu0
    %v2955 = vadd.f32 %v2942, %v2954
    %v2956 = vpop.f32.mrf.mxu0
    %2957 = vdwg.mxu0
    %2958 = vmatpush.bf16.msra.mxu0 %v726
    %2959 = vmatpush.bf16.msra.mxu0 %v718
    %2960 = vmatpush.bf16.msra.mxu0 %v710
    %2961 = vmatpush.bf16.msra.mxu0 %v702
    %2962 = vmatpush.bf16.msra.mxu0 %v694
    %2963 = vmatpush.bf16.msra.mxu0 %v686
    %2964 = vmatpush.bf16.msra.mxu0 %v678
    %2965 = vmatpush.bf16.msra.mxu0 %v670
    %2966 = vmatmul.bf16.gmra.mxu0 %v2824
    %v2967 = vpop.f32.mrf.mxu0
    %v2968 = vadd.f32 0.0, %v2967
    %v2969 = vpop.f32.mrf.mxu0
    %2970 = vdwg.mxu0
    %2971 = vmatpush.bf16.msra.mxu0 %v1310
    %2972 = vmatpush.bf16.msra.mxu0 %v1302
    %2973 = vmatpush.bf16.msra.mxu0 %v1294
    %2974 = vmatpush.bf16.msra.mxu0 %v1286
    %2975 = vmatpush.bf16.msra.mxu0 %v1278
    %2976 = vmatpush.bf16.msra.mxu0 %v1270
    %2977 = vmatpush.bf16.msra.mxu0 %v1262
    %2978 = vmatpush.bf16.msra.mxu0 %v1254
    %2979 = vmatmul.bf16.gmra.mxu0 %v2825
    %v2980 = vpop.f32.mrf.mxu0
    %v2981 = vadd.f32 %v2968, %v2980
    %v2982 = vpop.f32.mrf.mxu0
    %2983 = vdwg.mxu0
    %2984 = vmatpush.bf16.msra.mxu0 %v727
    %2985 = vmatpush.bf16.msra.mxu0 %v719
    %2986 = vmatpush.bf16.msra.mxu0 %v711
    %2987 = vmatpush.bf16.msra.mxu0 %v703
    %2988 = vmatpush.bf16.msra.mxu0 %v695
    %2989 = vmatpush.bf16.msra.mxu0 %v687
    %2990 = vmatpush.bf16.msra.mxu0 %v679
    %2991 = vmatpush.bf16.msra.mxu0 %v671
    %2992 = vmatmul.bf16.gmra.mxu0 %v2824
    %v2993 = vpop.f32.mrf.mxu0
    %v2994 = vadd.f32 0.0, %v2993
    %v2995 = vpop.f32.mrf.mxu0
    %2996 = vdwg.mxu0
    %2997 = vmatpush.bf16.msra.mxu0 %v1311
    %2998 = vmatpush.bf16.msra.mxu0 %v1303
    %2999 = vmatpush.bf16.msra.mxu0 %v1295
    %3000 = vmatpush.bf16.msra.mxu0 %v1287
    %3001 = vmatpush.bf16.msra.mxu0 %v1279
    %3002 = vmatpush.bf16.msra.mxu0 %v1271
    %3003 = vmatpush.bf16.msra.mxu0 %v1263
    %3004 = vmatpush.bf16.msra.mxu0 %v1255
    %3005 = vmatmul.bf16.gmra.mxu0 %v2825
    %v3006 = vpop.f32.mrf.mxu0
    %v3007 = vadd.f32 %v2994, %v3006
    %v3008 = vpop.f32.mrf.mxu0
    %3009 = vdwg.mxu0
    %3010 = vmatpush.bf16.msra.mxu0 %v728
    %3011 = vmatpush.bf16.msra.mxu0 %v720
    %3012 = vmatpush.bf16.msra.mxu0 %v712
    %3013 = vmatpush.bf16.msra.mxu0 %v704
    %3014 = vmatpush.bf16.msra.mxu0 %v696
    %3015 = vmatpush.bf16.msra.mxu0 %v688
    %3016 = vmatpush.bf16.msra.mxu0 %v680
    %3017 = vmatpush.bf16.msra.mxu0 %v672
    %3018 = vmatmul.bf16.gmra.mxu0 %v2824
    %v3019 = vpop.f32.mrf.mxu0
    %v3020 = vadd.f32 0.0, %v3019
    %v3021 = vpop.f32.mrf.mxu0
    %3022 = vdwg.mxu0
    %3023 = vmatpush.bf16.msra.mxu0 %v1312
    %3024 = vmatpush.bf16.msra.mxu0 %v1304
    %3025 = vmatpush.bf16.msra.mxu0 %v1296
    %3026 = vmatpush.bf16.msra.mxu0 %v1288
    %3027 = vmatpush.bf16.msra.mxu0 %v1280
    %3028 = vmatpush.bf16.msra.mxu0 %v1272
    %3029 = vmatpush.bf16.msra.mxu0 %v1264
    %3030 = vmatpush.bf16.msra.mxu0 %v1256
    %3031 = vmatmul.bf16.gmra.mxu0 %v2825
    %v3032 = vpop.f32.mrf.mxu0
    %v3033 = vadd.f32 %v3020, %v3032
    %v3034 = vpop.f32.mrf.mxu0
    %3035 = vdwg.mxu0
    %v3036 = vadd.f32 %v2955, %v284
    %v3037 = vadd.f32 %v2981, %v285
    %v3038 = vadd.f32 %v3007, %v286
    %v3039 = vadd.f32 %v3033, %v287
    %v3040 = vxor.u32 %v3036, 2147483648
    %v3041 = vxor.u32 %v3037, 2147483648
    %v3042 = vxor.u32 %v3038, 2147483648
    %v3043 = vmul.f32 %v3040, 1.442695
    %v3044 = vpow.pop %v3043
    %v3045 = vmul.f32 %v3041, 1.442695
    %v3046 = vpow.pop %v3045
    %v3047 = vmul.f32 %v3042, 1.442695
    %v3048 = vpow.pop %v3047
    %v3049 = vadd.f32 %v3044, 1.0
    %v3050 = vadd.f32 %v3046, 1.0
    %v3051 = vadd.f32 %v3048, 1.0
    %v3052 = vrcp.pop %v3049
    %v3053 = vmul.f32 %v3049, %v3052
    %v3054 = vsub.f32 1.0, %v3053
    %v3055 = vmul.f32 %v3052, %v3054
    %v3056 = vadd.f32 %v3052, %v3055
    %vm3057 = vweird.f32 %v3049
    %vm3058 = vweird.f32 %v3052
    %vm3059 = vmor %vm3057, %vm3058
    %v3060 = vsel %vm3059, %v3052, %v3056
    %v3061 = vand.u32 2147483647, %v3049
    %vm3062 = vcmp.eq.f32.partialorder %v3061, 8.507059e+37
    %v3063 = vand.u32 %v3049, 2147483648
    %v3064 = vor.u32 1.1754944e-38, %v3063
    %v3065 = vsel %vm3062, %v3064, %v3060
    %v3066 = vmul.f32 1.0, %v3065
    %v3067 = vrcp.pop %v3050
    %v3068 = vmul.f32 %v3050, %v3067
    %v3069 = vsub.f32 1.0, %v3068
    %v3070 = vmul.f32 %v3067, %v3069
    %v3071 = vadd.f32 %v3067, %v3070
    %vm3072 = vweird.f32 %v3050
    %vm3073 = vweird.f32 %v3067
    %vm3074 = vmor %vm3072, %vm3073
    %v3075 = vsel %vm3074, %v3067, %v3071
    %v3076 = vand.u32 2147483647, %v3050
    %vm3077 = vcmp.eq.f32.partialorder %v3076, 8.507059e+37
    %v3078 = vand.u32 %v3050, 2147483648
    %v3079 = vor.u32 1.1754944e-38, %v3078
    %v3080 = vsel %vm3077, %v3079, %v3075
    %v3081 = vmul.f32 1.0, %v3080
    %v3082 = vrcp.pop %v3051
    %v3083 = vmul.f32 %v3051, %v3082
    %v3084 = vsub.f32 1.0, %v3083
    %v3085 = vmul.f32 %v3082, %v3084
    %v3086 = vadd.f32 %v3082, %v3085
    %vm3087 = vweird.f32 %v3051
    %vm3088 = vweird.f32 %v3082
    %vm3089 = vmor %vm3087, %vm3088
    %v3090 = vsel %vm3089, %v3082, %v3086
    %v3091 = vand.u32 2147483647, %v3051
    %vm3092 = vcmp.eq.f32.partialorder %v3091, 8.507059e+37
    %v3093 = vand.u32 %v3051, 2147483648
    %v3094 = vor.u32 1.1754944e-38, %v3093
    %v3095 = vsel %vm3092, %v3094, %v3090
    %v3096 = vmul.f32 1.0, %v3095
    %v3097 = vtanh.pop %v3039
    %v3098 = vmul.f32 %v3081, %v2732
    %v3099 = vmul.f32 %v3066, %v3097
    %v3100 = vadd.f32 %v3098, %v3099
    %v3101 = vtanh.pop %v3100
    %v3102 = vmul.f32 %v3096, %v3101
    %v3107 = vrot.slane %v2851, 4
    %v3108 = vrot.slane %v2877, 4
    %v3109 = vrot.slane %v2903, 4
    %v3110 = vrot.slane %v2929, 4
    %v3115 = vadd.f32 %v365, %v3107
    %v3116 = vadd.f32 %v379, %v3108
    %v3117 = vadd.f32 %v393, %v3109
    %v3118 = vadd.f32 %v407, %v3110
    %v3119 = vxor.u32 %v3115, 2147483648
    %v3120 = vxor.u32 %v3116, 2147483648
    %v3121 = vxor.u32 %v3117, 2147483648
    %v3122 = vmul.f32 %v3119, 1.442695
    %v3123 = vpow.pop %v3122
    %v3124 = vmul.f32 %v3120, 1.442695
    %v3125 = vpow.pop %v3124
    %v3126 = vmul.f32 %v3121, 1.442695
    %v3127 = vpow.pop %v3126
    %v3128 = vadd.f32 %v3123, 1.0
    %v3129 = vadd.f32 %v3125, 1.0
    %v3130 = vadd.f32 %v3127, 1.0
    %v3131 = vrcp.pop %v3128
    %v3132 = vmul.f32 %v3128, %v3131
    %v3133 = vsub.f32 1.0, %v3132
    %v3134 = vmul.f32 %v3131, %v3133
    %v3135 = vadd.f32 %v3131, %v3134
    %vm3136 = vweird.f32 %v3128
    %vm3137 = vweird.f32 %v3131
    %vm3138 = vmor %vm3136, %vm3137
    %v3139 = vsel %vm3138, %v3131, %v3135
    %v3140 = vand.u32 2147483647, %v3128
    %vm3141 = vcmp.eq.f32.partialorder %v3140, 8.507059e+37
    %v3142 = vand.u32 %v3128, 2147483648
    %v3143 = vor.u32 1.1754944e-38, %v3142
    %v3144 = vsel %vm3141, %v3143, %v3139
    %v3145 = vmul.f32 1.0, %v3144
    %v3146 = vrcp.pop %v3129
    %v3147 = vmul.f32 %v3129, %v3146
    %v3148 = vsub.f32 1.0, %v3147
    %v3149 = vmul.f32 %v3146, %v3148
    %v3150 = vadd.f32 %v3146, %v3149
    %vm3151 = vweird.f32 %v3129
    %vm3152 = vweird.f32 %v3146
    %vm3153 = vmor %vm3151, %vm3152
    %v3154 = vsel %vm3153, %v3146, %v3150
    %v3155 = vand.u32 2147483647, %v3129
    %vm3156 = vcmp.eq.f32.partialorder %v3155, 8.507059e+37
    %v3157 = vand.u32 %v3129, 2147483648
    %v3158 = vor.u32 1.1754944e-38, %v3157
    %v3159 = vsel %vm3156, %v3158, %v3154
    %v3160 = vmul.f32 1.0, %v3159
    %v3161 = vrcp.pop %v3130
    %v3162 = vmul.f32 %v3130, %v3161
    %v3163 = vsub.f32 1.0, %v3162
    %v3164 = vmul.f32 %v3161, %v3163
    %v3165 = vadd.f32 %v3161, %v3164
    %vm3166 = vweird.f32 %v3130
    %vm3167 = vweird.f32 %v3161
    %vm3168 = vmor %vm3166, %vm3167
    %v3169 = vsel %vm3168, %v3161, %v3165
    %v3170 = vand.u32 2147483647, %v3130
    %vm3171 = vcmp.eq.f32.partialorder %v3170, 8.507059e+37
    %v3172 = vand.u32 %v3130, 2147483648
    %v3173 = vor.u32 1.1754944e-38, %v3172
    %v3174 = vsel %vm3171, %v3173, %v3169
    %v3175 = vmul.f32 1.0, %v3174
    %v3176 = vtanh.pop %v3118
    %v3178 = vrot.slane %v2814, 6
    %v3180 = vmul.f32 %v3160, %v3178
    %v3181 = vmul.f32 %v3145, %v3176
    %v3182 = vadd.f32 %v3180, %v3181
    %v3183 = vtanh.pop %v3182
    %v3184 = vmul.f32 %v3175, %v3183
    %v3186 = vrot.slane %v3102, 4
    %v3188 = vpack.c.bf16 %v3184, %v3184
    %v3189 = vpack.c.bf16 %v3186, %v3186
    %v3192 = vrot.slane %v3188, 2
    %v3193 = vrot.slane %v3189, 2
    %3196 = vmatpush.bf16.msra.mxu0 %v721
    %3197 = vmatpush.bf16.msra.mxu0 %v713
    %3198 = vmatpush.bf16.msra.mxu0 %v705
    %3199 = vmatpush.bf16.msra.mxu0 %v697
    %3200 = vmatpush.bf16.msra.mxu0 %v689
    %3201 = vmatpush.bf16.msra.mxu0 %v681
    %3202 = vmatpush.bf16.msra.mxu0 %v673
    %3203 = vmatpush.bf16.msra.mxu0 %v665
    %3204 = vmatmul.bf16.gmra.mxu0 %v3192
    %v3205 = vpop.f32.mrf.mxu0
    %v3206 = vadd.f32 0.0, %v3205
    %v3207 = vpop.f32.mrf.mxu0
    %3208 = vdwg.mxu0
    %3209 = vmatpush.bf16.msra.mxu0 %v1305
    %3210 = vmatpush.bf16.msra.mxu0 %v1297
    %3211 = vmatpush.bf16.msra.mxu0 %v1289
    %3212 = vmatpush.bf16.msra.mxu0 %v1281
    %3213 = vmatpush.bf16.msra.mxu0 %v1273
    %3214 = vmatpush.bf16.msra.mxu0 %v1265
    %3215 = vmatpush.bf16.msra.mxu0 %v1257
    %3216 = vmatpush.bf16.msra.mxu0 %v1249
    %3217 = vmatmul.bf16.gmra.mxu0 %v3193
    %v3218 = vpop.f32.mrf.mxu0
    %v3219 = vadd.f32 %v3206, %v3218
    %v3220 = vpop.f32.mrf.mxu0
    %3221 = vdwg.mxu0
    %3222 = vmatpush.bf16.msra.mxu0 %v722
    %3223 = vmatpush.bf16.msra.mxu0 %v714
    %3224 = vmatpush.bf16.msra.mxu0 %v706
    %3225 = vmatpush.bf16.msra.mxu0 %v698
    %3226 = vmatpush.bf16.msra.mxu0 %v690
    %3227 = vmatpush.bf16.msra.mxu0 %v682
    %3228 = vmatpush.bf16.msra.mxu0 %v674
    %3229 = vmatpush.bf16.msra.mxu0 %v666
    %3230 = vmatmul.bf16.gmra.mxu0 %v3192
    %v3231 = vpop.f32.mrf.mxu0
    %v3232 = vadd.f32 0.0, %v3231
    %v3233 = vpop.f32.mrf.mxu0
    %3234 = vdwg.mxu0
    %3235 = vmatpush.bf16.msra.mxu0 %v1306
    %3236 = vmatpush.bf16.msra.mxu0 %v1298
    %3237 = vmatpush.bf16.msra.mxu0 %v1290
    %3238 = vmatpush.bf16.msra.mxu0 %v1282
    %3239 = vmatpush.bf16.msra.mxu0 %v1274
    %3240 = vmatpush.bf16.msra.mxu0 %v1266
    %3241 = vmatpush.bf16.msra.mxu0 %v1258
    %3242 = vmatpush.bf16.msra.mxu0 %v1250
    %3243 = vmatmul.bf16.gmra.mxu0 %v3193
    %v3244 = vpop.f32.mrf.mxu0
    %v3245 = vadd.f32 %v3232, %v3244
    %v3246 = vpop.f32.mrf.mxu0
    %3247 = vdwg.mxu0
    %3248 = vmatpush.bf16.msra.mxu0 %v723
    %3249 = vmatpush.bf16.msra.mxu0 %v715
    %3250 = vmatpush.bf16.msra.mxu0 %v707
    %3251 = vmatpush.bf16.msra.mxu0 %v699
    %3252 = vmatpush.bf16.msra.mxu0 %v691
    %3253 = vmatpush.bf16.msra.mxu0 %v683
    %3254 = vmatpush.bf16.msra.mxu0 %v675
    %3255 = vmatpush.bf16.msra.mxu0 %v667
    %3256 = vmatmul.bf16.gmra.mxu0 %v3192
    %v3257 = vpop.f32.mrf.mxu0
    %v3258 = vadd.f32 0.0, %v3257
    %v3259 = vpop.f32.mrf.mxu0
    %3260 = vdwg.mxu0
    %3261 = vmatpush.bf16.msra.mxu0 %v1307
    %3262 = vmatpush.bf16.msra.mxu0 %v1299
    %3263 = vmatpush.bf16.msra.mxu0 %v1291
    %3264 = vmatpush.bf16.msra.mxu0 %v1283
    %3265 = vmatpush.bf16.msra.mxu0 %v1275
    %3266 = vmatpush.bf16.msra.mxu0 %v1267
    %3267 = vmatpush.bf16.msra.mxu0 %v1259
    %3268 = vmatpush.bf16.msra.mxu0 %v1251
    %3269 = vmatmul.bf16.gmra.mxu0 %v3193
    %v3270 = vpop.f32.mrf.mxu0
    %v3271 = vadd.f32 %v3258, %v3270
    %v3272 = vpop.f32.mrf.mxu0
    %3273 = vdwg.mxu0
    %3274 = vmatpush.bf16.msra.mxu0 %v724
    %3275 = vmatpush.bf16.msra.mxu0 %v716
    %3276 = vmatpush.bf16.msra.mxu0 %v708
    %3277 = vmatpush.bf16.msra.mxu0 %v700
    %3278 = vmatpush.bf16.msra.mxu0 %v692
    %3279 = vmatpush.bf16.msra.mxu0 %v684
    %3280 = vmatpush.bf16.msra.mxu0 %v676
    %3281 = vmatpush.bf16.msra.mxu0 %v668
    %3282 = vmatmul.bf16.gmra.mxu0 %v3192
    %v3283 = vpop.f32.mrf.mxu0
    %v3284 = vadd.f32 0.0, %v3283
    %v3285 = vpop.f32.mrf.mxu0
    %3286 = vdwg.mxu0
    %3287 = vmatpush.bf16.msra.mxu0 %v1308
    %3288 = vmatpush.bf16.msra.mxu0 %v1300
    %3289 = vmatpush.bf16.msra.mxu0 %v1292
    %3290 = vmatpush.bf16.msra.mxu0 %v1284
    %3291 = vmatpush.bf16.msra.mxu0 %v1276
    %3292 = vmatpush.bf16.msra.mxu0 %v1268
    %3293 = vmatpush.bf16.msra.mxu0 %v1260
    %3294 = vmatpush.bf16.msra.mxu0 %v1252
    %3295 = vmatmul.bf16.gmra.mxu0 %v3193
    %v3296 = vpop.f32.mrf.mxu0
    %v3297 = vadd.f32 %v3284, %v3296
    %v3298 = vpop.f32.mrf.mxu0
    %3299 = vdwg.mxu0
    %3300 = vmatpush.bf16.msra.mxu0 %v725
    %3301 = vmatpush.bf16.msra.mxu0 %v717
    %3302 = vmatpush.bf16.msra.mxu0 %v709
    %3303 = vmatpush.bf16.msra.mxu0 %v701
    %3304 = vmatpush.bf16.msra.mxu0 %v693
    %3305 = vmatpush.bf16.msra.mxu0 %v685
    %3306 = vmatpush.bf16.msra.mxu0 %v677
    %3307 = vmatpush.bf16.msra.mxu0 %v669
    %3308 = vmatmul.bf16.gmra.mxu0 %v3192
    %v3309 = vpop.f32.mrf.mxu0
    %v3310 = vadd.f32 0.0, %v3309
    %v3311 = vpop.f32.mrf.mxu0
    %3312 = vdwg.mxu0
    %3313 = vmatpush.bf16.msra.mxu0 %v1309
    %3314 = vmatpush.bf16.msra.mxu0 %v1301
    %3315 = vmatpush.bf16.msra.mxu0 %v1293
    %3316 = vmatpush.bf16.msra.mxu0 %v1285
    %3317 = vmatpush.bf16.msra.mxu0 %v1277
    %3318 = vmatpush.bf16.msra.mxu0 %v1269
    %3319 = vmatpush.bf16.msra.mxu0 %v1261
    %3320 = vmatpush.bf16.msra.mxu0 %v1253
    %3321 = vmatmul.bf16.gmra.mxu0 %v3193
    %v3322 = vpop.f32.mrf.mxu0
    %v3323 = vadd.f32 %v3310, %v3322
    %v3324 = vpop.f32.mrf.mxu0
    %3325 = vdwg.mxu0
    %3326 = vmatpush.bf16.msra.mxu0 %v726
    %3327 = vmatpush.bf16.msra.mxu0 %v718
    %3328 = vmatpush.bf16.msra.mxu0 %v710
    %3329 = vmatpush.bf16.msra.mxu0 %v702
    %3330 = vmatpush.bf16.msra.mxu0 %v694
    %3331 = vmatpush.bf16.msra.mxu0 %v686
    %3332 = vmatpush.bf16.msra.mxu0 %v678
    %3333 = vmatpush.bf16.msra.mxu0 %v670
    %3334 = vmatmul.bf16.gmra.mxu0 %v3192
    %v3335 = vpop.f32.mrf.mxu0
    %v3336 = vadd.f32 0.0, %v3335
    %v3337 = vpop.f32.mrf.mxu0
    %3338 = vdwg.mxu0
    %3339 = vmatpush.bf16.msra.mxu0 %v1310
    %3340 = vmatpush.bf16.msra.mxu0 %v1302
    %3341 = vmatpush.bf16.msra.mxu0 %v1294
    %3342 = vmatpush.bf16.msra.mxu0 %v1286
    %3343 = vmatpush.bf16.msra.mxu0 %v1278
    %3344 = vmatpush.bf16.msra.mxu0 %v1270
    %3345 = vmatpush.bf16.msra.mxu0 %v1262
    %3346 = vmatpush.bf16.msra.mxu0 %v1254
    %3347 = vmatmul.bf16.gmra.mxu0 %v3193
    %v3348 = vpop.f32.mrf.mxu0
    %v3349 = vadd.f32 %v3336, %v3348
    %v3350 = vpop.f32.mrf.mxu0
    %3351 = vdwg.mxu0
    %3352 = vmatpush.bf16.msra.mxu0 %v727
    %3353 = vmatpush.bf16.msra.mxu0 %v719
    %3354 = vmatpush.bf16.msra.mxu0 %v711
    %3355 = vmatpush.bf16.msra.mxu0 %v703
    %3356 = vmatpush.bf16.msra.mxu0 %v695
    %3357 = vmatpush.bf16.msra.mxu0 %v687
    %3358 = vmatpush.bf16.msra.mxu0 %v679
    %3359 = vmatpush.bf16.msra.mxu0 %v671
    %3360 = vmatmul.bf16.gmra.mxu0 %v3192
    %v3361 = vpop.f32.mrf.mxu0
    %v3362 = vadd.f32 0.0, %v3361
    %v3363 = vpop.f32.mrf.mxu0
    %3364 = vdwg.mxu0
    %3365 = vmatpush.bf16.msra.mxu0 %v1311
    %3366 = vmatpush.bf16.msra.mxu0 %v1303
    %3367 = vmatpush.bf16.msra.mxu0 %v1295
    %3368 = vmatpush.bf16.msra.mxu0 %v1287
    %3369 = vmatpush.bf16.msra.mxu0 %v1279
    %3370 = vmatpush.bf16.msra.mxu0 %v1271
    %3371 = vmatpush.bf16.msra.mxu0 %v1263
    %3372 = vmatpush.bf16.msra.mxu0 %v1255
    %3373 = vmatmul.bf16.gmra.mxu0 %v3193
    %v3374 = vpop.f32.mrf.mxu0
    %v3375 = vadd.f32 %v3362, %v3374
    %v3376 = vpop.f32.mrf.mxu0
    %3377 = vdwg.mxu0
    %3378 = vmatpush.bf16.msra.mxu0 %v728
    %3379 = vmatpush.bf16.msra.mxu0 %v720
    %3380 = vmatpush.bf16.msra.mxu0 %v712
    %3381 = vmatpush.bf16.msra.mxu0 %v704
    %3382 = vmatpush.bf16.msra.mxu0 %v696
    %3383 = vmatpush.bf16.msra.mxu0 %v688
    %3384 = vmatpush.bf16.msra.mxu0 %v680
    %3385 = vmatpush.bf16.msra.mxu0 %v672
    %3386 = vmatmul.bf16.gmra.mxu0 %v3192
    %v3387 = vpop.f32.mrf.mxu0
    %v3388 = vadd.f32 0.0, %v3387
    %v3389 = vpop.f32.mrf.mxu0
    %3390 = vdwg.mxu0
    %3391 = vmatpush.bf16.msra.mxu0 %v1312
    %3392 = vmatpush.bf16.msra.mxu0 %v1304
    %3393 = vmatpush.bf16.msra.mxu0 %v1296
    %3394 = vmatpush.bf16.msra.mxu0 %v1288
    %3395 = vmatpush.bf16.msra.mxu0 %v1280
    %3396 = vmatpush.bf16.msra.mxu0 %v1272
    %3397 = vmatpush.bf16.msra.mxu0 %v1264
    %3398 = vmatpush.bf16.msra.mxu0 %v1256
    %3399 = vmatmul.bf16.gmra.mxu0 %v3193
    %v3400 = vpop.f32.mrf.mxu0
    %v3401 = vadd.f32 %v3388, %v3400
    %v3402 = vpop.f32.mrf.mxu0
    %3403 = vdwg.mxu0
    %v3404 = vadd.f32 %v3323, %v284
    %v3405 = vadd.f32 %v3349, %v285
    %v3406 = vadd.f32 %v3375, %v286
    %v3407 = vadd.f32 %v3401, %v287
    %v3408 = vxor.u32 %v3404, 2147483648
    %v3409 = vxor.u32 %v3405, 2147483648
    %v3410 = vxor.u32 %v3406, 2147483648
    %v3411 = vmul.f32 %v3408, 1.442695
    %v3412 = vpow.pop %v3411
    %v3413 = vmul.f32 %v3409, 1.442695
    %v3414 = vpow.pop %v3413
    %v3415 = vmul.f32 %v3410, 1.442695
    %v3416 = vpow.pop %v3415
    %v3417 = vadd.f32 %v3412, 1.0
    %v3418 = vadd.f32 %v3414, 1.0
    %v3419 = vadd.f32 %v3416, 1.0
    %v3420 = vrcp.pop %v3417
    %v3421 = vmul.f32 %v3417, %v3420
    %v3422 = vsub.f32 1.0, %v3421
    %v3423 = vmul.f32 %v3420, %v3422
    %v3424 = vadd.f32 %v3420, %v3423
    %vm3425 = vweird.f32 %v3417
    %vm3426 = vweird.f32 %v3420
    %vm3427 = vmor %vm3425, %vm3426
    %v3428 = vsel %vm3427, %v3420, %v3424
    %v3429 = vand.u32 2147483647, %v3417
    %vm3430 = vcmp.eq.f32.partialorder %v3429, 8.507059e+37
    %v3431 = vand.u32 %v3417, 2147483648
    %v3432 = vor.u32 1.1754944e-38, %v3431
    %v3433 = vsel %vm3430, %v3432, %v3428
    %v3434 = vmul.f32 1.0, %v3433
    %v3435 = vrcp.pop %v3418
    %v3436 = vmul.f32 %v3418, %v3435
    %v3437 = vsub.f32 1.0, %v3436
    %v3438 = vmul.f32 %v3435, %v3437
    %v3439 = vadd.f32 %v3435, %v3438
    %vm3440 = vweird.f32 %v3418
    %vm3441 = vweird.f32 %v3435
    %vm3442 = vmor %vm3440, %vm3441
    %v3443 = vsel %vm3442, %v3435, %v3439
    %v3444 = vand.u32 2147483647, %v3418
    %vm3445 = vcmp.eq.f32.partialorder %v3444, 8.507059e+37
    %v3446 = vand.u32 %v3418, 2147483648
    %v3447 = vor.u32 1.1754944e-38, %v3446
    %v3448 = vsel %vm3445, %v3447, %v3443
    %v3449 = vmul.f32 1.0, %v3448
    %v3450 = vrcp.pop %v3419
    %v3451 = vmul.f32 %v3419, %v3450
    %v3452 = vsub.f32 1.0, %v3451
    %v3453 = vmul.f32 %v3450, %v3452
    %v3454 = vadd.f32 %v3450, %v3453
    %vm3455 = vweird.f32 %v3419
    %vm3456 = vweird.f32 %v3450
    %vm3457 = vmor %vm3455, %vm3456
    %v3458 = vsel %vm3457, %v3450, %v3454
    %v3459 = vand.u32 2147483647, %v3419
    %vm3460 = vcmp.eq.f32.partialorder %v3459, 8.507059e+37
    %v3461 = vand.u32 %v3419, 2147483648
    %v3462 = vor.u32 1.1754944e-38, %v3461
    %v3463 = vsel %vm3460, %v3462, %v3458
    %v3464 = vmul.f32 1.0, %v3463
    %v3465 = vtanh.pop %v3407
    %v3466 = vmul.f32 %v3449, %v3100
    %v3467 = vmul.f32 %v3434, %v3465
    %v3468 = vadd.f32 %v3466, %v3467
    %v3469 = vtanh.pop %v3468
    %v3470 = vmul.f32 %v3464, %v3469
    %v3475 = vrot.slane %v3219, 2
    %v3476 = vrot.slane %v3245, 2
    %v3477 = vrot.slane %v3271, 2
    %v3478 = vrot.slane %v3297, 2
    %v3483 = vadd.f32 %v365, %v3475
    %v3484 = vadd.f32 %v379, %v3476
    %v3485 = vadd.f32 %v393, %v3477
    %v3486 = vadd.f32 %v407, %v3478
    %v3487 = vxor.u32 %v3483, 2147483648
    %v3488 = vxor.u32 %v3484, 2147483648
    %v3489 = vxor.u32 %v3485, 2147483648
    %v3490 = vmul.f32 %v3487, 1.442695
    %v3491 = vpow.pop %v3490
    %v3492 = vmul.f32 %v3488, 1.442695
    %v3493 = vpow.pop %v3492
    %v3494 = vmul.f32 %v3489, 1.442695
    %v3495 = vpow.pop %v3494
    %v3496 = vadd.f32 %v3491, 1.0
    %v3497 = vadd.f32 %v3493, 1.0
    %v3498 = vadd.f32 %v3495, 1.0
    %v3499 = vrcp.pop %v3496
    %v3500 = vmul.f32 %v3496, %v3499
    %v3501 = vsub.f32 1.0, %v3500
    %v3502 = vmul.f32 %v3499, %v3501
    %v3503 = vadd.f32 %v3499, %v3502
    %vm3504 = vweird.f32 %v3496
    %vm3505 = vweird.f32 %v3499
    %vm3506 = vmor %vm3504, %vm3505
    %v3507 = vsel %vm3506, %v3499, %v3503
    %v3508 = vand.u32 2147483647, %v3496
    %vm3509 = vcmp.eq.f32.partialorder %v3508, 8.507059e+37
    %v3510 = vand.u32 %v3496, 2147483648
    %v3511 = vor.u32 1.1754944e-38, %v3510
    %v3512 = vsel %vm3509, %v3511, %v3507
    %v3513 = vmul.f32 1.0, %v3512
    %v3514 = vrcp.pop %v3497
    %v3515 = vmul.f32 %v3497, %v3514
    %v3516 = vsub.f32 1.0, %v3515
    %v3517 = vmul.f32 %v3514, %v3516
    %v3518 = vadd.f32 %v3514, %v3517
    %vm3519 = vweird.f32 %v3497
    %vm3520 = vweird.f32 %v3514
    %vm3521 = vmor %vm3519, %vm3520
    %v3522 = vsel %vm3521, %v3514, %v3518
    %v3523 = vand.u32 2147483647, %v3497
    %vm3524 = vcmp.eq.f32.partialorder %v3523, 8.507059e+37
    %v3525 = vand.u32 %v3497, 2147483648
    %v3526 = vor.u32 1.1754944e-38, %v3525
    %v3527 = vsel %vm3524, %v3526, %v3522
    %v3528 = vmul.f32 1.0, %v3527
    %v3529 = vrcp.pop %v3498
    %v3530 = vmul.f32 %v3498, %v3529
    %v3531 = vsub.f32 1.0, %v3530
    %v3532 = vmul.f32 %v3529, %v3531
    %v3533 = vadd.f32 %v3529, %v3532
    %vm3534 = vweird.f32 %v3498
    %vm3535 = vweird.f32 %v3529
    %vm3536 = vmor %vm3534, %vm3535
    %v3537 = vsel %vm3536, %v3529, %v3533
    %v3538 = vand.u32 2147483647, %v3498
    %vm3539 = vcmp.eq.f32.partialorder %v3538, 8.507059e+37
    %v3540 = vand.u32 %v3498, 2147483648
    %v3541 = vor.u32 1.1754944e-38, %v3540
    %v3542 = vsel %vm3539, %v3541, %v3537
    %v3543 = vmul.f32 1.0, %v3542
    %v3544 = vtanh.pop %v3486
    %v3546 = vrot.slane %v3182, 6
    %v3548 = vmul.f32 %v3528, %v3546
    %v3549 = vmul.f32 %v3513, %v3544
    %v3550 = vadd.f32 %v3548, %v3549
    %v3551 = vtanh.pop %v3550
    %v3552 = vmul.f32 %v3543, %v3551
    %v3554 = vrot.slane %v3470, 2
    %v3556 = vpack.c.bf16 %v3552, %v3552
    %v3557 = vpack.c.bf16 %v3554, %v3554
    %v3560 = vrot.slane %v3556, 3
    %v3561 = vrot.slane %v3557, 3
    %3564 = vmatpush.bf16.msra.mxu0 %v725
    %3565 = vmatpush.bf16.msra.mxu0 %v717
    %3566 = vmatpush.bf16.msra.mxu0 %v709
    %3567 = vmatpush.bf16.msra.mxu0 %v701
    %3568 = vmatpush.bf16.msra.mxu0 %v693
    %3569 = vmatpush.bf16.msra.mxu0 %v685
    %3570 = vmatpush.bf16.msra.mxu0 %v677
    %3571 = vmatpush.bf16.msra.mxu0 %v669
    %3572 = vmatmul.bf16.gmra.mxu0 %v3560
    %v3573 = vpop.f32.mrf.mxu0
    %v3574 = vadd.f32 0.0, %v3573
    %v3575 = vpop.f32.mrf.mxu0
    %3576 = vdwg.mxu0
    %3577 = vmatpush.bf16.msra.mxu0 %v1309
    %3578 = vmatpush.bf16.msra.mxu0 %v1301
    %3579 = vmatpush.bf16.msra.mxu0 %v1293
    %3580 = vmatpush.bf16.msra.mxu0 %v1285
    %3581 = vmatpush.bf16.msra.mxu0 %v1277
    %3582 = vmatpush.bf16.msra.mxu0 %v1269
    %3583 = vmatpush.bf16.msra.mxu0 %v1261
    %3584 = vmatpush.bf16.msra.mxu0 %v1253
    %3585 = vmatmul.bf16.gmra.mxu0 %v3561
    %v3586 = vpop.f32.mrf.mxu0
    %v3587 = vadd.f32 %v3574, %v3586
    %v3588 = vpop.f32.mrf.mxu0
    %3589 = vdwg.mxu0
    %3590 = vmatpush.bf16.msra.mxu0 %v726
    %3591 = vmatpush.bf16.msra.mxu0 %v718
    %3592 = vmatpush.bf16.msra.mxu0 %v710
    %3593 = vmatpush.bf16.msra.mxu0 %v702
    %3594 = vmatpush.bf16.msra.mxu0 %v694
    %3595 = vmatpush.bf16.msra.mxu0 %v686
    %3596 = vmatpush.bf16.msra.mxu0 %v678
    %3597 = vmatpush.bf16.msra.mxu0 %v670
    %3598 = vmatmul.bf16.gmra.mxu0 %v3560
    %v3599 = vpop.f32.mrf.mxu0
    %v3600 = vadd.f32 0.0, %v3599
    %v3601 = vpop.f32.mrf.mxu0
    %3602 = vdwg.mxu0
    %3603 = vmatpush.bf16.msra.mxu0 %v1310
    %3604 = vmatpush.bf16.msra.mxu0 %v1302
    %3605 = vmatpush.bf16.msra.mxu0 %v1294
    %3606 = vmatpush.bf16.msra.mxu0 %v1286
    %3607 = vmatpush.bf16.msra.mxu0 %v1278
    %3608 = vmatpush.bf16.msra.mxu0 %v1270
    %3609 = vmatpush.bf16.msra.mxu0 %v1262
    %3610 = vmatpush.bf16.msra.mxu0 %v1254
    %3611 = vmatmul.bf16.gmra.mxu0 %v3561
    %v3612 = vpop.f32.mrf.mxu0
    %v3613 = vadd.f32 %v3600, %v3612
    %v3614 = vpop.f32.mrf.mxu0
    %3615 = vdwg.mxu0
    %3616 = vmatpush.bf16.msra.mxu0 %v727
    %3617 = vmatpush.bf16.msra.mxu0 %v719
    %3618 = vmatpush.bf16.msra.mxu0 %v711
    %3619 = vmatpush.bf16.msra.mxu0 %v703
    %3620 = vmatpush.bf16.msra.mxu0 %v695
    %3621 = vmatpush.bf16.msra.mxu0 %v687
    %3622 = vmatpush.bf16.msra.mxu0 %v679
    %3623 = vmatpush.bf16.msra.mxu0 %v671
    %3624 = vmatmul.bf16.gmra.mxu0 %v3560
    %v3625 = vpop.f32.mrf.mxu0
    %v3626 = vadd.f32 0.0, %v3625
    %v3627 = vpop.f32.mrf.mxu0
    %3628 = vdwg.mxu0
    %3629 = vmatpush.bf16.msra.mxu0 %v1311
    %3630 = vmatpush.bf16.msra.mxu0 %v1303
    %3631 = vmatpush.bf16.msra.mxu0 %v1295
    %3632 = vmatpush.bf16.msra.mxu0 %v1287
    %3633 = vmatpush.bf16.msra.mxu0 %v1279
    %3634 = vmatpush.bf16.msra.mxu0 %v1271
    %3635 = vmatpush.bf16.msra.mxu0 %v1263
    %3636 = vmatpush.bf16.msra.mxu0 %v1255
    %3637 = vmatmul.bf16.gmra.mxu0 %v3561
    %v3638 = vpop.f32.mrf.mxu0
    %v3639 = vadd.f32 %v3626, %v3638
    %v3640 = vpop.f32.mrf.mxu0
    %3641 = vdwg.mxu0
    %3642 = vmatpush.bf16.msra.mxu0 %v728
    %3643 = vmatpush.bf16.msra.mxu0 %v720
    %3644 = vmatpush.bf16.msra.mxu0 %v712
    %3645 = vmatpush.bf16.msra.mxu0 %v704
    %3646 = vmatpush.bf16.msra.mxu0 %v696
    %3647 = vmatpush.bf16.msra.mxu0 %v688
    %3648 = vmatpush.bf16.msra.mxu0 %v680
    %3649 = vmatpush.bf16.msra.mxu0 %v672
    %3650 = vmatmul.bf16.gmra.mxu0 %v3560
    %v3651 = vpop.f32.mrf.mxu0
    %v3652 = vadd.f32 0.0, %v3651
    %v3653 = vpop.f32.mrf.mxu0
    %3654 = vdwg.mxu0
    %3655 = vmatpush.bf16.msra.mxu0 %v1312
    %3656 = vmatpush.bf16.msra.mxu0 %v1304
    %3657 = vmatpush.bf16.msra.mxu0 %v1296
    %3658 = vmatpush.bf16.msra.mxu0 %v1288
    %3659 = vmatpush.bf16.msra.mxu0 %v1280
    %3660 = vmatpush.bf16.msra.mxu0 %v1272
    %3661 = vmatpush.bf16.msra.mxu0 %v1264
    %3662 = vmatpush.bf16.msra.mxu0 %v1256
    %3663 = vmatmul.bf16.gmra.mxu0 %v3561
    %v3664 = vpop.f32.mrf.mxu0
    %v3665 = vadd.f32 %v3652, %v3664
    %v3666 = vpop.f32.mrf.mxu0
    %3667 = vdwg.mxu0
    %v3668 = vadd.f32 %v3587, %v284
    %v3669 = vadd.f32 %v3613, %v285
    %v3670 = vadd.f32 %v3639, %v286
    %v3671 = vadd.f32 %v3665, %v287
    %v3672 = vxor.u32 %v3668, 2147483648
    %v3673 = vxor.u32 %v3669, 2147483648
    %v3674 = vxor.u32 %v3670, 2147483648
    %v3675 = vmul.f32 %v3672, 1.442695
    %v3676 = vpow.pop %v3675
    %v3677 = vmul.f32 %v3673, 1.442695
    %v3678 = vpow.pop %v3677
    %v3679 = vmul.f32 %v3674, 1.442695
    %v3680 = vpow.pop %v3679
    %v3681 = vadd.f32 %v3676, 1.0
    %v3682 = vadd.f32 %v3678, 1.0
    %v3683 = vadd.f32 %v3680, 1.0
    %v3684 = vrcp.pop %v3681
    %v3685 = vmul.f32 %v3681, %v3684
    %v3686 = vsub.f32 1.0, %v3685
    %v3687 = vmul.f32 %v3684, %v3686
    %v3688 = vadd.f32 %v3684, %v3687
    %vm3689 = vweird.f32 %v3681
    %vm3690 = vweird.f32 %v3684
    %vm3691 = vmor %vm3689, %vm3690
    %v3692 = vsel %vm3691, %v3684, %v3688
    %v3693 = vand.u32 2147483647, %v3681
    %vm3694 = vcmp.eq.f32.partialorder %v3693, 8.507059e+37
    %v3695 = vand.u32 %v3681, 2147483648
    %v3696 = vor.u32 1.1754944e-38, %v3695
    %v3697 = vsel %vm3694, %v3696, %v3692
    %v3698 = vmul.f32 1.0, %v3697
    %v3699 = vrcp.pop %v3682
    %v3700 = vmul.f32 %v3682, %v3699
    %v3701 = vsub.f32 1.0, %v3700
    %v3702 = vmul.f32 %v3699, %v3701
    %v3703 = vadd.f32 %v3699, %v3702
    %vm3704 = vweird.f32 %v3682
    %vm3705 = vweird.f32 %v3699
    %vm3706 = vmor %vm3704, %vm3705
    %v3707 = vsel %vm3706, %v3699, %v3703
    %v3708 = vand.u32 2147483647, %v3682
    %vm3709 = vcmp.eq.f32.partialorder %v3708, 8.507059e+37
    %v3710 = vand.u32 %v3682, 2147483648
    %v3711 = vor.u32 1.1754944e-38, %v3710
    %v3712 = vsel %vm3709, %v3711, %v3707
    %v3713 = vmul.f32 1.0, %v3712
    %v3714 = vrcp.pop %v3683
    %v3715 = vmul.f32 %v3683, %v3714
    %v3716 = vsub.f32 1.0, %v3715
    %v3717 = vmul.f32 %v3714, %v3716
    %v3718 = vadd.f32 %v3714, %v3717
    %vm3719 = vweird.f32 %v3683
    %vm3720 = vweird.f32 %v3714
    %vm3721 = vmor %vm3719, %vm3720
    %v3722 = vsel %vm3721, %v3714, %v3718
    %v3723 = vand.u32 2147483647, %v3683
    %vm3724 = vcmp.eq.f32.partialorder %v3723, 8.507059e+37
    %v3725 = vand.u32 %v3683, 2147483648
    %v3726 = vor.u32 1.1754944e-38, %v3725
    %v3727 = vsel %vm3724, %v3726, %v3722
    %v3728 = vmul.f32 1.0, %v3727
    %v3729 = vtanh.pop %v3671
    %v3730 = vmul.f32 %v3713, %v3468
    %v3731 = vmul.f32 %v3698, %v3729
    %v3732 = vadd.f32 %v3730, %v3731
    %v3733 = vtanh.pop %v3732
    %v3734 = vmul.f32 %v3728, %v3733
    %s3735 = smul.u32 4, 32
    %s3736 = smul.u32 %s3735, 4
    %s3737 = sshll.u32 %s3736, 4
    %3738 = dma.done [#allocation4], %s3737
    %s3739 = sshll.u32 %s3736, 4
    %3740 = dma.done %s124, %s3739
    %v3741 = vld [vmem:[#allocation2] sm:$0xff]
    %v3742 = vld [vmem:[#allocation2 + $0x8] sm:$0xff]
    %v3743 = vld [vmem:[#allocation2 + $0x10] sm:$0xff]
    %v3744 = vld [vmem:[#allocation2 + $0x18] sm:$0xff]
    %v3745 = vld [vmem:[#allocation2 + $0x20] sm:$0xff]
    %v3746 = vld [vmem:[#allocation2 + $0x28] sm:$0xff]
    %v3747 = vld [vmem:[#allocation2 + $0x30] sm:$0xff]
    %v3748 = vld [vmem:[#allocation2 + $0x38] sm:$0xff]
    %v3749 = vld [vmem:[#allocation2 + $0x40] sm:$0xff]
    %v3750 = vld [vmem:[#allocation2 + $0x48] sm:$0xff]
    %v3751 = vld [vmem:[#allocation2 + $0x50] sm:$0xff]
    %v3752 = vld [vmem:[#allocation2 + $0x58] sm:$0xff]
    %v3753 = vld [vmem:[#allocation2 + $0x60] sm:$0xff]
    %v3754 = vld [vmem:[#allocation2 + $0x68] sm:$0xff]
    %v3755 = vld [vmem:[#allocation2 + $0x70] sm:$0xff]
    %v3756 = vld [vmem:[#allocation2 + $0x78] sm:$0xff]
    %v3757 = vld [vmem:[#allocation2 + $0x80] sm:$0xff]
    %v3758 = vld [vmem:[#allocation2 + $0x88] sm:$0xff]
    %v3759 = vld [vmem:[#allocation2 + $0x90] sm:$0xff]
    %v3760 = vld [vmem:[#allocation2 + $0x98] sm:$0xff]
    %v3761 = vld [vmem:[#allocation2 + $0xa0] sm:$0xff]
    %v3762 = vld [vmem:[#allocation2 + $0xa8] sm:$0xff]
    %v3763 = vld [vmem:[#allocation2 + $0xb0] sm:$0xff]
    %v3764 = vld [vmem:[#allocation2 + $0xb8] sm:$0xff]
    %v3765 = vld [vmem:[#allocation2 + $0xc0] sm:$0xff]
    %v3766 = vld [vmem:[#allocation2 + $0xc8] sm:$0xff]
    %v3767 = vld [vmem:[#allocation2 + $0xd0] sm:$0xff]
    %v3768 = vld [vmem:[#allocation2 + $0xd8] sm:$0xff]
    %v3769 = vld [vmem:[#allocation2 + $0xe0] sm:$0xff]
    %v3770 = vld [vmem:[#allocation2 + $0xe8] sm:$0xff]
    %v3771 = vld [vmem:[#allocation2 + $0xf0] sm:$0xff]
    %v3772 = vld [vmem:[#allocation2 + $0xf8] sm:$0xff]
    %v3773 = vld [vmem:[#allocation2 + $0x100] sm:$0xff]
    %v3774 = vld [vmem:[#allocation2 + $0x108] sm:$0xff]
    %v3775 = vld [vmem:[#allocation2 + $0x110] sm:$0xff]
    %v3776 = vld [vmem:[#allocation2 + $0x118] sm:$0xff]
    %v3777 = vld [vmem:[#allocation2 + $0x120] sm:$0xff]
    %v3778 = vld [vmem:[#allocation2 + $0x128] sm:$0xff]
    %v3779 = vld [vmem:[#allocation2 + $0x130] sm:$0xff]
    %v3780 = vld [vmem:[#allocation2 + $0x138] sm:$0xff]
    %v3781 = vld [vmem:[#allocation2 + $0x140] sm:$0xff]
    %v3782 = vld [vmem:[#allocation2 + $0x148] sm:$0xff]
    %v3783 = vld [vmem:[#allocation2 + $0x150] sm:$0xff]
    %v3784 = vld [vmem:[#allocation2 + $0x158] sm:$0xff]
    %v3785 = vld [vmem:[#allocation2 + $0x160] sm:$0xff]
    %v3786 = vld [vmem:[#allocation2 + $0x168] sm:$0xff]
    %v3787 = vld [vmem:[#allocation2 + $0x170] sm:$0xff]
    %v3788 = vld [vmem:[#allocation2 + $0x178] sm:$0xff]
    %v3789 = vld [vmem:[#allocation2 + $0x180] sm:$0xff]
    %v3790 = vld [vmem:[#allocation2 + $0x188] sm:$0xff]
    %v3791 = vld [vmem:[#allocation2 + $0x190] sm:$0xff]
    %v3792 = vld [vmem:[#allocation2 + $0x198] sm:$0xff]
    %v3793 = vld [vmem:[#allocation2 + $0x1a0] sm:$0xff]
    %v3794 = vld [vmem:[#allocation2 + $0x1a8] sm:$0xff]
    %v3795 = vld [vmem:[#allocation2 + $0x1b0] sm:$0xff]
    %v3796 = vld [vmem:[#allocation2 + $0x1b8] sm:$0xff]
    %v3797 = vld [vmem:[#allocation2 + $0x1c0] sm:$0xff]
    %v3798 = vld [vmem:[#allocation2 + $0x1c8] sm:$0xff]
    %v3799 = vld [vmem:[#allocation2 + $0x1d0] sm:$0xff]
    %v3800 = vld [vmem:[#allocation2 + $0x1d8] sm:$0xff]
    %v3801 = vld [vmem:[#allocation2 + $0x1e0] sm:$0xff]
    %v3802 = vld [vmem:[#allocation2 + $0x1e8] sm:$0xff]
    %v3803 = vld [vmem:[#allocation2 + $0x1f0] sm:$0xff]
    %v3804 = vld [vmem:[#allocation2 + $0x1f8] sm:$0xff]
    %v3805 = vld [vmem:[#allocation3] sm:$0xff]
    %v3806 = vld [vmem:[#allocation3 + $0x8] sm:$0xff]
    %v3807 = vld [vmem:[#allocation3 + $0x10] sm:$0xff]
    %v3808 = vld [vmem:[#allocation3 + $0x18] sm:$0xff]
    %v3809 = vld [vmem:[#allocation3 + $0x20] sm:$0xff]
    %v3810 = vld [vmem:[#allocation3 + $0x28] sm:$0xff]
    %v3811 = vld [vmem:[#allocation3 + $0x30] sm:$0xff]
    %v3812 = vld [vmem:[#allocation3 + $0x38] sm:$0xff]
    %v3813 = vld [vmem:[#allocation3 + $0x40] sm:$0xff]
    %v3814 = vld [vmem:[#allocation3 + $0x48] sm:$0xff]
    %v3815 = vld [vmem:[#allocation3 + $0x50] sm:$0xff]
    %v3816 = vld [vmem:[#allocation3 + $0x58] sm:$0xff]
    %v3817 = vld [vmem:[#allocation3 + $0x60] sm:$0xff]
    %v3818 = vld [vmem:[#allocation3 + $0x68] sm:$0xff]
    %v3819 = vld [vmem:[#allocation3 + $0x70] sm:$0xff]
    %v3820 = vld [vmem:[#allocation3 + $0x78] sm:$0xff]
    %v3821 = vld [vmem:[#allocation3 + $0x80] sm:$0xff]
    %v3822 = vld [vmem:[#allocation3 + $0x88] sm:$0xff]
    %v3823 = vld [vmem:[#allocation3 + $0x90] sm:$0xff]
    %v3824 = vld [vmem:[#allocation3 + $0x98] sm:$0xff]
    %v3825 = vld [vmem:[#allocation3 + $0xa0] sm:$0xff]
    %v3826 = vld [vmem:[#allocation3 + $0xa8] sm:$0xff]
    %v3827 = vld [vmem:[#allocation3 + $0xb0] sm:$0xff]
    %v3828 = vld [vmem:[#allocation3 + $0xb8] sm:$0xff]
    %v3829 = vld [vmem:[#allocation3 + $0xc0] sm:$0xff]
    %v3830 = vld [vmem:[#allocation3 + $0xc8] sm:$0xff]
    %v3831 = vld [vmem:[#allocation3 + $0xd0] sm:$0xff]
    %v3832 = vld [vmem:[#allocation3 + $0xd8] sm:$0xff]
    %v3833 = vld [vmem:[#allocation3 + $0xe0] sm:$0xff]
    %v3834 = vld [vmem:[#allocation3 + $0xe8] sm:$0xff]
    %v3835 = vld [vmem:[#allocation3 + $0xf0] sm:$0xff]
    %v3836 = vld [vmem:[#allocation3 + $0xf8] sm:$0xff]
    %v3837 = vld [vmem:[#allocation3 + $0x100] sm:$0xff]
    %v3838 = vld [vmem:[#allocation3 + $0x108] sm:$0xff]
    %v3839 = vld [vmem:[#allocation3 + $0x110] sm:$0xff]
    %v3840 = vld [vmem:[#allocation3 + $0x118] sm:$0xff]
    %v3841 = vld [vmem:[#allocation3 + $0x120] sm:$0xff]
    %v3842 = vld [vmem:[#allocation3 + $0x128] sm:$0xff]
    %v3843 = vld [vmem:[#allocation3 + $0x130] sm:$0xff]
    %v3844 = vld [vmem:[#allocation3 + $0x138] sm:$0xff]
    %v3845 = vld [vmem:[#allocation3 + $0x140] sm:$0xff]
    %v3846 = vld [vmem:[#allocation3 + $0x148] sm:$0xff]
    %v3847 = vld [vmem:[#allocation3 + $0x150] sm:$0xff]
    %v3848 = vld [vmem:[#allocation3 + $0x158] sm:$0xff]
    %v3849 = vld [vmem:[#allocation3 + $0x160] sm:$0xff]
    %v3850 = vld [vmem:[#allocation3 + $0x168] sm:$0xff]
    %v3851 = vld [vmem:[#allocation3 + $0x170] sm:$0xff]
    %v3852 = vld [vmem:[#allocation3 + $0x178] sm:$0xff]
    %v3853 = vld [vmem:[#allocation3 + $0x180] sm:$0xff]
    %v3854 = vld [vmem:[#allocation3 + $0x188] sm:$0xff]
    %v3855 = vld [vmem:[#allocation3 + $0x190] sm:$0xff]
    %v3856 = vld [vmem:[#allocation3 + $0x198] sm:$0xff]
    %v3857 = vld [vmem:[#allocation3 + $0x1a0] sm:$0xff]
    %v3858 = vld [vmem:[#allocation3 + $0x1a8] sm:$0xff]
    %v3859 = vld [vmem:[#allocation3 + $0x1b0] sm:$0xff]
    %v3860 = vld [vmem:[#allocation3 + $0x1b8] sm:$0xff]
    %v3861 = vld [vmem:[#allocation3 + $0x1c0] sm:$0xff]
    %v3862 = vld [vmem:[#allocation3 + $0x1c8] sm:$0xff]
    %v3863 = vld [vmem:[#allocation3 + $0x1d0] sm:$0xff]
    %v3864 = vld [vmem:[#allocation3 + $0x1d8] sm:$0xff]
    %v3865 = vld [vmem:[#allocation3 + $0x1e0] sm:$0xff]
    %v3866 = vld [vmem:[#allocation3 + $0x1e8] sm:$0xff]
    %v3867 = vld [vmem:[#allocation3 + $0x1f0] sm:$0xff]
    %v3868 = vld [vmem:[#allocation3 + $0x1f8] sm:$0xff]
    %v3869 = vld [vmem:[#allocation10] sm:$0xff]
    %v3871 = vrot.slane 0, 3
    %v3937 = vunpack.c.l.b16 %v3741
    %v3938 = vunpack.c.h.b16 %v3741
    %v3939 = vunpack.c.l.b16 %v3742
    %v3940 = vunpack.c.h.b16 %v3742
    %v3941 = vunpack.c.l.b16 %v3743
    %v3942 = vunpack.c.h.b16 %v3743
    %v3943 = vunpack.c.l.b16 %v3744
    %v3944 = vunpack.c.h.b16 %v3744
    %v3945 = vunpack.c.l.b16 %v3745
    %v3946 = vunpack.c.h.b16 %v3745
    %v3947 = vunpack.c.l.b16 %v3746
    %v3948 = vunpack.c.h.b16 %v3746
    %v3949 = vunpack.c.l.b16 %v3747
    %v3950 = vunpack.c.h.b16 %v3747
    %v3951 = vunpack.c.l.b16 %v3748
    %v3952 = vunpack.c.h.b16 %v3748
    %v3953 = vunpack.c.l.b16 %v3749
    %v3954 = vunpack.c.h.b16 %v3749
    %v3955 = vunpack.c.l.b16 %v3750
    %v3956 = vunpack.c.h.b16 %v3750
    %v3957 = vunpack.c.l.b16 %v3751
    %v3958 = vunpack.c.h.b16 %v3751
    %v3959 = vunpack.c.l.b16 %v3752
    %v3960 = vunpack.c.h.b16 %v3752
    %v3961 = vunpack.c.l.b16 %v3753
    %v3962 = vunpack.c.h.b16 %v3753
    %v3963 = vunpack.c.l.b16 %v3754
    %v3964 = vunpack.c.h.b16 %v3754
    %v3965 = vunpack.c.l.b16 %v3755
    %v3966 = vunpack.c.h.b16 %v3755
    %v3967 = vunpack.c.l.b16 %v3756
    %v3968 = vunpack.c.h.b16 %v3756
    %v3969 = vunpack.c.l.b16 %v3757
    %v3970 = vunpack.c.h.b16 %v3757
    %v3971 = vunpack.c.l.b16 %v3758
    %v3972 = vunpack.c.h.b16 %v3758
    %v3973 = vunpack.c.l.b16 %v3759
    %v3974 = vunpack.c.h.b16 %v3759
    %v3975 = vunpack.c.l.b16 %v3760
    %v3976 = vunpack.c.h.b16 %v3760
    %v3977 = vunpack.c.l.b16 %v3761
    %v3978 = vunpack.c.h.b16 %v3761
    %v3979 = vunpack.c.l.b16 %v3762
    %v3980 = vunpack.c.h.b16 %v3762
    %v3981 = vunpack.c.l.b16 %v3763
    %v3982 = vunpack.c.h.b16 %v3763
    %v3983 = vunpack.c.l.b16 %v3764
    %v3984 = vunpack.c.h.b16 %v3764
    %v3985 = vunpack.c.l.b16 %v3765
    %v3986 = vunpack.c.h.b16 %v3765
    %v3987 = vunpack.c.l.b16 %v3766
    %v3988 = vunpack.c.h.b16 %v3766
    %v3989 = vunpack.c.l.b16 %v3767
    %v3990 = vunpack.c.h.b16 %v3767
    %v3991 = vunpack.c.l.b16 %v3768
    %v3992 = vunpack.c.h.b16 %v3768
    %v3993 = vunpack.c.l.b16 %v3769
    %v3994 = vunpack.c.h.b16 %v3769
    %v3995 = vunpack.c.l.b16 %v3770
    %v3996 = vunpack.c.h.b16 %v3770
    %v3997 = vunpack.c.l.b16 %v3771
    %v3998 = vunpack.c.h.b16 %v3771
    %v3999 = vunpack.c.l.b16 %v3772
    %v4000 = vunpack.c.h.b16 %v3772
    %v4001 = vunpack.c.l.b16 %v3773
    %v4002 = vunpack.c.h.b16 %v3773
    %v4003 = vunpack.c.l.b16 %v3774
    %v4004 = vunpack.c.h.b16 %v3774
    %v4005 = vunpack.c.l.b16 %v3775
    %v4006 = vunpack.c.h.b16 %v3775
    %v4007 = vunpack.c.l.b16 %v3776
    %v4008 = vunpack.c.h.b16 %v3776
    %v4009 = vunpack.c.l.b16 %v3777
    %v4010 = vunpack.c.h.b16 %v3777
    %v4011 = vunpack.c.l.b16 %v3778
    %v4012 = vunpack.c.h.b16 %v3778
    %v4013 = vunpack.c.l.b16 %v3779
    %v4014 = vunpack.c.h.b16 %v3779
    %v4015 = vunpack.c.l.b16 %v3780
    %v4016 = vunpack.c.h.b16 %v3780
    %v4017 = vunpack.c.l.b16 %v3781
    %v4018 = vunpack.c.h.b16 %v3781
    %v4019 = vunpack.c.l.b16 %v3782
    %v4020 = vunpack.c.h.b16 %v3782
    %v4021 = vunpack.c.l.b16 %v3783
    %v4022 = vunpack.c.h.b16 %v3783
    %v4023 = vunpack.c.l.b16 %v3784
    %v4024 = vunpack.c.h.b16 %v3784
    %v4025 = vunpack.c.l.b16 %v3785
    %v4026 = vunpack.c.h.b16 %v3785
    %v4027 = vunpack.c.l.b16 %v3786
    %v4028 = vunpack.c.h.b16 %v3786
    %v4029 = vunpack.c.l.b16 %v3787
    %v4030 = vunpack.c.h.b16 %v3787
    %v4031 = vunpack.c.l.b16 %v3788
    %v4032 = vunpack.c.h.b16 %v3788
    %v4033 = vunpack.c.l.b16 %v3789
    %v4034 = vunpack.c.h.b16 %v3789
    %v4035 = vunpack.c.l.b16 %v3790
    %v4036 = vunpack.c.h.b16 %v3790
    %v4037 = vunpack.c.l.b16 %v3791
    %v4038 = vunpack.c.h.b16 %v3791
    %v4039 = vunpack.c.l.b16 %v3792
    %v4040 = vunpack.c.h.b16 %v3792
    %v4041 = vunpack.c.l.b16 %v3793
    %v4042 = vunpack.c.h.b16 %v3793
    %v4043 = vunpack.c.l.b16 %v3794
    %v4044 = vunpack.c.h.b16 %v3794
    %v4045 = vunpack.c.l.b16 %v3795
    %v4046 = vunpack.c.h.b16 %v3795
    %v4047 = vunpack.c.l.b16 %v3796
    %v4048 = vunpack.c.h.b16 %v3796
    %v4049 = vunpack.c.l.b16 %v3797
    %v4050 = vunpack.c.h.b16 %v3797
    %v4051 = vunpack.c.l.b16 %v3798
    %v4052 = vunpack.c.h.b16 %v3798
    %v4053 = vunpack.c.l.b16 %v3799
    %v4054 = vunpack.c.h.b16 %v3799
    %v4055 = vunpack.c.l.b16 %v3800
    %v4056 = vunpack.c.h.b16 %v3800
    %v4057 = vunpack.c.l.b16 %v3801
    %v4058 = vunpack.c.h.b16 %v3801
    %v4059 = vunpack.c.l.b16 %v3802
    %v4060 = vunpack.c.h.b16 %v3802
    %v4061 = vunpack.c.l.b16 %v3803
    %v4062 = vunpack.c.h.b16 %v3803
    %v4063 = vunpack.c.l.b16 %v3804
    %v4064 = vunpack.c.h.b16 %v3804
    %v4065 = vpack.c.b16 %v3941, %v3937
    %v4066 = vpack.c.b16 %v3942, %v3938
    %v4067 = vpack.c.b16 %v3943, %v3939
    %v4068 = vpack.c.b16 %v3944, %v3940
    %v4069 = vpack.c.b16 %v3949, %v3945
    %v4070 = vpack.c.b16 %v3950, %v3946
    %v4071 = vpack.c.b16 %v3951, %v3947
    %v4072 = vpack.c.b16 %v3952, %v3948
    %v4073 = vpack.c.b16 %v3957, %v3953
    %v4074 = vpack.c.b16 %v3958, %v3954
    %v4075 = vpack.c.b16 %v3959, %v3955
    %v4076 = vpack.c.b16 %v3960, %v3956
    %v4077 = vpack.c.b16 %v3965, %v3961
    %v4078 = vpack.c.b16 %v3966, %v3962
    %v4079 = vpack.c.b16 %v3967, %v3963
    %v4080 = vpack.c.b16 %v3968, %v3964
    %v4081 = vpack.c.b16 %v3973, %v3969
    %v4082 = vpack.c.b16 %v3974, %v3970
    %v4083 = vpack.c.b16 %v3975, %v3971
    %v4084 = vpack.c.b16 %v3976, %v3972
    %v4085 = vpack.c.b16 %v3981, %v3977
    %v4086 = vpack.c.b16 %v3982, %v3978
    %v4087 = vpack.c.b16 %v3983, %v3979
    %v4088 = vpack.c.b16 %v3984, %v3980
    %v4089 = vpack.c.b16 %v3989, %v3985
    %v4090 = vpack.c.b16 %v3990, %v3986
    %v4091 = vpack.c.b16 %v3991, %v3987
    %v4092 = vpack.c.b16 %v3992, %v3988
    %v4093 = vpack.c.b16 %v3997, %v3993
    %v4094 = vpack.c.b16 %v3998, %v3994
    %v4095 = vpack.c.b16 %v3999, %v3995
    %v4096 = vpack.c.b16 %v4000, %v3996
    %v4097 = vpack.c.b16 %v4005, %v4001
    %v4098 = vpack.c.b16 %v4006, %v4002
    %v4099 = vpack.c.b16 %v4007, %v4003
    %v4100 = vpack.c.b16 %v4008, %v4004
    %v4101 = vpack.c.b16 %v4013, %v4009
    %v4102 = vpack.c.b16 %v4014, %v4010
    %v4103 = vpack.c.b16 %v4015, %v4011
    %v4104 = vpack.c.b16 %v4016, %v4012
    %v4105 = vpack.c.b16 %v4021, %v4017
    %v4106 = vpack.c.b16 %v4022, %v4018
    %v4107 = vpack.c.b16 %v4023, %v4019
    %v4108 = vpack.c.b16 %v4024, %v4020
    %v4109 = vpack.c.b16 %v4029, %v4025
    %v4110 = vpack.c.b16 %v4030, %v4026
    %v4111 = vpack.c.b16 %v4031, %v4027
    %v4112 = vpack.c.b16 %v4032, %v4028
    %v4113 = vpack.c.b16 %v4037, %v4033
    %v4114 = vpack.c.b16 %v4038, %v4034
    %v4115 = vpack.c.b16 %v4039, %v4035
    %v4116 = vpack.c.b16 %v4040, %v4036
    %v4117 = vpack.c.b16 %v4045, %v4041
    %v4118 = vpack.c.b16 %v4046, %v4042
    %v4119 = vpack.c.b16 %v4047, %v4043
    %v4120 = vpack.c.b16 %v4048, %v4044
    %v4121 = vpack.c.b16 %v4053, %v4049
    %v4122 = vpack.c.b16 %v4054, %v4050
    %v4123 = vpack.c.b16 %v4055, %v4051
    %v4124 = vpack.c.b16 %v4056, %v4052
    %v4125 = vpack.c.b16 %v4061, %v4057
    %v4126 = vpack.c.b16 %v4062, %v4058
    %v4127 = vpack.c.b16 %v4063, %v4059
    %v4128 = vpack.c.b16 %v4064, %v4060
    %4194 = vst [vmem:[#allocation1] ss:$4 sm:$0xff] %v3869
    %v4195 = vld.sshfl [vmem:[#allocation1] sm:$0xff pattern:$0x73625140]
    %v4196 = vld.sshfl [vmem:[#allocation1 + $0x8] sm:$0xff pattern:$0x73625140]
    %v4197 = vld.sshfl [vmem:[#allocation1 + $0x10] sm:$0xff pattern:$0x73625140]
    %v4198 = vld.sshfl [vmem:[#allocation1 + $0x18] sm:$0xff pattern:$0x73625140]
    %4203 = vmatpush.bf16.msra.mxu0 %v4093
    %4204 = vmatpush.bf16.msra.mxu0 %v4089
    %4205 = vmatpush.bf16.msra.mxu0 %v4085
    %4206 = vmatpush.bf16.msra.mxu0 %v4081
    %4207 = vmatpush.bf16.msra.mxu0 %v4077
    %4208 = vmatpush.bf16.msra.mxu0 %v4073
    %4209 = vmatpush.bf16.msra.mxu0 %v4069
    %4210 = vmatpush.bf16.msra.mxu0 %v4065
    %4211 = vmatmul.bf16.gmra.mxu0 %v3560
    %v4212 = vpop.f32.mrf.mxu0
    %v4213 = vadd.f32 %v4195, %v4212
    %v4214 = vpop.f32.mrf.mxu0
    %4215 = vdwg.mxu0
    %4216 = vmatpush.bf16.msra.mxu0 %v4125
    %4217 = vmatpush.bf16.msra.mxu0 %v4121
    %4218 = vmatpush.bf16.msra.mxu0 %v4117
    %4219 = vmatpush.bf16.msra.mxu0 %v4113
    %4220 = vmatpush.bf16.msra.mxu0 %v4109
    %4221 = vmatpush.bf16.msra.mxu0 %v4105
    %4222 = vmatpush.bf16.msra.mxu0 %v4101
    %4223 = vmatpush.bf16.msra.mxu0 %v4097
    %4224 = vmatmul.bf16.gmra.mxu0 %v3871
    %v4225 = vpop.f32.mrf.mxu0
    %v4226 = vadd.f32 %v4213, %v4225
    %v4227 = vpop.f32.mrf.mxu0
    %4228 = vdwg.mxu0
    %4229 = vmatpush.bf16.msra.mxu0 %v4094
    %4230 = vmatpush.bf16.msra.mxu0 %v4090
    %4231 = vmatpush.bf16.msra.mxu0 %v4086
    %4232 = vmatpush.bf16.msra.mxu0 %v4082
    %4233 = vmatpush.bf16.msra.mxu0 %v4078
    %4234 = vmatpush.bf16.msra.mxu0 %v4074
    %4235 = vmatpush.bf16.msra.mxu0 %v4070
    %4236 = vmatpush.bf16.msra.mxu0 %v4066
    %4237 = vmatmul.bf16.gmra.mxu0 %v3560
    %v4238 = vpop.f32.mrf.mxu0
    %v4239 = vadd.f32 %v4196, %v4238
    %v4240 = vpop.f32.mrf.mxu0
    %4241 = vdwg.mxu0
    %4242 = vmatpush.bf16.msra.mxu0 %v4126
    %4243 = vmatpush.bf16.msra.mxu0 %v4122
    %4244 = vmatpush.bf16.msra.mxu0 %v4118
    %4245 = vmatpush.bf16.msra.mxu0 %v4114
    %4246 = vmatpush.bf16.msra.mxu0 %v4110
    %4247 = vmatpush.bf16.msra.mxu0 %v4106
    %4248 = vmatpush.bf16.msra.mxu0 %v4102
    %4249 = vmatpush.bf16.msra.mxu0 %v4098
    %4250 = vmatmul.bf16.gmra.mxu0 %v3871
    %v4251 = vpop.f32.mrf.mxu0
    %v4252 = vadd.f32 %v4239, %v4251
    %v4253 = vpop.f32.mrf.mxu0
    %4254 = vdwg.mxu0
    %4255 = vmatpush.bf16.msra.mxu0 %v4095
    %4256 = vmatpush.bf16.msra.mxu0 %v4091
    %4257 = vmatpush.bf16.msra.mxu0 %v4087
    %4258 = vmatpush.bf16.msra.mxu0 %v4083
    %4259 = vmatpush.bf16.msra.mxu0 %v4079
    %4260 = vmatpush.bf16.msra.mxu0 %v4075
    %4261 = vmatpush.bf16.msra.mxu0 %v4071
    %4262 = vmatpush.bf16.msra.mxu0 %v4067
    %4263 = vmatmul.bf16.gmra.mxu0 %v3560
    %v4264 = vpop.f32.mrf.mxu0
    %v4265 = vadd.f32 %v4197, %v4264
    %v4266 = vpop.f32.mrf.mxu0
    %4267 = vdwg.mxu0
    %4268 = vmatpush.bf16.msra.mxu0 %v4127
    %4269 = vmatpush.bf16.msra.mxu0 %v4123
    %4270 = vmatpush.bf16.msra.mxu0 %v4119
    %4271 = vmatpush.bf16.msra.mxu0 %v4115
    %4272 = vmatpush.bf16.msra.mxu0 %v4111
    %4273 = vmatpush.bf16.msra.mxu0 %v4107
    %4274 = vmatpush.bf16.msra.mxu0 %v4103
    %4275 = vmatpush.bf16.msra.mxu0 %v4099
    %4276 = vmatmul.bf16.gmra.mxu0 %v3871
    %v4277 = vpop.f32.mrf.mxu0
    %v4278 = vadd.f32 %v4265, %v4277
    %v4279 = vpop.f32.mrf.mxu0
    %4280 = vdwg.mxu0
    %4281 = vmatpush.bf16.msra.mxu0 %v4096
    %4282 = vmatpush.bf16.msra.mxu0 %v4092
    %4283 = vmatpush.bf16.msra.mxu0 %v4088
    %4284 = vmatpush.bf16.msra.mxu0 %v4084
    %4285 = vmatpush.bf16.msra.mxu0 %v4080
    %4286 = vmatpush.bf16.msra.mxu0 %v4076
    %4287 = vmatpush.bf16.msra.mxu0 %v4072
    %4288 = vmatpush.bf16.msra.mxu0 %v4068
    %4289 = vmatmul.bf16.gmra.mxu0 %v3560
    %v4290 = vpop.f32.mrf.mxu0
    %v4291 = vadd.f32 %v4198, %v4290
    %v4292 = vpop.f32.mrf.mxu0
    %4293 = vdwg.mxu0
    %4294 = vmatpush.bf16.msra.mxu0 %v4128
    %4295 = vmatpush.bf16.msra.mxu0 %v4124
    %4296 = vmatpush.bf16.msra.mxu0 %v4120
    %4297 = vmatpush.bf16.msra.mxu0 %v4116
    %4298 = vmatpush.bf16.msra.mxu0 %v4112
    %4299 = vmatpush.bf16.msra.mxu0 %v4108
    %4300 = vmatpush.bf16.msra.mxu0 %v4104
    %4301 = vmatpush.bf16.msra.mxu0 %v4100
    %4302 = vmatmul.bf16.gmra.mxu0 %v3871
    %v4303 = vpop.f32.mrf.mxu0
    %v4304 = vadd.f32 %v4291, %v4303
    %v4305 = vpop.f32.mrf.mxu0
    %4306 = vdwg.mxu0
    %v4307 = vxor.u32 %v4226, 2147483648
    %v4308 = vxor.u32 %v4252, 2147483648
    %v4309 = vxor.u32 %v4278, 2147483648
    %v4310 = vmul.f32 %v4307, 1.442695
    %v4311 = vpow.pop %v4310
    %v4312 = vmul.f32 %v4308, 1.442695
    %v4313 = vpow.pop %v4312
    %v4314 = vmul.f32 %v4309, 1.442695
    %v4315 = vpow.pop %v4314
    %v4316 = vadd.f32 %v4311, 1.0
    %v4317 = vadd.f32 %v4313, 1.0
    %v4318 = vadd.f32 %v4315, 1.0
    %v4319 = vrcp.pop %v4316
    %v4320 = vmul.f32 %v4316, %v4319
    %v4321 = vsub.f32 1.0, %v4320
    %v4322 = vmul.f32 %v4319, %v4321
    %v4323 = vadd.f32 %v4319, %v4322
    %vm4324 = vweird.f32 %v4316
    %vm4325 = vweird.f32 %v4319
    %vm4326 = vmor %vm4324, %vm4325
    %v4327 = vsel %vm4326, %v4319, %v4323
    %v4328 = vand.u32 2147483647, %v4316
    %vm4329 = vcmp.eq.f32.partialorder %v4328, 8.507059e+37
    %v4330 = vand.u32 %v4316, 2147483648
    %v4331 = vor.u32 1.1754944e-38, %v4330
    %v4332 = vsel %vm4329, %v4331, %v4327
    %v4333 = vmul.f32 1.0, %v4332
    %v4334 = vrcp.pop %v4317
    %v4335 = vmul.f32 %v4317, %v4334
    %v4336 = vsub.f32 1.0, %v4335
    %v4337 = vmul.f32 %v4334, %v4336
    %v4338 = vadd.f32 %v4334, %v4337
    %vm4339 = vweird.f32 %v4317
    %vm4340 = vweird.f32 %v4334
    %vm4341 = vmor %vm4339, %vm4340
    %v4342 = vsel %vm4341, %v4334, %v4338
    %v4343 = vand.u32 2147483647, %v4317
    %vm4344 = vcmp.eq.f32.partialorder %v4343, 8.507059e+37
    %v4345 = vand.u32 %v4317, 2147483648
    %v4346 = vor.u32 1.1754944e-38, %v4345
    %v4347 = vsel %vm4344, %v4346, %v4342
    %v4348 = vmul.f32 1.0, %v4347
    %v4349 = vrcp.pop %v4318
    %v4350 = vmul.f32 %v4318, %v4349
    %v4351 = vsub.f32 1.0, %v4350
    %v4352 = vmul.f32 %v4349, %v4351
    %v4353 = vadd.f32 %v4349, %v4352
    %vm4354 = vweird.f32 %v4318
    %vm4355 = vweird.f32 %v4349
    %vm4356 = vmor %vm4354, %vm4355
    %v4357 = vsel %vm4356, %v4349, %v4353
    %v4358 = vand.u32 2147483647, %v4318
    %vm4359 = vcmp.eq.f32.partialorder %v4358, 8.507059e+37
    %v4360 = vand.u32 %v4318, 2147483648
    %v4361 = vor.u32 1.1754944e-38, %v4360
    %v4362 = vsel %vm4359, %v4361, %v4357
    %v4363 = vmul.f32 1.0, %v4362
    %v4364 = vtanh.pop %v4304
    %v4366 = vrot.slane %v3550, 6
    %v4368 = vmul.f32 %v4348, %v4366
    %v4369 = vmul.f32 %v4333, %v4364
    %v4370 = vadd.f32 %v4368, %v4369
    %v4371 = vtanh.pop %v4370
    %v4372 = vmul.f32 %v4363, %v4371
    %v4373 = vpack.c.bf16 %v4372, %v4372
    %v4374 = vpack.c.bf16 %v3734, %v3734
    %v4439 = vunpack.c.l.b16 %v3805
    %v4440 = vunpack.c.h.b16 %v3805
    %v4441 = vunpack.c.l.b16 %v3806
    %v4442 = vunpack.c.h.b16 %v3806
    %v4443 = vunpack.c.l.b16 %v3807
    %v4444 = vunpack.c.h.b16 %v3807
    %v4445 = vunpack.c.l.b16 %v3808
    %v4446 = vunpack.c.h.b16 %v3808
    %v4447 = vunpack.c.l.b16 %v3809
    %v4448 = vunpack.c.h.b16 %v3809
    %v4449 = vunpack.c.l.b16 %v3810
    %v4450 = vunpack.c.h.b16 %v3810
    %v4451 = vunpack.c.l.b16 %v3811
    %v4452 = vunpack.c.h.b16 %v3811
    %v4453 = vunpack.c.l.b16 %v3812
    %v4454 = vunpack.c.h.b16 %v3812
    %v4455 = vunpack.c.l.b16 %v3813
    %v4456 = vunpack.c.h.b16 %v3813
    %v4457 = vunpack.c.l.b16 %v3814
    %v4458 = vunpack.c.h.b16 %v3814
    %v4459 = vunpack.c.l.b16 %v3815
    %v4460 = vunpack.c.h.b16 %v3815
    %v4461 = vunpack.c.l.b16 %v3816
    %v4462 = vunpack.c.h.b16 %v3816
    %v4463 = vunpack.c.l.b16 %v3817
    %v4464 = vunpack.c.h.b16 %v3817
    %v4465 = vunpack.c.l.b16 %v3818
    %v4466 = vunpack.c.h.b16 %v3818
    %v4467 = vunpack.c.l.b16 %v3819
    %v4468 = vunpack.c.h.b16 %v3819
    %v4469 = vunpack.c.l.b16 %v3820
    %v4470 = vunpack.c.h.b16 %v3820
    %v4471 = vunpack.c.l.b16 %v3821
    %v4472 = vunpack.c.h.b16 %v3821
    %v4473 = vunpack.c.l.b16 %v3822
    %v4474 = vunpack.c.h.b16 %v3822
    %v4475 = vunpack.c.l.b16 %v3823
    %v4476 = vunpack.c.h.b16 %v3823
    %v4477 = vunpack.c.l.b16 %v3824
    %v4478 = vunpack.c.h.b16 %v3824
    %v4479 = vunpack.c.l.b16 %v3825
    %v4480 = vunpack.c.h.b16 %v3825
    %v4481 = vunpack.c.l.b16 %v3826
    %v4482 = vunpack.c.h.b16 %v3826
    %v4483 = vunpack.c.l.b16 %v3827
    %v4484 = vunpack.c.h.b16 %v3827
    %v4485 = vunpack.c.l.b16 %v3828
    %v4486 = vunpack.c.h.b16 %v3828
    %v4487 = vunpack.c.l.b16 %v3829
    %v4488 = vunpack.c.h.b16 %v3829
    %v4489 = vunpack.c.l.b16 %v3830
    %v4490 = vunpack.c.h.b16 %v3830
    %v4491 = vunpack.c.l.b16 %v3831
    %v4492 = vunpack.c.h.b16 %v3831
    %v4493 = vunpack.c.l.b16 %v3832
    %v4494 = vunpack.c.h.b16 %v3832
    %v4495 = vunpack.c.l.b16 %v3833
    %v4496 = vunpack.c.h.b16 %v3833
    %v4497 = vunpack.c.l.b16 %v3834
    %v4498 = vunpack.c.h.b16 %v3834
    %v4499 = vunpack.c.l.b16 %v3835
    %v4500 = vunpack.c.h.b16 %v3835
    %v4501 = vunpack.c.l.b16 %v3836
    %v4502 = vunpack.c.h.b16 %v3836
    %v4503 = vunpack.c.l.b16 %v3837
    %v4504 = vunpack.c.h.b16 %v3837
    %v4505 = vunpack.c.l.b16 %v3838
    %v4506 = vunpack.c.h.b16 %v3838
    %v4507 = vunpack.c.l.b16 %v3839
    %v4508 = vunpack.c.h.b16 %v3839
    %v4509 = vunpack.c.l.b16 %v3840
    %v4510 = vunpack.c.h.b16 %v3840
    %v4511 = vunpack.c.l.b16 %v3841
    %v4512 = vunpack.c.h.b16 %v3841
    %v4513 = vunpack.c.l.b16 %v3842
    %v4514 = vunpack.c.h.b16 %v3842
    %v4515 = vunpack.c.l.b16 %v3843
    %v4516 = vunpack.c.h.b16 %v3843
    %v4517 = vunpack.c.l.b16 %v3844
    %v4518 = vunpack.c.h.b16 %v3844
    %v4519 = vunpack.c.l.b16 %v3845
    %v4520 = vunpack.c.h.b16 %v3845
    %v4521 = vunpack.c.l.b16 %v3846
    %v4522 = vunpack.c.h.b16 %v3846
    %v4523 = vunpack.c.l.b16 %v3847
    %v4524 = vunpack.c.h.b16 %v3847
    %v4525 = vunpack.c.l.b16 %v3848
    %v4526 = vunpack.c.h.b16 %v3848
    %v4527 = vunpack.c.l.b16 %v3849
    %v4528 = vunpack.c.h.b16 %v3849
    %v4529 = vunpack.c.l.b16 %v3850
    %v4530 = vunpack.c.h.b16 %v3850
    %v4531 = vunpack.c.l.b16 %v3851
    %v4532 = vunpack.c.h.b16 %v3851
    %v4533 = vunpack.c.l.b16 %v3852
    %v4534 = vunpack.c.h.b16 %v3852
    %v4535 = vunpack.c.l.b16 %v3853
    %v4536 = vunpack.c.h.b16 %v3853
    %v4537 = vunpack.c.l.b16 %v3854
    %v4538 = vunpack.c.h.b16 %v3854
    %v4539 = vunpack.c.l.b16 %v3855
    %v4540 = vunpack.c.h.b16 %v3855
    %v4541 = vunpack.c.l.b16 %v3856
    %v4542 = vunpack.c.h.b16 %v3856
    %v4543 = vunpack.c.l.b16 %v3857
    %v4544 = vunpack.c.h.b16 %v3857
    %v4545 = vunpack.c.l.b16 %v3858
    %v4546 = vunpack.c.h.b16 %v3858
    %v4547 = vunpack.c.l.b16 %v3859
    %v4548 = vunpack.c.h.b16 %v3859
    %v4549 = vunpack.c.l.b16 %v3860
    %v4550 = vunpack.c.h.b16 %v3860
    %v4551 = vunpack.c.l.b16 %v3861
    %v4552 = vunpack.c.h.b16 %v3861
    %v4553 = vunpack.c.l.b16 %v3862
    %v4554 = vunpack.c.h.b16 %v3862
    %v4555 = vunpack.c.l.b16 %v3863
    %v4556 = vunpack.c.h.b16 %v3863
    %v4557 = vunpack.c.l.b16 %v3864
    %v4558 = vunpack.c.h.b16 %v3864
    %v4559 = vunpack.c.l.b16 %v3865
    %v4560 = vunpack.c.h.b16 %v3865
    %v4561 = vunpack.c.l.b16 %v3866
    %v4562 = vunpack.c.h.b16 %v3866
    %v4563 = vunpack.c.l.b16 %v3867
    %v4564 = vunpack.c.h.b16 %v3867
    %v4565 = vunpack.c.l.b16 %v3868
    %v4566 = vunpack.c.h.b16 %v3868
    %v4567 = vpack.c.b16 %v4443, %v4439
    %v4568 = vpack.c.b16 %v4444, %v4440
    %v4569 = vpack.c.b16 %v4445, %v4441
    %v4570 = vpack.c.b16 %v4446, %v4442
    %v4571 = vpack.c.b16 %v4451, %v4447
    %v4572 = vpack.c.b16 %v4452, %v4448
    %v4573 = vpack.c.b16 %v4453, %v4449
    %v4574 = vpack.c.b16 %v4454, %v4450
    %v4575 = vpack.c.b16 %v4459, %v4455
    %v4576 = vpack.c.b16 %v4460, %v4456
    %v4577 = vpack.c.b16 %v4461, %v4457
    %v4578 = vpack.c.b16 %v4462, %v4458
    %v4579 = vpack.c.b16 %v4467, %v4463
    %v4580 = vpack.c.b16 %v4468, %v4464
    %v4581 = vpack.c.b16 %v4469, %v4465
    %v4582 = vpack.c.b16 %v4470, %v4466
    %v4583 = vpack.c.b16 %v4475, %v4471
    %v4584 = vpack.c.b16 %v4476, %v4472
    %v4585 = vpack.c.b16 %v4477, %v4473
    %v4586 = vpack.c.b16 %v4478, %v4474
    %v4587 = vpack.c.b16 %v4483, %v4479
    %v4588 = vpack.c.b16 %v4484, %v4480
    %v4589 = vpack.c.b16 %v4485, %v4481
    %v4590 = vpack.c.b16 %v4486, %v4482
    %v4591 = vpack.c.b16 %v4491, %v4487
    %v4592 = vpack.c.b16 %v4492, %v4488
    %v4593 = vpack.c.b16 %v4493, %v4489
    %v4594 = vpack.c.b16 %v4494, %v4490
    %v4595 = vpack.c.b16 %v4499, %v4495
    %v4596 = vpack.c.b16 %v4500, %v4496
    %v4597 = vpack.c.b16 %v4501, %v4497
    %v4598 = vpack.c.b16 %v4502, %v4498
    %v4599 = vpack.c.b16 %v4507, %v4503
    %v4600 = vpack.c.b16 %v4508, %v4504
    %v4601 = vpack.c.b16 %v4509, %v4505
    %v4602 = vpack.c.b16 %v4510, %v4506
    %v4603 = vpack.c.b16 %v4515, %v4511
    %v4604 = vpack.c.b16 %v4516, %v4512
    %v4605 = vpack.c.b16 %v4517, %v4513
    %v4606 = vpack.c.b16 %v4518, %v4514
    %v4607 = vpack.c.b16 %v4523, %v4519
    %v4608 = vpack.c.b16 %v4524, %v4520
    %v4609 = vpack.c.b16 %v4525, %v4521
    %v4610 = vpack.c.b16 %v4526, %v4522
    %v4611 = vpack.c.b16 %v4531, %v4527
    %v4612 = vpack.c.b16 %v4532, %v4528
    %v4613 = vpack.c.b16 %v4533, %v4529
    %v4614 = vpack.c.b16 %v4534, %v4530
    %v4615 = vpack.c.b16 %v4539, %v4535
    %v4616 = vpack.c.b16 %v4540, %v4536
    %v4617 = vpack.c.b16 %v4541, %v4537
    %v4618 = vpack.c.b16 %v4542, %v4538
    %v4619 = vpack.c.b16 %v4547, %v4543
    %v4620 = vpack.c.b16 %v4548, %v4544
    %v4621 = vpack.c.b16 %v4549, %v4545
    %v4622 = vpack.c.b16 %v4550, %v4546
    %v4623 = vpack.c.b16 %v4555, %v4551
    %v4624 = vpack.c.b16 %v4556, %v4552
    %v4625 = vpack.c.b16 %v4557, %v4553
    %v4626 = vpack.c.b16 %v4558, %v4554
    %v4627 = vpack.c.b16 %v4563, %v4559
    %v4628 = vpack.c.b16 %v4564, %v4560
    %v4629 = vpack.c.b16 %v4565, %v4561
    %v4630 = vpack.c.b16 %v4566, %v4562
    %4695 = vmatpush.bf16.msra.mxu0 %v4595
    %4696 = vmatpush.bf16.msra.mxu0 %v4591
    %4697 = vmatpush.bf16.msra.mxu0 %v4587
    %4698 = vmatpush.bf16.msra.mxu0 %v4583
    %4699 = vmatpush.bf16.msra.mxu0 %v4579
    %4700 = vmatpush.bf16.msra.mxu0 %v4575
    %4701 = vmatpush.bf16.msra.mxu0 %v4571
    %4702 = vmatpush.bf16.msra.mxu0 %v4567
    %4703 = vmatmul.bf16.gmra.mxu0 %v4373
    %v4704 = vpop.f32.mrf.mxu0
    %v4705 = vadd.f32 %v304, %v4704
    %v4706 = vpop.f32.mrf.mxu0
    %4707 = vdwg.mxu0
    %4708 = vmatpush.bf16.msra.mxu0 %v4627
    %4709 = vmatpush.bf16.msra.mxu0 %v4623
    %4710 = vmatpush.bf16.msra.mxu0 %v4619
    %4711 = vmatpush.bf16.msra.mxu0 %v4615
    %4712 = vmatpush.bf16.msra.mxu0 %v4611
    %4713 = vmatpush.bf16.msra.mxu0 %v4607
    %4714 = vmatpush.bf16.msra.mxu0 %v4603
    %4715 = vmatpush.bf16.msra.mxu0 %v4599
    %4716 = vmatmul.bf16.gmra.mxu0 %v4374
    %v4717 = vpop.f32.mrf.mxu0
    %v4718 = vadd.f32 %v4705, %v4717
    %v4719 = vpop.f32.mrf.mxu0
    %4720 = vdwg.mxu0
    %4721 = vmatpush.bf16.msra.mxu0 %v4596
    %4722 = vmatpush.bf16.msra.mxu0 %v4592
    %4723 = vmatpush.bf16.msra.mxu0 %v4588
    %4724 = vmatpush.bf16.msra.mxu0 %v4584
    %4725 = vmatpush.bf16.msra.mxu0 %v4580
    %4726 = vmatpush.bf16.msra.mxu0 %v4576
    %4727 = vmatpush.bf16.msra.mxu0 %v4572
    %4728 = vmatpush.bf16.msra.mxu0 %v4568
    %4729 = vmatmul.bf16.gmra.mxu0 %v4373
    %v4730 = vpop.f32.mrf.mxu0
    %v4731 = vadd.f32 %v305, %v4730
    %v4732 = vpop.f32.mrf.mxu0
    %4733 = vdwg.mxu0
    %4734 = vmatpush.bf16.msra.mxu0 %v4628
    %4735 = vmatpush.bf16.msra.mxu0 %v4624
    %4736 = vmatpush.bf16.msra.mxu0 %v4620
    %4737 = vmatpush.bf16.msra.mxu0 %v4616
    %4738 = vmatpush.bf16.msra.mxu0 %v4612
    %4739 = vmatpush.bf16.msra.mxu0 %v4608
    %4740 = vmatpush.bf16.msra.mxu0 %v4604
    %4741 = vmatpush.bf16.msra.mxu0 %v4600
    %4742 = vmatmul.bf16.gmra.mxu0 %v4374
    %v4743 = vpop.f32.mrf.mxu0
    %v4744 = vadd.f32 %v4731, %v4743
    %v4745 = vpop.f32.mrf.mxu0
    %4746 = vdwg.mxu0
    %4747 = vmatpush.bf16.msra.mxu0 %v4597
    %4748 = vmatpush.bf16.msra.mxu0 %v4593
    %4749 = vmatpush.bf16.msra.mxu0 %v4589
    %4750 = vmatpush.bf16.msra.mxu0 %v4585
    %4751 = vmatpush.bf16.msra.mxu0 %v4581
    %4752 = vmatpush.bf16.msra.mxu0 %v4577
    %4753 = vmatpush.bf16.msra.mxu0 %v4573
    %4754 = vmatpush.bf16.msra.mxu0 %v4569
    %4755 = vmatmul.bf16.gmra.mxu0 %v4373
    %v4756 = vpop.f32.mrf.mxu0
    %v4757 = vadd.f32 %v306, %v4756
    %v4758 = vpop.f32.mrf.mxu0
    %4759 = vdwg.mxu0
    %4760 = vmatpush.bf16.msra.mxu0 %v4629
    %4761 = vmatpush.bf16.msra.mxu0 %v4625
    %4762 = vmatpush.bf16.msra.mxu0 %v4621
    %4763 = vmatpush.bf16.msra.mxu0 %v4617
    %4764 = vmatpush.bf16.msra.mxu0 %v4613
    %4765 = vmatpush.bf16.msra.mxu0 %v4609
    %4766 = vmatpush.bf16.msra.mxu0 %v4605
    %4767 = vmatpush.bf16.msra.mxu0 %v4601
    %4768 = vmatmul.bf16.gmra.mxu0 %v4374
    %v4769 = vpop.f32.mrf.mxu0
    %v4770 = vadd.f32 %v4757, %v4769
    %v4771 = vpop.f32.mrf.mxu0
    %4772 = vdwg.mxu0
    %4773 = vmatpush.bf16.msra.mxu0 %v4598
    %4774 = vmatpush.bf16.msra.mxu0 %v4594
    %4775 = vmatpush.bf16.msra.mxu0 %v4590
    %4776 = vmatpush.bf16.msra.mxu0 %v4586
    %4777 = vmatpush.bf16.msra.mxu0 %v4582
    %4778 = vmatpush.bf16.msra.mxu0 %v4578
    %4779 = vmatpush.bf16.msra.mxu0 %v4574
    %4780 = vmatpush.bf16.msra.mxu0 %v4570
    %4781 = vmatmul.bf16.gmra.mxu0 %v4373
    %v4782 = vpop.f32.mrf.mxu0
    %v4783 = vadd.f32 %v307, %v4782
    %v4784 = vpop.f32.mrf.mxu0
    %4785 = vdwg.mxu0
    %4786 = vmatpush.bf16.msra.mxu0 %v4630
    %4787 = vmatpush.bf16.msra.mxu0 %v4626
    %4788 = vmatpush.bf16.msra.mxu0 %v4622
    %4789 = vmatpush.bf16.msra.mxu0 %v4618
    %4790 = vmatpush.bf16.msra.mxu0 %v4614
    %4791 = vmatpush.bf16.msra.mxu0 %v4610
    %4792 = vmatpush.bf16.msra.mxu0 %v4606
    %4793 = vmatpush.bf16.msra.mxu0 %v4602
    %4794 = vmatmul.bf16.gmra.mxu0 %v4374
    %v4795 = vpop.f32.mrf.mxu0
    %v4796 = vadd.f32 %v4783, %v4795
    %v4797 = vpop.f32.mrf.mxu0
    %4798 = vdwg.mxu0
    %v4799 = vxor.u32 %v4718, 2147483648
    %v4800 = vxor.u32 %v4744, 2147483648
    %v4801 = vxor.u32 %v4770, 2147483648
    %v4802 = vmul.f32 %v4799, 1.442695
    %v4803 = vpow.pop %v4802
    %v4804 = vmul.f32 %v4800, 1.442695
    %v4805 = vpow.pop %v4804
    %v4806 = vmul.f32 %v4801, 1.442695
    %v4807 = vpow.pop %v4806
    %v4808 = vadd.f32 %v4803, 1.0
    %v4809 = vadd.f32 %v4805, 1.0
    %v4810 = vadd.f32 %v4807, 1.0
    %v4811 = vrcp.pop %v4808
    %v4812 = vmul.f32 %v4808, %v4811
    %v4813 = vsub.f32 1.0, %v4812
    %v4814 = vmul.f32 %v4811, %v4813
    %v4815 = vadd.f32 %v4811, %v4814
    %vm4816 = vweird.f32 %v4808
    %vm4817 = vweird.f32 %v4811
    %vm4818 = vmor %vm4816, %vm4817
    %v4819 = vsel %vm4818, %v4811, %v4815
    %v4820 = vand.u32 2147483647, %v4808
    %vm4821 = vcmp.eq.f32.partialorder %v4820, 8.507059e+37
    %v4822 = vand.u32 %v4808, 2147483648
    %v4823 = vor.u32 1.1754944e-38, %v4822
    %v4824 = vsel %vm4821, %v4823, %v4819
    %v4825 = vmul.f32 1.0, %v4824
    %v4826 = vrcp.pop %v4809
    %v4827 = vmul.f32 %v4809, %v4826
    %v4828 = vsub.f32 1.0, %v4827
    %v4829 = vmul.f32 %v4826, %v4828
    %v4830 = vadd.f32 %v4826, %v4829
    %vm4831 = vweird.f32 %v4809
    %vm4832 = vweird.f32 %v4826
    %vm4833 = vmor %vm4831, %vm4832
    %v4834 = vsel %vm4833, %v4826, %v4830
    %v4835 = vand.u32 2147483647, %v4809
    %vm4836 = vcmp.eq.f32.partialorder %v4835, 8.507059e+37
    %v4837 = vand.u32 %v4809, 2147483648
    %v4838 = vor.u32 1.1754944e-38, %v4837
    %v4839 = vsel %vm4836, %v4838, %v4834
    %v4840 = vmul.f32 1.0, %v4839
    %v4841 = vrcp.pop %v4810
    %v4842 = vmul.f32 %v4810, %v4841
    %v4843 = vsub.f32 1.0, %v4842
    %v4844 = vmul.f32 %v4841, %v4843
    %v4845 = vadd.f32 %v4841, %v4844
    %vm4846 = vweird.f32 %v4810
    %vm4847 = vweird.f32 %v4841
    %vm4848 = vmor %vm4846, %vm4847
    %v4849 = vsel %vm4848, %v4841, %v4845
    %v4850 = vand.u32 2147483647, %v4810
    %vm4851 = vcmp.eq.f32.partialorder %v4850, 8.507059e+37
    %v4852 = vand.u32 %v4810, 2147483648
    %v4853 = vor.u32 1.1754944e-38, %v4852
    %v4854 = vsel %vm4851, %v4853, %v4849
    %v4855 = vmul.f32 1.0, %v4854
    %v4856 = vtanh.pop %v4796
    %v4857 = vmul.f32 %v4840, %v3732
    %v4858 = vmul.f32 %v4825, %v4856
    %v4859 = vadd.f32 %v4857, %v4858
    %v4860 = vtanh.pop %v4859
    %v4861 = vmul.f32 %v4855, %v4860
    %v4862 = vpack.c.bf16 %v4861, %v4861
    %4863 = vmatpush.bf16.msra.mxu0 %v4093
    %4864 = vmatpush.bf16.msra.mxu0 %v4089
    %4865 = vmatpush.bf16.msra.mxu0 %v4085
    %4866 = vmatpush.bf16.msra.mxu0 %v4081
    %4867 = vmatpush.bf16.msra.mxu0 %v4077
    %4868 = vmatpush.bf16.msra.mxu0 %v4073
    %4869 = vmatpush.bf16.msra.mxu0 %v4069
    %4870 = vmatpush.bf16.msra.mxu0 %v4065
    %4871 = vmatmul.bf16.gmra.mxu0 %v4373
    %v4872 = vpop.f32.mrf.mxu0
    %v4873 = vadd.f32 %v294, %v4872
    %v4874 = vpop.f32.mrf.mxu0
    %4875 = vdwg.mxu0
    %4876 = vmatpush.bf16.msra.mxu0 %v4125
    %4877 = vmatpush.bf16.msra.mxu0 %v4121
    %4878 = vmatpush.bf16.msra.mxu0 %v4117
    %4879 = vmatpush.bf16.msra.mxu0 %v4113
    %4880 = vmatpush.bf16.msra.mxu0 %v4109
    %4881 = vmatpush.bf16.msra.mxu0 %v4105
    %4882 = vmatpush.bf16.msra.mxu0 %v4101
    %4883 = vmatpush.bf16.msra.mxu0 %v4097
    %4884 = vmatmul.bf16.gmra.mxu0 %v4862
    %v4885 = vpop.f32.mrf.mxu0
    %v4886 = vadd.f32 %v4873, %v4885
    %v4887 = vpop.f32.mrf.mxu0
    %4888 = vdwg.mxu0
    %4889 = vmatpush.bf16.msra.mxu0 %v4094
    %4890 = vmatpush.bf16.msra.mxu0 %v4090
    %4891 = vmatpush.bf16.msra.mxu0 %v4086
    %4892 = vmatpush.bf16.msra.mxu0 %v4082
    %4893 = vmatpush.bf16.msra.mxu0 %v4078
    %4894 = vmatpush.bf16.msra.mxu0 %v4074
    %4895 = vmatpush.bf16.msra.mxu0 %v4070
    %4896 = vmatpush.bf16.msra.mxu0 %v4066
    %4897 = vmatmul.bf16.gmra.mxu0 %v4373
    %v4898 = vpop.f32.mrf.mxu0
    %v4899 = vadd.f32 %v295, %v4898
    %v4900 = vpop.f32.mrf.mxu0
    %4901 = vdwg.mxu0
    %4902 = vmatpush.bf16.msra.mxu0 %v4126
    %4903 = vmatpush.bf16.msra.mxu0 %v4122
    %4904 = vmatpush.bf16.msra.mxu0 %v4118
    %4905 = vmatpush.bf16.msra.mxu0 %v4114
    %4906 = vmatpush.bf16.msra.mxu0 %v4110
    %4907 = vmatpush.bf16.msra.mxu0 %v4106
    %4908 = vmatpush.bf16.msra.mxu0 %v4102
    %4909 = vmatpush.bf16.msra.mxu0 %v4098
    %4910 = vmatmul.bf16.gmra.mxu0 %v4862
    %v4911 = vpop.f32.mrf.mxu0
    %v4912 = vadd.f32 %v4899, %v4911
    %v4913 = vpop.f32.mrf.mxu0
    %4914 = vdwg.mxu0
    %4915 = vmatpush.bf16.msra.mxu0 %v4095
    %4916 = vmatpush.bf16.msra.mxu0 %v4091
    %4917 = vmatpush.bf16.msra.mxu0 %v4087
    %4918 = vmatpush.bf16.msra.mxu0 %v4083
    %4919 = vmatpush.bf16.msra.mxu0 %v4079
    %4920 = vmatpush.bf16.msra.mxu0 %v4075
    %4921 = vmatpush.bf16.msra.mxu0 %v4071
    %4922 = vmatpush.bf16.msra.mxu0 %v4067
    %4923 = vmatmul.bf16.gmra.mxu0 %v4373
    %v4924 = vpop.f32.mrf.mxu0
    %v4925 = vadd.f32 %v296, %v4924
    %v4926 = vpop.f32.mrf.mxu0
    %4927 = vdwg.mxu0
    %4928 = vmatpush.bf16.msra.mxu0 %v4127
    %4929 = vmatpush.bf16.msra.mxu0 %v4123
    %4930 = vmatpush.bf16.msra.mxu0 %v4119
    %4931 = vmatpush.bf16.msra.mxu0 %v4115
    %4932 = vmatpush.bf16.msra.mxu0 %v4111
    %4933 = vmatpush.bf16.msra.mxu0 %v4107
    %4934 = vmatpush.bf16.msra.mxu0 %v4103
    %4935 = vmatpush.bf16.msra.mxu0 %v4099
    %4936 = vmatmul.bf16.gmra.mxu0 %v4862
    %v4937 = vpop.f32.mrf.mxu0
    %v4938 = vadd.f32 %v4925, %v4937
    %v4939 = vpop.f32.mrf.mxu0
    %4940 = vdwg.mxu0
    %4941 = vmatpush.bf16.msra.mxu0 %v4096
    %4942 = vmatpush.bf16.msra.mxu0 %v4092
    %4943 = vmatpush.bf16.msra.mxu0 %v4088
    %4944 = vmatpush.bf16.msra.mxu0 %v4084
    %4945 = vmatpush.bf16.msra.mxu0 %v4080
    %4946 = vmatpush.bf16.msra.mxu0 %v4076
    %4947 = vmatpush.bf16.msra.mxu0 %v4072
    %4948 = vmatpush.bf16.msra.mxu0 %v4068
    %4949 = vmatmul.bf16.gmra.mxu0 %v4373
    %v4950 = vpop.f32.mrf.mxu0
    %v4951 = vadd.f32 %v297, %v4950
    %v4952 = vpop.f32.mrf.mxu0
    %4953 = vdwg.mxu0
    %4954 = vmatpush.bf16.msra.mxu0 %v4128
    %4955 = vmatpush.bf16.msra.mxu0 %v4124
    %4956 = vmatpush.bf16.msra.mxu0 %v4120
    %4957 = vmatpush.bf16.msra.mxu0 %v4116
    %4958 = vmatpush.bf16.msra.mxu0 %v4112
    %4959 = vmatpush.bf16.msra.mxu0 %v4108
    %4960 = vmatpush.bf16.msra.mxu0 %v4104
    %4961 = vmatpush.bf16.msra.mxu0 %v4100
    %4962 = vmatmul.bf16.gmra.mxu0 %v4862
    %v4963 = vpop.f32.mrf.mxu0
    %v4964 = vadd.f32 %v4951, %v4963
    %v4965 = vpop.f32.mrf.mxu0
    %4966 = vdwg.mxu0
    %v4967 = vxor.u32 %v4886, 2147483648
    %v4968 = vxor.u32 %v4912, 2147483648
    %v4969 = vxor.u32 %v4938, 2147483648
    %v4970 = vmul.f32 %v4967, 1.442695
    %v4971 = vpow.pop %v4970
    %v4972 = vmul.f32 %v4968, 1.442695
    %v4973 = vpow.pop %v4972
    %v4974 = vmul.f32 %v4969, 1.442695
    %v4975 = vpow.pop %v4974
    %v4976 = vadd.f32 %v4971, 1.0
    %v4977 = vadd.f32 %v4973, 1.0
    %v4978 = vadd.f32 %v4975, 1.0
    %v4979 = vrcp.pop %v4976
    %v4980 = vmul.f32 %v4976, %v4979
    %v4981 = vsub.f32 1.0, %v4980
    %v4982 = vmul.f32 %v4979, %v4981
    %v4983 = vadd.f32 %v4979, %v4982
    %vm4984 = vweird.f32 %v4976
    %vm4985 = vweird.f32 %v4979
    %vm4986 = vmor %vm4984, %vm4985
    %v4987 = vsel %vm4986, %v4979, %v4983
    %v4988 = vand.u32 2147483647, %v4976
    %vm4989 = vcmp.eq.f32.partialorder %v4988, 8.507059e+37
    %v4990 = vand.u32 %v4976, 2147483648
    %v4991 = vor.u32 1.1754944e-38, %v4990
    %v4992 = vsel %vm4989, %v4991, %v4987
    %v4993 = vmul.f32 1.0, %v4992
    %v4994 = vrcp.pop %v4977
    %v4995 = vmul.f32 %v4977, %v4994
    %v4996 = vsub.f32 1.0, %v4995
    %v4997 = vmul.f32 %v4994, %v4996
    %v4998 = vadd.f32 %v4994, %v4997
    %vm4999 = vweird.f32 %v4977
    %vm5000 = vweird.f32 %v4994
    %vm5001 = vmor %vm4999, %vm5000
    %v5002 = vsel %vm5001, %v4994, %v4998
    %v5003 = vand.u32 2147483647, %v4977
    %vm5004 = vcmp.eq.f32.partialorder %v5003, 8.507059e+37
    %v5005 = vand.u32 %v4977, 2147483648
    %v5006 = vor.u32 1.1754944e-38, %v5005
    %v5007 = vsel %vm5004, %v5006, %v5002
    %v5008 = vmul.f32 1.0, %v5007
    %v5009 = vrcp.pop %v4978
    %v5010 = vmul.f32 %v4978, %v5009
    %v5011 = vsub.f32 1.0, %v5010
    %v5012 = vmul.f32 %v5009, %v5011
    %v5013 = vadd.f32 %v5009, %v5012
    %vm5014 = vweird.f32 %v4978
    %vm5015 = vweird.f32 %v5009
    %vm5016 = vmor %vm5014, %vm5015
    %v5017 = vsel %vm5016, %v5009, %v5013
    %v5018 = vand.u32 2147483647, %v4978
    %vm5019 = vcmp.eq.f32.partialorder %v5018, 8.507059e+37
    %v5020 = vand.u32 %v4978, 2147483648
    %v5021 = vor.u32 1.1754944e-38, %v5020
    %v5022 = vsel %vm5019, %v5021, %v5017
    %v5023 = vmul.f32 1.0, %v5022
    %v5024 = vtanh.pop %v4964
    %v5025 = vmul.f32 %v5008, %v4370
    %v5026 = vmul.f32 %v4993, %v5024
    %v5027 = vadd.f32 %v5025, %v5026
    %v5028 = vtanh.pop %v5027
    %v5029 = vmul.f32 %v5023, %v5028
    %v5030 = vpack.c.bf16 %v5029, %v5029
    %5031 = vmatpush.bf16.msra.mxu0 %v4595
    %5032 = vmatpush.bf16.msra.mxu0 %v4591
    %5033 = vmatpush.bf16.msra.mxu0 %v4587
    %5034 = vmatpush.bf16.msra.mxu0 %v4583
    %5035 = vmatpush.bf16.msra.mxu0 %v4579
    %5036 = vmatpush.bf16.msra.mxu0 %v4575
    %5037 = vmatpush.bf16.msra.mxu0 %v4571
    %5038 = vmatpush.bf16.msra.mxu0 %v4567
    %5039 = vmatmul.bf16.gmra.mxu0 %v5030
    %v5040 = vpop.f32.mrf.mxu0
    %v5041 = vadd.f32 %v304, %v5040
    %v5042 = vpop.f32.mrf.mxu0
    %5043 = vdwg.mxu0
    %5044 = vmatpush.bf16.msra.mxu0 %v4627
    %5045 = vmatpush.bf16.msra.mxu0 %v4623
    %5046 = vmatpush.bf16.msra.mxu0 %v4619
    %5047 = vmatpush.bf16.msra.mxu0 %v4615
    %5048 = vmatpush.bf16.msra.mxu0 %v4611
    %5049 = vmatpush.bf16.msra.mxu0 %v4607
    %5050 = vmatpush.bf16.msra.mxu0 %v4603
    %5051 = vmatpush.bf16.msra.mxu0 %v4599
    %5052 = vmatmul.bf16.gmra.mxu0 %v4862
    %v5053 = vpop.f32.mrf.mxu0
    %v5054 = vadd.f32 %v5041, %v5053
    %v5055 = vpop.f32.mrf.mxu0
    %5056 = vdwg.mxu0
    %5057 = vmatpush.bf16.msra.mxu0 %v4596
    %5058 = vmatpush.bf16.msra.mxu0 %v4592
    %5059 = vmatpush.bf16.msra.mxu0 %v4588
    %5060 = vmatpush.bf16.msra.mxu0 %v4584
    %5061 = vmatpush.bf16.msra.mxu0 %v4580
    %5062 = vmatpush.bf16.msra.mxu0 %v4576
    %5063 = vmatpush.bf16.msra.mxu0 %v4572
    %5064 = vmatpush.bf16.msra.mxu0 %v4568
    %5065 = vmatmul.bf16.gmra.mxu0 %v5030
    %v5066 = vpop.f32.mrf.mxu0
    %v5067 = vadd.f32 %v305, %v5066
    %v5068 = vpop.f32.mrf.mxu0
    %5069 = vdwg.mxu0
    %5070 = vmatpush.bf16.msra.mxu0 %v4628
    %5071 = vmatpush.bf16.msra.mxu0 %v4624
    %5072 = vmatpush.bf16.msra.mxu0 %v4620
    %5073 = vmatpush.bf16.msra.mxu0 %v4616
    %5074 = vmatpush.bf16.msra.mxu0 %v4612
    %5075 = vmatpush.bf16.msra.mxu0 %v4608
    %5076 = vmatpush.bf16.msra.mxu0 %v4604
    %5077 = vmatpush.bf16.msra.mxu0 %v4600
    %5078 = vmatmul.bf16.gmra.mxu0 %v4862
    %v5079 = vpop.f32.mrf.mxu0
    %v5080 = vadd.f32 %v5067, %v5079
    %v5081 = vpop.f32.mrf.mxu0
    %5082 = vdwg.mxu0
    %5083 = vmatpush.bf16.msra.mxu0 %v4597
    %5084 = vmatpush.bf16.msra.mxu0 %v4593
    %5085 = vmatpush.bf16.msra.mxu0 %v4589
    %5086 = vmatpush.bf16.msra.mxu0 %v4585
    %5087 = vmatpush.bf16.msra.mxu0 %v4581
    %5088 = vmatpush.bf16.msra.mxu0 %v4577
    %5089 = vmatpush.bf16.msra.mxu0 %v4573
    %5090 = vmatpush.bf16.msra.mxu0 %v4569
    %5091 = vmatmul.bf16.gmra.mxu0 %v5030
    %v5092 = vpop.f32.mrf.mxu0
    %v5093 = vadd.f32 %v306, %v5092
    %v5094 = vpop.f32.mrf.mxu0
    %5095 = vdwg.mxu0
    %5096 = vmatpush.bf16.msra.mxu0 %v4629
    %5097 = vmatpush.bf16.msra.mxu0 %v4625
    %5098 = vmatpush.bf16.msra.mxu0 %v4621
    %5099 = vmatpush.bf16.msra.mxu0 %v4617
    %5100 = vmatpush.bf16.msra.mxu0 %v4613
    %5101 = vmatpush.bf16.msra.mxu0 %v4609
    %5102 = vmatpush.bf16.msra.mxu0 %v4605
    %5103 = vmatpush.bf16.msra.mxu0 %v4601
    %5104 = vmatmul.bf16.gmra.mxu0 %v4862
    %v5105 = vpop.f32.mrf.mxu0
    %v5106 = vadd.f32 %v5093, %v5105
    %v5107 = vpop.f32.mrf.mxu0
    %5108 = vdwg.mxu0
    %5109 = vmatpush.bf16.msra.mxu0 %v4598
    %5110 = vmatpush.bf16.msra.mxu0 %v4594
    %5111 = vmatpush.bf16.msra.mxu0 %v4590
    %5112 = vmatpush.bf16.msra.mxu0 %v4586
    %5113 = vmatpush.bf16.msra.mxu0 %v4582
    %5114 = vmatpush.bf16.msra.mxu0 %v4578
    %5115 = vmatpush.bf16.msra.mxu0 %v4574
    %5116 = vmatpush.bf16.msra.mxu0 %v4570
    %5117 = vmatmul.bf16.gmra.mxu0 %v5030
    %v5118 = vpop.f32.mrf.mxu0
    %v5119 = vadd.f32 %v307, %v5118
    %v5120 = vpop.f32.mrf.mxu0
    %5121 = vdwg.mxu0
    %5122 = vmatpush.bf16.msra.mxu0 %v4630
    %5123 = vmatpush.bf16.msra.mxu0 %v4626
    %5124 = vmatpush.bf16.msra.mxu0 %v4622
    %5125 = vmatpush.bf16.msra.mxu0 %v4618
    %5126 = vmatpush.bf16.msra.mxu0 %v4614
    %5127 = vmatpush.bf16.msra.mxu0 %v4610
    %5128 = vmatpush.bf16.msra.mxu0 %v4606
    %5129 = vmatpush.bf16.msra.mxu0 %v4602
    %5130 = vmatmul.bf16.gmra.mxu0 %v4862
    %v5131 = vpop.f32.mrf.mxu0
    %v5132 = vadd.f32 %v5119, %v5131
    %v5133 = vpop.f32.mrf.mxu0
    %5134 = vdwg.mxu0
    %v5135 = vxor.u32 %v5054, 2147483648
    %v5136 = vxor.u32 %v5080, 2147483648
    %v5137 = vxor.u32 %v5106, 2147483648
    %v5138 = vmul.f32 %v5135, 1.442695
    %v5139 = vpow.pop %v5138
    %v5140 = vmul.f32 %v5136, 1.442695
    %v5141 = vpow.pop %v5140
    %v5142 = vmul.f32 %v5137, 1.442695
    %v5143 = vpow.pop %v5142
    %v5144 = vadd.f32 %v5139, 1.0
    %v5145 = vadd.f32 %v5141, 1.0
    %v5146 = vadd.f32 %v5143, 1.0
    %v5147 = vrcp.pop %v5144
    %v5148 = vmul.f32 %v5144, %v5147
    %v5149 = vsub.f32 1.0, %v5148
    %v5150 = vmul.f32 %v5147, %v5149
    %v5151 = vadd.f32 %v5147, %v5150
    %vm5152 = vweird.f32 %v5144
    %vm5153 = vweird.f32 %v5147
    %vm5154 = vmor %vm5152, %vm5153
    %v5155 = vsel %vm5154, %v5147, %v5151
    %v5156 = vand.u32 2147483647, %v5144
    %vm5157 = vcmp.eq.f32.partialorder %v5156, 8.507059e+37
    %v5158 = vand.u32 %v5144, 2147483648
    %v5159 = vor.u32 1.1754944e-38, %v5158
    %v5160 = vsel %vm5157, %v5159, %v5155
    %v5161 = vmul.f32 1.0, %v5160
    %v5162 = vrcp.pop %v5145
    %v5163 = vmul.f32 %v5145, %v5162
    %v5164 = vsub.f32 1.0, %v5163
    %v5165 = vmul.f32 %v5162, %v5164
    %v5166 = vadd.f32 %v5162, %v5165
    %vm5167 = vweird.f32 %v5145
    %vm5168 = vweird.f32 %v5162
    %vm5169 = vmor %vm5167, %vm5168
    %v5170 = vsel %vm5169, %v5162, %v5166
    %v5171 = vand.u32 2147483647, %v5145
    %vm5172 = vcmp.eq.f32.partialorder %v5171, 8.507059e+37
    %v5173 = vand.u32 %v5145, 2147483648
    %v5174 = vor.u32 1.1754944e-38, %v5173
    %v5175 = vsel %vm5172, %v5174, %v5170
    %v5176 = vmul.f32 1.0, %v5175
    %v5177 = vrcp.pop %v5146
    %v5178 = vmul.f32 %v5146, %v5177
    %v5179 = vsub.f32 1.0, %v5178
    %v5180 = vmul.f32 %v5177, %v5179
    %v5181 = vadd.f32 %v5177, %v5180
    %vm5182 = vweird.f32 %v5146
    %vm5183 = vweird.f32 %v5177
    %vm5184 = vmor %vm5182, %vm5183
    %v5185 = vsel %vm5184, %v5177, %v5181
    %v5186 = vand.u32 2147483647, %v5146
    %vm5187 = vcmp.eq.f32.partialorder %v5186, 8.507059e+37
    %v5188 = vand.u32 %v5146, 2147483648
    %v5189 = vor.u32 1.1754944e-38, %v5188
    %v5190 = vsel %vm5187, %v5189, %v5185
    %v5191 = vmul.f32 1.0, %v5190
    %v5192 = vtanh.pop %v5132
    %v5193 = vmul.f32 %v5176, %v4859
    %v5194 = vmul.f32 %v5161, %v5192
    %v5195 = vadd.f32 %v5193, %v5194
    %v5196 = vtanh.pop %v5195
    %v5197 = vmul.f32 %v5191, %v5196
    %v5198 = vpack.c.bf16 %v5197, %v5197
    %5199 = vmatpush.bf16.msra.mxu0 %v4093
    %5200 = vmatpush.bf16.msra.mxu0 %v4089
    %5201 = vmatpush.bf16.msra.mxu0 %v4085
    %5202 = vmatpush.bf16.msra.mxu0 %v4081
    %5203 = vmatpush.bf16.msra.mxu0 %v4077
    %5204 = vmatpush.bf16.msra.mxu0 %v4073
    %5205 = vmatpush.bf16.msra.mxu0 %v4069
    %5206 = vmatpush.bf16.msra.mxu0 %v4065
    %5207 = vmatmul.bf16.gmra.mxu0 %v5030
    %v5208 = vpop.f32.mrf.mxu0
    %v5209 = vadd.f32 %v294, %v5208
    %v5210 = vpop.f32.mrf.mxu0
    %5211 = vdwg.mxu0
    %5212 = vmatpush.bf16.msra.mxu0 %v4125
    %5213 = vmatpush.bf16.msra.mxu0 %v4121
    %5214 = vmatpush.bf16.msra.mxu0 %v4117
    %5215 = vmatpush.bf16.msra.mxu0 %v4113
    %5216 = vmatpush.bf16.msra.mxu0 %v4109
    %5217 = vmatpush.bf16.msra.mxu0 %v4105
    %5218 = vmatpush.bf16.msra.mxu0 %v4101
    %5219 = vmatpush.bf16.msra.mxu0 %v4097
    %5220 = vmatmul.bf16.gmra.mxu0 %v5198
    %v5221 = vpop.f32.mrf.mxu0
    %v5222 = vadd.f32 %v5209, %v5221
    %v5223 = vpop.f32.mrf.mxu0
    %5224 = vdwg.mxu0
    %5225 = vmatpush.bf16.msra.mxu0 %v4094
    %5226 = vmatpush.bf16.msra.mxu0 %v4090
    %5227 = vmatpush.bf16.msra.mxu0 %v4086
    %5228 = vmatpush.bf16.msra.mxu0 %v4082
    %5229 = vmatpush.bf16.msra.mxu0 %v4078
    %5230 = vmatpush.bf16.msra.mxu0 %v4074
    %5231 = vmatpush.bf16.msra.mxu0 %v4070
    %5232 = vmatpush.bf16.msra.mxu0 %v4066
    %5233 = vmatmul.bf16.gmra.mxu0 %v5030
    %v5234 = vpop.f32.mrf.mxu0
    %v5235 = vadd.f32 %v295, %v5234
    %v5236 = vpop.f32.mrf.mxu0
    %5237 = vdwg.mxu0
    %5238 = vmatpush.bf16.msra.mxu0 %v4126
    %5239 = vmatpush.bf16.msra.mxu0 %v4122
    %5240 = vmatpush.bf16.msra.mxu0 %v4118
    %5241 = vmatpush.bf16.msra.mxu0 %v4114
    %5242 = vmatpush.bf16.msra.mxu0 %v4110
    %5243 = vmatpush.bf16.msra.mxu0 %v4106
    %5244 = vmatpush.bf16.msra.mxu0 %v4102
    %5245 = vmatpush.bf16.msra.mxu0 %v4098
    %5246 = vmatmul.bf16.gmra.mxu0 %v5198
    %v5247 = vpop.f32.mrf.mxu0
    %v5248 = vadd.f32 %v5235, %v5247
    %v5249 = vpop.f32.mrf.mxu0
    %5250 = vdwg.mxu0
    %5251 = vmatpush.bf16.msra.mxu0 %v4095
    %5252 = vmatpush.bf16.msra.mxu0 %v4091
    %5253 = vmatpush.bf16.msra.mxu0 %v4087
    %5254 = vmatpush.bf16.msra.mxu0 %v4083
    %5255 = vmatpush.bf16.msra.mxu0 %v4079
    %5256 = vmatpush.bf16.msra.mxu0 %v4075
    %5257 = vmatpush.bf16.msra.mxu0 %v4071
    %5258 = vmatpush.bf16.msra.mxu0 %v4067
    %5259 = vmatmul.bf16.gmra.mxu0 %v5030
    %v5260 = vpop.f32.mrf.mxu0
    %v5261 = vadd.f32 %v296, %v5260
    %v5262 = vpop.f32.mrf.mxu0
    %5263 = vdwg.mxu0
    %5264 = vmatpush.bf16.msra.mxu0 %v4127
    %5265 = vmatpush.bf16.msra.mxu0 %v4123
    %5266 = vmatpush.bf16.msra.mxu0 %v4119
    %5267 = vmatpush.bf16.msra.mxu0 %v4115
    %5268 = vmatpush.bf16.msra.mxu0 %v4111
    %5269 = vmatpush.bf16.msra.mxu0 %v4107
    %5270 = vmatpush.bf16.msra.mxu0 %v4103
    %5271 = vmatpush.bf16.msra.mxu0 %v4099
    %5272 = vmatmul.bf16.gmra.mxu0 %v5198
    %v5273 = vpop.f32.mrf.mxu0
    %v5274 = vadd.f32 %v5261, %v5273
    %v5275 = vpop.f32.mrf.mxu0
    %5276 = vdwg.mxu0
    %5277 = vmatpush.bf16.msra.mxu0 %v4096
    %5278 = vmatpush.bf16.msra.mxu0 %v4092
    %5279 = vmatpush.bf16.msra.mxu0 %v4088
    %5280 = vmatpush.bf16.msra.mxu0 %v4084
    %5281 = vmatpush.bf16.msra.mxu0 %v4080
    %5282 = vmatpush.bf16.msra.mxu0 %v4076
    %5283 = vmatpush.bf16.msra.mxu0 %v4072
    %5284 = vmatpush.bf16.msra.mxu0 %v4068
    %5285 = vmatmul.bf16.gmra.mxu0 %v5030
    %v5286 = vpop.f32.mrf.mxu0
    %v5287 = vadd.f32 %v297, %v5286
    %v5288 = vpop.f32.mrf.mxu0
    %5289 = vdwg.mxu0
    %5290 = vmatpush.bf16.msra.mxu0 %v4128
    %5291 = vmatpush.bf16.msra.mxu0 %v4124
    %5292 = vmatpush.bf16.msra.mxu0 %v4120
    %5293 = vmatpush.bf16.msra.mxu0 %v4116
    %5294 = vmatpush.bf16.msra.mxu0 %v4112
    %5295 = vmatpush.bf16.msra.mxu0 %v4108
    %5296 = vmatpush.bf16.msra.mxu0 %v4104
    %5297 = vmatpush.bf16.msra.mxu0 %v4100
    %5298 = vmatmul.bf16.gmra.mxu0 %v5198
    %v5299 = vpop.f32.mrf.mxu0
    %v5300 = vadd.f32 %v5287, %v5299
    %v5301 = vpop.f32.mrf.mxu0
    %5302 = vdwg.mxu0
    %v5303 = vxor.u32 %v5222, 2147483648
    %v5304 = vxor.u32 %v5248, 2147483648
    %v5305 = vxor.u32 %v5274, 2147483648
    %v5306 = vmul.f32 %v5303, 1.442695
    %v5307 = vpow.pop %v5306
    %v5308 = vmul.f32 %v5304, 1.442695
    %v5309 = vpow.pop %v5308
    %v5310 = vmul.f32 %v5305, 1.442695
    %v5311 = vpow.pop %v5310
    %v5312 = vadd.f32 %v5307, 1.0
    %v5313 = vadd.f32 %v5309, 1.0
    %v5314 = vadd.f32 %v5311, 1.0
    %v5315 = vrcp.pop %v5312
    %v5316 = vmul.f32 %v5312, %v5315
    %v5317 = vsub.f32 1.0, %v5316
    %v5318 = vmul.f32 %v5315, %v5317
    %v5319 = vadd.f32 %v5315, %v5318
    %vm5320 = vweird.f32 %v5312
    %vm5321 = vweird.f32 %v5315
    %vm5322 = vmor %vm5320, %vm5321
    %v5323 = vsel %vm5322, %v5315, %v5319
    %v5324 = vand.u32 2147483647, %v5312
    %vm5325 = vcmp.eq.f32.partialorder %v5324, 8.507059e+37
    %v5326 = vand.u32 %v5312, 2147483648
    %v5327 = vor.u32 1.1754944e-38, %v5326
    %v5328 = vsel %vm5325, %v5327, %v5323
    %v5329 = vmul.f32 1.0, %v5328
    %v5330 = vrcp.pop %v5313
    %v5331 = vmul.f32 %v5313, %v5330
    %v5332 = vsub.f32 1.0, %v5331
    %v5333 = vmul.f32 %v5330, %v5332
    %v5334 = vadd.f32 %v5330, %v5333
    %vm5335 = vweird.f32 %v5313
    %vm5336 = vweird.f32 %v5330
    %vm5337 = vmor %vm5335, %vm5336
    %v5338 = vsel %vm5337, %v5330, %v5334
    %v5339 = vand.u32 2147483647, %v5313
    %vm5340 = vcmp.eq.f32.partialorder %v5339, 8.507059e+37
    %v5341 = vand.u32 %v5313, 2147483648
    %v5342 = vor.u32 1.1754944e-38, %v5341
    %v5343 = vsel %vm5340, %v5342, %v5338
    %v5344 = vmul.f32 1.0, %v5343
    %v5345 = vrcp.pop %v5314
    %v5346 = vmul.f32 %v5314, %v5345
    %v5347 = vsub.f32 1.0, %v5346
    %v5348 = vmul.f32 %v5345, %v5347
    %v5349 = vadd.f32 %v5345, %v5348
    %vm5350 = vweird.f32 %v5314
    %vm5351 = vweird.f32 %v5345
    %vm5352 = vmor %vm5350, %vm5351
    %v5353 = vsel %vm5352, %v5345, %v5349
    %v5354 = vand.u32 2147483647, %v5314
    %vm5355 = vcmp.eq.f32.partialorder %v5354, 8.507059e+37
    %v5356 = vand.u32 %v5314, 2147483648
    %v5357 = vor.u32 1.1754944e-38, %v5356
    %v5358 = vsel %vm5355, %v5357, %v5353
    %v5359 = vmul.f32 1.0, %v5358
    %v5360 = vtanh.pop %v5300
    %v5361 = vmul.f32 %v5344, %v5027
    %v5362 = vmul.f32 %v5329, %v5360
    %v5363 = vadd.f32 %v5361, %v5362
    %v5364 = vtanh.pop %v5363
    %v5365 = vmul.f32 %v5359, %v5364
    %v5366 = vpack.c.bf16 %v5365, %v5365
    %5367 = vmatpush.bf16.msra.mxu0 %v4595
    %5368 = vmatpush.bf16.msra.mxu0 %v4591
    %5369 = vmatpush.bf16.msra.mxu0 %v4587
    %5370 = vmatpush.bf16.msra.mxu0 %v4583
    %5371 = vmatpush.bf16.msra.mxu0 %v4579
    %5372 = vmatpush.bf16.msra.mxu0 %v4575
    %5373 = vmatpush.bf16.msra.mxu0 %v4571
    %5374 = vmatpush.bf16.msra.mxu0 %v4567
    %5375 = vmatmul.bf16.gmra.mxu0 %v5366
    %v5376 = vpop.f32.mrf.mxu0
    %v5377 = vadd.f32 %v304, %v5376
    %v5378 = vpop.f32.mrf.mxu0
    %5379 = vdwg.mxu0
    %5380 = vmatpush.bf16.msra.mxu0 %v4627
    %5381 = vmatpush.bf16.msra.mxu0 %v4623
    %5382 = vmatpush.bf16.msra.mxu0 %v4619
    %5383 = vmatpush.bf16.msra.mxu0 %v4615
    %5384 = vmatpush.bf16.msra.mxu0 %v4611
    %5385 = vmatpush.bf16.msra.mxu0 %v4607
    %5386 = vmatpush.bf16.msra.mxu0 %v4603
    %5387 = vmatpush.bf16.msra.mxu0 %v4599
    %5388 = vmatmul.bf16.gmra.mxu0 %v5198
    %v5389 = vpop.f32.mrf.mxu0
    %v5390 = vadd.f32 %v5377, %v5389
    %v5391 = vpop.f32.mrf.mxu0
    %5392 = vdwg.mxu0
    %5393 = vmatpush.bf16.msra.mxu0 %v4596
    %5394 = vmatpush.bf16.msra.mxu0 %v4592
    %5395 = vmatpush.bf16.msra.mxu0 %v4588
    %5396 = vmatpush.bf16.msra.mxu0 %v4584
    %5397 = vmatpush.bf16.msra.mxu0 %v4580
    %5398 = vmatpush.bf16.msra.mxu0 %v4576
    %5399 = vmatpush.bf16.msra.mxu0 %v4572
    %5400 = vmatpush.bf16.msra.mxu0 %v4568
    %5401 = vmatmul.bf16.gmra.mxu0 %v5366
    %v5402 = vpop.f32.mrf.mxu0
    %v5403 = vadd.f32 %v305, %v5402
    %v5404 = vpop.f32.mrf.mxu0
    %5405 = vdwg.mxu0
    %5406 = vmatpush.bf16.msra.mxu0 %v4628
    %5407 = vmatpush.bf16.msra.mxu0 %v4624
    %5408 = vmatpush.bf16.msra.mxu0 %v4620
    %5409 = vmatpush.bf16.msra.mxu0 %v4616
    %5410 = vmatpush.bf16.msra.mxu0 %v4612
    %5411 = vmatpush.bf16.msra.mxu0 %v4608
    %5412 = vmatpush.bf16.msra.mxu0 %v4604
    %5413 = vmatpush.bf16.msra.mxu0 %v4600
    %5414 = vmatmul.bf16.gmra.mxu0 %v5198
    %v5415 = vpop.f32.mrf.mxu0
    %v5416 = vadd.f32 %v5403, %v5415
    %v5417 = vpop.f32.mrf.mxu0
    %5418 = vdwg.mxu0
    %5419 = vmatpush.bf16.msra.mxu0 %v4597
    %5420 = vmatpush.bf16.msra.mxu0 %v4593
    %5421 = vmatpush.bf16.msra.mxu0 %v4589
    %5422 = vmatpush.bf16.msra.mxu0 %v4585
    %5423 = vmatpush.bf16.msra.mxu0 %v4581
    %5424 = vmatpush.bf16.msra.mxu0 %v4577
    %5425 = vmatpush.bf16.msra.mxu0 %v4573
    %5426 = vmatpush.bf16.msra.mxu0 %v4569
    %5427 = vmatmul.bf16.gmra.mxu0 %v5366
    %v5428 = vpop.f32.mrf.mxu0
    %v5429 = vadd.f32 %v306, %v5428
    %v5430 = vpop.f32.mrf.mxu0
    %5431 = vdwg.mxu0
    %5432 = vmatpush.bf16.msra.mxu0 %v4629
    %5433 = vmatpush.bf16.msra.mxu0 %v4625
    %5434 = vmatpush.bf16.msra.mxu0 %v4621
    %5435 = vmatpush.bf16.msra.mxu0 %v4617
    %5436 = vmatpush.bf16.msra.mxu0 %v4613
    %5437 = vmatpush.bf16.msra.mxu0 %v4609
    %5438 = vmatpush.bf16.msra.mxu0 %v4605
    %5439 = vmatpush.bf16.msra.mxu0 %v4601
    %5440 = vmatmul.bf16.gmra.mxu0 %v5198
    %v5441 = vpop.f32.mrf.mxu0
    %v5442 = vadd.f32 %v5429, %v5441
    %v5443 = vpop.f32.mrf.mxu0
    %5444 = vdwg.mxu0
    %5445 = vmatpush.bf16.msra.mxu0 %v4598
    %5446 = vmatpush.bf16.msra.mxu0 %v4594
    %5447 = vmatpush.bf16.msra.mxu0 %v4590
    %5448 = vmatpush.bf16.msra.mxu0 %v4586
    %5449 = vmatpush.bf16.msra.mxu0 %v4582
    %5450 = vmatpush.bf16.msra.mxu0 %v4578
    %5451 = vmatpush.bf16.msra.mxu0 %v4574
    %5452 = vmatpush.bf16.msra.mxu0 %v4570
    %5453 = vmatmul.bf16.gmra.mxu0 %v5366
    %v5454 = vpop.f32.mrf.mxu0
    %v5455 = vadd.f32 %v307, %v5454
    %v5456 = vpop.f32.mrf.mxu0
    %5457 = vdwg.mxu0
    %5458 = vmatpush.bf16.msra.mxu0 %v4630
    %5459 = vmatpush.bf16.msra.mxu0 %v4626
    %5460 = vmatpush.bf16.msra.mxu0 %v4622
    %5461 = vmatpush.bf16.msra.mxu0 %v4618
    %5462 = vmatpush.bf16.msra.mxu0 %v4614
    %5463 = vmatpush.bf16.msra.mxu0 %v4610
    %5464 = vmatpush.bf16.msra.mxu0 %v4606
    %5465 = vmatpush.bf16.msra.mxu0 %v4602
    %5466 = vmatmul.bf16.gmra.mxu0 %v5198
    %v5467 = vpop.f32.mrf.mxu0
    %v5468 = vadd.f32 %v5455, %v5467
    %v5469 = vpop.f32.mrf.mxu0
    %5470 = vdwg.mxu0
    %v5471 = vxor.u32 %v5390, 2147483648
    %v5472 = vxor.u32 %v5416, 2147483648
    %v5473 = vxor.u32 %v5442, 2147483648
    %v5474 = vmul.f32 %v5471, 1.442695
    %v5475 = vpow.pop %v5474
    %v5476 = vmul.f32 %v5472, 1.442695
    %v5477 = vpow.pop %v5476
    %v5478 = vmul.f32 %v5473, 1.442695
    %v5479 = vpow.pop %v5478
    %v5480 = vadd.f32 %v5475, 1.0
    %v5481 = vadd.f32 %v5477, 1.0
    %v5482 = vadd.f32 %v5479, 1.0
    %v5483 = vrcp.pop %v5480
    %v5484 = vmul.f32 %v5480, %v5483
    %v5485 = vsub.f32 1.0, %v5484
    %v5486 = vmul.f32 %v5483, %v5485
    %v5487 = vadd.f32 %v5483, %v5486
    %vm5488 = vweird.f32 %v5480
    %vm5489 = vweird.f32 %v5483
    %vm5490 = vmor %vm5488, %vm5489
    %v5491 = vsel %vm5490, %v5483, %v5487
    %v5492 = vand.u32 2147483647, %v5480
    %vm5493 = vcmp.eq.f32.partialorder %v5492, 8.507059e+37
    %v5494 = vand.u32 %v5480, 2147483648
    %v5495 = vor.u32 1.1754944e-38, %v5494
    %v5496 = vsel %vm5493, %v5495, %v5491
    %v5497 = vmul.f32 1.0, %v5496
    %v5498 = vrcp.pop %v5481
    %v5499 = vmul.f32 %v5481, %v5498
    %v5500 = vsub.f32 1.0, %v5499
    %v5501 = vmul.f32 %v5498, %v5500
    %v5502 = vadd.f32 %v5498, %v5501
    %vm5503 = vweird.f32 %v5481
    %vm5504 = vweird.f32 %v5498
    %vm5505 = vmor %vm5503, %vm5504
    %v5506 = vsel %vm5505, %v5498, %v5502
    %v5507 = vand.u32 2147483647, %v5481
    %vm5508 = vcmp.eq.f32.partialorder %v5507, 8.507059e+37
    %v5509 = vand.u32 %v5481, 2147483648
    %v5510 = vor.u32 1.1754944e-38, %v5509
    %v5511 = vsel %vm5508, %v5510, %v5506
    %v5512 = vmul.f32 1.0, %v5511
    %v5513 = vrcp.pop %v5482
    %v5514 = vmul.f32 %v5482, %v5513
    %v5515 = vsub.f32 1.0, %v5514
    %v5516 = vmul.f32 %v5513, %v5515
    %v5517 = vadd.f32 %v5513, %v5516
    %vm5518 = vweird.f32 %v5482
    %vm5519 = vweird.f32 %v5513
    %vm5520 = vmor %vm5518, %vm5519
    %v5521 = vsel %vm5520, %v5513, %v5517
    %v5522 = vand.u32 2147483647, %v5482
    %vm5523 = vcmp.eq.f32.partialorder %v5522, 8.507059e+37
    %v5524 = vand.u32 %v5482, 2147483648
    %v5525 = vor.u32 1.1754944e-38, %v5524
    %v5526 = vsel %vm5523, %v5525, %v5521
    %v5527 = vmul.f32 1.0, %v5526
    %v5528 = vtanh.pop %v5468
    %v5529 = vmul.f32 %v5512, %v5195
    %v5530 = vmul.f32 %v5497, %v5528
    %v5531 = vadd.f32 %v5529, %v5530
    %v5532 = vtanh.pop %v5531
    %v5533 = vmul.f32 %v5527, %v5532
    %v5534 = vpack.c.bf16 %v5533, %v5533
    %5535 = vmatpush.bf16.msra.mxu0 %v4093
    %5536 = vmatpush.bf16.msra.mxu0 %v4089
    %5537 = vmatpush.bf16.msra.mxu0 %v4085
    %5538 = vmatpush.bf16.msra.mxu0 %v4081
    %5539 = vmatpush.bf16.msra.mxu0 %v4077
    %5540 = vmatpush.bf16.msra.mxu0 %v4073
    %5541 = vmatpush.bf16.msra.mxu0 %v4069
    %5542 = vmatpush.bf16.msra.mxu0 %v4065
    %5543 = vmatmul.bf16.gmra.mxu0 %v5366
    %v5544 = vpop.f32.mrf.mxu0
    %v5545 = vadd.f32 %v294, %v5544
    %v5546 = vpop.f32.mrf.mxu0
    %5547 = vdwg.mxu0
    %5548 = vmatpush.bf16.msra.mxu0 %v4125
    %5549 = vmatpush.bf16.msra.mxu0 %v4121
    %5550 = vmatpush.bf16.msra.mxu0 %v4117
    %5551 = vmatpush.bf16.msra.mxu0 %v4113
    %5552 = vmatpush.bf16.msra.mxu0 %v4109
    %5553 = vmatpush.bf16.msra.mxu0 %v4105
    %5554 = vmatpush.bf16.msra.mxu0 %v4101
    %5555 = vmatpush.bf16.msra.mxu0 %v4097
    %5556 = vmatmul.bf16.gmra.mxu0 %v5534
    %v5557 = vpop.f32.mrf.mxu0
    %v5558 = vadd.f32 %v5545, %v5557
    %v5559 = vpop.f32.mrf.mxu0
    %5560 = vdwg.mxu0
    %5561 = vmatpush.bf16.msra.mxu0 %v4094
    %5562 = vmatpush.bf16.msra.mxu0 %v4090
    %5563 = vmatpush.bf16.msra.mxu0 %v4086
    %5564 = vmatpush.bf16.msra.mxu0 %v4082
    %5565 = vmatpush.bf16.msra.mxu0 %v4078
    %5566 = vmatpush.bf16.msra.mxu0 %v4074
    %5567 = vmatpush.bf16.msra.mxu0 %v4070
    %5568 = vmatpush.bf16.msra.mxu0 %v4066
    %5569 = vmatmul.bf16.gmra.mxu0 %v5366
    %v5570 = vpop.f32.mrf.mxu0
    %v5571 = vadd.f32 %v295, %v5570
    %v5572 = vpop.f32.mrf.mxu0
    %5573 = vdwg.mxu0
    %5574 = vmatpush.bf16.msra.mxu0 %v4126
    %5575 = vmatpush.bf16.msra.mxu0 %v4122
    %5576 = vmatpush.bf16.msra.mxu0 %v4118
    %5577 = vmatpush.bf16.msra.mxu0 %v4114
    %5578 = vmatpush.bf16.msra.mxu0 %v4110
    %5579 = vmatpush.bf16.msra.mxu0 %v4106
    %5580 = vmatpush.bf16.msra.mxu0 %v4102
    %5581 = vmatpush.bf16.msra.mxu0 %v4098
    %5582 = vmatmul.bf16.gmra.mxu0 %v5534
    %v5583 = vpop.f32.mrf.mxu0
    %v5584 = vadd.f32 %v5571, %v5583
    %v5585 = vpop.f32.mrf.mxu0
    %5586 = vdwg.mxu0
    %5587 = vmatpush.bf16.msra.mxu0 %v4095
    %5588 = vmatpush.bf16.msra.mxu0 %v4091
    %5589 = vmatpush.bf16.msra.mxu0 %v4087
    %5590 = vmatpush.bf16.msra.mxu0 %v4083
    %5591 = vmatpush.bf16.msra.mxu0 %v4079
    %5592 = vmatpush.bf16.msra.mxu0 %v4075
    %5593 = vmatpush.bf16.msra.mxu0 %v4071
    %5594 = vmatpush.bf16.msra.mxu0 %v4067
    %5595 = vmatmul.bf16.gmra.mxu0 %v5366
    %v5596 = vpop.f32.mrf.mxu0
    %v5597 = vadd.f32 %v296, %v5596
    %v5598 = vpop.f32.mrf.mxu0
    %5599 = vdwg.mxu0
    %5600 = vmatpush.bf16.msra.mxu0 %v4127
    %5601 = vmatpush.bf16.msra.mxu0 %v4123
    %5602 = vmatpush.bf16.msra.mxu0 %v4119
    %5603 = vmatpush.bf16.msra.mxu0 %v4115
    %5604 = vmatpush.bf16.msra.mxu0 %v4111
    %5605 = vmatpush.bf16.msra.mxu0 %v4107
    %5606 = vmatpush.bf16.msra.mxu0 %v4103
    %5607 = vmatpush.bf16.msra.mxu0 %v4099
    %5608 = vmatmul.bf16.gmra.mxu0 %v5534
    %v5609 = vpop.f32.mrf.mxu0
    %v5610 = vadd.f32 %v5597, %v5609
    %v5611 = vpop.f32.mrf.mxu0
    %5612 = vdwg.mxu0
    %5613 = vmatpush.bf16.msra.mxu0 %v4096
    %5614 = vmatpush.bf16.msra.mxu0 %v4092
    %5615 = vmatpush.bf16.msra.mxu0 %v4088
    %5616 = vmatpush.bf16.msra.mxu0 %v4084
    %5617 = vmatpush.bf16.msra.mxu0 %v4080
    %5618 = vmatpush.bf16.msra.mxu0 %v4076
    %5619 = vmatpush.bf16.msra.mxu0 %v4072
    %5620 = vmatpush.bf16.msra.mxu0 %v4068
    %5621 = vmatmul.bf16.gmra.mxu0 %v5366
    %v5622 = vpop.f32.mrf.mxu0
    %v5623 = vadd.f32 %v297, %v5622
    %v5624 = vpop.f32.mrf.mxu0
    %5625 = vdwg.mxu0
    %5626 = vmatpush.bf16.msra.mxu0 %v4128
    %5627 = vmatpush.bf16.msra.mxu0 %v4124
    %5628 = vmatpush.bf16.msra.mxu0 %v4120
    %5629 = vmatpush.bf16.msra.mxu0 %v4116
    %5630 = vmatpush.bf16.msra.mxu0 %v4112
    %5631 = vmatpush.bf16.msra.mxu0 %v4108
    %5632 = vmatpush.bf16.msra.mxu0 %v4104
    %5633 = vmatpush.bf16.msra.mxu0 %v4100
    %5634 = vmatmul.bf16.gmra.mxu0 %v5534
    %v5635 = vpop.f32.mrf.mxu0
    %v5636 = vadd.f32 %v5623, %v5635
    %v5637 = vpop.f32.mrf.mxu0
    %5638 = vdwg.mxu0
    %v5639 = vxor.u32 %v5558, 2147483648
    %v5640 = vxor.u32 %v5584, 2147483648
    %v5641 = vxor.u32 %v5610, 2147483648
    %v5642 = vmul.f32 %v5639, 1.442695
    %v5643 = vpow.pop %v5642
    %v5644 = vmul.f32 %v5640, 1.442695
    %v5645 = vpow.pop %v5644
    %v5646 = vmul.f32 %v5641, 1.442695
    %v5647 = vpow.pop %v5646
    %v5648 = vadd.f32 %v5643, 1.0
    %v5649 = vadd.f32 %v5645, 1.0
    %v5650 = vadd.f32 %v5647, 1.0
    %v5651 = vrcp.pop %v5648
    %v5652 = vmul.f32 %v5648, %v5651
    %v5653 = vsub.f32 1.0, %v5652
    %v5654 = vmul.f32 %v5651, %v5653
    %v5655 = vadd.f32 %v5651, %v5654
    %vm5656 = vweird.f32 %v5648
    %vm5657 = vweird.f32 %v5651
    %vm5658 = vmor %vm5656, %vm5657
    %v5659 = vsel %vm5658, %v5651, %v5655
    %v5660 = vand.u32 2147483647, %v5648
    %vm5661 = vcmp.eq.f32.partialorder %v5660, 8.507059e+37
    %v5662 = vand.u32 %v5648, 2147483648
    %v5663 = vor.u32 1.1754944e-38, %v5662
    %v5664 = vsel %vm5661, %v5663, %v5659
    %v5665 = vmul.f32 1.0, %v5664
    %v5666 = vrcp.pop %v5649
    %v5667 = vmul.f32 %v5649, %v5666
    %v5668 = vsub.f32 1.0, %v5667
    %v5669 = vmul.f32 %v5666, %v5668
    %v5670 = vadd.f32 %v5666, %v5669
    %vm5671 = vweird.f32 %v5649
    %vm5672 = vweird.f32 %v5666
    %vm5673 = vmor %vm5671, %vm5672
    %v5674 = vsel %vm5673, %v5666, %v5670
    %v5675 = vand.u32 2147483647, %v5649
    %vm5676 = vcmp.eq.f32.partialorder %v5675, 8.507059e+37
    %v5677 = vand.u32 %v5649, 2147483648
    %v5678 = vor.u32 1.1754944e-38, %v5677
    %v5679 = vsel %vm5676, %v5678, %v5674
    %v5680 = vmul.f32 1.0, %v5679
    %v5681 = vrcp.pop %v5650
    %v5682 = vmul.f32 %v5650, %v5681
    %v5683 = vsub.f32 1.0, %v5682
    %v5684 = vmul.f32 %v5681, %v5683
    %v5685 = vadd.f32 %v5681, %v5684
    %vm5686 = vweird.f32 %v5650
    %vm5687 = vweird.f32 %v5681
    %vm5688 = vmor %vm5686, %vm5687
    %v5689 = vsel %vm5688, %v5681, %v5685
    %v5690 = vand.u32 2147483647, %v5650
    %vm5691 = vcmp.eq.f32.partialorder %v5690, 8.507059e+37
    %v5692 = vand.u32 %v5650, 2147483648
    %v5693 = vor.u32 1.1754944e-38, %v5692
    %v5694 = vsel %vm5691, %v5693, %v5689
    %v5695 = vmul.f32 1.0, %v5694
    %v5696 = vtanh.pop %v5636
    %v5697 = vmul.f32 %v5680, %v5363
    %v5698 = vmul.f32 %v5665, %v5696
    %v5699 = vadd.f32 %v5697, %v5698
    %v5700 = vtanh.pop %v5699
    %v5701 = vmul.f32 %v5695, %v5700
    %v5702 = vpack.c.bf16 %v5701, %v5701
    %5703 = vmatpush.bf16.msra.mxu0 %v4595
    %5704 = vmatpush.bf16.msra.mxu0 %v4591
    %5705 = vmatpush.bf16.msra.mxu0 %v4587
    %5706 = vmatpush.bf16.msra.mxu0 %v4583
    %5707 = vmatpush.bf16.msra.mxu0 %v4579
    %5708 = vmatpush.bf16.msra.mxu0 %v4575
    %5709 = vmatpush.bf16.msra.mxu0 %v4571
    %5710 = vmatpush.bf16.msra.mxu0 %v4567
    %5711 = vmatmul.bf16.gmra.mxu0 %v5702
    %v5712 = vpop.f32.mrf.mxu0
    %v5713 = vadd.f32 %v304, %v5712
    %v5714 = vpop.f32.mrf.mxu0
    %5715 = vdwg.mxu0
    %5716 = vmatpush.bf16.msra.mxu0 %v4627
    %5717 = vmatpush.bf16.msra.mxu0 %v4623
    %5718 = vmatpush.bf16.msra.mxu0 %v4619
    %5719 = vmatpush.bf16.msra.mxu0 %v4615
    %5720 = vmatpush.bf16.msra.mxu0 %v4611
    %5721 = vmatpush.bf16.msra.mxu0 %v4607
    %5722 = vmatpush.bf16.msra.mxu0 %v4603
    %5723 = vmatpush.bf16.msra.mxu0 %v4599
    %5724 = vmatmul.bf16.gmra.mxu0 %v5534
    %v5725 = vpop.f32.mrf.mxu0
    %v5726 = vadd.f32 %v5713, %v5725
    %v5727 = vpop.f32.mrf.mxu0
    %5728 = vdwg.mxu0
    %5729 = vmatpush.bf16.msra.mxu0 %v4596
    %5730 = vmatpush.bf16.msra.mxu0 %v4592
    %5731 = vmatpush.bf16.msra.mxu0 %v4588
    %5732 = vmatpush.bf16.msra.mxu0 %v4584
    %5733 = vmatpush.bf16.msra.mxu0 %v4580
    %5734 = vmatpush.bf16.msra.mxu0 %v4576
    %5735 = vmatpush.bf16.msra.mxu0 %v4572
    %5736 = vmatpush.bf16.msra.mxu0 %v4568
    %5737 = vmatmul.bf16.gmra.mxu0 %v5702
    %v5738 = vpop.f32.mrf.mxu0
    %v5739 = vadd.f32 %v305, %v5738
    %v5740 = vpop.f32.mrf.mxu0
    %5741 = vdwg.mxu0
    %5742 = vmatpush.bf16.msra.mxu0 %v4628
    %5743 = vmatpush.bf16.msra.mxu0 %v4624
    %5744 = vmatpush.bf16.msra.mxu0 %v4620
    %5745 = vmatpush.bf16.msra.mxu0 %v4616
    %5746 = vmatpush.bf16.msra.mxu0 %v4612
    %5747 = vmatpush.bf16.msra.mxu0 %v4608
    %5748 = vmatpush.bf16.msra.mxu0 %v4604
    %5749 = vmatpush.bf16.msra.mxu0 %v4600
    %5750 = vmatmul.bf16.gmra.mxu0 %v5534
    %v5751 = vpop.f32.mrf.mxu0
    %v5752 = vadd.f32 %v5739, %v5751
    %v5753 = vpop.f32.mrf.mxu0
    %5754 = vdwg.mxu0
    %5755 = vmatpush.bf16.msra.mxu0 %v4597
    %5756 = vmatpush.bf16.msra.mxu0 %v4593
    %5757 = vmatpush.bf16.msra.mxu0 %v4589
    %5758 = vmatpush.bf16.msra.mxu0 %v4585
    %5759 = vmatpush.bf16.msra.mxu0 %v4581
    %5760 = vmatpush.bf16.msra.mxu0 %v4577
    %5761 = vmatpush.bf16.msra.mxu0 %v4573
    %5762 = vmatpush.bf16.msra.mxu0 %v4569
    %5763 = vmatmul.bf16.gmra.mxu0 %v5702
    %v5764 = vpop.f32.mrf.mxu0
    %v5765 = vadd.f32 %v306, %v5764
    %v5766 = vpop.f32.mrf.mxu0
    %5767 = vdwg.mxu0
    %5768 = vmatpush.bf16.msra.mxu0 %v4629
    %5769 = vmatpush.bf16.msra.mxu0 %v4625
    %5770 = vmatpush.bf16.msra.mxu0 %v4621
    %5771 = vmatpush.bf16.msra.mxu0 %v4617
    %5772 = vmatpush.bf16.msra.mxu0 %v4613
    %5773 = vmatpush.bf16.msra.mxu0 %v4609
    %5774 = vmatpush.bf16.msra.mxu0 %v4605
    %5775 = vmatpush.bf16.msra.mxu0 %v4601
    %5776 = vmatmul.bf16.gmra.mxu0 %v5534
    %v5777 = vpop.f32.mrf.mxu0
    %v5778 = vadd.f32 %v5765, %v5777
    %v5779 = vpop.f32.mrf.mxu0
    %5780 = vdwg.mxu0
    %5781 = vmatpush.bf16.msra.mxu0 %v4598
    %5782 = vmatpush.bf16.msra.mxu0 %v4594
    %5783 = vmatpush.bf16.msra.mxu0 %v4590
    %5784 = vmatpush.bf16.msra.mxu0 %v4586
    %5785 = vmatpush.bf16.msra.mxu0 %v4582
    %5786 = vmatpush.bf16.msra.mxu0 %v4578
    %5787 = vmatpush.bf16.msra.mxu0 %v4574
    %5788 = vmatpush.bf16.msra.mxu0 %v4570
    %5789 = vmatmul.bf16.gmra.mxu0 %v5702
    %v5790 = vpop.f32.mrf.mxu0
    %v5791 = vadd.f32 %v307, %v5790
    %v5792 = vpop.f32.mrf.mxu0
    %5793 = vdwg.mxu0
    %5794 = vmatpush.bf16.msra.mxu0 %v4630
    %5795 = vmatpush.bf16.msra.mxu0 %v4626
    %5796 = vmatpush.bf16.msra.mxu0 %v4622
    %5797 = vmatpush.bf16.msra.mxu0 %v4618
    %5798 = vmatpush.bf16.msra.mxu0 %v4614
    %5799 = vmatpush.bf16.msra.mxu0 %v4610
    %5800 = vmatpush.bf16.msra.mxu0 %v4606
    %5801 = vmatpush.bf16.msra.mxu0 %v4602
    %5802 = vmatmul.bf16.gmra.mxu0 %v5534
    %v5803 = vpop.f32.mrf.mxu0
    %v5804 = vadd.f32 %v5791, %v5803
    %v5805 = vpop.f32.mrf.mxu0
    %5806 = vdwg.mxu0
    %v5807 = vxor.u32 %v5726, 2147483648
    %v5808 = vxor.u32 %v5752, 2147483648
    %v5809 = vxor.u32 %v5778, 2147483648
    %v5810 = vmul.f32 %v5807, 1.442695
    %v5811 = vpow.pop %v5810
    %v5812 = vmul.f32 %v5808, 1.442695
    %v5813 = vpow.pop %v5812
    %v5814 = vmul.f32 %v5809, 1.442695
    %v5815 = vpow.pop %v5814
    %v5816 = vadd.f32 %v5811, 1.0
    %v5817 = vadd.f32 %v5813, 1.0
    %v5818 = vadd.f32 %v5815, 1.0
    %v5819 = vrcp.pop %v5816
    %v5820 = vmul.f32 %v5816, %v5819
    %v5821 = vsub.f32 1.0, %v5820
    %v5822 = vmul.f32 %v5819, %v5821
    %v5823 = vadd.f32 %v5819, %v5822
    %vm5824 = vweird.f32 %v5816
    %vm5825 = vweird.f32 %v5819
    %vm5826 = vmor %vm5824, %vm5825
    %v5827 = vsel %vm5826, %v5819, %v5823
    %v5828 = vand.u32 2147483647, %v5816
    %vm5829 = vcmp.eq.f32.partialorder %v5828, 8.507059e+37
    %v5830 = vand.u32 %v5816, 2147483648
    %v5831 = vor.u32 1.1754944e-38, %v5830
    %v5832 = vsel %vm5829, %v5831, %v5827
    %v5833 = vmul.f32 1.0, %v5832
    %v5834 = vrcp.pop %v5817
    %v5835 = vmul.f32 %v5817, %v5834
    %v5836 = vsub.f32 1.0, %v5835
    %v5837 = vmul.f32 %v5834, %v5836
    %v5838 = vadd.f32 %v5834, %v5837
    %vm5839 = vweird.f32 %v5817
    %vm5840 = vweird.f32 %v5834
    %vm5841 = vmor %vm5839, %vm5840
    %v5842 = vsel %vm5841, %v5834, %v5838
    %v5843 = vand.u32 2147483647, %v5817
    %vm5844 = vcmp.eq.f32.partialorder %v5843, 8.507059e+37
    %v5845 = vand.u32 %v5817, 2147483648
    %v5846 = vor.u32 1.1754944e-38, %v5845
    %v5847 = vsel %vm5844, %v5846, %v5842
    %v5848 = vmul.f32 1.0, %v5847
    %v5849 = vrcp.pop %v5818
    %v5850 = vmul.f32 %v5818, %v5849
    %v5851 = vsub.f32 1.0, %v5850
    %v5852 = vmul.f32 %v5849, %v5851
    %v5853 = vadd.f32 %v5849, %v5852
    %vm5854 = vweird.f32 %v5818
    %vm5855 = vweird.f32 %v5849
    %vm5856 = vmor %vm5854, %vm5855
    %v5857 = vsel %vm5856, %v5849, %v5853
    %v5858 = vand.u32 2147483647, %v5818
    %vm5859 = vcmp.eq.f32.partialorder %v5858, 8.507059e+37
    %v5860 = vand.u32 %v5818, 2147483648
    %v5861 = vor.u32 1.1754944e-38, %v5860
    %v5862 = vsel %vm5859, %v5861, %v5857
    %v5863 = vmul.f32 1.0, %v5862
    %v5864 = vtanh.pop %v5804
    %v5865 = vmul.f32 %v5848, %v5531
    %v5866 = vmul.f32 %v5833, %v5864
    %v5867 = vadd.f32 %v5865, %v5866
    %v5868 = vtanh.pop %v5867
    %v5869 = vmul.f32 %v5863, %v5868
    %v5871 = vrot.slane %v5197, 6
    %v5874 = vrot.slane %v5533, 4
    %v5877 = vrot.slane %v5869, 2
    %v5879 = vsel %vm344, %v4861, %v5871
    %vm5880 = vcmask 1043456
    %v5881 = vsel %vm5880, %v5879, %v5874
    %vm5882 = vcmask 1045504
    %v5883 = vsel %vm5882, %v5881, %v5877
    %v5884 = vpack.c.bf16 %v5883, %v5883
    %v5901 = vunpack.c.l.b16 %v266
    %v5902 = vunpack.c.l.b16 %v267
    %v5903 = vunpack.c.l.b16 %v268
    %v5904 = vunpack.c.l.b16 %v269
    %v5905 = vunpack.c.l.b16 %v270
    %v5906 = vunpack.c.l.b16 %v271
    %v5907 = vunpack.c.l.b16 %v272
    %v5908 = vunpack.c.l.b16 %v273
    %v5909 = vunpack.c.l.b16 %v274
    %v5910 = vunpack.c.l.b16 %v275
    %v5911 = vunpack.c.l.b16 %v276
    %v5912 = vunpack.c.l.b16 %v277
    %v5913 = vunpack.c.l.b16 %v278
    %v5914 = vunpack.c.l.b16 %v279
    %v5915 = vunpack.c.l.b16 %v280
    %v5916 = vunpack.c.l.b16 %v281
    %v5917 = vpack.c.b16 %v5902, %v5901
    %v5918 = vpack.c.b16 %v5904, %v5903
    %v5919 = vpack.c.b16 %v5906, %v5905
    %v5920 = vpack.c.b16 %v5908, %v5907
    %v5921 = vpack.c.b16 %v5910, %v5909
    %v5922 = vpack.c.b16 %v5912, %v5911
    %v5923 = vpack.c.b16 %v5914, %v5913
    %v5924 = vpack.c.b16 %v5916, %v5915
    %5933 = vmatpush.bf16.msra.mxu0 %v5924
    %5934 = vmatpush.bf16.msra.mxu0 %v5923
    %5935 = vmatpush.bf16.msra.mxu0 %v5922
    %5936 = vmatpush.bf16.msra.mxu0 %v5921
    %5937 = vmatpush.bf16.msra.mxu0 %v5920
    %5938 = vmatpush.bf16.msra.mxu0 %v5919
    %5939 = vmatpush.bf16.msra.mxu0 %v5918
    %5940 = vmatpush.bf16.msra.mxu0 %v5917
    %5941 = vmatmul.bf16.gmra.mxu0 %v5884
    %v5942 = vpop.f32.mrf.mxu0
    %v5943 = vadd.f32 %v314, %v5942
    %v5944 = vpop.f32.mrf.mxu0
    %5945 = vdwg.mxu0
    %5946 = vst [vmem:[#allocation14] sm:$0xff] %v5943
    // Predicated region
    $region70: #{tpu_custom_call.1} parent=1 // pred_check
      _
    $region71: #{tpu_custom_call.1} parent=1 // pred_check_branch
      %5948 = sbr.rel (0) target = $region73
    $region72: #{tpu_custom_call.1} parent=1 // pred_region
      %5950 = vsyncadd [#allocation7], 0
      %s5952 = sshll.u32 [#allocation14], 4
      %s5953 = int_to_ptr.vmem [resolvable:$true] %s5952
      %s5954 = sshll.u32 %s12, 4
      %s5955 = int_to_ptr.hbm [resolvable:$true] %s5954
      %5957 = dma.vmem_to_hbm [thread:$0]  %s5953, 128, %s5955, [#allocation7]
    $region73: #{tpu_custom_call.1} parent=1 // pred_fallthru
      _
    // Predicated region
    $region74: #{tpu_custom_call.1} parent=1 // pred_check
      _
    $region75: #{tpu_custom_call.1} parent=1 // pred_check_branch
      %5959 = sbr.rel (0) target = $region77
    $region76: #{tpu_custom_call.1} parent=1 // pred_region
      %5961 = dma.done [#allocation7], 128
    $region77: #{tpu_custom_call.1} parent=1 // pred_fallthru
      _
    %5962 = vsyncpa [#allocation6], 1
    %5963 = vsyncpa [#allocation9], 1
    %5964 = vsyncpa [#allocation12], 1
    %5965 = vsyncpa [#allocation7], 1
  %5966 = vsyncmov [#allocation4]
  %s5967 = vpop.sfrf %5966
  %p5968 = scmp.eq.s32.totalorder %s5967, 0
  %p5969 = pneg %p5968
  %5971 = shalt.err (%p5969)
  %s5972 = scalar_lea.sflag [#allocation4], 1
  %5973 = vsyncmov %s5972
  %s5974 = vpop.sfrf %5973
  %p5975 = scmp.eq.s32.totalorder %s5974, 0
  %p5976 = pneg %p5975
  %5978 = shalt.err (%p5976)

</llo_original>
